<compile_context>
chip_gen: v7x
topology: tpu7x:2x2x1
jax: 0.10.0
libtpu: 0.0.40
codegen_flags: <defaults>
</compile_context>

<pallas_src>
import numpy as np
import jax
import jax.numpy as jnp
from jax import lax
from jax.experimental import pallas as pl
from jax.experimental.pallas import tpu as pltpu


# --------------------------------------------------------------------------- shapes / operators
def _conv_out_size(n, k=3, s=1, p=1):
    return (n + 2 * p - k) // s + 1


def _conv3x3_tap_operator(hin, win, stride):
    """0/1 operator (HW_in, 9*HW_out): column t*HW_out+p selects the zero-padded input pixel of
    tap t=(dh*3+dw) for output pixel p of a 3x3 conv with padding=1 and the given stride."""
    hout, wout = _conv_out_size(hin, s=stride), _conv_out_size(win, s=stride)
    q_in, q_out = hin * win, hout * wout
    op = np.zeros((q_in, 9 * q_out), np.float32)
    for dh in range(3):
        for dw in range(3):
            t = dh * 3 + dw
            for ho in range(hout):
                hi = ho * stride + dh - 1
                if not (0 <= hi < hin):
                    continue
                for wo in range(wout):
                    wi = wo * stride + dw - 1
                    if not (0 <= wi < win):
                        continue
                    op[hi * win + wi, t * q_out + ho * wout + wo] = 1.0
    return op


def _avgpool3x3_s2_operator(hin, win):
    """(HW_in, HW_out) operator for AvgPool2d(k=3, s=2, p=1, count_include_pad=True)."""
    hout, wout = _conv_out_size(hin, s=2), _conv_out_size(win, s=2)
    op = np.zeros((hin * win, hout * wout), np.float32)
    for ho in range(hout):
        for wo in range(wout):
            for dh in range(3):
                hi = ho * 2 + dh - 1
                if not (0 <= hi < hin):
                    continue
                for dw in range(3):
                    wi = wo * 2 + dw - 1
                    if not (0 <= wi < win):
                        continue
                    op[hi * win + wi, ho * wout + wo] += 1.0 / 9.0
    return op


# --------------------------------------------------------------------------- parameters (PyTorch layouts)
def _init_bn(key, c):
    k1, k2, k3, k4 = jax.random.split(key, 4)
    return dict(
        gamma=jax.random.uniform(k1, (c,), jnp.float32, 0.5, 1.5),
        beta=0.1 * jax.random.normal(k2, (c,), jnp.float32),
        mean=0.1 * jax.random.normal(k3, (c,), jnp.float32),
        var=jax.random.uniform(k4, (c,), jnp.float32, 0.5, 1.5),
    )


def _init_conv(key, c_out, c_in, k):
    fan_in = c_in * k * k
    return jax.random.normal(key, (c_out, c_in, k, k), jnp.float32) * float(np.sqrt(2.0 / fan_in))


def init_stdc_params(key, in_channels=3, ch_widths=(8, 16, 32)):
    """Synthetic parameters in PyTorch layouts (OIHW conv weights, BN running stats)."""
    w1, w2, w3 = ch_widths
    keys = iter(jax.random.split(key, 32))

    def conv_bn(c_out, c_in, k):
        return dict(w=_init_conv(next(keys), c_out, c_in, k), bn=_init_bn(next(keys), c_out))

    def stdc_block(c_in, c_out, stride):
        blk = dict(
            conv0=conv_bn(c_out // 2, c_in, 1),              # 1x1 ConvBNReLU
            conv1=conv_bn(c_out // 4, c_out // 2, 3),        # 3x3 ConvBNReLU
            conv2=conv_bn(c_out // 8, c_out // 4, 3),
            conv3=conv_bn(c_out // 8, c_out // 8, 3),
        )
        if stride == 2:                                      # depthwise 3x3 s2 ConvBN (no act)
            blk['dw'] = dict(
                w=jax.random.normal(next(keys), (c_out // 2, 1, 3, 3), jnp.float32)
                  * float(np.sqrt(2.0 / 9.0)),
                bn=_init_bn(next(keys), c_out // 2))
        return blk

    return dict(
        stage1=conv_bn(w1, in_channels, 3),                  # 'conv' stage, stride 2
        stage2=conv_bn(w2, w1, 3),                           # 'conv' stage, stride 2
        stage3=dict(block1=stdc_block(w2, w3, 2),            # 'stdc' stage: stride-2 + stride-1
                    block2=stdc_block(w3, w3, 1)),
    )


# --------------------------------------------------------------------------- BN folding
def _fold_bn(bn, eps=1e-5):
    s = bn['gamma'] / jnp.sqrt(bn['var'] + eps)
    return s, bn['beta'] - bn['mean'] * s


def _fold_conv3x3(w, bn):
    """(C_out, C_in, 3, 3) + BN -> fused weight (C_out, 9*C_in) bf16 (columns ordered (tap, ci))
    and bias (C_out, 1) f32."""
    scale, bias = _fold_bn(bn)
    wf = w * scale[:, None, None, None]
    c_out, c_in = wf.shape[0], wf.shape[1]
    wcat = jnp.transpose(wf, (0, 2, 3, 1)).reshape(c_out, 9 * c_in)
    return wcat.astype(jnp.bfloat16), bias.reshape(c_out, 1)


def _fold_conv1x1(w, bn):
    scale, bias = _fold_bn(bn)
    wf = w[:, :, 0, 0] * scale[:, None]
    return wf.astype(jnp.bfloat16), bias.reshape(-1, 1)


def _fold_dw3x3(w_dw, bn):
    """Depthwise (C, 1, 3, 3) expanded to a dense (C, C, 3, 3) weight (exact zeros off-diagonal)
    so it reuses the generic fused-conv path."""
    c = w_dw.shape[0]
    dense = jnp.eye(c, dtype=jnp.float32)[:, :, None, None] * w_dw[:, 0][:, None, :, :]
    return _fold_conv3x3(dense, bn)


# --------------------------------------------------------------------------- Pallas kernel
def _stdc_kernel(x_ref,
                 t1, w1, b1, t2, w2, b2,
                 w_b1c0, b_b1c0, pool, t_dw, w_dw, b_dw,
                 t_s1, w_b1c1, b_b1c1, w_b1c2, b_b1c2, w_b1c3, b_b1c3,
                 w_b2c0, b_b2c0, w_b2c1, b_b2c1, w_b2c2, b_b2c2, w_b2c3, b_b2c3,
                 out1_ref, out2_ref, out3_ref):
    bf16 = jnp.bfloat16

    def conv3x3(x2, t_ref, w_ref, b_ref, relu=True):
        # x2: (C_in, HW_in) f32.  t_ref: (HW_in, 9*HW_out) bf16 0/1 tap selector (pad+stride folded).
        q_out = t_ref.shape[1] // 9
        shifted = jnp.dot(x2.astype(bf16), t_ref[...],
                          preferred_element_type=jnp.float32)            # (C_in, 9*HW_out)
        # stack the 9 shifted windows on the contraction axis -> one fused K = 9*C_in matmul
        patches = jnp.concatenate(
            [shifted[:, t * q_out:(t + 1) * q_out] for t in range(9)], axis=0)  # (9*C_in, HW_out)
        y = jnp.dot(w_ref[...], patches.astype(bf16),
                    preferred_element_type=jnp.float32) + b_ref[...]     # (C_out, HW_out)
        return jnp.maximum(y, 0.0) if relu else y

    def conv1x1(x2, w_ref, b_ref):
        y = jnp.dot(w_ref[...], x2.astype(bf16),
                    preferred_element_type=jnp.float32) + b_ref[...]
        return jnp.maximum(y, 0.0)

    x = x_ref[0].astype(jnp.float32)                                     # (C_in, H0*W0)

    # --- stage 1 / stage 2: plain ConvBNReLU 3x3 stride-2 blocks ---
    y1 = conv3x3(x, t1, w1, b1)                                          # (8,  q1)
    out1_ref[0] = y1
    y2 = conv3x3(y1, t2, w2, b2)                                         # (16, q2)
    out2_ref[0] = y2

    # --- stage 3, STDC block 1 (stride 2, steps=4, avg_pool skip) ---
    a = conv1x1(y2, w_b1c0, b_b1c0)                                      # (16, q2)
    skip = jnp.dot(a.astype(bf16), pool[...],
                   preferred_element_type=jnp.float32)                   # (16, q3) AvgPool 3x3 s2
    d = conv3x3(a, t_dw, w_dw, b_dw, relu=False)                         # (16, q3) dw 3x3 s2 + BN
    xb2 = conv3x3(d, t_s1, w_b1c1, b_b1c1)                               # (8,  q3)
    xb3 = conv3x3(xb2, t_s1, w_b1c2, b_b1c2)                             # (4,  q3)
    xb4 = conv3x3(xb3, t_s1, w_b1c3, b_b1c3)                             # (4,  q3)
    blk1 = jnp.concatenate([skip, xb2, xb3, xb4], axis=0)                # (32, q3)

    # --- stage 3, STDC block 2 (stride 1, Residual skip) ---
    a2 = conv1x1(blk1, w_b2c0, b_b2c0)                                   # (16, q3)
    xc2 = conv3x3(a2, t_s1, w_b2c1, b_b2c1)                              # (8,  q3)
    xc3 = conv3x3(xc2, t_s1, w_b2c2, b_b2c2)                             # (4,  q3)
    xc4 = conv3x3(xc3, t_s1, w_b2c3, b_b2c3)                             # (4,  q3)
    out3_ref[0] = jnp.concatenate([a2, xc2, xc3, xc4], axis=0)           # (32, q3)


# --------------------------------------------------------------------------- wrapper
@jax.jit
def stdc_backbone_forward(x, params):
    """x: (N, C_in, H, W) NCHW f32 -> tuple of 3 NCHW feature maps (strides 2, 4, 8)."""
    n, c_in, h0, w0 = x.shape
    h1, w1_ = _conv_out_size(h0, s=2), _conv_out_size(w0, s=2)
    h2, w2_ = _conv_out_size(h1, s=2), _conv_out_size(w1_, s=2)
    h3, w3_ = _conv_out_size(h2, s=2), _conv_out_size(w2_, s=2)
    q0, q1, q2, q3 = h0 * w0, h1 * w1_, h2 * w2_, h3 * w3_

    bf16 = jnp.bfloat16
    # spatial tap / pooling operators (shape-only, exact 0/1 and 1/9 entries; bf16 halves DMA bytes)
    t1 = jnp.asarray(_conv3x3_tap_operator(h0, w0, 2), bf16)
    t2 = jnp.asarray(_conv3x3_tap_operator(h1, w1_, 2), bf16)
    t_dw = jnp.asarray(_conv3x3_tap_operator(h2, w2_, 2), bf16)
    t_s1 = jnp.asarray(_conv3x3_tap_operator(h3, w3_, 1), bf16)
    pool = jnp.asarray(_avgpool3x3_s2_operator(h2, w2_), bf16)

    # BN-folded weights (bf16) and biases (f32)
    s1w, s1b = _fold_conv3x3(params['stage1']['w'], params['stage1']['bn'])
    s2w, s2b = _fold_conv3x3(params['stage2']['w'], params['stage2']['bn'])
    b1p = params['stage3']['block1']
    b2p = params['stage3']['block2']
    c0w, c0b = _fold_conv1x1(b1p['conv0']['w'], b1p['conv0']['bn'])
    dww, dwb = _fold_dw3x3(b1p['dw']['w'], b1p['dw']['bn'])
    c1w, c1b = _fold_conv3x3(b1p['conv1']['w'], b1p['conv1']['bn'])
    c2w, c2b = _fold_conv3x3(b1p['conv2']['w'], b1p['conv2']['bn'])
    c3w, c3b = _fold_conv3x3(b1p['conv3']['w'], b1p['conv3']['bn'])
    d0w, d0b = _fold_conv1x1(b2p['conv0']['w'], b2p['conv0']['bn'])
    d1w, d1b = _fold_conv3x3(b2p['conv1']['w'], b2p['conv1']['bn'])
    d2w, d2b = _fold_conv3x3(b2p['conv2']['w'], b2p['conv2']['bn'])
    d3w, d3b = _fold_conv3x3(b2p['conv3']['w'], b2p['conv3']['bn'])

    c_out1 = s1w.shape[0]
    c_out2 = s2w.shape[0]
    c_out3 = d0w.shape[0] + d1w.shape[0] + d2w.shape[0] + d3w.shape[0]

    # channel-major kernel view: NCHW -> (N, C, H*W) is a free reshape (spatial stays on lanes)
    x_flat = x.reshape(n, c_in, q0).astype(jnp.float32)

    weights = [t1, s1w, s1b, t2, s2w, s2b,
               c0w, c0b, pool, t_dw, dww, dwb,
               t_s1, c1w, c1b, c2w, c2b, c3w, c3b,
               d0w, d0b, d1w, d1b, d2w, d2b, d3w, d3b]

    in_specs = [pl.BlockSpec((1, c_in, q0), lambda i: (i, 0, 0))]
    # constant index maps: the pipeline re-uses the same VMEM block for the weights across both
    # grid steps (at production sizes additionally pass pipeline_mode=pl.Buffered(1) to drop the
    # second buffer).
    in_specs += [pl.BlockSpec(w_.shape, lambda i: (0, 0)) for w_ in weights]

    out_shape = (jax.ShapeDtypeStruct((n, c_out1, q1), jnp.float32),
                 jax.ShapeDtypeStruct((n, c_out2, q2), jnp.float32),
                 jax.ShapeDtypeStruct((n, c_out3, q3), jnp.float32))
    out_specs = (pl.BlockSpec((1, c_out1, q1), lambda i: (i, 0, 0)),
                 pl.BlockSpec((1, c_out2, q2), lambda i: (i, 0, 0)),
                 pl.BlockSpec((1, c_out3, q3), lambda i: (i, 0, 0)))

    y1, y2, y3 = pl.pallas_call(
        _stdc_kernel,
        out_shape=out_shape,
        grid_spec=pltpu.PrefetchScalarGridSpec(
            num_scalar_prefetch=0,
            grid=(n,),
            in_specs=in_specs,
            out_specs=out_specs),
        compiler_params=pltpu.CompilerParams(
            dimension_semantics=("parallel",),          # N=2 steps -> both v7x TensorCores busy
            vmem_limit_bytes=40 * 1024 * 1024),         # ~2x the ~5 MiB operand footprint + slack
    )(x_flat, *weights)

    return (y1.reshape(n, c_out1, h1, w1_),
            y2.reshape(n, c_out2, h2, w2_),
            y3.reshape(n, c_out3, h3, w3_))


# --------------------------------------------------------------------------- reference (f32, lax.conv)
def _q(v):
    # mirror the kernel's bf16 MXU-operand precision (f32 accumulation everywhere else)
    return v.astype(jnp.bfloat16).astype(jnp.float32)


def _ref_conv_bn_act(x, w, bn, stride, padding, groups=1, relu=True):
    scale, bias = _fold_bn(bn)
    wf = w * scale[:, None, None, None]
    y = lax.conv_general_dilated(
        _q(x), _q(wf),
        window_strides=(stride, stride),
        padding=((padding, padding), (padding, padding)),
        dimension_numbers=("NCHW", "OIHW", "NCHW"),
        feature_group_count=groups,
        precision=lax.Precision.HIGHEST)
    y = y + bias[None, :, None, None]
    return jnp.maximum(y, 0.0) if relu else y


def _ref_avgpool_3x3_s2(x):
    xq = _q(x)
    s = lax.reduce_window(xq, 0.0, lax.add, (1, 1, 3, 3), (1, 1, 2, 2),
                          ((0, 0), (0, 0), (1, 1), (1, 1)))
    inv9 = jnp.asarray(1.0 / 9.0, jnp.bfloat16).astype(jnp.float32)      # same 1/9 as the kernel
    return s * inv9


@jax.jit
def stdc_backbone_reference(x, params):
    """Independent NCHW implementation of the STDCBackbone forward (inference BN folded)."""
    y1 = _ref_conv_bn_act(x, params['stage1']['w'], params['stage1']['bn'], 2, 1)
    y2 = _ref_conv_bn_act(y1, params['stage2']['w'], params['stage2']['bn'], 2, 1)

    b1p = params['stage3']['block1']
    a = _ref_conv_bn_act(y2, b1p['conv0']['w'], b1p['conv0']['bn'], 1, 0)
    skip = _ref_avgpool_3x3_s2(a)
    d = _ref_conv_bn_act(a, b1p['dw']['w'], b1p['dw']['bn'], 2, 1,
                         groups=a.shape[1], relu=False)
    xb2 = _ref_conv_bn_act(d, b1p['conv1']['w'], b1p['conv1']['bn'], 1, 1)
    xb3 = _ref_conv_bn_act(xb2, b1p['conv2']['w'], b1p['conv2']['bn'], 1, 1)
    xb4 = _ref_conv_bn_act(xb3, b1p['conv3']['w'], b1p['conv3']['bn'], 1, 1)
    blk1 = jnp.concatenate([skip, xb2, xb3, xb4], axis=1)

    b2p = params['stage3']['block2']
    a2 = _ref_conv_bn_act(blk1, b2p['conv0']['w'], b2p['conv0']['bn'], 1, 0)
    xc2 = _ref_conv_bn_act(a2, b2p['conv1']['w'], b2p['conv1']['bn'], 1, 1)
    xc3 = _ref_conv_bn_act(xc2, b2p['conv2']['w'], b2p['conv2']['bn'], 1, 1)
    xc4 = _ref_conv_bn_act(xc3, b2p['conv3']['w'], b2p['conv3']['bn'], 1, 1)
    y3 = jnp.concatenate([a2, xc2, xc3, xc4], axis=1)
    return y1, y2, y3


# --------------------------------------------------------------------------- main
if __name__ == "__main__":
    key = jax.random.PRNGKey(0)
    k_x, k_p = jax.random.split(key)

    N, C_IN, H, W = 2, 3, 32, 32
    x = jax.random.normal(k_x, (N, C_IN, H, W), jnp.float32)             # NCHW, like PyTorch
    params = init_stdc_params(k_p, in_channels=C_IN, ch_widths=(8, 16, 32))

    outs = stdc_backbone_forward(x, params)
    outs = jax.block_until_ready(outs)
    assert outs[0].shape == (N, 8, 16, 16), outs[0].shape
    assert outs[1].shape == (N, 16, 8, 8), outs[1].shape
    assert outs[2].shape == (N, 32, 4, 4), outs[2].shape

    # Validate against an independent lax.conv reference.  The reference mirrors the kernel's
    # bf16 MXU-operand precision (f32 accumulation), so the two agree up to f32 summation order
    # and the occasional bf16 tie-break; 1e-2 comfortably bounds that while catching real bugs.
    refs = stdc_backbone_reference(x, params)
    for got, ref in zip(outs, refs):
        np.testing.assert_allclose(np.asarray(got), np.asarray(ref), rtol=1e-2, atol=1e-2)

    print("KERNEL_OK")
</pallas_src>

<mosaic_0001>
module attributes {stable_mosaic.version = 11 : i64} {
  func.func @_stdc_kernel(%arg0: i32, %arg1: memref<1x3x1024xf32, #tpu.memory_space<vmem>>, %arg2: memref<1024x2304xbf16, #tpu.memory_space<vmem>>, %arg3: memref<8x27xbf16, #tpu.memory_space<vmem>>, %arg4: memref<8x1xf32, #tpu.memory_space<vmem>>, %arg5: memref<256x576xbf16, #tpu.memory_space<vmem>>, %arg6: memref<16x72xbf16, #tpu.memory_space<vmem>>, %arg7: memref<16x1xf32, #tpu.memory_space<vmem>>, %arg8: memref<16x16xbf16, #tpu.memory_space<vmem>>, %arg9: memref<16x1xf32, #tpu.memory_space<vmem>>, %arg10: memref<64x16xbf16, #tpu.memory_space<vmem>>, %arg11: memref<64x144xbf16, #tpu.memory_space<vmem>>, %arg12: memref<16x144xbf16, #tpu.memory_space<vmem>>, %arg13: memref<16x1xf32, #tpu.memory_space<vmem>>, %arg14: memref<16x144xbf16, #tpu.memory_space<vmem>>, %arg15: memref<8x144xbf16, #tpu.memory_space<vmem>>, %arg16: memref<8x1xf32, #tpu.memory_space<vmem>>, %arg17: memref<4x72xbf16, #tpu.memory_space<vmem>>, %arg18: memref<4x1xf32, #tpu.memory_space<vmem>>, %arg19: memref<4x36xbf16, #tpu.memory_space<vmem>>, %arg20: memref<4x1xf32, #tpu.memory_space<vmem>>, %arg21: memref<16x32xbf16, #tpu.memory_space<vmem>>, %arg22: memref<16x1xf32, #tpu.memory_space<vmem>>, %arg23: memref<8x144xbf16, #tpu.memory_space<vmem>>, %arg24: memref<8x1xf32, #tpu.memory_space<vmem>>, %arg25: memref<4x72xbf16, #tpu.memory_space<vmem>>, %arg26: memref<4x1xf32, #tpu.memory_space<vmem>>, %arg27: memref<4x36xbf16, #tpu.memory_space<vmem>>, %arg28: memref<4x1xf32, #tpu.memory_space<vmem>>, %arg29: memref<1x8x256xf32, #tpu.memory_space<vmem>>, %arg30: memref<1x16x64xf32, #tpu.memory_space<vmem>>, %arg31: memref<1x32x16xf32, #tpu.memory_space<vmem>>) attributes {dimension_semantics = [#tpu.dimension_semantics<parallel>], iteration_bounds = array<i64: 2>, scalar_prefetch = 0 : i64, scratch_operands = 0 : i64, tpu.core_type = #tpu.core_type<tc>, window_params = [{transform_indices = @transform_0, window_bounds = array<i64: 1, 3, 1024>}, {pipeline_mode = #tpu.pipeline_mode<synchronous>, transform_indices = @transform_1, window_bounds = array<i64: 1024, 2304>}, {pipeline_mode = #tpu.pipeline_mode<synchronous>, transform_indices = @transform_2, window_bounds = array<i64: 8, 27>}, {pipeline_mode = #tpu.pipeline_mode<synchronous>, transform_indices = @transform_3, window_bounds = array<i64: 8, 1>}, {pipeline_mode = #tpu.pipeline_mode<synchronous>, transform_indices = @transform_4, window_bounds = array<i64: 256, 576>}, {pipeline_mode = #tpu.pipeline_mode<synchronous>, transform_indices = @transform_5, window_bounds = array<i64: 16, 72>}, {pipeline_mode = #tpu.pipeline_mode<synchronous>, transform_indices = @transform_6, window_bounds = array<i64: 16, 1>}, {pipeline_mode = #tpu.pipeline_mode<synchronous>, transform_indices = @transform_7, window_bounds = array<i64: 16, 16>}, {pipeline_mode = #tpu.pipeline_mode<synchronous>, transform_indices = @transform_8, window_bounds = array<i64: 16, 1>}, {pipeline_mode = #tpu.pipeline_mode<synchronous>, transform_indices = @transform_9, window_bounds = array<i64: 64, 16>}, {pipeline_mode = #tpu.pipeline_mode<synchronous>, transform_indices = @transform_10, window_bounds = array<i64: 64, 144>}, {pipeline_mode = #tpu.pipeline_mode<synchronous>, transform_indices = @transform_11, window_bounds = array<i64: 16, 144>}, {pipeline_mode = #tpu.pipeline_mode<synchronous>, transform_indices = @transform_12, window_bounds = array<i64: 16, 1>}, {pipeline_mode = #tpu.pipeline_mode<synchronous>, transform_indices = @transform_13, window_bounds = array<i64: 16, 144>}, {pipeline_mode = #tpu.pipeline_mode<synchronous>, transform_indices = @transform_14, window_bounds = array<i64: 8, 144>}, {pipeline_mode = #tpu.pipeline_mode<synchronous>, transform_indices = @transform_15, window_bounds = array<i64: 8, 1>}, {pipeline_mode = #tpu.pipeline_mode<synchronous>, transform_indices = @transform_16, window_bounds = array<i64: 4, 72>}, {pipeline_mode = #tpu.pipeline_mode<synchronous>, transform_indices = @transform_17, window_bounds = array<i64: 4, 1>}, {pipeline_mode = #tpu.pipeline_mode<synchronous>, transform_indices = @transform_18, window_bounds = array<i64: 4, 36>}, {pipeline_mode = #tpu.pipeline_mode<synchronous>, transform_indices = @transform_19, window_bounds = array<i64: 4, 1>}, {pipeline_mode = #tpu.pipeline_mode<synchronous>, transform_indices = @transform_20, window_bounds = array<i64: 16, 32>}, {pipeline_mode = #tpu.pipeline_mode<synchronous>, transform_indices = @transform_21, window_bounds = array<i64: 16, 1>}, {pipeline_mode = #tpu.pipeline_mode<synchronous>, transform_indices = @transform_22, window_bounds = array<i64: 8, 144>}, {pipeline_mode = #tpu.pipeline_mode<synchronous>, transform_indices = @transform_23, window_bounds = array<i64: 8, 1>}, {pipeline_mode = #tpu.pipeline_mode<synchronous>, transform_indices = @transform_24, window_bounds = array<i64: 4, 72>}, {pipeline_mode = #tpu.pipeline_mode<synchronous>, transform_indices = @transform_25, window_bounds = array<i64: 4, 1>}, {pipeline_mode = #tpu.pipeline_mode<synchronous>, transform_indices = @transform_26, window_bounds = array<i64: 4, 36>}, {pipeline_mode = #tpu.pipeline_mode<synchronous>, transform_indices = @transform_27, window_bounds = array<i64: 4, 1>}, {transform_indices = @transform_28, window_bounds = array<i64: 1, 8, 256>}, {transform_indices = @transform_29, window_bounds = array<i64: 1, 16, 64>}, {transform_indices = @transform_30, window_bounds = array<i64: 1, 32, 16>}]} {
    %c0 = arith.constant 0 : index
    %c0_0 = arith.constant 0 : index
    %c0_1 = arith.constant 0 : index
    %0 = vector.load %arg1[%c0, %c0_0, %c0_1] : memref<1x3x1024xf32, #tpu.memory_space<vmem>>, vector<1x3x1024xf32>
    %1 = vector.shape_cast %0 : vector<1x3x1024xf32> to vector<3x1024xf32>
    %2 = arith.truncf %1 : vector<3x1024xf32> to vector<3x1024xbf16>
    %c0_2 = arith.constant 0 : index
    %c0_3 = arith.constant 0 : index
    %3 = vector.load %arg2[%c0_2, %c0_3] : memref<1024x2304xbf16, #tpu.memory_space<vmem>>, vector<1024x2304xbf16>
    %cst = arith.constant dense<0.000000e+00> : vector<3x2304xf32>
    %4 = tpu.matmul %2, %3, %cst {dimension_numbers = #tpu.dot_dimension_numbers<[1], [0], [0], [1], [0, 0, 1, 1], [], []>} : vector<3x1024xbf16>, vector<1024x2304xbf16>, vector<3x2304xf32> -> vector<3x2304xf32>
    %5 = vector.extract_strided_slice %4 {offsets = [0, 0], sizes = [3, 256], strides = [1, 1]} : vector<3x2304xf32> to vector<3x256xf32>
    %6 = vector.extract_strided_slice %4 {offsets = [0, 256], sizes = [3, 256], strides = [1, 1]} : vector<3x2304xf32> to vector<3x256xf32>
    %7 = vector.extract_strided_slice %4 {offsets = [0, 512], sizes = [3, 256], strides = [1, 1]} : vector<3x2304xf32> to vector<3x256xf32>
    %8 = vector.extract_strided_slice %4 {offsets = [0, 768], sizes = [3, 256], strides = [1, 1]} : vector<3x2304xf32> to vector<3x256xf32>
    %9 = vector.extract_strided_slice %4 {offsets = [0, 1024], sizes = [3, 256], strides = [1, 1]} : vector<3x2304xf32> to vector<3x256xf32>
    %10 = vector.extract_strided_slice %4 {offsets = [0, 1280], sizes = [3, 256], strides = [1, 1]} : vector<3x2304xf32> to vector<3x256xf32>
    %11 = vector.extract_strided_slice %4 {offsets = [0, 1536], sizes = [3, 256], strides = [1, 1]} : vector<3x2304xf32> to vector<3x256xf32>
    %12 = vector.extract_strided_slice %4 {offsets = [0, 1792], sizes = [3, 256], strides = [1, 1]} : vector<3x2304xf32> to vector<3x256xf32>
    %13 = vector.extract_strided_slice %4 {offsets = [0, 2048], sizes = [3, 256], strides = [1, 1]} : vector<3x2304xf32> to vector<3x256xf32>
    %14 = tpu.concatenate %5, %6, %7, %8, %9, %10, %11, %12, %13 in 0 : vector<3x256xf32>, vector<3x256xf32>, vector<3x256xf32>, vector<3x256xf32>, vector<3x256xf32>, vector<3x256xf32>, vector<3x256xf32>, vector<3x256xf32>, vector<3x256xf32> -> vector<27x256xf32>
    %c0_4 = arith.constant 0 : index
    %c0_5 = arith.constant 0 : index
    %15 = vector.load %arg3[%c0_4, %c0_5] : memref<8x27xbf16, #tpu.memory_space<vmem>>, vector<8x27xbf16>
    %16 = arith.truncf %14 : vector<27x256xf32> to vector<27x256xbf16>
    %cst_6 = arith.constant dense<0.000000e+00> : vector<8x256xf32>
    %17 = tpu.matmul %15, %16, %cst_6 {dimension_numbers = #tpu.dot_dimension_numbers<[1], [0], [0], [1], [0, 0, 1, 1], [], []>} : vector<8x27xbf16>, vector<27x256xbf16>, vector<8x256xf32> -> vector<8x256xf32>
    %c0_7 = arith.constant 0 : index
    %c0_8 = arith.constant 0 : index
    %18 = vector.load %arg4[%c0_7, %c0_8] : memref<8x1xf32, #tpu.memory_space<vmem>>, vector<8x1xf32>
    %19 = vector.broadcast %18 : vector<8x1xf32> to vector<8x256xf32>
    %20 = arith.addf %17, %19 : vector<8x256xf32>
    %cst_9 = arith.constant 0.000000e+00 : f32
    %21 = vector.broadcast %cst_9 : f32 to vector<8x256xf32>
    %22 = arith.maximumf %20, %21 : vector<8x256xf32>
    %c0_10 = arith.constant 0 : index
    %c0_11 = arith.constant 0 : index
    %c0_12 = arith.constant 0 : index
    %23 = vector.load %arg29[%c0_10, %c0_11, %c0_12] : memref<1x8x256xf32, #tpu.memory_space<vmem>>, vector<1x8x256xf32>
    %24 = vector.shape_cast %23 : vector<1x8x256xf32> to vector<8x256xf32>
    %25 = vector.shape_cast %22 : vector<8x256xf32> to vector<1x8x256xf32>
    tpu.vector_store %arg29[%c0_10, %c0_11, %c0_12], %25 {strides = array<i32>} : memref<1x8x256xf32, #tpu.memory_space<vmem>>, vector<1x8x256xf32>,
    %26 = arith.truncf %22 : vector<8x256xf32> to vector<8x256xbf16>
    %c0_13 = arith.constant 0 : index
    %c0_14 = arith.constant 0 : index
    %27 = vector.load %arg5[%c0_13, %c0_14] : memref<256x576xbf16, #tpu.memory_space<vmem>>, vector<256x576xbf16>
    %cst_15 = arith.constant dense<0.000000e+00> : vector<8x576xf32>
    %28 = tpu.matmul %26, %27, %cst_15 {dimension_numbers = #tpu.dot_dimension_numbers<[1], [0], [0], [1], [0, 0, 1, 1], [], []>} : vector<8x256xbf16>, vector<256x576xbf16>, vector<8x576xf32> -> vector<8x576xf32>
    %29 = vector.extract_strided_slice %28 {offsets = [0, 0], sizes = [8, 64], strides = [1, 1]} : vector<8x576xf32> to vector<8x64xf32>
    %30 = vector.extract_strided_slice %28 {offsets = [0, 64], sizes = [8, 64], strides = [1, 1]} : vector<8x576xf32> to vector<8x64xf32>
    %31 = vector.extract_strided_slice %28 {offsets = [0, 128], sizes = [8, 64], strides = [1, 1]} : vector<8x576xf32> to vector<8x64xf32>
    %32 = vector.extract_strided_slice %28 {offsets = [0, 192], sizes = [8, 64], strides = [1, 1]} : vector<8x576xf32> to vector<8x64xf32>
    %33 = vector.extract_strided_slice %28 {offsets = [0, 256], sizes = [8, 64], strides = [1, 1]} : vector<8x576xf32> to vector<8x64xf32>
    %34 = vector.extract_strided_slice %28 {offsets = [0, 320], sizes = [8, 64], strides = [1, 1]} : vector<8x576xf32> to vector<8x64xf32>
    %35 = vector.extract_strided_slice %28 {offsets = [0, 384], sizes = [8, 64], strides = [1, 1]} : vector<8x576xf32> to vector<8x64xf32>
    %36 = vector.extract_strided_slice %28 {offsets = [0, 448], sizes = [8, 64], strides = [1, 1]} : vector<8x576xf32> to vector<8x64xf32>
    %37 = vector.extract_strided_slice %28 {offsets = [0, 512], sizes = [8, 64], strides = [1, 1]} : vector<8x576xf32> to vector<8x64xf32>
    %38 = tpu.concatenate %29, %30, %31, %32, %33, %34, %35, %36, %37 in 0 : vector<8x64xf32>, vector<8x64xf32>, vector<8x64xf32>, vector<8x64xf32>, vector<8x64xf32>, vector<8x64xf32>, vector<8x64xf32>, vector<8x64xf32>, vector<8x64xf32> -> vector<72x64xf32>
    %c0_16 = arith.constant 0 : index
    %c0_17 = arith.constant 0 : index
    %39 = vector.load %arg6[%c0_16, %c0_17] : memref<16x72xbf16, #tpu.memory_space<vmem>>, vector<16x72xbf16>
    %40 = arith.truncf %38 : vector<72x64xf32> to vector<72x64xbf16>
    %cst_18 = arith.constant dense<0.000000e+00> : vector<16x64xf32>
    %41 = tpu.matmul %39, %40, %cst_18 {dimension_numbers = #tpu.dot_dimension_numbers<[1], [0], [0], [1], [0, 0, 1, 1], [], []>} : vector<16x72xbf16>, vector<72x64xbf16>, vector<16x64xf32> -> vector<16x64xf32>
    %c0_19 = arith.constant 0 : index
    %c0_20 = arith.constant 0 : index
    %42 = vector.load %arg7[%c0_19, %c0_20] : memref<16x1xf32, #tpu.memory_space<vmem>>, vector<16x1xf32>
    %43 = vector.broadcast %42 : vector<16x1xf32> to vector<16x64xf32>
    %44 = arith.addf %41, %43 : vector<16x64xf32>
    %cst_21 = arith.constant 0.000000e+00 : f32
    %45 = vector.broadcast %cst_21 : f32 to vector<16x64xf32>
    %46 = arith.maximumf %44, %45 : vector<16x64xf32>
    %c0_22 = arith.constant 0 : index
    %c0_23 = arith.constant 0 : index
    %c0_24 = arith.constant 0 : index
    %47 = vector.load %arg30[%c0_22, %c0_23, %c0_24] : memref<1x16x64xf32, #tpu.memory_space<vmem>>, vector<1x16x64xf32>
    %48 = vector.shape_cast %47 : vector<1x16x64xf32> to vector<16x64xf32>
    %49 = vector.shape_cast %46 : vector<16x64xf32> to vector<1x16x64xf32>
    tpu.vector_store %arg30[%c0_22, %c0_23, %c0_24], %49 {strides = array<i32>} : memref<1x16x64xf32, #tpu.memory_space<vmem>>, vector<1x16x64xf32>,
    %c0_25 = arith.constant 0 : index
    %c0_26 = arith.constant 0 : index
    %50 = vector.load %arg8[%c0_25, %c0_26] : memref<16x16xbf16, #tpu.memory_space<vmem>>, vector<16x16xbf16>
    %51 = arith.truncf %46 : vector<16x64xf32> to vector<16x64xbf16>
    %cst_27 = arith.constant dense<0.000000e+00> : vector<16x64xf32>
    %52 = tpu.matmul %50, %51, %cst_27 {dimension_numbers = #tpu.dot_dimension_numbers<[1], [0], [0], [1], [0, 0, 1, 1], [], []>} : vector<16x16xbf16>, vector<16x64xbf16>, vector<16x64xf32> -> vector<16x64xf32>
    %c0_28 = arith.constant 0 : index
    %c0_29 = arith.constant 0 : index
    %53 = vector.load %arg9[%c0_28, %c0_29] : memref<16x1xf32, #tpu.memory_space<vmem>>, vector<16x1xf32>
    %54 = vector.broadcast %53 : vector<16x1xf32> to vector<16x64xf32>
    %55 = arith.addf %52, %54 : vector<16x64xf32>
    %cst_30 = arith.constant 0.000000e+00 : f32
    %56 = vector.broadcast %cst_30 : f32 to vector<16x64xf32>
    %57 = arith.maximumf %55, %56 : vector<16x64xf32>
    %58 = arith.truncf %57 : vector<16x64xf32> to vector<16x64xbf16>
    %c0_31 = arith.constant 0 : index
    %c0_32 = arith.constant 0 : index
    %59 = vector.load %arg10[%c0_31, %c0_32] : memref<64x16xbf16, #tpu.memory_space<vmem>>, vector<64x16xbf16>
    %cst_33 = arith.constant dense<0.000000e+00> : vector<16x16xf32>
    %60 = tpu.matmul %58, %59, %cst_33 {dimension_numbers = #tpu.dot_dimension_numbers<[1], [0], [0], [1], [0, 0, 1, 1], [], []>} : vector<16x64xbf16>, vector<64x16xbf16>, vector<16x16xf32> -> vector<16x16xf32>
    %61 = arith.truncf %57 : vector<16x64xf32> to vector<16x64xbf16>
    %c0_34 = arith.constant 0 : index
    %c0_35 = arith.constant 0 : index
    %62 = vector.load %arg11[%c0_34, %c0_35] : memref<64x144xbf16, #tpu.memory_space<vmem>>, vector<64x144xbf16>
    %cst_36 = arith.constant dense<0.000000e+00> : vector<16x144xf32>
    %63 = tpu.matmul %61, %62, %cst_36 {dimension_numbers = #tpu.dot_dimension_numbers<[1], [0], [0], [1], [0, 0, 1, 1], [], []>} : vector<16x64xbf16>, vector<64x144xbf16>, vector<16x144xf32> -> vector<16x144xf32>
    %64 = vector.extract_strided_slice %63 {offsets = [0, 0], sizes = [16, 16], strides = [1, 1]} : vector<16x144xf32> to vector<16x16xf32>
    %65 = vector.extract_strided_slice %63 {offsets = [0, 16], sizes = [16, 16], strides = [1, 1]} : vector<16x144xf32> to vector<16x16xf32>
    %66 = vector.extract_strided_slice %63 {offsets = [0, 32], sizes = [16, 16], strides = [1, 1]} : vector<16x144xf32> to vector<16x16xf32>
    %67 = vector.extract_strided_slice %63 {offsets = [0, 48], sizes = [16, 16], strides = [1, 1]} : vector<16x144xf32> to vector<16x16xf32>
    %68 = vector.extract_strided_slice %63 {offsets = [0, 64], sizes = [16, 16], strides = [1, 1]} : vector<16x144xf32> to vector<16x16xf32>
    %69 = vector.extract_strided_slice %63 {offsets = [0, 80], sizes = [16, 16], strides = [1, 1]} : vector<16x144xf32> to vector<16x16xf32>
    %70 = vector.extract_strided_slice %63 {offsets = [0, 96], sizes = [16, 16], strides = [1, 1]} : vector<16x144xf32> to vector<16x16xf32>
    %71 = vector.extract_strided_slice %63 {offsets = [0, 112], sizes = [16, 16], strides = [1, 1]} : vector<16x144xf32> to vector<16x16xf32>
    %72 = vector.extract_strided_slice %63 {offsets = [0, 128], sizes = [16, 16], strides = [1, 1]} : vector<16x144xf32> to vector<16x16xf32>
    %73 = tpu.concatenate %64, %65, %66, %67, %68, %69, %70, %71, %72 in 0 : vector<16x16xf32>, vector<16x16xf32>, vector<16x16xf32>, vector<16x16xf32>, vector<16x16xf32>, vector<16x16xf32>, vector<16x16xf32>, vector<16x16xf32>, vector<16x16xf32> -> vector<144x16xf32>
    %c0_37 = arith.constant 0 : index
    %c0_38 = arith.constant 0 : index
    %74 = vector.load %arg12[%c0_37, %c0_38] : memref<16x144xbf16, #tpu.memory_space<vmem>>, vector<16x144xbf16>
    %75 = arith.truncf %73 : vector<144x16xf32> to vector<144x16xbf16>
    %cst_39 = arith.constant dense<0.000000e+00> : vector<16x16xf32>
    %76 = tpu.matmul %74, %75, %cst_39 {dimension_numbers = #tpu.dot_dimension_numbers<[1], [0], [0], [1], [0, 0, 1, 1], [], []>} : vector<16x144xbf16>, vector<144x16xbf16>, vector<16x16xf32> -> vector<16x16xf32>
    %c0_40 = arith.constant 0 : index
    %c0_41 = arith.constant 0 : index
    %77 = vector.load %arg13[%c0_40, %c0_41] : memref<16x1xf32, #tpu.memory_space<vmem>>, vector<16x1xf32>
    %78 = vector.broadcast %77 : vector<16x1xf32> to vector<16x16xf32>
    %79 = arith.addf %76, %78 : vector<16x16xf32>
    %80 = arith.truncf %79 : vector<16x16xf32> to vector<16x16xbf16>
    %c0_42 = arith.constant 0 : index
    %c0_43 = arith.constant 0 : index
    %81 = vector.load %arg14[%c0_42, %c0_43] : memref<16x144xbf16, #tpu.memory_space<vmem>>, vector<16x144xbf16>
    %cst_44 = arith.constant dense<0.000000e+00> : vector<16x144xf32>
    %82 = tpu.matmul %80, %81, %cst_44 {dimension_numbers = #tpu.dot_dimension_numbers<[1], [0], [0], [1], [0, 0, 1, 1], [], []>} : vector<16x16xbf16>, vector<16x144xbf16>, vector<16x144xf32> -> vector<16x144xf32>
    %83 = vector.extract_strided_slice %82 {offsets = [0, 0], sizes = [16, 16], strides = [1, 1]} : vector<16x144xf32> to vector<16x16xf32>
    %84 = vector.extract_strided_slice %82 {offsets = [0, 16], sizes = [16, 16], strides = [1, 1]} : vector<16x144xf32> to vector<16x16xf32>
    %85 = vector.extract_strided_slice %82 {offsets = [0, 32], sizes = [16, 16], strides = [1, 1]} : vector<16x144xf32> to vector<16x16xf32>
    %86 = vector.extract_strided_slice %82 {offsets = [0, 48], sizes = [16, 16], strides = [1, 1]} : vector<16x144xf32> to vector<16x16xf32>
    %87 = vector.extract_strided_slice %82 {offsets = [0, 64], sizes = [16, 16], strides = [1, 1]} : vector<16x144xf32> to vector<16x16xf32>
    %88 = vector.extract_strided_slice %82 {offsets = [0, 80], sizes = [16, 16], strides = [1, 1]} : vector<16x144xf32> to vector<16x16xf32>
    %89 = vector.extract_strided_slice %82 {offsets = [0, 96], sizes = [16, 16], strides = [1, 1]} : vector<16x144xf32> to vector<16x16xf32>
    %90 = vector.extract_strided_slice %82 {offsets = [0, 112], sizes = [16, 16], strides = [1, 1]} : vector<16x144xf32> to vector<16x16xf32>
    %91 = vector.extract_strided_slice %82 {offsets = [0, 128], sizes = [16, 16], strides = [1, 1]} : vector<16x144xf32> to vector<16x16xf32>
    %92 = tpu.concatenate %83, %84, %85, %86, %87, %88, %89, %90, %91 in 0 : vector<16x16xf32>, vector<16x16xf32>, vector<16x16xf32>, vector<16x16xf32>, vector<16x16xf32>, vector<16x16xf32>, vector<16x16xf32>, vector<16x16xf32>, vector<16x16xf32> -> vector<144x16xf32>
    %c0_45 = arith.constant 0 : index
    %c0_46 = arith.constant 0 : index
    %93 = vector.load %arg15[%c0_45, %c0_46] : memref<8x144xbf16, #tpu.memory_space<vmem>>, vector<8x144xbf16>
    %94 = arith.truncf %92 : vector<144x16xf32> to vector<144x16xbf16>
    %cst_47 = arith.constant dense<0.000000e+00> : vector<8x16xf32>
    %95 = tpu.matmul %93, %94, %cst_47 {dimension_numbers = #tpu.dot_dimension_numbers<[1], [0], [0], [1], [0, 0, 1, 1], [], []>} : vector<8x144xbf16>, vector<144x16xbf16>, vector<8x16xf32> -> vector<8x16xf32>
    %c0_48 = arith.constant 0 : index
    %c0_49 = arith.constant 0 : index
    %96 = vector.load %arg16[%c0_48, %c0_49] : memref<8x1xf32, #tpu.memory_space<vmem>>, vector<8x1xf32>
    %97 = vector.broadcast %96 : vector<8x1xf32> to vector<8x16xf32>
    %98 = arith.addf %95, %97 : vector<8x16xf32>
    %cst_50 = arith.constant 0.000000e+00 : f32
    %99 = vector.broadcast %cst_50 : f32 to vector<8x16xf32>
    %100 = arith.maximumf %98, %99 : vector<8x16xf32>
    %101 = arith.truncf %100 : vector<8x16xf32> to vector<8x16xbf16>
    %c0_51 = arith.constant 0 : index
    %c0_52 = arith.constant 0 : index
    %102 = vector.load %arg14[%c0_51, %c0_52] : memref<16x144xbf16, #tpu.memory_space<vmem>>, vector<16x144xbf16>
    %cst_53 = arith.constant dense<0.000000e+00> : vector<8x144xf32>
    %103 = tpu.matmul %101, %102, %cst_53 {dimension_numbers = #tpu.dot_dimension_numbers<[1], [0], [0], [1], [0, 0, 1, 1], [], []>} : vector<8x16xbf16>, vector<16x144xbf16>, vector<8x144xf32> -> vector<8x144xf32>
    %104 = vector.extract_strided_slice %103 {offsets = [0, 0], sizes = [8, 16], strides = [1, 1]} : vector<8x144xf32> to vector<8x16xf32>
    %105 = vector.extract_strided_slice %103 {offsets = [0, 16], sizes = [8, 16], strides = [1, 1]} : vector<8x144xf32> to vector<8x16xf32>
    %106 = vector.extract_strided_slice %103 {offsets = [0, 32], sizes = [8, 16], strides = [1, 1]} : vector<8x144xf32> to vector<8x16xf32>
    %107 = vector.extract_strided_slice %103 {offsets = [0, 48], sizes = [8, 16], strides = [1, 1]} : vector<8x144xf32> to vector<8x16xf32>
    %108 = vector.extract_strided_slice %103 {offsets = [0, 64], sizes = [8, 16], strides = [1, 1]} : vector<8x144xf32> to vector<8x16xf32>
    %109 = vector.extract_strided_slice %103 {offsets = [0, 80], sizes = [8, 16], strides = [1, 1]} : vector<8x144xf32> to vector<8x16xf32>
    %110 = vector.extract_strided_slice %103 {offsets = [0, 96], sizes = [8, 16], strides = [1, 1]} : vector<8x144xf32> to vector<8x16xf32>
    %111 = vector.extract_strided_slice %103 {offsets = [0, 112], sizes = [8, 16], strides = [1, 1]} : vector<8x144xf32> to vector<8x16xf32>
    %112 = vector.extract_strided_slice %103 {offsets = [0, 128], sizes = [8, 16], strides = [1, 1]} : vector<8x144xf32> to vector<8x16xf32>
    %113 = tpu.concatenate %104, %105, %106, %107, %108, %109, %110, %111, %112 in 0 : vector<8x16xf32>, vector<8x16xf32>, vector<8x16xf32>, vector<8x16xf32>, vector<8x16xf32>, vector<8x16xf32>, vector<8x16xf32>, vector<8x16xf32>, vector<8x16xf32> -> vector<72x16xf32>
    %c0_54 = arith.constant 0 : index
    %c0_55 = arith.constant 0 : index
    %114 = vector.load %arg17[%c0_54, %c0_55] : memref<4x72xbf16, #tpu.memory_space<vmem>>, vector<4x72xbf16>
    %115 = arith.truncf %113 : vector<72x16xf32> to vector<72x16xbf16>
    %cst_56 = arith.constant dense<0.000000e+00> : vector<4x16xf32>
    %116 = tpu.matmul %114, %115, %cst_56 {dimension_numbers = #tpu.dot_dimension_numbers<[1], [0], [0], [1], [0, 0, 1, 1], [], []>} : vector<4x72xbf16>, vector<72x16xbf16>, vector<4x16xf32> -> vector<4x16xf32>
    %c0_57 = arith.constant 0 : index
    %c0_58 = arith.constant 0 : index
    %117 = vector.load %arg18[%c0_57, %c0_58] : memref<4x1xf32, #tpu.memory_space<vmem>>, vector<4x1xf32>
    %118 = vector.broadcast %117 : vector<4x1xf32> to vector<4x16xf32>
    %119 = arith.addf %116, %118 : vector<4x16xf32>
    %cst_59 = arith.constant 0.000000e+00 : f32
    %120 = vector.broadcast %cst_59 : f32 to vector<4x16xf32>
    %121 = arith.maximumf %119, %120 : vector<4x16xf32>
    %122 = arith.truncf %121 : vector<4x16xf32> to vector<4x16xbf16>
    %c0_60 = arith.constant 0 : index
    %c0_61 = arith.constant 0 : index
    %123 = vector.load %arg14[%c0_60, %c0_61] : memref<16x144xbf16, #tpu.memory_space<vmem>>, vector<16x144xbf16>
    %cst_62 = arith.constant dense<0.000000e+00> : vector<4x144xf32>
    %124 = tpu.matmul %122, %123, %cst_62 {dimension_numbers = #tpu.dot_dimension_numbers<[1], [0], [0], [1], [0, 0, 1, 1], [], []>} : vector<4x16xbf16>, vector<16x144xbf16>, vector<4x144xf32> -> vector<4x144xf32>
    %125 = vector.extract_strided_slice %124 {offsets = [0, 0], sizes = [4, 16], strides = [1, 1]} : vector<4x144xf32> to vector<4x16xf32>
    %126 = vector.extract_strided_slice %124 {offsets = [0, 16], sizes = [4, 16], strides = [1, 1]} : vector<4x144xf32> to vector<4x16xf32>
    %127 = vector.extract_strided_slice %124 {offsets = [0, 32], sizes = [4, 16], strides = [1, 1]} : vector<4x144xf32> to vector<4x16xf32>
    %128 = vector.extract_strided_slice %124 {offsets = [0, 48], sizes = [4, 16], strides = [1, 1]} : vector<4x144xf32> to vector<4x16xf32>
    %129 = vector.extract_strided_slice %124 {offsets = [0, 64], sizes = [4, 16], strides = [1, 1]} : vector<4x144xf32> to vector<4x16xf32>
    %130 = vector.extract_strided_slice %124 {offsets = [0, 80], sizes = [4, 16], strides = [1, 1]} : vector<4x144xf32> to vector<4x16xf32>
    %131 = vector.extract_strided_slice %124 {offsets = [0, 96], sizes = [4, 16], strides = [1, 1]} : vector<4x144xf32> to vector<4x16xf32>
    %132 = vector.extract_strided_slice %124 {offsets = [0, 112], sizes = [4, 16], strides = [1, 1]} : vector<4x144xf32> to vector<4x16xf32>
    %133 = vector.extract_strided_slice %124 {offsets = [0, 128], sizes = [4, 16], strides = [1, 1]} : vector<4x144xf32> to vector<4x16xf32>
    %134 = tpu.concatenate %125, %126, %127, %128, %129, %130, %131, %132, %133 in 0 : vector<4x16xf32>, vector<4x16xf32>, vector<4x16xf32>, vector<4x16xf32>, vector<4x16xf32>, vector<4x16xf32>, vector<4x16xf32>, vector<4x16xf32>, vector<4x16xf32> -> vector<36x16xf32>
    %c0_63 = arith.constant 0 : index
    %c0_64 = arith.constant 0 : index
    %135 = vector.load %arg19[%c0_63, %c0_64] : memref<4x36xbf16, #tpu.memory_space<vmem>>, vector<4x36xbf16>
    %136 = arith.truncf %134 : vector<36x16xf32> to vector<36x16xbf16>
    %cst_65 = arith.constant dense<0.000000e+00> : vector<4x16xf32>
    %137 = tpu.matmul %135, %136, %cst_65 {dimension_numbers = #tpu.dot_dimension_numbers<[1], [0], [0], [1], [0, 0, 1, 1], [], []>} : vector<4x36xbf16>, vector<36x16xbf16>, vector<4x16xf32> -> vector<4x16xf32>
    %c0_66 = arith.constant 0 : index
    %c0_67 = arith.constant 0 : index
    %138 = vector.load %arg20[%c0_66, %c0_67] : memref<4x1xf32, #tpu.memory_space<vmem>>, vector<4x1xf32>
    %139 = vector.broadcast %138 : vector<4x1xf32> to vector<4x16xf32>
    %140 = arith.addf %137, %139 : vector<4x16xf32>
    %cst_68 = arith.constant 0.000000e+00 : f32
    %141 = vector.broadcast %cst_68 : f32 to vector<4x16xf32>
    %142 = arith.maximumf %140, %141 : vector<4x16xf32>
    %143 = tpu.concatenate %60, %100, %121, %142 in 0 : vector<16x16xf32>, vector<8x16xf32>, vector<4x16xf32>, vector<4x16xf32> -> vector<32x16xf32>
    %c0_69 = arith.constant 0 : index
    %c0_70 = arith.constant 0 : index
    %144 = vector.load %arg21[%c0_69, %c0_70] : memref<16x32xbf16, #tpu.memory_space<vmem>>, vector<16x32xbf16>
    %145 = arith.truncf %143 : vector<32x16xf32> to vector<32x16xbf16>
    %cst_71 = arith.constant dense<0.000000e+00> : vector<16x16xf32>
    %146 = tpu.matmul %144, %145, %cst_71 {dimension_numbers = #tpu.dot_dimension_numbers<[1], [0], [0], [1], [0, 0, 1, 1], [], []>} : vector<16x32xbf16>, vector<32x16xbf16>, vector<16x16xf32> -> vector<16x16xf32>
    %c0_72 = arith.constant 0 : index
    %c0_73 = arith.constant 0 : index
    %147 = vector.load %arg22[%c0_72, %c0_73] : memref<16x1xf32, #tpu.memory_space<vmem>>, vector<16x1xf32>
    %148 = vector.broadcast %147 : vector<16x1xf32> to vector<16x16xf32>
    %149 = arith.addf %146, %148 : vector<16x16xf32>
    %cst_74 = arith.constant 0.000000e+00 : f32
    %150 = vector.broadcast %cst_74 : f32 to vector<16x16xf32>
    %151 = arith.maximumf %149, %150 : vector<16x16xf32>
    %152 = arith.truncf %151 : vector<16x16xf32> to vector<16x16xbf16>
    %c0_75 = arith.constant 0 : index
    %c0_76 = arith.constant 0 : index
    %153 = vector.load %arg14[%c0_75, %c0_76] : memref<16x144xbf16, #tpu.memory_space<vmem>>, vector<16x144xbf16>
    %cst_77 = arith.constant dense<0.000000e+00> : vector<16x144xf32>
    %154 = tpu.matmul %152, %153, %cst_77 {dimension_numbers = #tpu.dot_dimension_numbers<[1], [0], [0], [1], [0, 0, 1, 1], [], []>} : vector<16x16xbf16>, vector<16x144xbf16>, vector<16x144xf32> -> vector<16x144xf32>
    %155 = vector.extract_strided_slice %154 {offsets = [0, 0], sizes = [16, 16], strides = [1, 1]} : vector<16x144xf32> to vector<16x16xf32>
    %156 = vector.extract_strided_slice %154 {offsets = [0, 16], sizes = [16, 16], strides = [1, 1]} : vector<16x144xf32> to vector<16x16xf32>
    %157 = vector.extract_strided_slice %154 {offsets = [0, 32], sizes = [16, 16], strides = [1, 1]} : vector<16x144xf32> to vector<16x16xf32>
    %158 = vector.extract_strided_slice %154 {offsets = [0, 48], sizes = [16, 16], strides = [1, 1]} : vector<16x144xf32> to vector<16x16xf32>
    %159 = vector.extract_strided_slice %154 {offsets = [0, 64], sizes = [16, 16], strides = [1, 1]} : vector<16x144xf32> to vector<16x16xf32>
    %160 = vector.extract_strided_slice %154 {offsets = [0, 80], sizes = [16, 16], strides = [1, 1]} : vector<16x144xf32> to vector<16x16xf32>
    %161 = vector.extract_strided_slice %154 {offsets = [0, 96], sizes = [16, 16], strides = [1, 1]} : vector<16x144xf32> to vector<16x16xf32>
    %162 = vector.extract_strided_slice %154 {offsets = [0, 112], sizes = [16, 16], strides = [1, 1]} : vector<16x144xf32> to vector<16x16xf32>
    %163 = vector.extract_strided_slice %154 {offsets = [0, 128], sizes = [16, 16], strides = [1, 1]} : vector<16x144xf32> to vector<16x16xf32>
    %164 = tpu.concatenate %155, %156, %157, %158, %159, %160, %161, %162, %163 in 0 : vector<16x16xf32>, vector<16x16xf32>, vector<16x16xf32>, vector<16x16xf32>, vector<16x16xf32>, vector<16x16xf32>, vector<16x16xf32>, vector<16x16xf32>, vector<16x16xf32> -> vector<144x16xf32>
    %c0_78 = arith.constant 0 : index
    %c0_79 = arith.constant 0 : index
    %165 = vector.load %arg23[%c0_78, %c0_79] : memref<8x144xbf16, #tpu.memory_space<vmem>>, vector<8x144xbf16>
    %166 = arith.truncf %164 : vector<144x16xf32> to vector<144x16xbf16>
    %cst_80 = arith.constant dense<0.000000e+00> : vector<8x16xf32>
    %167 = tpu.matmul %165, %166, %cst_80 {dimension_numbers = #tpu.dot_dimension_numbers<[1], [0], [0], [1], [0, 0, 1, 1], [], []>} : vector<8x144xbf16>, vector<144x16xbf16>, vector<8x16xf32> -> vector<8x16xf32>
    %c0_81 = arith.constant 0 : index
    %c0_82 = arith.constant 0 : index
    %168 = vector.load %arg24[%c0_81, %c0_82] : memref<8x1xf32, #tpu.memory_space<vmem>>, vector<8x1xf32>
    %169 = vector.broadcast %168 : vector<8x1xf32> to vector<8x16xf32>
    %170 = arith.addf %167, %169 : vector<8x16xf32>
    %cst_83 = arith.constant 0.000000e+00 : f32
    %171 = vector.broadcast %cst_83 : f32 to vector<8x16xf32>
    %172 = arith.maximumf %170, %171 : vector<8x16xf32>
    %173 = arith.truncf %172 : vector<8x16xf32> to vector<8x16xbf16>
    %c0_84 = arith.constant 0 : index
    %c0_85 = arith.constant 0 : index
    %174 = vector.load %arg14[%c0_84, %c0_85] : memref<16x144xbf16, #tpu.memory_space<vmem>>, vector<16x144xbf16>
    %cst_86 = arith.constant dense<0.000000e+00> : vector<8x144xf32>
    %175 = tpu.matmul %173, %174, %cst_86 {dimension_numbers = #tpu.dot_dimension_numbers<[1], [0], [0], [1], [0, 0, 1, 1], [], []>} : vector<8x16xbf16>, vector<16x144xbf16>, vector<8x144xf32> -> vector<8x144xf32>
    %176 = vector.extract_strided_slice %175 {offsets = [0, 0], sizes = [8, 16], strides = [1, 1]} : vector<8x144xf32> to vector<8x16xf32>
    %177 = vector.extract_strided_slice %175 {offsets = [0, 16], sizes = [8, 16], strides = [1, 1]} : vector<8x144xf32> to vector<8x16xf32>
    %178 = vector.extract_strided_slice %175 {offsets = [0, 32], sizes = [8, 16], strides = [1, 1]} : vector<8x144xf32> to vector<8x16xf32>
    %179 = vector.extract_strided_slice %175 {offsets = [0, 48], sizes = [8, 16], strides = [1, 1]} : vector<8x144xf32> to vector<8x16xf32>
    %180 = vector.extract_strided_slice %175 {offsets = [0, 64], sizes = [8, 16], strides = [1, 1]} : vector<8x144xf32> to vector<8x16xf32>
    %181 = vector.extract_strided_slice %175 {offsets = [0, 80], sizes = [8, 16], strides = [1, 1]} : vector<8x144xf32> to vector<8x16xf32>
    %182 = vector.extract_strided_slice %175 {offsets = [0, 96], sizes = [8, 16], strides = [1, 1]} : vector<8x144xf32> to vector<8x16xf32>
    %183 = vector.extract_strided_slice %175 {offsets = [0, 112], sizes = [8, 16], strides = [1, 1]} : vector<8x144xf32> to vector<8x16xf32>
    %184 = vector.extract_strided_slice %175 {offsets = [0, 128], sizes = [8, 16], strides = [1, 1]} : vector<8x144xf32> to vector<8x16xf32>
    %185 = tpu.concatenate %176, %177, %178, %179, %180, %181, %182, %183, %184 in 0 : vector<8x16xf32>, vector<8x16xf32>, vector<8x16xf32>, vector<8x16xf32>, vector<8x16xf32>, vector<8x16xf32>, vector<8x16xf32>, vector<8x16xf32>, vector<8x16xf32> -> vector<72x16xf32>
    %c0_87 = arith.constant 0 : index
    %c0_88 = arith.constant 0 : index
    %186 = vector.load %arg25[%c0_87, %c0_88] : memref<4x72xbf16, #tpu.memory_space<vmem>>, vector<4x72xbf16>
    %187 = arith.truncf %185 : vector<72x16xf32> to vector<72x16xbf16>
    %cst_89 = arith.constant dense<0.000000e+00> : vector<4x16xf32>
    %188 = tpu.matmul %186, %187, %cst_89 {dimension_numbers = #tpu.dot_dimension_numbers<[1], [0], [0], [1], [0, 0, 1, 1], [], []>} : vector<4x72xbf16>, vector<72x16xbf16>, vector<4x16xf32> -> vector<4x16xf32>
    %c0_90 = arith.constant 0 : index
    %c0_91 = arith.constant 0 : index
    %189 = vector.load %arg26[%c0_90, %c0_91] : memref<4x1xf32, #tpu.memory_space<vmem>>, vector<4x1xf32>
    %190 = vector.broadcast %189 : vector<4x1xf32> to vector<4x16xf32>
    %191 = arith.addf %188, %190 : vector<4x16xf32>
    %cst_92 = arith.constant 0.000000e+00 : f32
    %192 = vector.broadcast %cst_92 : f32 to vector<4x16xf32>
    %193 = arith.maximumf %191, %192 : vector<4x16xf32>
    %194 = arith.truncf %193 : vector<4x16xf32> to vector<4x16xbf16>
    %c0_93 = arith.constant 0 : index
    %c0_94 = arith.constant 0 : index
    %195 = vector.load %arg14[%c0_93, %c0_94] : memref<16x144xbf16, #tpu.memory_space<vmem>>, vector<16x144xbf16>
    %cst_95 = arith.constant dense<0.000000e+00> : vector<4x144xf32>
    %196 = tpu.matmul %194, %195, %cst_95 {dimension_numbers = #tpu.dot_dimension_numbers<[1], [0], [0], [1], [0, 0, 1, 1], [], []>} : vector<4x16xbf16>, vector<16x144xbf16>, vector<4x144xf32> -> vector<4x144xf32>
    %197 = vector.extract_strided_slice %196 {offsets = [0, 0], sizes = [4, 16], strides = [1, 1]} : vector<4x144xf32> to vector<4x16xf32>
    %198 = vector.extract_strided_slice %196 {offsets = [0, 16], sizes = [4, 16], strides = [1, 1]} : vector<4x144xf32> to vector<4x16xf32>
    %199 = vector.extract_strided_slice %196 {offsets = [0, 32], sizes = [4, 16], strides = [1, 1]} : vector<4x144xf32> to vector<4x16xf32>
    %200 = vector.extract_strided_slice %196 {offsets = [0, 48], sizes = [4, 16], strides = [1, 1]} : vector<4x144xf32> to vector<4x16xf32>
    %201 = vector.extract_strided_slice %196 {offsets = [0, 64], sizes = [4, 16], strides = [1, 1]} : vector<4x144xf32> to vector<4x16xf32>
    %202 = vector.extract_strided_slice %196 {offsets = [0, 80], sizes = [4, 16], strides = [1, 1]} : vector<4x144xf32> to vector<4x16xf32>
    %203 = vector.extract_strided_slice %196 {offsets = [0, 96], sizes = [4, 16], strides = [1, 1]} : vector<4x144xf32> to vector<4x16xf32>
    %204 = vector.extract_strided_slice %196 {offsets = [0, 112], sizes = [4, 16], strides = [1, 1]} : vector<4x144xf32> to vector<4x16xf32>
    %205 = vector.extract_strided_slice %196 {offsets = [0, 128], sizes = [4, 16], strides = [1, 1]} : vector<4x144xf32> to vector<4x16xf32>
    %206 = tpu.concatenate %197, %198, %199, %200, %201, %202, %203, %204, %205 in 0 : vector<4x16xf32>, vector<4x16xf32>, vector<4x16xf32>, vector<4x16xf32>, vector<4x16xf32>, vector<4x16xf32>, vector<4x16xf32>, vector<4x16xf32>, vector<4x16xf32> -> vector<36x16xf32>
    %c0_96 = arith.constant 0 : index
    %c0_97 = arith.constant 0 : index
    %207 = vector.load %arg27[%c0_96, %c0_97] : memref<4x36xbf16, #tpu.memory_space<vmem>>, vector<4x36xbf16>
    %208 = arith.truncf %206 : vector<36x16xf32> to vector<36x16xbf16>
    %cst_98 = arith.constant dense<0.000000e+00> : vector<4x16xf32>
    %209 = tpu.matmul %207, %208, %cst_98 {dimension_numbers = #tpu.dot_dimension_numbers<[1], [0], [0], [1], [0, 0, 1, 1], [], []>} : vector<4x36xbf16>, vector<36x16xbf16>, vector<4x16xf32> -> vector<4x16xf32>
    %c0_99 = arith.constant 0 : index
    %c0_100 = arith.constant 0 : index
    %210 = vector.load %arg28[%c0_99, %c0_100] : memref<4x1xf32, #tpu.memory_space<vmem>>, vector<4x1xf32>
    %211 = vector.broadcast %210 : vector<4x1xf32> to vector<4x16xf32>
    %212 = arith.addf %209, %211 : vector<4x16xf32>
    %cst_101 = arith.constant 0.000000e+00 : f32
    %213 = vector.broadcast %cst_101 : f32 to vector<4x16xf32>
    %214 = arith.maximumf %212, %213 : vector<4x16xf32>
    %215 = tpu.concatenate %151, %172, %193, %214 in 0 : vector<16x16xf32>, vector<8x16xf32>, vector<4x16xf32>, vector<4x16xf32> -> vector<32x16xf32>
    %c0_102 = arith.constant 0 : index
    %c0_103 = arith.constant 0 : index
    %c0_104 = arith.constant 0 : index
    %216 = vector.load %arg31[%c0_102, %c0_103, %c0_104] : memref<1x32x16xf32, #tpu.memory_space<vmem>>, vector<1x32x16xf32>
    %217 = vector.shape_cast %216 : vector<1x32x16xf32> to vector<32x16xf32>
    %218 = vector.shape_cast %215 : vector<32x16xf32> to vector<1x32x16xf32>
    tpu.vector_store %arg31[%c0_102, %c0_103, %c0_104], %218 {strides = array<i32>} : memref<1x32x16xf32, #tpu.memory_space<vmem>>, vector<1x32x16xf32>,
    return
  }
  func.func @transform_0(%arg0: i32) -> (i32, i32, i32) {
    %c0_i32 = arith.constant 0 : i32
    %c0_i32_0 = arith.constant 0 : i32
    %c0_i32_1 = arith.constant 0 : i32
    return %arg0, %c0_i32, %c0_i32_0 : i32, i32, i32
  }
  func.func @transform_1(%arg0: i32) -> (i32, i32) {
    %c0_i32 = arith.constant 0 : i32
    %c0_i32_0 = arith.constant 0 : i32
    %c0_i32_1 = arith.constant 0 : i32
    return %c0_i32, %c0_i32_0 : i32, i32
  }
  func.func @transform_2(%arg0: i32) -> (i32, i32) {
    %c0_i32 = arith.constant 0 : i32
    %c0_i32_0 = arith.constant 0 : i32
    %c0_i32_1 = arith.constant 0 : i32
    return %c0_i32, %c0_i32_0 : i32, i32
  }
  func.func @transform_3(%arg0: i32) -> (i32, i32) {
    %c0_i32 = arith.constant 0 : i32
    %c0_i32_0 = arith.constant 0 : i32
    %c0_i32_1 = arith.constant 0 : i32
    return %c0_i32, %c0_i32_0 : i32, i32
  }
  func.func @transform_4(%arg0: i32) -> (i32, i32) {
    %c0_i32 = arith.constant 0 : i32
    %c0_i32_0 = arith.constant 0 : i32
    %c0_i32_1 = arith.constant 0 : i32
    return %c0_i32, %c0_i32_0 : i32, i32
  }
  func.func @transform_5(%arg0: i32) -> (i32, i32) {
    %c0_i32 = arith.constant 0 : i32
    %c0_i32_0 = arith.constant 0 : i32
    %c0_i32_1 = arith.constant 0 : i32
    return %c0_i32, %c0_i32_0 : i32, i32
  }
  func.func @transform_6(%arg0: i32) -> (i32, i32) {
    %c0_i32 = arith.constant 0 : i32
    %c0_i32_0 = arith.constant 0 : i32
    %c0_i32_1 = arith.constant 0 : i32
    return %c0_i32, %c0_i32_0 : i32, i32
  }
  func.func @transform_7(%arg0: i32) -> (i32, i32) {
    %c0_i32 = arith.constant 0 : i32
    %c0_i32_0 = arith.constant 0 : i32
    %c0_i32_1 = arith.constant 0 : i32
    return %c0_i32, %c0_i32_0 : i32, i32
  }
  func.func @transform_8(%arg0: i32) -> (i32, i32) {
    %c0_i32 = arith.constant 0 : i32
    %c0_i32_0 = arith.constant 0 : i32
    %c0_i32_1 = arith.constant 0 : i32
    return %c0_i32, %c0_i32_0 : i32, i32
  }
  func.func @transform_9(%arg0: i32) -> (i32, i32) {
    %c0_i32 = arith.constant 0 : i32
    %c0_i32_0 = arith.constant 0 : i32
    %c0_i32_1 = arith.constant 0 : i32
    return %c0_i32, %c0_i32_0 : i32, i32
  }
  func.func @transform_10(%arg0: i32) -> (i32, i32) {
    %c0_i32 = arith.constant 0 : i32
    %c0_i32_0 = arith.constant 0 : i32
    %c0_i32_1 = arith.constant 0 : i32
    return %c0_i32, %c0_i32_0 : i32, i32
  }
  func.func @transform_11(%arg0: i32) -> (i32, i32) {
    %c0_i32 = arith.constant 0 : i32
    %c0_i32_0 = arith.constant 0 : i32
    %c0_i32_1 = arith.constant 0 : i32
    return %c0_i32, %c0_i32_0 : i32, i32
  }
  func.func @transform_12(%arg0: i32) -> (i32, i32) {
    %c0_i32 = arith.constant 0 : i32
    %c0_i32_0 = arith.constant 0 : i32
    %c0_i32_1 = arith.constant 0 : i32
    return %c0_i32, %c0_i32_0 : i32, i32
  }
  func.func @transform_13(%arg0: i32) -> (i32, i32) {
    %c0_i32 = arith.constant 0 : i32
    %c0_i32_0 = arith.constant 0 : i32
    %c0_i32_1 = arith.constant 0 : i32
    return %c0_i32, %c0_i32_0 : i32, i32
  }
  func.func @transform_14(%arg0: i32) -> (i32, i32) {
    %c0_i32 = arith.constant 0 : i32
    %c0_i32_0 = arith.constant 0 : i32
    %c0_i32_1 = arith.constant 0 : i32
    return %c0_i32, %c0_i32_0 : i32, i32
  }
  func.func @transform_15(%arg0: i32) -> (i32, i32) {
    %c0_i32 = arith.constant 0 : i32
    %c0_i32_0 = arith.constant 0 : i32
    %c0_i32_1 = arith.constant 0 : i32
    return %c0_i32, %c0_i32_0 : i32, i32
  }
  func.func @transform_16(%arg0: i32) -> (i32, i32) {
    %c0_i32 = arith.constant 0 : i32
    %c0_i32_0 = arith.constant 0 : i32
    %c0_i32_1 = arith.constant 0 : i32
    return %c0_i32, %c0_i32_0 : i32, i32
  }
  func.func @transform_17(%arg0: i32) -> (i32, i32) {
    %c0_i32 = arith.constant 0 : i32
    %c0_i32_0 = arith.constant 0 : i32
    %c0_i32_1 = arith.constant 0 : i32
    return %c0_i32, %c0_i32_0 : i32, i32
  }
  func.func @transform_18(%arg0: i32) -> (i32, i32) {
    %c0_i32 = arith.constant 0 : i32
    %c0_i32_0 = arith.constant 0 : i32
    %c0_i32_1 = arith.constant 0 : i32
    return %c0_i32, %c0_i32_0 : i32, i32
  }
  func.func @transform_19(%arg0: i32) -> (i32, i32) {
    %c0_i32 = arith.constant 0 : i32
    %c0_i32_0 = arith.constant 0 : i32
    %c0_i32_1 = arith.constant 0 : i32
    return %c0_i32, %c0_i32_0 : i32, i32
  }
  func.func @transform_20(%arg0: i32) -> (i32, i32) {
    %c0_i32 = arith.constant 0 : i32
    %c0_i32_0 = arith.constant 0 : i32
    %c0_i32_1 = arith.constant 0 : i32
    return %c0_i32, %c0_i32_0 : i32, i32
  }
  func.func @transform_21(%arg0: i32) -> (i32, i32) {
    %c0_i32 = arith.constant 0 : i32
    %c0_i32_0 = arith.constant 0 : i32
    %c0_i32_1 = arith.constant 0 : i32
    return %c0_i32, %c0_i32_0 : i32, i32
  }
  func.func @transform_22(%arg0: i32) -> (i32, i32) {
    %c0_i32 = arith.constant 0 : i32
    %c0_i32_0 = arith.constant 0 : i32
    %c0_i32_1 = arith.constant 0 : i32
    return %c0_i32, %c0_i32_0 : i32, i32
  }
  func.func @transform_23(%arg0: i32) -> (i32, i32) {
    %c0_i32 = arith.constant 0 : i32
    %c0_i32_0 = arith.constant 0 : i32
    %c0_i32_1 = arith.constant 0 : i32
    return %c0_i32, %c0_i32_0 : i32, i32
  }
  func.func @transform_24(%arg0: i32) -> (i32, i32) {
    %c0_i32 = arith.constant 0 : i32
    %c0_i32_0 = arith.constant 0 : i32
    %c0_i32_1 = arith.constant 0 : i32
    return %c0_i32, %c0_i32_0 : i32, i32
  }
  func.func @transform_25(%arg0: i32) -> (i32, i32) {
    %c0_i32 = arith.constant 0 : i32
    %c0_i32_0 = arith.constant 0 : i32
    %c0_i32_1 = arith.constant 0 : i32
    return %c0_i32, %c0_i32_0 : i32, i32
  }
  func.func @transform_26(%arg0: i32) -> (i32, i32) {
    %c0_i32 = arith.constant 0 : i32
    %c0_i32_0 = arith.constant 0 : i32
    %c0_i32_1 = arith.constant 0 : i32
    return %c0_i32, %c0_i32_0 : i32, i32
  }
  func.func @transform_27(%arg0: i32) -> (i32, i32) {
    %c0_i32 = arith.constant 0 : i32
    %c0_i32_0 = arith.constant 0 : i32
    %c0_i32_1 = arith.constant 0 : i32
    return %c0_i32, %c0_i32_0 : i32, i32
  }
  func.func @transform_28(%arg0: i32) -> (i32, i32, i32) {
    %c0_i32 = arith.constant 0 : i32
    %c0_i32_0 = arith.constant 0 : i32
    %c0_i32_1 = arith.constant 0 : i32
    return %arg0, %c0_i32, %c0_i32_0 : i32, i32, i32
  }
  func.func @transform_29(%arg0: i32) -> (i32, i32, i32) {
    %c0_i32 = arith.constant 0 : i32
    %c0_i32_0 = arith.constant 0 : i32
    %c0_i32_1 = arith.constant 0 : i32
    return %arg0, %c0_i32, %c0_i32_0 : i32, i32, i32
  }
  func.func @transform_30(%arg0: i32) -> (i32, i32, i32) {
    %c0_i32 = arith.constant 0 : i32
    %c0_i32_0 = arith.constant 0 : i32
    %c0_i32_1 = arith.constant 0 : i32
    return %arg0, %c0_i32, %c0_i32_0 : i32, i32, i32
  }
}

</mosaic_0001>

<llo_original>
// kernel: stdc_backbone_forward.1
$region0: #{stdc_backbone_forward.1}
  #allocation0 [shape = 'u32[]', space=smem, size = 0x4, offset = 0x4, fixed_abs, tag = 'smem constant byte address 0x4 - core index']
  #allocation1 [shape = 'u32[144,128]{1,0:T(1,128)}', space=vmem, size = 0x12000, scoped, tag = 'internal scratch']
  %s0 = inlined_call_operand.smem [shape: u32[31], index: -1, kind: input, shape index: {}]
  %s1 = sld [smem:[%s0]]
  %s2 = scalar_lea.smem %s0, 1
  %s3 = sld [smem:[%s2]]
  %s4 = scalar_lea.smem %s0, 2
  %s5 = sld [smem:[%s4]]
  %s6 = scalar_lea.smem %s0, 3
  %s7 = sld [smem:[%s6]]
  %s8 = scalar_lea.smem %s0, 4
  %s9 = sld [smem:[%s8]]
  %s10 = scalar_lea.smem %s0, 5
  %s11 = sld [smem:[%s10]]
  %s12 = scalar_lea.smem %s0, 6
  %s13 = sld [smem:[%s12]]
  %s14 = scalar_lea.smem %s0, 7
  %s15 = sld [smem:[%s14]]
  %s16 = scalar_lea.smem %s0, 8
  %s17 = sld [smem:[%s16]]
  %s18 = scalar_lea.smem %s0, 9
  %s19 = sld [smem:[%s18]]
  %s20 = scalar_lea.smem %s0, 10
  %s21 = sld [smem:[%s20]]
  %s22 = scalar_lea.smem %s0, 11
  %s23 = sld [smem:[%s22]]
  %s24 = scalar_lea.smem %s0, 12
  %s25 = sld [smem:[%s24]]
  %s26 = scalar_lea.smem %s0, 13
  %s27 = sld [smem:[%s26]]
  %s28 = scalar_lea.smem %s0, 14
  %s29 = sld [smem:[%s28]]
  %s30 = scalar_lea.smem %s0, 15
  %s31 = sld [smem:[%s30]]
  %s32 = scalar_lea.smem %s0, 16
  %s33 = sld [smem:[%s32]]
  %s34 = scalar_lea.smem %s0, 17
  %s35 = sld [smem:[%s34]]
  %s36 = scalar_lea.smem %s0, 18
  %s37 = sld [smem:[%s36]]
  %s38 = scalar_lea.smem %s0, 19
  %s39 = sld [smem:[%s38]]
  %s40 = scalar_lea.smem %s0, 20
  %s41 = sld [smem:[%s40]]
  %s42 = scalar_lea.smem %s0, 21
  %s43 = sld [smem:[%s42]]
  %s44 = scalar_lea.smem %s0, 22
  %s45 = sld [smem:[%s44]]
  %s46 = scalar_lea.smem %s0, 23
  %s47 = sld [smem:[%s46]]
  %s48 = scalar_lea.smem %s0, 24
  %s49 = sld [smem:[%s48]]
  %s50 = scalar_lea.smem %s0, 25
  %s51 = sld [smem:[%s50]]
  %s52 = scalar_lea.smem %s0, 26
  %s53 = sld [smem:[%s52]]
  %s54 = scalar_lea.smem %s0, 27
  %s55 = sld [smem:[%s54]]
  %s56 = scalar_lea.smem %s0, 28
  %s57 = sld [smem:[%s56]]
  %s58 = scalar_lea.smem %s0, 29
  %s59 = sld [smem:[%s58]]
  %s60 = scalar_lea.smem %s0, 30
  %s61 = sld [smem:[%s60]]
  %62 = xla_tuple %s57, %s59, %s61
  %s63 = sld [smem:[#allocation0]]
  $region161: #{stdc_backbone_forward.1} parent=0
    _
  %s65 = ssub.s32 1, %s63
  %s66 = scalar_select 0, %s65, %s63
  loop: start=0, step=1, limit=4
  $region2: #{stdc_backbone_forward.1} parent=0 // loop_pre_header
    _
  $region3: #{stdc_backbone_forward.1} parent=0 // loop_header
    %s68 = sphi 0, %s72
    %p69 = scmp.ge.s32.totalorder %s68, 4
    %s78 = sphi 0, %s80
    %s81 = sphi 0, %s78
    %s82 = sphi 0, %s81
    %s98 = sphi 0, %s82
    %s102 = sphi 0, %s102
    %s104 = sphi 0, %s102
    %s105 = sphi 0, %s104
    %s119 = sphi 0, %s105
    %s123 = sphi 0, %s123
    %s125 = sphi 0, %s123
    %s126 = sphi 0, %s125
    %s140 = sphi 0, %s126
    %s144 = sphi 0, %s144
    %s146 = sphi 0, %s144
    %s147 = sphi 0, %s146
    %s161 = sphi 0, %s147
    %s165 = sphi 0, %s165
    %s167 = sphi 0, %s165
    %s168 = sphi 0, %s167
    %s182 = sphi 0, %s168
    %s186 = sphi 0, %s186
    %s188 = sphi 0, %s186
    %s189 = sphi 0, %s188
    %s203 = sphi 0, %s189
    %s207 = sphi 0, %s207
    %s209 = sphi 0, %s207
    %s210 = sphi 0, %s209
    %s224 = sphi 0, %s210
    %s228 = sphi 0, %s228
    %s230 = sphi 0, %s228
    %s231 = sphi 0, %s230
    %s245 = sphi 0, %s231
    %s249 = sphi 0, %s249
    %s251 = sphi 0, %s249
    %s252 = sphi 0, %s251
    %s266 = sphi 0, %s252
    %s270 = sphi 0, %s270
    %s272 = sphi 0, %s270
    %s273 = sphi 0, %s272
    %s287 = sphi 0, %s273
    %s291 = sphi 0, %s291
    %s293 = sphi 0, %s291
    %s294 = sphi 0, %s293
    %s308 = sphi 0, %s294
    %s312 = sphi 0, %s312
    %s314 = sphi 0, %s312
    %s315 = sphi 0, %s314
    %s329 = sphi 0, %s315
    %s333 = sphi 0, %s333
    %s335 = sphi 0, %s333
    %s336 = sphi 0, %s335
    %s350 = sphi 0, %s336
    %s354 = sphi 0, %s354
    %s356 = sphi 0, %s354
    %s357 = sphi 0, %s356
    %s371 = sphi 0, %s357
    %s375 = sphi 0, %s375
    %s377 = sphi 0, %s375
    %s378 = sphi 0, %s377
    %s392 = sphi 0, %s378
    %s396 = sphi 0, %s396
    %s398 = sphi 0, %s396
    %s399 = sphi 0, %s398
    %s413 = sphi 0, %s399
    %s417 = sphi 0, %s417
    %s419 = sphi 0, %s417
    %s420 = sphi 0, %s419
    %s434 = sphi 0, %s420
    %s438 = sphi 0, %s438
    %s440 = sphi 0, %s438
    %s441 = sphi 0, %s440
    %s455 = sphi 0, %s441
    %s459 = sphi 0, %s459
    %s461 = sphi 0, %s459
    %s462 = sphi 0, %s461
    %s476 = sphi 0, %s462
    %s480 = sphi 0, %s480
    %s482 = sphi 0, %s480
    %s483 = sphi 0, %s482
    %s497 = sphi 0, %s483
    %s501 = sphi 0, %s501
    %s503 = sphi 0, %s501
    %s504 = sphi 0, %s503
    %s518 = sphi 0, %s504
    %s522 = sphi 0, %s522
    %s524 = sphi 0, %s522
    %s525 = sphi 0, %s524
    %s539 = sphi 0, %s525
    %s543 = sphi 0, %s543
    %s545 = sphi 0, %s543
    %s546 = sphi 0, %s545
    %s560 = sphi 0, %s546
    %s564 = sphi 0, %s564
    %s566 = sphi 0, %s564
    %s567 = sphi 0, %s566
    %s581 = sphi 0, %s567
    %s585 = sphi 0, %s585
    %s587 = sphi 0, %s585
    %s588 = sphi 0, %s587
    %s602 = sphi 0, %s588
    %s606 = sphi 0, %s606
    %s608 = sphi 0, %s606
    %s609 = sphi 0, %s608
    %s623 = sphi 0, %s609
    %s627 = sphi 0, %s627
    %s629 = sphi 0, %s627
    %s630 = sphi 0, %s629
    %s644 = sphi 0, %s630
    %s648 = sphi 0, %s648
    %s650 = sphi 0, %s648
    %s651 = sphi 0, %s650
    %s665 = sphi 0, %s651
    %s671 = sphi 0, %s673
    %s674 = sphi 0, %s671
    %s675 = sphi 0, %s674
    %s691 = sphi 0, %s675
    %s697 = sphi 0, %s699
    %s700 = sphi 0, %s697
    %s701 = sphi 0, %s700
    %s717 = sphi 0, %s701
    %s723 = sphi 0, %s725
    %s726 = sphi 0, %s723
    %s727 = sphi 0, %s726
    %s743 = sphi 0, %s727
  $region4: #{stdc_backbone_forward.1} parent=0 // loop_header_branch
    %71 = sbr.rel (%p69) target = $region8
  $region5: #{stdc_backbone_forward.1} parent=0 // loop_body
    %s73 = ssub.s32 %s68, 1
    %s74 = ssub.s32 %s68, 2
    %s75 = sadd.s32 %s68, 1
    %s76 = ssub.s32 %s68, %s75
    %p77 = scmp.eq.s32.totalorder %s76, 0
    %s79 = sadd.s32 %s78, 1
    %s80 = scalar_select %p77, %s78, %s79
    %p83 = pneg %p77
    %p84 = scmp.eq.s32.totalorder %s68, 1
    %p85 = por %p83, %p84
    %p86 = scmp.ne.s32.totalorder %s78, %s81
    %p87 = scmp.eq.s32.totalorder %s68, 0
    %p88 = por %p86, %p87
    %p89 = scmp.ne.s32.totalorder %s78, %s81
    %p90 = scmp.eq.s32.totalorder %s73, 1
    %p91 = por %p89, %p90
    %p92 = scmp.ne.s32.totalorder %s81, %s82
    %p93 = scmp.eq.s32.totalorder %s73, 0
    %p94 = por %p92, %p93
    %p95 = scmp.ne.s32.totalorder %s81, %s82
    %p96 = scmp.eq.s32.totalorder %s74, 1
    %p97 = por %p95, %p96
    %p99 = scmp.ne.s32.totalorder %s82, %s98
    %p100 = scmp.eq.s32.totalorder %s74, 0
    %p101 = por %p99, %p100
    %s103 = sadd.s32 %s102, 1
    %p106 = scmp.eq.s32.totalorder %s68, 1
    %p107 = scmp.ne.s32.totalorder %s102, %s104
    %p108 = scmp.eq.s32.totalorder %s68, 0
    %p109 = por %p107, %p108
    %p110 = scmp.ne.s32.totalorder %s102, %s104
    %p111 = scmp.eq.s32.totalorder %s73, 1
    %p112 = por %p110, %p111
    %p113 = scmp.ne.s32.totalorder %s104, %s105
    %p114 = scmp.eq.s32.totalorder %s73, 0
    %p115 = por %p113, %p114
    %p116 = scmp.ne.s32.totalorder %s104, %s105
    %p117 = scmp.eq.s32.totalorder %s74, 1
    %p118 = por %p116, %p117
    %p120 = scmp.ne.s32.totalorder %s105, %s119
    %p121 = scmp.eq.s32.totalorder %s74, 0
    %p122 = por %p120, %p121
    %s124 = sadd.s32 %s123, 1
    %p127 = scmp.eq.s32.totalorder %s68, 1
    %p128 = scmp.ne.s32.totalorder %s123, %s125
    %p129 = scmp.eq.s32.totalorder %s68, 0
    %p130 = por %p128, %p129
    %p131 = scmp.ne.s32.totalorder %s123, %s125
    %p132 = scmp.eq.s32.totalorder %s73, 1
    %p133 = por %p131, %p132
    %p134 = scmp.ne.s32.totalorder %s125, %s126
    %p135 = scmp.eq.s32.totalorder %s73, 0
    %p136 = por %p134, %p135
    %p137 = scmp.ne.s32.totalorder %s125, %s126
    %p138 = scmp.eq.s32.totalorder %s74, 1
    %p139 = por %p137, %p138
    %p141 = scmp.ne.s32.totalorder %s126, %s140
    %p142 = scmp.eq.s32.totalorder %s74, 0
    %p143 = por %p141, %p142
    %s145 = sadd.s32 %s144, 1
    %p148 = scmp.eq.s32.totalorder %s68, 1
    %p149 = scmp.ne.s32.totalorder %s144, %s146
    %p150 = scmp.eq.s32.totalorder %s68, 0
    %p151 = por %p149, %p150
    %p152 = scmp.ne.s32.totalorder %s144, %s146
    %p153 = scmp.eq.s32.totalorder %s73, 1
    %p154 = por %p152, %p153
    %p155 = scmp.ne.s32.totalorder %s146, %s147
    %p156 = scmp.eq.s32.totalorder %s73, 0
    %p157 = por %p155, %p156
    %p158 = scmp.ne.s32.totalorder %s146, %s147
    %p159 = scmp.eq.s32.totalorder %s74, 1
    %p160 = por %p158, %p159
    %p162 = scmp.ne.s32.totalorder %s147, %s161
    %p163 = scmp.eq.s32.totalorder %s74, 0
    %p164 = por %p162, %p163
    %s166 = sadd.s32 %s165, 1
    %p169 = scmp.eq.s32.totalorder %s68, 1
    %p170 = scmp.ne.s32.totalorder %s165, %s167
    %p171 = scmp.eq.s32.totalorder %s68, 0
    %p172 = por %p170, %p171
    %p173 = scmp.ne.s32.totalorder %s165, %s167
    %p174 = scmp.eq.s32.totalorder %s73, 1
    %p175 = por %p173, %p174
    %p176 = scmp.ne.s32.totalorder %s167, %s168
    %p177 = scmp.eq.s32.totalorder %s73, 0
    %p178 = por %p176, %p177
    %p179 = scmp.ne.s32.totalorder %s167, %s168
    %p180 = scmp.eq.s32.totalorder %s74, 1
    %p181 = por %p179, %p180
    %p183 = scmp.ne.s32.totalorder %s168, %s182
    %p184 = scmp.eq.s32.totalorder %s74, 0
    %p185 = por %p183, %p184
    %s187 = sadd.s32 %s186, 1
    %p190 = scmp.eq.s32.totalorder %s68, 1
    %p191 = scmp.ne.s32.totalorder %s186, %s188
    %p192 = scmp.eq.s32.totalorder %s68, 0
    %p193 = por %p191, %p192
    %p194 = scmp.ne.s32.totalorder %s186, %s188
    %p195 = scmp.eq.s32.totalorder %s73, 1
    %p196 = por %p194, %p195
    %p197 = scmp.ne.s32.totalorder %s188, %s189
    %p198 = scmp.eq.s32.totalorder %s73, 0
    %p199 = por %p197, %p198
    %p200 = scmp.ne.s32.totalorder %s188, %s189
    %p201 = scmp.eq.s32.totalorder %s74, 1
    %p202 = por %p200, %p201
    %p204 = scmp.ne.s32.totalorder %s189, %s203
    %p205 = scmp.eq.s32.totalorder %s74, 0
    %p206 = por %p204, %p205
    %s208 = sadd.s32 %s207, 1
    %p211 = scmp.eq.s32.totalorder %s68, 1
    %p212 = scmp.ne.s32.totalorder %s207, %s209
    %p213 = scmp.eq.s32.totalorder %s68, 0
    %p214 = por %p212, %p213
    %p215 = scmp.ne.s32.totalorder %s207, %s209
    %p216 = scmp.eq.s32.totalorder %s73, 1
    %p217 = por %p215, %p216
    %p218 = scmp.ne.s32.totalorder %s209, %s210
    %p219 = scmp.eq.s32.totalorder %s73, 0
    %p220 = por %p218, %p219
    %p221 = scmp.ne.s32.totalorder %s209, %s210
    %p222 = scmp.eq.s32.totalorder %s74, 1
    %p223 = por %p221, %p222
    %p225 = scmp.ne.s32.totalorder %s210, %s224
    %p226 = scmp.eq.s32.totalorder %s74, 0
    %p227 = por %p225, %p226
    %s229 = sadd.s32 %s228, 1
    %p232 = scmp.eq.s32.totalorder %s68, 1
    %p233 = scmp.ne.s32.totalorder %s228, %s230
    %p234 = scmp.eq.s32.totalorder %s68, 0
    %p235 = por %p233, %p234
    %p236 = scmp.ne.s32.totalorder %s228, %s230
    %p237 = scmp.eq.s32.totalorder %s73, 1
    %p238 = por %p236, %p237
    %p239 = scmp.ne.s32.totalorder %s230, %s231
    %p240 = scmp.eq.s32.totalorder %s73, 0
    %p241 = por %p239, %p240
    %p242 = scmp.ne.s32.totalorder %s230, %s231
    %p243 = scmp.eq.s32.totalorder %s74, 1
    %p244 = por %p242, %p243
    %p246 = scmp.ne.s32.totalorder %s231, %s245
    %p247 = scmp.eq.s32.totalorder %s74, 0
    %p248 = por %p246, %p247
    %s250 = sadd.s32 %s249, 1
    %p253 = scmp.eq.s32.totalorder %s68, 1
    %p254 = scmp.ne.s32.totalorder %s249, %s251
    %p255 = scmp.eq.s32.totalorder %s68, 0
    %p256 = por %p254, %p255
    %p257 = scmp.ne.s32.totalorder %s249, %s251
    %p258 = scmp.eq.s32.totalorder %s73, 1
    %p259 = por %p257, %p258
    %p260 = scmp.ne.s32.totalorder %s251, %s252
    %p261 = scmp.eq.s32.totalorder %s73, 0
    %p262 = por %p260, %p261
    %p263 = scmp.ne.s32.totalorder %s251, %s252
    %p264 = scmp.eq.s32.totalorder %s74, 1
    %p265 = por %p263, %p264
    %p267 = scmp.ne.s32.totalorder %s252, %s266
    %p268 = scmp.eq.s32.totalorder %s74, 0
    %p269 = por %p267, %p268
    %s271 = sadd.s32 %s270, 1
    %p274 = scmp.eq.s32.totalorder %s68, 1
    %p275 = scmp.ne.s32.totalorder %s270, %s272
    %p276 = scmp.eq.s32.totalorder %s68, 0
    %p277 = por %p275, %p276
    %p278 = scmp.ne.s32.totalorder %s270, %s272
    %p279 = scmp.eq.s32.totalorder %s73, 1
    %p280 = por %p278, %p279
    %p281 = scmp.ne.s32.totalorder %s272, %s273
    %p282 = scmp.eq.s32.totalorder %s73, 0
    %p283 = por %p281, %p282
    %p284 = scmp.ne.s32.totalorder %s272, %s273
    %p285 = scmp.eq.s32.totalorder %s74, 1
    %p286 = por %p284, %p285
    %p288 = scmp.ne.s32.totalorder %s273, %s287
    %p289 = scmp.eq.s32.totalorder %s74, 0
    %p290 = por %p288, %p289
    %s292 = sadd.s32 %s291, 1
    %p295 = scmp.eq.s32.totalorder %s68, 1
    %p296 = scmp.ne.s32.totalorder %s291, %s293
    %p297 = scmp.eq.s32.totalorder %s68, 0
    %p298 = por %p296, %p297
    %p299 = scmp.ne.s32.totalorder %s291, %s293
    %p300 = scmp.eq.s32.totalorder %s73, 1
    %p301 = por %p299, %p300
    %p302 = scmp.ne.s32.totalorder %s293, %s294
    %p303 = scmp.eq.s32.totalorder %s73, 0
    %p304 = por %p302, %p303
    %p305 = scmp.ne.s32.totalorder %s293, %s294
    %p306 = scmp.eq.s32.totalorder %s74, 1
    %p307 = por %p305, %p306
    %p309 = scmp.ne.s32.totalorder %s294, %s308
    %p310 = scmp.eq.s32.totalorder %s74, 0
    %p311 = por %p309, %p310
    %s313 = sadd.s32 %s312, 1
    %p316 = scmp.eq.s32.totalorder %s68, 1
    %p317 = scmp.ne.s32.totalorder %s312, %s314
    %p318 = scmp.eq.s32.totalorder %s68, 0
    %p319 = por %p317, %p318
    %p320 = scmp.ne.s32.totalorder %s312, %s314
    %p321 = scmp.eq.s32.totalorder %s73, 1
    %p322 = por %p320, %p321
    %p323 = scmp.ne.s32.totalorder %s314, %s315
    %p324 = scmp.eq.s32.totalorder %s73, 0
    %p325 = por %p323, %p324
    %p326 = scmp.ne.s32.totalorder %s314, %s315
    %p327 = scmp.eq.s32.totalorder %s74, 1
    %p328 = por %p326, %p327
    %p330 = scmp.ne.s32.totalorder %s315, %s329
    %p331 = scmp.eq.s32.totalorder %s74, 0
    %p332 = por %p330, %p331
    %s334 = sadd.s32 %s333, 1
    %p337 = scmp.eq.s32.totalorder %s68, 1
    %p338 = scmp.ne.s32.totalorder %s333, %s335
    %p339 = scmp.eq.s32.totalorder %s68, 0
    %p340 = por %p338, %p339
    %p341 = scmp.ne.s32.totalorder %s333, %s335
    %p342 = scmp.eq.s32.totalorder %s73, 1
    %p343 = por %p341, %p342
    %p344 = scmp.ne.s32.totalorder %s335, %s336
    %p345 = scmp.eq.s32.totalorder %s73, 0
    %p346 = por %p344, %p345
    %p347 = scmp.ne.s32.totalorder %s335, %s336
    %p348 = scmp.eq.s32.totalorder %s74, 1
    %p349 = por %p347, %p348
    %p351 = scmp.ne.s32.totalorder %s336, %s350
    %p352 = scmp.eq.s32.totalorder %s74, 0
    %p353 = por %p351, %p352
    %s355 = sadd.s32 %s354, 1
    %p358 = scmp.eq.s32.totalorder %s68, 1
    %p359 = scmp.ne.s32.totalorder %s354, %s356
    %p360 = scmp.eq.s32.totalorder %s68, 0
    %p361 = por %p359, %p360
    %p362 = scmp.ne.s32.totalorder %s354, %s356
    %p363 = scmp.eq.s32.totalorder %s73, 1
    %p364 = por %p362, %p363
    %p365 = scmp.ne.s32.totalorder %s356, %s357
    %p366 = scmp.eq.s32.totalorder %s73, 0
    %p367 = por %p365, %p366
    %p368 = scmp.ne.s32.totalorder %s356, %s357
    %p369 = scmp.eq.s32.totalorder %s74, 1
    %p370 = por %p368, %p369
    %p372 = scmp.ne.s32.totalorder %s357, %s371
    %p373 = scmp.eq.s32.totalorder %s74, 0
    %p374 = por %p372, %p373
    %s376 = sadd.s32 %s375, 1
    %p379 = scmp.eq.s32.totalorder %s68, 1
    %p380 = scmp.ne.s32.totalorder %s375, %s377
    %p381 = scmp.eq.s32.totalorder %s68, 0
    %p382 = por %p380, %p381
    %p383 = scmp.ne.s32.totalorder %s375, %s377
    %p384 = scmp.eq.s32.totalorder %s73, 1
    %p385 = por %p383, %p384
    %p386 = scmp.ne.s32.totalorder %s377, %s378
    %p387 = scmp.eq.s32.totalorder %s73, 0
    %p388 = por %p386, %p387
    %p389 = scmp.ne.s32.totalorder %s377, %s378
    %p390 = scmp.eq.s32.totalorder %s74, 1
    %p391 = por %p389, %p390
    %p393 = scmp.ne.s32.totalorder %s378, %s392
    %p394 = scmp.eq.s32.totalorder %s74, 0
    %p395 = por %p393, %p394
    %s397 = sadd.s32 %s396, 1
    %p400 = scmp.eq.s32.totalorder %s68, 1
    %p401 = scmp.ne.s32.totalorder %s396, %s398
    %p402 = scmp.eq.s32.totalorder %s68, 0
    %p403 = por %p401, %p402
    %p404 = scmp.ne.s32.totalorder %s396, %s398
    %p405 = scmp.eq.s32.totalorder %s73, 1
    %p406 = por %p404, %p405
    %p407 = scmp.ne.s32.totalorder %s398, %s399
    %p408 = scmp.eq.s32.totalorder %s73, 0
    %p409 = por %p407, %p408
    %p410 = scmp.ne.s32.totalorder %s398, %s399
    %p411 = scmp.eq.s32.totalorder %s74, 1
    %p412 = por %p410, %p411
    %p414 = scmp.ne.s32.totalorder %s399, %s413
    %p415 = scmp.eq.s32.totalorder %s74, 0
    %p416 = por %p414, %p415
    %s418 = sadd.s32 %s417, 1
    %p421 = scmp.eq.s32.totalorder %s68, 1
    %p422 = scmp.ne.s32.totalorder %s417, %s419
    %p423 = scmp.eq.s32.totalorder %s68, 0
    %p424 = por %p422, %p423
    %p425 = scmp.ne.s32.totalorder %s417, %s419
    %p426 = scmp.eq.s32.totalorder %s73, 1
    %p427 = por %p425, %p426
    %p428 = scmp.ne.s32.totalorder %s419, %s420
    %p429 = scmp.eq.s32.totalorder %s73, 0
    %p430 = por %p428, %p429
    %p431 = scmp.ne.s32.totalorder %s419, %s420
    %p432 = scmp.eq.s32.totalorder %s74, 1
    %p433 = por %p431, %p432
    %p435 = scmp.ne.s32.totalorder %s420, %s434
    %p436 = scmp.eq.s32.totalorder %s74, 0
    %p437 = por %p435, %p436
    %s439 = sadd.s32 %s438, 1
    %p442 = scmp.eq.s32.totalorder %s68, 1
    %p443 = scmp.ne.s32.totalorder %s438, %s440
    %p444 = scmp.eq.s32.totalorder %s68, 0
    %p445 = por %p443, %p444
    %p446 = scmp.ne.s32.totalorder %s438, %s440
    %p447 = scmp.eq.s32.totalorder %s73, 1
    %p448 = por %p446, %p447
    %p449 = scmp.ne.s32.totalorder %s440, %s441
    %p450 = scmp.eq.s32.totalorder %s73, 0
    %p451 = por %p449, %p450
    %p452 = scmp.ne.s32.totalorder %s440, %s441
    %p453 = scmp.eq.s32.totalorder %s74, 1
    %p454 = por %p452, %p453
    %p456 = scmp.ne.s32.totalorder %s441, %s455
    %p457 = scmp.eq.s32.totalorder %s74, 0
    %p458 = por %p456, %p457
    %s460 = sadd.s32 %s459, 1
    %p463 = scmp.eq.s32.totalorder %s68, 1
    %p464 = scmp.ne.s32.totalorder %s459, %s461
    %p465 = scmp.eq.s32.totalorder %s68, 0
    %p466 = por %p464, %p465
    %p467 = scmp.ne.s32.totalorder %s459, %s461
    %p468 = scmp.eq.s32.totalorder %s73, 1
    %p469 = por %p467, %p468
    %p470 = scmp.ne.s32.totalorder %s461, %s462
    %p471 = scmp.eq.s32.totalorder %s73, 0
    %p472 = por %p470, %p471
    %p473 = scmp.ne.s32.totalorder %s461, %s462
    %p474 = scmp.eq.s32.totalorder %s74, 1
    %p475 = por %p473, %p474
    %p477 = scmp.ne.s32.totalorder %s462, %s476
    %p478 = scmp.eq.s32.totalorder %s74, 0
    %p479 = por %p477, %p478
    %s481 = sadd.s32 %s480, 1
    %p484 = scmp.eq.s32.totalorder %s68, 1
    %p485 = scmp.ne.s32.totalorder %s480, %s482
    %p486 = scmp.eq.s32.totalorder %s68, 0
    %p487 = por %p485, %p486
    %p488 = scmp.ne.s32.totalorder %s480, %s482
    %p489 = scmp.eq.s32.totalorder %s73, 1
    %p490 = por %p488, %p489
    %p491 = scmp.ne.s32.totalorder %s482, %s483
    %p492 = scmp.eq.s32.totalorder %s73, 0
    %p493 = por %p491, %p492
    %p494 = scmp.ne.s32.totalorder %s482, %s483
    %p495 = scmp.eq.s32.totalorder %s74, 1
    %p496 = por %p494, %p495
    %p498 = scmp.ne.s32.totalorder %s483, %s497
    %p499 = scmp.eq.s32.totalorder %s74, 0
    %p500 = por %p498, %p499
    %s502 = sadd.s32 %s501, 1
    %p505 = scmp.eq.s32.totalorder %s68, 1
    %p506 = scmp.ne.s32.totalorder %s501, %s503
    %p507 = scmp.eq.s32.totalorder %s68, 0
    %p508 = por %p506, %p507
    %p509 = scmp.ne.s32.totalorder %s501, %s503
    %p510 = scmp.eq.s32.totalorder %s73, 1
    %p511 = por %p509, %p510
    %p512 = scmp.ne.s32.totalorder %s503, %s504
    %p513 = scmp.eq.s32.totalorder %s73, 0
    %p514 = por %p512, %p513
    %p515 = scmp.ne.s32.totalorder %s503, %s504
    %p516 = scmp.eq.s32.totalorder %s74, 1
    %p517 = por %p515, %p516
    %p519 = scmp.ne.s32.totalorder %s504, %s518
    %p520 = scmp.eq.s32.totalorder %s74, 0
    %p521 = por %p519, %p520
    %s523 = sadd.s32 %s522, 1
    %p526 = scmp.eq.s32.totalorder %s68, 1
    %p527 = scmp.ne.s32.totalorder %s522, %s524
    %p528 = scmp.eq.s32.totalorder %s68, 0
    %p529 = por %p527, %p528
    %p530 = scmp.ne.s32.totalorder %s522, %s524
    %p531 = scmp.eq.s32.totalorder %s73, 1
    %p532 = por %p530, %p531
    %p533 = scmp.ne.s32.totalorder %s524, %s525
    %p534 = scmp.eq.s32.totalorder %s73, 0
    %p535 = por %p533, %p534
    %p536 = scmp.ne.s32.totalorder %s524, %s525
    %p537 = scmp.eq.s32.totalorder %s74, 1
    %p538 = por %p536, %p537
    %p540 = scmp.ne.s32.totalorder %s525, %s539
    %p541 = scmp.eq.s32.totalorder %s74, 0
    %p542 = por %p540, %p541
    %s544 = sadd.s32 %s543, 1
    %p547 = scmp.eq.s32.totalorder %s68, 1
    %p548 = scmp.ne.s32.totalorder %s543, %s545
    %p549 = scmp.eq.s32.totalorder %s68, 0
    %p550 = por %p548, %p549
    %p551 = scmp.ne.s32.totalorder %s543, %s545
    %p552 = scmp.eq.s32.totalorder %s73, 1
    %p553 = por %p551, %p552
    %p554 = scmp.ne.s32.totalorder %s545, %s546
    %p555 = scmp.eq.s32.totalorder %s73, 0
    %p556 = por %p554, %p555
    %p557 = scmp.ne.s32.totalorder %s545, %s546
    %p558 = scmp.eq.s32.totalorder %s74, 1
    %p559 = por %p557, %p558
    %p561 = scmp.ne.s32.totalorder %s546, %s560
    %p562 = scmp.eq.s32.totalorder %s74, 0
    %p563 = por %p561, %p562
    %s565 = sadd.s32 %s564, 1
    %p568 = scmp.eq.s32.totalorder %s68, 1
    %p569 = scmp.ne.s32.totalorder %s564, %s566
    %p570 = scmp.eq.s32.totalorder %s68, 0
    %p571 = por %p569, %p570
    %p572 = scmp.ne.s32.totalorder %s564, %s566
    %p573 = scmp.eq.s32.totalorder %s73, 1
    %p574 = por %p572, %p573
    %p575 = scmp.ne.s32.totalorder %s566, %s567
    %p576 = scmp.eq.s32.totalorder %s73, 0
    %p577 = por %p575, %p576
    %p578 = scmp.ne.s32.totalorder %s566, %s567
    %p579 = scmp.eq.s32.totalorder %s74, 1
    %p580 = por %p578, %p579
    %p582 = scmp.ne.s32.totalorder %s567, %s581
    %p583 = scmp.eq.s32.totalorder %s74, 0
    %p584 = por %p582, %p583
    %s586 = sadd.s32 %s585, 1
    %p589 = scmp.eq.s32.totalorder %s68, 1
    %p590 = scmp.ne.s32.totalorder %s585, %s587
    %p591 = scmp.eq.s32.totalorder %s68, 0
    %p592 = por %p590, %p591
    %p593 = scmp.ne.s32.totalorder %s585, %s587
    %p594 = scmp.eq.s32.totalorder %s73, 1
    %p595 = por %p593, %p594
    %p596 = scmp.ne.s32.totalorder %s587, %s588
    %p597 = scmp.eq.s32.totalorder %s73, 0
    %p598 = por %p596, %p597
    %p599 = scmp.ne.s32.totalorder %s587, %s588
    %p600 = scmp.eq.s32.totalorder %s74, 1
    %p601 = por %p599, %p600
    %p603 = scmp.ne.s32.totalorder %s588, %s602
    %p604 = scmp.eq.s32.totalorder %s74, 0
    %p605 = por %p603, %p604
    %s607 = sadd.s32 %s606, 1
    %p610 = scmp.eq.s32.totalorder %s68, 1
    %p611 = scmp.ne.s32.totalorder %s606, %s608
    %p612 = scmp.eq.s32.totalorder %s68, 0
    %p613 = por %p611, %p612
    %p614 = scmp.ne.s32.totalorder %s606, %s608
    %p615 = scmp.eq.s32.totalorder %s73, 1
    %p616 = por %p614, %p615
    %p617 = scmp.ne.s32.totalorder %s608, %s609
    %p618 = scmp.eq.s32.totalorder %s73, 0
    %p619 = por %p617, %p618
    %p620 = scmp.ne.s32.totalorder %s608, %s609
    %p621 = scmp.eq.s32.totalorder %s74, 1
    %p622 = por %p620, %p621
    %p624 = scmp.ne.s32.totalorder %s609, %s623
    %p625 = scmp.eq.s32.totalorder %s74, 0
    %p626 = por %p624, %p625
    %s628 = sadd.s32 %s627, 1
    %p631 = scmp.eq.s32.totalorder %s68, 1
    %p632 = scmp.ne.s32.totalorder %s627, %s629
    %p633 = scmp.eq.s32.totalorder %s68, 0
    %p634 = por %p632, %p633
    %p635 = scmp.ne.s32.totalorder %s627, %s629
    %p636 = scmp.eq.s32.totalorder %s73, 1
    %p637 = por %p635, %p636
    %p638 = scmp.ne.s32.totalorder %s629, %s630
    %p639 = scmp.eq.s32.totalorder %s73, 0
    %p640 = por %p638, %p639
    %p641 = scmp.ne.s32.totalorder %s629, %s630
    %p642 = scmp.eq.s32.totalorder %s74, 1
    %p643 = por %p641, %p642
    %p645 = scmp.ne.s32.totalorder %s630, %s644
    %p646 = scmp.eq.s32.totalorder %s74, 0
    %p647 = por %p645, %p646
    %s649 = sadd.s32 %s648, 1
    %p652 = scmp.eq.s32.totalorder %s68, 1
    %p653 = scmp.ne.s32.totalorder %s648, %s650
    %p654 = scmp.eq.s32.totalorder %s68, 0
    %p655 = por %p653, %p654
    %p656 = scmp.ne.s32.totalorder %s648, %s650
    %p657 = scmp.eq.s32.totalorder %s73, 1
    %p658 = por %p656, %p657
    %p659 = scmp.ne.s32.totalorder %s650, %s651
    %p660 = scmp.eq.s32.totalorder %s73, 0
    %p661 = por %p659, %p660
    %p662 = scmp.ne.s32.totalorder %s650, %s651
    %p663 = scmp.eq.s32.totalorder %s74, 1
    %p664 = por %p662, %p663
    %p666 = scmp.ne.s32.totalorder %s651, %s665
    %p667 = scmp.eq.s32.totalorder %s74, 0
    %p668 = por %p666, %p667
    %s669 = ssub.s32 %s68, %s75
    %p670 = scmp.eq.s32.totalorder %s669, 0
    %s672 = sadd.s32 %s671, 1
    %s673 = scalar_select %p670, %s671, %s672
    %p676 = pneg %p670
    %p677 = scmp.eq.s32.totalorder %s68, 1
    %p678 = por %p676, %p677
    %p679 = scmp.ne.s32.totalorder %s671, %s674
    %p680 = scmp.eq.s32.totalorder %s68, 0
    %p681 = por %p679, %p680
    %p682 = scmp.ne.s32.totalorder %s671, %s674
    %p683 = scmp.eq.s32.totalorder %s73, 1
    %p684 = por %p682, %p683
    %p685 = scmp.ne.s32.totalorder %s674, %s675
    %p686 = scmp.eq.s32.totalorder %s73, 0
    %p687 = por %p685, %p686
    %p688 = scmp.ne.s32.totalorder %s674, %s675
    %p689 = scmp.eq.s32.totalorder %s74, 1
    %p690 = por %p688, %p689
    %p692 = scmp.ne.s32.totalorder %s675, %s691
    %p693 = scmp.eq.s32.totalorder %s74, 0
    %p694 = por %p692, %p693
    %s695 = ssub.s32 %s68, %s75
    %p696 = scmp.eq.s32.totalorder %s695, 0
    %s698 = sadd.s32 %s697, 1
    %s699 = scalar_select %p696, %s697, %s698
    %p702 = pneg %p696
    %p703 = scmp.eq.s32.totalorder %s68, 1
    %p704 = por %p702, %p703
    %p705 = scmp.ne.s32.totalorder %s697, %s700
    %p706 = scmp.eq.s32.totalorder %s68, 0
    %p707 = por %p705, %p706
    %p708 = scmp.ne.s32.totalorder %s697, %s700
    %p709 = scmp.eq.s32.totalorder %s73, 1
    %p710 = por %p708, %p709
    %p711 = scmp.ne.s32.totalorder %s700, %s701
    %p712 = scmp.eq.s32.totalorder %s73, 0
    %p713 = por %p711, %p712
    %p714 = scmp.ne.s32.totalorder %s700, %s701
    %p715 = scmp.eq.s32.totalorder %s74, 1
    %p716 = por %p714, %p715
    %p718 = scmp.ne.s32.totalorder %s701, %s717
    %p719 = scmp.eq.s32.totalorder %s74, 0
    %p720 = por %p718, %p719
    %s721 = ssub.s32 %s68, %s75
    %p722 = scmp.eq.s32.totalorder %s721, 0
    %s724 = sadd.s32 %s723, 1
    %s725 = scalar_select %p722, %s723, %s724
    %p728 = pneg %p722
    %p729 = scmp.eq.s32.totalorder %s68, 1
    %p730 = por %p728, %p729
    %p731 = scmp.ne.s32.totalorder %s723, %s726
    %p732 = scmp.eq.s32.totalorder %s68, 0
    %p733 = por %p731, %p732
    %p734 = scmp.ne.s32.totalorder %s723, %s726
    %p735 = scmp.eq.s32.totalorder %s73, 1
    %p736 = por %p734, %p735
    %p737 = scmp.ne.s32.totalorder %s726, %s727
    %p738 = scmp.eq.s32.totalorder %s73, 0
    %p739 = por %p737, %p738
    %p740 = scmp.ne.s32.totalorder %s726, %s727
    %p741 = scmp.eq.s32.totalorder %s74, 1
    %p742 = por %p740, %p741
    %p744 = scmp.ne.s32.totalorder %s727, %s743
    %p745 = scmp.eq.s32.totalorder %s74, 0
    %p746 = por %p744, %p745
    %p747 = scmp.le.s32.totalorder 1, %s68
    %p748 = scmp.lt.s32.totalorder %s68, 3
    %p749 = pnand %p747, %p748
    %p750 = pneg %p749
    // Predicated region
    $region9: #{stdc_backbone_forward.1} parent=5 // pred_check
      _
    $region10: #{stdc_backbone_forward.1} parent=5 // pred_check_branch
      %752 = sbr.rel (%p749) target = $region12
    $region11: #{stdc_backbone_forward.1} parent=5 // pred_region
      %s753 = ssub.s32 %s68, 1
      // Predicated region
      $region13: #{stdc_backbone_forward.1} parent=11 // pred_check
        %p754 = pneg %p115
      $region14: #{stdc_backbone_forward.1} parent=11 // pred_check_branch
        %756 = sbr.rel (%p754) target = $region16
      $region15: #{stdc_backbone_forward.1} parent=11 // pred_region
        _
      $region16: #{stdc_backbone_forward.1} parent=11 // pred_fallthru
        _
      // Predicated region
      $region17: #{stdc_backbone_forward.1} parent=11 // pred_check
        %p757 = pneg %p136
      $region18: #{stdc_backbone_forward.1} parent=11 // pred_check_branch
        %759 = sbr.rel (%p757) target = $region20
      $region19: #{stdc_backbone_forward.1} parent=11 // pred_region
        _
      $region20: #{stdc_backbone_forward.1} parent=11 // pred_fallthru
        _
      // Predicated region
      $region21: #{stdc_backbone_forward.1} parent=11 // pred_check
        %p760 = pneg %p157
      $region22: #{stdc_backbone_forward.1} parent=11 // pred_check_branch
        %762 = sbr.rel (%p760) target = $region24
      $region23: #{stdc_backbone_forward.1} parent=11 // pred_region
        _
      $region24: #{stdc_backbone_forward.1} parent=11 // pred_fallthru
        _
      // Predicated region
      $region25: #{stdc_backbone_forward.1} parent=11 // pred_check
        %p763 = pneg %p178
      $region26: #{stdc_backbone_forward.1} parent=11 // pred_check_branch
        %765 = sbr.rel (%p763) target = $region28
      $region27: #{stdc_backbone_forward.1} parent=11 // pred_region
        _
      $region28: #{stdc_backbone_forward.1} parent=11 // pred_fallthru
        _
      // Predicated region
      $region29: #{stdc_backbone_forward.1} parent=11 // pred_check
        %p766 = pneg %p199
      $region30: #{stdc_backbone_forward.1} parent=11 // pred_check_branch
        %768 = sbr.rel (%p766) target = $region32
      $region31: #{stdc_backbone_forward.1} parent=11 // pred_region
        _
      $region32: #{stdc_backbone_forward.1} parent=11 // pred_fallthru
        _
      // Predicated region
      $region33: #{stdc_backbone_forward.1} parent=11 // pred_check
        %p769 = pneg %p220
      $region34: #{stdc_backbone_forward.1} parent=11 // pred_check_branch
        %771 = sbr.rel (%p769) target = $region36
      $region35: #{stdc_backbone_forward.1} parent=11 // pred_region
        _
      $region36: #{stdc_backbone_forward.1} parent=11 // pred_fallthru
        _
      // Predicated region
      $region37: #{stdc_backbone_forward.1} parent=11 // pred_check
        %p772 = pneg %p241
      $region38: #{stdc_backbone_forward.1} parent=11 // pred_check_branch
        %774 = sbr.rel (%p772) target = $region40
      $region39: #{stdc_backbone_forward.1} parent=11 // pred_region
        _
      $region40: #{stdc_backbone_forward.1} parent=11 // pred_fallthru
        _
      // Predicated region
      $region41: #{stdc_backbone_forward.1} parent=11 // pred_check
        %p775 = pneg %p262
      $region42: #{stdc_backbone_forward.1} parent=11 // pred_check_branch
        %777 = sbr.rel (%p775) target = $region44
      $region43: #{stdc_backbone_forward.1} parent=11 // pred_region
        _
      $region44: #{stdc_backbone_forward.1} parent=11 // pred_fallthru
        _
      // Predicated region
      $region45: #{stdc_backbone_forward.1} parent=11 // pred_check
        %p778 = pneg %p283
      $region46: #{stdc_backbone_forward.1} parent=11 // pred_check_branch
        %780 = sbr.rel (%p778) target = $region48
      $region47: #{stdc_backbone_forward.1} parent=11 // pred_region
        _
      $region48: #{stdc_backbone_forward.1} parent=11 // pred_fallthru
        _
      // Predicated region
      $region49: #{stdc_backbone_forward.1} parent=11 // pred_check
        %p781 = pneg %p304
      $region50: #{stdc_backbone_forward.1} parent=11 // pred_check_branch
        %783 = sbr.rel (%p781) target = $region52
      $region51: #{stdc_backbone_forward.1} parent=11 // pred_region
        _
      $region52: #{stdc_backbone_forward.1} parent=11 // pred_fallthru
        _
      // Predicated region
      $region53: #{stdc_backbone_forward.1} parent=11 // pred_check
        %p784 = pneg %p325
      $region54: #{stdc_backbone_forward.1} parent=11 // pred_check_branch
        %786 = sbr.rel (%p784) target = $region56
      $region55: #{stdc_backbone_forward.1} parent=11 // pred_region
        _
      $region56: #{stdc_backbone_forward.1} parent=11 // pred_fallthru
        _
      // Predicated region
      $region57: #{stdc_backbone_forward.1} parent=11 // pred_check
        %p787 = pneg %p346
      $region58: #{stdc_backbone_forward.1} parent=11 // pred_check_branch
        %789 = sbr.rel (%p787) target = $region60
      $region59: #{stdc_backbone_forward.1} parent=11 // pred_region
        _
      $region60: #{stdc_backbone_forward.1} parent=11 // pred_fallthru
        _
      // Predicated region
      $region61: #{stdc_backbone_forward.1} parent=11 // pred_check
        %p790 = pneg %p367
      $region62: #{stdc_backbone_forward.1} parent=11 // pred_check_branch
        %792 = sbr.rel (%p790) target = $region64
      $region63: #{stdc_backbone_forward.1} parent=11 // pred_region
        _
      $region64: #{stdc_backbone_forward.1} parent=11 // pred_fallthru
        _
      // Predicated region
      $region65: #{stdc_backbone_forward.1} parent=11 // pred_check
        %p793 = pneg %p388
      $region66: #{stdc_backbone_forward.1} parent=11 // pred_check_branch
        %795 = sbr.rel (%p793) target = $region68
      $region67: #{stdc_backbone_forward.1} parent=11 // pred_region
        _
      $region68: #{stdc_backbone_forward.1} parent=11 // pred_fallthru
        _
      // Predicated region
      $region69: #{stdc_backbone_forward.1} parent=11 // pred_check
        %p796 = pneg %p409
      $region70: #{stdc_backbone_forward.1} parent=11 // pred_check_branch
        %798 = sbr.rel (%p796) target = $region72
      $region71: #{stdc_backbone_forward.1} parent=11 // pred_region
        _
      $region72: #{stdc_backbone_forward.1} parent=11 // pred_fallthru
        _
      // Predicated region
      $region73: #{stdc_backbone_forward.1} parent=11 // pred_check
        %p799 = pneg %p430
      $region74: #{stdc_backbone_forward.1} parent=11 // pred_check_branch
        %801 = sbr.rel (%p799) target = $region76
      $region75: #{stdc_backbone_forward.1} parent=11 // pred_region
        _
      $region76: #{stdc_backbone_forward.1} parent=11 // pred_fallthru
        _
      // Predicated region
      $region77: #{stdc_backbone_forward.1} parent=11 // pred_check
        %p802 = pneg %p451
      $region78: #{stdc_backbone_forward.1} parent=11 // pred_check_branch
        %804 = sbr.rel (%p802) target = $region80
      $region79: #{stdc_backbone_forward.1} parent=11 // pred_region
        _
      $region80: #{stdc_backbone_forward.1} parent=11 // pred_fallthru
        _
      // Predicated region
      $region81: #{stdc_backbone_forward.1} parent=11 // pred_check
        %p805 = pneg %p472
      $region82: #{stdc_backbone_forward.1} parent=11 // pred_check_branch
        %807 = sbr.rel (%p805) target = $region84
      $region83: #{stdc_backbone_forward.1} parent=11 // pred_region
        _
      $region84: #{stdc_backbone_forward.1} parent=11 // pred_fallthru
        _
      // Predicated region
      $region85: #{stdc_backbone_forward.1} parent=11 // pred_check
        %p808 = pneg %p493
      $region86: #{stdc_backbone_forward.1} parent=11 // pred_check_branch
        %810 = sbr.rel (%p808) target = $region88
      $region87: #{stdc_backbone_forward.1} parent=11 // pred_region
        _
      $region88: #{stdc_backbone_forward.1} parent=11 // pred_fallthru
        _
      // Predicated region
      $region89: #{stdc_backbone_forward.1} parent=11 // pred_check
        %p811 = pneg %p514
      $region90: #{stdc_backbone_forward.1} parent=11 // pred_check_branch
        %813 = sbr.rel (%p811) target = $region92
      $region91: #{stdc_backbone_forward.1} parent=11 // pred_region
        _
      $region92: #{stdc_backbone_forward.1} parent=11 // pred_fallthru
        _
      // Predicated region
      $region93: #{stdc_backbone_forward.1} parent=11 // pred_check
        %p814 = pneg %p535
      $region94: #{stdc_backbone_forward.1} parent=11 // pred_check_branch
        %816 = sbr.rel (%p814) target = $region96
      $region95: #{stdc_backbone_forward.1} parent=11 // pred_region
        _
      $region96: #{stdc_backbone_forward.1} parent=11 // pred_fallthru
        _
      // Predicated region
      $region97: #{stdc_backbone_forward.1} parent=11 // pred_check
        %p817 = pneg %p556
      $region98: #{stdc_backbone_forward.1} parent=11 // pred_check_branch
        %819 = sbr.rel (%p817) target = $region100
      $region99: #{stdc_backbone_forward.1} parent=11 // pred_region
        _
      $region100: #{stdc_backbone_forward.1} parent=11 // pred_fallthru
        _
      // Predicated region
      $region101: #{stdc_backbone_forward.1} parent=11 // pred_check
        %p820 = pneg %p577
      $region102: #{stdc_backbone_forward.1} parent=11 // pred_check_branch
        %822 = sbr.rel (%p820) target = $region104
      $region103: #{stdc_backbone_forward.1} parent=11 // pred_region
        _
      $region104: #{stdc_backbone_forward.1} parent=11 // pred_fallthru
        _
      // Predicated region
      $region105: #{stdc_backbone_forward.1} parent=11 // pred_check
        %p823 = pneg %p598
      $region106: #{stdc_backbone_forward.1} parent=11 // pred_check_branch
        %825 = sbr.rel (%p823) target = $region108
      $region107: #{stdc_backbone_forward.1} parent=11 // pred_region
        _
      $region108: #{stdc_backbone_forward.1} parent=11 // pred_fallthru
        _
      // Predicated region
      $region109: #{stdc_backbone_forward.1} parent=11 // pred_check
        %p826 = pneg %p619
      $region110: #{stdc_backbone_forward.1} parent=11 // pred_check_branch
        %828 = sbr.rel (%p826) target = $region112
      $region111: #{stdc_backbone_forward.1} parent=11 // pred_region
        _
      $region112: #{stdc_backbone_forward.1} parent=11 // pred_fallthru
        _
      // Predicated region
      $region113: #{stdc_backbone_forward.1} parent=11 // pred_check
        %p829 = pneg %p640
      $region114: #{stdc_backbone_forward.1} parent=11 // pred_check_branch
        %831 = sbr.rel (%p829) target = $region116
      $region115: #{stdc_backbone_forward.1} parent=11 // pred_region
        _
      $region116: #{stdc_backbone_forward.1} parent=11 // pred_fallthru
        _
      // Predicated region
      $region117: #{stdc_backbone_forward.1} parent=11 // pred_check
        %p832 = pneg %p661
      $region118: #{stdc_backbone_forward.1} parent=11 // pred_check_branch
        %834 = sbr.rel (%p832) target = $region120
      $region119: #{stdc_backbone_forward.1} parent=11 // pred_region
        _
      $region120: #{stdc_backbone_forward.1} parent=11 // pred_fallthru
        _
    $region12: #{stdc_backbone_forward.1} parent=5 // pred_fallthru
      _
    %p835 = scmp.lt.s32.totalorder %s68, 2
    // Predicated region
    $region121: #{stdc_backbone_forward.1} parent=5 // pred_check
      %p836 = pneg %p835
    $region122: #{stdc_backbone_forward.1} parent=5 // pred_check_branch
      %838 = sbr.rel (%p836) target = $region124
    $region123: #{stdc_backbone_forward.1} parent=5 // pred_region
      // Predicated region
      $region125: #{stdc_backbone_forward.1} parent=123 // pred_check
        %p839 = pneg %p88
      $region126: #{stdc_backbone_forward.1} parent=123 // pred_check_branch
        %841 = sbr.rel (%p839) target = $region128
      $region127: #{stdc_backbone_forward.1} parent=123 // pred_region
        %p842 = scmp.lt.s32.totalorder %s68, 1
        %s843 = scalar_select %p842, %s68, 1
        %s844 = smul.addr %s843, 8
        %s845 = smul.addr %s844, 4
        %s846 = scalar_lea.vmem %s1, %s845
      $region128: #{stdc_backbone_forward.1} parent=123 // pred_fallthru
        _
    $region124: #{stdc_backbone_forward.1} parent=5 // pred_fallthru
      _
    %p847 = scmp.le.s32.totalorder 1, %s68
    %p848 = scmp.lt.s32.totalorder %s68, 3
    %p849 = pnand %p847, %p848
    %p850 = pneg %p849
    // Predicated region
    $region129: #{stdc_backbone_forward.1} parent=5 // pred_check
      _
    $region130: #{stdc_backbone_forward.1} parent=5 // pred_check_branch
      %852 = sbr.rel (%p849) target = $region132
    $region131: #{stdc_backbone_forward.1} parent=5 // pred_region
      %s853 = ssub.s32 %s68, 1
      %p854 = scmp.lt.s32.totalorder %s73, 1
      %s855 = scalar_select %p854, %s73, 1
      %s856 = smul.addr %s855, 8
      %s857 = smul.addr %s856, 4
      %s858 = scalar_lea.vmem %s1, %s857
      %p859 = pneg %p94
      %p860 = pneg %p91
      %p861 = pneg %p115
      %p862 = pneg %p112
      %p863 = pneg %p136
      %p864 = pneg %p133
      %p865 = pneg %p157
      %p866 = pneg %p154
      %p867 = pneg %p178
      %p868 = pneg %p175
      %p869 = pneg %p199
      %p870 = pneg %p196
      %p871 = pneg %p220
      %p872 = pneg %p217
      %p873 = pneg %p241
      %p874 = pneg %p238
      %p875 = pneg %p262
      %p876 = pneg %p259
      %p877 = pneg %p283
      %p878 = pneg %p280
      %p879 = pneg %p304
      %p880 = pneg %p301
      %p881 = pneg %p325
      %p882 = pneg %p322
      %p883 = pneg %p346
      %p884 = pneg %p343
      %p885 = pneg %p367
      %p886 = pneg %p364
      %p887 = pneg %p388
      %p888 = pneg %p385
      %p889 = pneg %p409
      %p890 = pneg %p406
      %p891 = pneg %p430
      %p892 = pneg %p427
      %p893 = pneg %p451
      %p894 = pneg %p448
      %p895 = pneg %p472
      %p896 = pneg %p469
      %p897 = pneg %p493
      %p898 = pneg %p490
      %p899 = pneg %p514
      %p900 = pneg %p511
      %p901 = pneg %p535
      %p902 = pneg %p532
      %p903 = pneg %p556
      %p904 = pneg %p553
      %p905 = pneg %p577
      %p906 = pneg %p574
      %p907 = pneg %p598
      %p908 = pneg %p595
      %p909 = pneg %p619
      %p910 = pneg %p616
      %p911 = pneg %p640
      %p912 = pneg %p637
      %p913 = pneg %p661
      %p914 = pneg %p658
      %p915 = pneg %p687
      %p916 = pneg %p684
      %p917 = scmp.lt.s32.totalorder %s73, 1
      %s918 = scalar_select %p917, %s73, 1
      %s919 = smul.addr %s918, 2
      %s920 = smul.addr %s919, 8
      %s921 = scalar_lea.vmem %s57, %s920
      %p922 = pneg %p713
      %p923 = pneg %p710
      %p924 = scmp.lt.s32.totalorder %s73, 1
      %s925 = scalar_select %p924, %s73, 1
      %s926 = smul.addr %s925, 2
      %s927 = smul.addr %s926, 8
      %s928 = scalar_lea.vmem %s59, %s927
      %p929 = pneg %p739
      %p930 = pneg %p736
      %p931 = scmp.lt.s32.totalorder %s73, 1
      %s932 = scalar_select %p931, %s73, 1
      %s933 = smul.addr %s932, 4
      %s934 = smul.addr %s933, 8
      %s935 = scalar_lea.vmem %s61, %s934
      %p936 = scmp.lt.s32.totalorder %s73, 1
      %s937 = scalar_select %p936, %s73, 1
      %s938 = smul.addr %s937, 8
      %s939 = smul.addr %s938, 4
      %s940 = scalar_lea.vmem %s1, %s939
      %p941 = scmp.lt.s32.totalorder %s73, 1
      %s942 = scalar_select %p941, %s73, 1
      %s943 = smul.addr %s942, 2
      %s944 = smul.addr %s943, 8
      %s945 = scalar_lea.vmem %s57, %s944
      %p946 = scmp.lt.s32.totalorder %s73, 1
      %s947 = scalar_select %p946, %s73, 1
      %s948 = smul.addr %s947, 2
      %s949 = smul.addr %s948, 8
      %s950 = scalar_lea.vmem %s59, %s949
      %p951 = scmp.lt.s32.totalorder %s73, 1
      %s952 = scalar_select %p951, %s73, 1
      %s953 = smul.addr %s952, 4
      %s954 = smul.addr %s953, 8
      %s955 = scalar_lea.vmem %s61, %s954
      %v957 = vld [vmem:[%s940] sm:$0x77]
      %v958 = vld [vmem:[%s940 + $0x8] sm:$0x77]
      %v959 = vld [vmem:[%s940 + $0x10] sm:$0x77]
      %v960 = vld [vmem:[%s940 + $0x18] sm:$0x77]
      %v965 = vcombine.high %v957, %v957
      %v966 = vcombine.high %v958, %v958
      %v967 = vcombine.high %v959, %v959
      %v968 = vcombine.high %v960, %v960
      %v973 = vpack.c.bf16 %v957, %v957
      %v974 = vpack.c.bf16 %v965, %v965
      %v975 = vpack.c.bf16 %v958, %v958
      %v976 = vpack.c.bf16 %v966, %v966
      %v977 = vpack.c.bf16 %v959, %v959
      %v978 = vpack.c.bf16 %v967, %v967
      %v979 = vpack.c.bf16 %v960, %v960
      %v980 = vpack.c.bf16 %v968, %v968
      %v981 = vld [vmem:[%s3] sm:$0xff]
      %v982 = vld [vmem:[%s3 + $0x8] sm:$0xff]
      %v983 = vld [vmem:[%s3 + $0x10] sm:$0xff]
      %v984 = vld [vmem:[%s3 + $0x18] sm:$0xff]
      %v985 = vld [vmem:[%s3 + $0x20] sm:$0xff]
      %v986 = vld [vmem:[%s3 + $0x28] sm:$0xff]
      %v987 = vld [vmem:[%s3 + $0x30] sm:$0xff]
      %v988 = vld [vmem:[%s3 + $0x38] sm:$0xff]
      %v989 = vld [vmem:[%s3 + $0x40] sm:$0xff]
      %v990 = vld [vmem:[%s3 + $0x48] sm:$0xff]
      %v991 = vld [vmem:[%s3 + $0x50] sm:$0xff]
      %v992 = vld [vmem:[%s3 + $0x58] sm:$0xff]
      %v993 = vld [vmem:[%s3 + $0x60] sm:$0xff]
      %v994 = vld [vmem:[%s3 + $0x68] sm:$0xff]
      %v995 = vld [vmem:[%s3 + $0x70] sm:$0xff]
      %v996 = vld [vmem:[%s3 + $0x78] sm:$0xff]
      %v997 = vld [vmem:[%s3 + $0x80] sm:$0xff]
      %v998 = vld [vmem:[%s3 + $0x88] sm:$0xff]
      %v999 = vld [vmem:[%s3 + $0x90] sm:$0xff]
      %v1000 = vld [vmem:[%s3 + $0x98] sm:$0xff]
      %v1001 = vld [vmem:[%s3 + $0xa0] sm:$0xff]
      %v1002 = vld [vmem:[%s3 + $0xa8] sm:$0xff]
      %v1003 = vld [vmem:[%s3 + $0xb0] sm:$0xff]
      %v1004 = vld [vmem:[%s3 + $0xb8] sm:$0xff]
      %v1005 = vld [vmem:[%s3 + $0xc0] sm:$0xff]
      %v1006 = vld [vmem:[%s3 + $0xc8] sm:$0xff]
      %v1007 = vld [vmem:[%s3 + $0xd0] sm:$0xff]
      %v1008 = vld [vmem:[%s3 + $0xd8] sm:$0xff]
      %v1009 = vld [vmem:[%s3 + $0xe0] sm:$0xff]
      %v1010 = vld [vmem:[%s3 + $0xe8] sm:$0xff]
      %v1011 = vld [vmem:[%s3 + $0xf0] sm:$0xff]
      %v1012 = vld [vmem:[%s3 + $0xf8] sm:$0xff]
      %v1013 = vld [vmem:[%s3 + $0x100] sm:$0xff]
      %v1014 = vld [vmem:[%s3 + $0x108] sm:$0xff]
      %v1015 = vld [vmem:[%s3 + $0x110] sm:$0xff]
      %v1016 = vld [vmem:[%s3 + $0x118] sm:$0xff]
      %v1017 = vld [vmem:[%s3 + $0x120] sm:$0xff]
      %v1018 = vld [vmem:[%s3 + $0x128] sm:$0xff]
      %v1019 = vld [vmem:[%s3 + $0x130] sm:$0xff]
      %v1020 = vld [vmem:[%s3 + $0x138] sm:$0xff]
      %v1021 = vld [vmem:[%s3 + $0x140] sm:$0xff]
      %v1022 = vld [vmem:[%s3 + $0x148] sm:$0xff]
      %v1023 = vld [vmem:[%s3 + $0x150] sm:$0xff]
      %v1024 = vld [vmem:[%s3 + $0x158] sm:$0xff]
      %v1025 = vld [vmem:[%s3 + $0x160] sm:$0xff]
      %v1026 = vld [vmem:[%s3 + $0x168] sm:$0xff]
      %v1027 = vld [vmem:[%s3 + $0x170] sm:$0xff]
      %v1028 = vld [vmem:[%s3 + $0x178] sm:$0xff]
      %v1029 = vld [vmem:[%s3 + $0x180] sm:$0xff]
      %v1030 = vld [vmem:[%s3 + $0x188] sm:$0xff]
      %v1031 = vld [vmem:[%s3 + $0x190] sm:$0xff]
      %v1032 = vld [vmem:[%s3 + $0x198] sm:$0xff]
      %v1033 = vld [vmem:[%s3 + $0x1a0] sm:$0xff]
      %v1034 = vld [vmem:[%s3 + $0x1a8] sm:$0xff]
      %v1035 = vld [vmem:[%s3 + $0x1b0] sm:$0xff]
      %v1036 = vld [vmem:[%s3 + $0x1b8] sm:$0xff]
      %v1037 = vld [vmem:[%s3 + $0x1c0] sm:$0xff]
      %v1038 = vld [vmem:[%s3 + $0x1c8] sm:$0xff]
      %v1039 = vld [vmem:[%s3 + $0x1d0] sm:$0xff]
      %v1040 = vld [vmem:[%s3 + $0x1d8] sm:$0xff]
      %v1041 = vld [vmem:[%s3 + $0x1e0] sm:$0xff]
      %v1042 = vld [vmem:[%s3 + $0x1e8] sm:$0xff]
      %v1043 = vld [vmem:[%s3 + $0x1f0] sm:$0xff]
      %v1044 = vld [vmem:[%s3 + $0x1f8] sm:$0xff]
      %v1045 = vld [vmem:[%s3 + $0x200] sm:$0xff]
      %v1046 = vld [vmem:[%s3 + $0x208] sm:$0xff]
      %v1047 = vld [vmem:[%s3 + $0x210] sm:$0xff]
      %v1048 = vld [vmem:[%s3 + $0x218] sm:$0xff]
      %v1049 = vld [vmem:[%s3 + $0x220] sm:$0xff]
      %v1050 = vld [vmem:[%s3 + $0x228] sm:$0xff]
      %v1051 = vld [vmem:[%s3 + $0x230] sm:$0xff]
      %v1052 = vld [vmem:[%s3 + $0x238] sm:$0xff]
      %v1053 = vld [vmem:[%s3 + $0x240] sm:$0xff]
      %v1054 = vld [vmem:[%s3 + $0x248] sm:$0xff]
      %v1055 = vld [vmem:[%s3 + $0x250] sm:$0xff]
      %v1056 = vld [vmem:[%s3 + $0x258] sm:$0xff]
      %v1057 = vld [vmem:[%s3 + $0x260] sm:$0xff]
      %v1058 = vld [vmem:[%s3 + $0x268] sm:$0xff]
      %v1059 = vld [vmem:[%s3 + $0x270] sm:$0xff]
      %v1060 = vld [vmem:[%s3 + $0x278] sm:$0xff]
      %v1061 = vld [vmem:[%s3 + $0x280] sm:$0xff]
      %v1062 = vld [vmem:[%s3 + $0x288] sm:$0xff]
      %v1063 = vld [vmem:[%s3 + $0x290] sm:$0xff]
      %v1064 = vld [vmem:[%s3 + $0x298] sm:$0xff]
      %v1065 = vld [vmem:[%s3 + $0x2a0] sm:$0xff]
      %v1066 = vld [vmem:[%s3 + $0x2a8] sm:$0xff]
      %v1067 = vld [vmem:[%s3 + $0x2b0] sm:$0xff]
      %v1068 = vld [vmem:[%s3 + $0x2b8] sm:$0xff]
      %v1069 = vld [vmem:[%s3 + $0x2c0] sm:$0xff]
      %v1070 = vld [vmem:[%s3 + $0x2c8] sm:$0xff]
      %v1071 = vld [vmem:[%s3 + $0x2d0] sm:$0xff]
      %v1072 = vld [vmem:[%s3 + $0x2d8] sm:$0xff]
      %v1073 = vld [vmem:[%s3 + $0x2e0] sm:$0xff]
      %v1074 = vld [vmem:[%s3 + $0x2e8] sm:$0xff]
      %v1075 = vld [vmem:[%s3 + $0x2f0] sm:$0xff]
      %v1076 = vld [vmem:[%s3 + $0x2f8] sm:$0xff]
      %v1077 = vld [vmem:[%s3 + $0x300] sm:$0xff]
      %v1078 = vld [vmem:[%s3 + $0x308] sm:$0xff]
      %v1079 = vld [vmem:[%s3 + $0x310] sm:$0xff]
      %v1080 = vld [vmem:[%s3 + $0x318] sm:$0xff]
      %v1081 = vld [vmem:[%s3 + $0x320] sm:$0xff]
      %v1082 = vld [vmem:[%s3 + $0x328] sm:$0xff]
      %v1083 = vld [vmem:[%s3 + $0x330] sm:$0xff]
      %v1084 = vld [vmem:[%s3 + $0x338] sm:$0xff]
      %v1085 = vld [vmem:[%s3 + $0x340] sm:$0xff]
      %v1086 = vld [vmem:[%s3 + $0x348] sm:$0xff]
      %v1087 = vld [vmem:[%s3 + $0x350] sm:$0xff]
      %v1088 = vld [vmem:[%s3 + $0x358] sm:$0xff]
      %v1089 = vld [vmem:[%s3 + $0x360] sm:$0xff]
      %v1090 = vld [vmem:[%s3 + $0x368] sm:$0xff]
      %v1091 = vld [vmem:[%s3 + $0x370] sm:$0xff]
      %v1092 = vld [vmem:[%s3 + $0x378] sm:$0xff]
      %v1093 = vld [vmem:[%s3 + $0x380] sm:$0xff]
      %v1094 = vld [vmem:[%s3 + $0x388] sm:$0xff]
      %v1095 = vld [vmem:[%s3 + $0x390] sm:$0xff]
      %v1096 = vld [vmem:[%s3 + $0x398] sm:$0xff]
      %v1097 = vld [vmem:[%s3 + $0x3a0] sm:$0xff]
      %v1098 = vld [vmem:[%s3 + $0x3a8] sm:$0xff]
      %v1099 = vld [vmem:[%s3 + $0x3b0] sm:$0xff]
      %v1100 = vld [vmem:[%s3 + $0x3b8] sm:$0xff]
      %v1101 = vld [vmem:[%s3 + $0x3c0] sm:$0xff]
      %v1102 = vld [vmem:[%s3 + $0x3c8] sm:$0xff]
      %v1103 = vld [vmem:[%s3 + $0x3d0] sm:$0xff]
      %v1104 = vld [vmem:[%s3 + $0x3d8] sm:$0xff]
      %v1105 = vld [vmem:[%s3 + $0x3e0] sm:$0xff]
      %v1106 = vld [vmem:[%s3 + $0x3e8] sm:$0xff]
      %v1107 = vld [vmem:[%s3 + $0x3f0] sm:$0xff]
      %v1108 = vld [vmem:[%s3 + $0x3f8] sm:$0xff]
      %v1109 = vld [vmem:[%s3 + $0x400] sm:$0xff]
      %v1110 = vld [vmem:[%s3 + $0x408] sm:$0xff]
      %v1111 = vld [vmem:[%s3 + $0x410] sm:$0xff]
      %v1112 = vld [vmem:[%s3 + $0x418] sm:$0xff]
      %v1113 = vld [vmem:[%s3 + $0x420] sm:$0xff]
      %v1114 = vld [vmem:[%s3 + $0x428] sm:$0xff]
      %v1115 = vld [vmem:[%s3 + $0x430] sm:$0xff]
      %v1116 = vld [vmem:[%s3 + $0x438] sm:$0xff]
      %v1117 = vld [vmem:[%s3 + $0x440] sm:$0xff]
      %v1118 = vld [vmem:[%s3 + $0x448] sm:$0xff]
      %v1119 = vld [vmem:[%s3 + $0x450] sm:$0xff]
      %v1120 = vld [vmem:[%s3 + $0x458] sm:$0xff]
      %v1121 = vld [vmem:[%s3 + $0x460] sm:$0xff]
      %v1122 = vld [vmem:[%s3 + $0x468] sm:$0xff]
      %v1123 = vld [vmem:[%s3 + $0x470] sm:$0xff]
      %v1124 = vld [vmem:[%s3 + $0x478] sm:$0xff]
      %v1125 = vld [vmem:[%s3 + $0x480] sm:$0xff]
      %v1126 = vld [vmem:[%s3 + $0x488] sm:$0xff]
      %v1127 = vld [vmem:[%s3 + $0x490] sm:$0xff]
      %v1128 = vld [vmem:[%s3 + $0x498] sm:$0xff]
      %v1129 = vld [vmem:[%s3 + $0x4a0] sm:$0xff]
      %v1130 = vld [vmem:[%s3 + $0x4a8] sm:$0xff]
      %v1131 = vld [vmem:[%s3 + $0x4b0] sm:$0xff]
      %v1132 = vld [vmem:[%s3 + $0x4b8] sm:$0xff]
      %v1133 = vld [vmem:[%s3 + $0x4c0] sm:$0xff]
      %v1134 = vld [vmem:[%s3 + $0x4c8] sm:$0xff]
      %v1135 = vld [vmem:[%s3 + $0x4d0] sm:$0xff]
      %v1136 = vld [vmem:[%s3 + $0x4d8] sm:$0xff]
      %v1137 = vld [vmem:[%s3 + $0x4e0] sm:$0xff]
      %v1138 = vld [vmem:[%s3 + $0x4e8] sm:$0xff]
      %v1139 = vld [vmem:[%s3 + $0x4f0] sm:$0xff]
      %v1140 = vld [vmem:[%s3 + $0x4f8] sm:$0xff]
      %v1141 = vld [vmem:[%s3 + $0x500] sm:$0xff]
      %v1142 = vld [vmem:[%s3 + $0x508] sm:$0xff]
      %v1143 = vld [vmem:[%s3 + $0x510] sm:$0xff]
      %v1144 = vld [vmem:[%s3 + $0x518] sm:$0xff]
      %v1145 = vld [vmem:[%s3 + $0x520] sm:$0xff]
      %v1146 = vld [vmem:[%s3 + $0x528] sm:$0xff]
      %v1147 = vld [vmem:[%s3 + $0x530] sm:$0xff]
      %v1148 = vld [vmem:[%s3 + $0x538] sm:$0xff]
      %v1149 = vld [vmem:[%s3 + $0x540] sm:$0xff]
      %v1150 = vld [vmem:[%s3 + $0x548] sm:$0xff]
      %v1151 = vld [vmem:[%s3 + $0x550] sm:$0xff]
      %v1152 = vld [vmem:[%s3 + $0x558] sm:$0xff]
      %v1153 = vld [vmem:[%s3 + $0x560] sm:$0xff]
      %v1154 = vld [vmem:[%s3 + $0x568] sm:$0xff]
      %v1155 = vld [vmem:[%s3 + $0x570] sm:$0xff]
      %v1156 = vld [vmem:[%s3 + $0x578] sm:$0xff]
      %v1157 = vld [vmem:[%s3 + $0x580] sm:$0xff]
      %v1158 = vld [vmem:[%s3 + $0x588] sm:$0xff]
      %v1159 = vld [vmem:[%s3 + $0x590] sm:$0xff]
      %v1160 = vld [vmem:[%s3 + $0x598] sm:$0xff]
      %v1161 = vld [vmem:[%s3 + $0x5a0] sm:$0xff]
      %v1162 = vld [vmem:[%s3 + $0x5a8] sm:$0xff]
      %v1163 = vld [vmem:[%s3 + $0x5b0] sm:$0xff]
      %v1164 = vld [vmem:[%s3 + $0x5b8] sm:$0xff]
      %v1165 = vld [vmem:[%s3 + $0x5c0] sm:$0xff]
      %v1166 = vld [vmem:[%s3 + $0x5c8] sm:$0xff]
      %v1167 = vld [vmem:[%s3 + $0x5d0] sm:$0xff]
      %v1168 = vld [vmem:[%s3 + $0x5d8] sm:$0xff]
      %v1169 = vld [vmem:[%s3 + $0x5e0] sm:$0xff]
      %v1170 = vld [vmem:[%s3 + $0x5e8] sm:$0xff]
      %v1171 = vld [vmem:[%s3 + $0x5f0] sm:$0xff]
      %v1172 = vld [vmem:[%s3 + $0x5f8] sm:$0xff]
      %v1173 = vld [vmem:[%s3 + $0x600] sm:$0xff]
      %v1174 = vld [vmem:[%s3 + $0x608] sm:$0xff]
      %v1175 = vld [vmem:[%s3 + $0x610] sm:$0xff]
      %v1176 = vld [vmem:[%s3 + $0x618] sm:$0xff]
      %v1177 = vld [vmem:[%s3 + $0x620] sm:$0xff]
      %v1178 = vld [vmem:[%s3 + $0x628] sm:$0xff]
      %v1179 = vld [vmem:[%s3 + $0x630] sm:$0xff]
      %v1180 = vld [vmem:[%s3 + $0x638] sm:$0xff]
      %v1181 = vld [vmem:[%s3 + $0x640] sm:$0xff]
      %v1182 = vld [vmem:[%s3 + $0x648] sm:$0xff]
      %v1183 = vld [vmem:[%s3 + $0x650] sm:$0xff]
      %v1184 = vld [vmem:[%s3 + $0x658] sm:$0xff]
      %v1185 = vld [vmem:[%s3 + $0x660] sm:$0xff]
      %v1186 = vld [vmem:[%s3 + $0x668] sm:$0xff]
      %v1187 = vld [vmem:[%s3 + $0x670] sm:$0xff]
      %v1188 = vld [vmem:[%s3 + $0x678] sm:$0xff]
      %v1189 = vld [vmem:[%s3 + $0x680] sm:$0xff]
      %v1190 = vld [vmem:[%s3 + $0x688] sm:$0xff]
      %v1191 = vld [vmem:[%s3 + $0x690] sm:$0xff]
      %v1192 = vld [vmem:[%s3 + $0x698] sm:$0xff]
      %v1193 = vld [vmem:[%s3 + $0x6a0] sm:$0xff]
      %v1194 = vld [vmem:[%s3 + $0x6a8] sm:$0xff]
      %v1195 = vld [vmem:[%s3 + $0x6b0] sm:$0xff]
      %v1196 = vld [vmem:[%s3 + $0x6b8] sm:$0xff]
      %v1197 = vld [vmem:[%s3 + $0x6c0] sm:$0xff]
      %v1198 = vld [vmem:[%s3 + $0x6c8] sm:$0xff]
      %v1199 = vld [vmem:[%s3 + $0x6d0] sm:$0xff]
      %v1200 = vld [vmem:[%s3 + $0x6d8] sm:$0xff]
      %v1201 = vld [vmem:[%s3 + $0x6e0] sm:$0xff]
      %v1202 = vld [vmem:[%s3 + $0x6e8] sm:$0xff]
      %v1203 = vld [vmem:[%s3 + $0x6f0] sm:$0xff]
      %v1204 = vld [vmem:[%s3 + $0x6f8] sm:$0xff]
      %v1205 = vld [vmem:[%s3 + $0x700] sm:$0xff]
      %v1206 = vld [vmem:[%s3 + $0x708] sm:$0xff]
      %v1207 = vld [vmem:[%s3 + $0x710] sm:$0xff]
      %v1208 = vld [vmem:[%s3 + $0x718] sm:$0xff]
      %v1209 = vld [vmem:[%s3 + $0x720] sm:$0xff]
      %v1210 = vld [vmem:[%s3 + $0x728] sm:$0xff]
      %v1211 = vld [vmem:[%s3 + $0x730] sm:$0xff]
      %v1212 = vld [vmem:[%s3 + $0x738] sm:$0xff]
      %v1213 = vld [vmem:[%s3 + $0x740] sm:$0xff]
      %v1214 = vld [vmem:[%s3 + $0x748] sm:$0xff]
      %v1215 = vld [vmem:[%s3 + $0x750] sm:$0xff]
      %v1216 = vld [vmem:[%s3 + $0x758] sm:$0xff]
      %v1217 = vld [vmem:[%s3 + $0x760] sm:$0xff]
      %v1218 = vld [vmem:[%s3 + $0x768] sm:$0xff]
      %v1219 = vld [vmem:[%s3 + $0x770] sm:$0xff]
      %v1220 = vld [vmem:[%s3 + $0x778] sm:$0xff]
      %v1221 = vld [vmem:[%s3 + $0x780] sm:$0xff]
      %v1222 = vld [vmem:[%s3 + $0x788] sm:$0xff]
      %v1223 = vld [vmem:[%s3 + $0x790] sm:$0xff]
      %v1224 = vld [vmem:[%s3 + $0x798] sm:$0xff]
      %v1225 = vld [vmem:[%s3 + $0x7a0] sm:$0xff]
      %v1226 = vld [vmem:[%s3 + $0x7a8] sm:$0xff]
      %v1227 = vld [vmem:[%s3 + $0x7b0] sm:$0xff]
      %v1228 = vld [vmem:[%s3 + $0x7b8] sm:$0xff]
      %v1229 = vld [vmem:[%s3 + $0x7c0] sm:$0xff]
      %v1230 = vld [vmem:[%s3 + $0x7c8] sm:$0xff]
      %v1231 = vld [vmem:[%s3 + $0x7d0] sm:$0xff]
      %v1232 = vld [vmem:[%s3 + $0x7d8] sm:$0xff]
      %v1233 = vld [vmem:[%s3 + $0x7e0] sm:$0xff]
      %v1234 = vld [vmem:[%s3 + $0x7e8] sm:$0xff]
      %v1235 = vld [vmem:[%s3 + $0x7f0] sm:$0xff]
      %v1236 = vld [vmem:[%s3 + $0x7f8] sm:$0xff]
      %v1237 = vld [vmem:[%s3 + $0x800] sm:$0xff]
      %v1238 = vld [vmem:[%s3 + $0x808] sm:$0xff]
      %v1239 = vld [vmem:[%s3 + $0x810] sm:$0xff]
      %v1240 = vld [vmem:[%s3 + $0x818] sm:$0xff]
      %v1241 = vld [vmem:[%s3 + $0x820] sm:$0xff]
      %v1242 = vld [vmem:[%s3 + $0x828] sm:$0xff]
      %v1243 = vld [vmem:[%s3 + $0x830] sm:$0xff]
      %v1244 = vld [vmem:[%s3 + $0x838] sm:$0xff]
      %v1245 = vld [vmem:[%s3 + $0x840] sm:$0xff]
      %v1246 = vld [vmem:[%s3 + $0x848] sm:$0xff]
      %v1247 = vld [vmem:[%s3 + $0x850] sm:$0xff]
      %v1248 = vld [vmem:[%s3 + $0x858] sm:$0xff]
      %v1249 = vld [vmem:[%s3 + $0x860] sm:$0xff]
      %v1250 = vld [vmem:[%s3 + $0x868] sm:$0xff]
      %v1251 = vld [vmem:[%s3 + $0x870] sm:$0xff]
      %v1252 = vld [vmem:[%s3 + $0x878] sm:$0xff]
      %v1253 = vld [vmem:[%s3 + $0x880] sm:$0xff]
      %v1254 = vld [vmem:[%s3 + $0x888] sm:$0xff]
      %v1255 = vld [vmem:[%s3 + $0x890] sm:$0xff]
      %v1256 = vld [vmem:[%s3 + $0x898] sm:$0xff]
      %v1257 = vld [vmem:[%s3 + $0x8a0] sm:$0xff]
      %v1258 = vld [vmem:[%s3 + $0x8a8] sm:$0xff]
      %v1259 = vld [vmem:[%s3 + $0x8b0] sm:$0xff]
      %v1260 = vld [vmem:[%s3 + $0x8b8] sm:$0xff]
      %v1261 = vld [vmem:[%s3 + $0x8c0] sm:$0xff]
      %v1262 = vld [vmem:[%s3 + $0x8c8] sm:$0xff]
      %v1263 = vld [vmem:[%s3 + $0x8d0] sm:$0xff]
      %v1264 = vld [vmem:[%s3 + $0x8d8] sm:$0xff]
      %v1265 = vld [vmem:[%s3 + $0x8e0] sm:$0xff]
      %v1266 = vld [vmem:[%s3 + $0x8e8] sm:$0xff]
      %v1267 = vld [vmem:[%s3 + $0x8f0] sm:$0xff]
      %v1268 = vld [vmem:[%s3 + $0x8f8] sm:$0xff]
      %v1269 = vld [vmem:[%s3 + $0x900] sm:$0xff]
      %v1270 = vld [vmem:[%s3 + $0x908] sm:$0xff]
      %v1271 = vld [vmem:[%s3 + $0x910] sm:$0xff]
      %v1272 = vld [vmem:[%s3 + $0x918] sm:$0xff]
      %v1273 = vld [vmem:[%s3 + $0x920] sm:$0xff]
      %v1274 = vld [vmem:[%s3 + $0x928] sm:$0xff]
      %v1275 = vld [vmem:[%s3 + $0x930] sm:$0xff]
      %v1276 = vld [vmem:[%s3 + $0x938] sm:$0xff]
      %v1277 = vld [vmem:[%s3 + $0x940] sm:$0xff]
      %v1278 = vld [vmem:[%s3 + $0x948] sm:$0xff]
      %v1279 = vld [vmem:[%s3 + $0x950] sm:$0xff]
      %v1280 = vld [vmem:[%s3 + $0x958] sm:$0xff]
      %v1281 = vld [vmem:[%s3 + $0x960] sm:$0xff]
      %v1282 = vld [vmem:[%s3 + $0x968] sm:$0xff]
      %v1283 = vld [vmem:[%s3 + $0x970] sm:$0xff]
      %v1284 = vld [vmem:[%s3 + $0x978] sm:$0xff]
      %v1285 = vld [vmem:[%s3 + $0x980] sm:$0xff]
      %v1286 = vld [vmem:[%s3 + $0x988] sm:$0xff]
      %v1287 = vld [vmem:[%s3 + $0x990] sm:$0xff]
      %v1288 = vld [vmem:[%s3 + $0x998] sm:$0xff]
      %v1289 = vld [vmem:[%s3 + $0x9a0] sm:$0xff]
      %v1290 = vld [vmem:[%s3 + $0x9a8] sm:$0xff]
      %v1291 = vld [vmem:[%s3 + $0x9b0] sm:$0xff]
      %v1292 = vld [vmem:[%s3 + $0x9b8] sm:$0xff]
      %v1293 = vld [vmem:[%s3 + $0x9c0] sm:$0xff]
      %v1294 = vld [vmem:[%s3 + $0x9c8] sm:$0xff]
      %v1295 = vld [vmem:[%s3 + $0x9d0] sm:$0xff]
      %v1296 = vld [vmem:[%s3 + $0x9d8] sm:$0xff]
      %v1297 = vld [vmem:[%s3 + $0x9e0] sm:$0xff]
      %v1298 = vld [vmem:[%s3 + $0x9e8] sm:$0xff]
      %v1299 = vld [vmem:[%s3 + $0x9f0] sm:$0xff]
      %v1300 = vld [vmem:[%s3 + $0x9f8] sm:$0xff]
      %v1301 = vld [vmem:[%s3 + $0xa00] sm:$0xff]
      %v1302 = vld [vmem:[%s3 + $0xa08] sm:$0xff]
      %v1303 = vld [vmem:[%s3 + $0xa10] sm:$0xff]
      %v1304 = vld [vmem:[%s3 + $0xa18] sm:$0xff]
      %v1305 = vld [vmem:[%s3 + $0xa20] sm:$0xff]
      %v1306 = vld [vmem:[%s3 + $0xa28] sm:$0xff]
      %v1307 = vld [vmem:[%s3 + $0xa30] sm:$0xff]
      %v1308 = vld [vmem:[%s3 + $0xa38] sm:$0xff]
      %v1309 = vld [vmem:[%s3 + $0xa40] sm:$0xff]
      %v1310 = vld [vmem:[%s3 + $0xa48] sm:$0xff]
      %v1311 = vld [vmem:[%s3 + $0xa50] sm:$0xff]
      %v1312 = vld [vmem:[%s3 + $0xa58] sm:$0xff]
      %v1313 = vld [vmem:[%s3 + $0xa60] sm:$0xff]
      %v1314 = vld [vmem:[%s3 + $0xa68] sm:$0xff]
      %v1315 = vld [vmem:[%s3 + $0xa70] sm:$0xff]
      %v1316 = vld [vmem:[%s3 + $0xa78] sm:$0xff]
      %v1317 = vld [vmem:[%s3 + $0xa80] sm:$0xff]
      %v1318 = vld [vmem:[%s3 + $0xa88] sm:$0xff]
      %v1319 = vld [vmem:[%s3 + $0xa90] sm:$0xff]
      %v1320 = vld [vmem:[%s3 + $0xa98] sm:$0xff]
      %v1321 = vld [vmem:[%s3 + $0xaa0] sm:$0xff]
      %v1322 = vld [vmem:[%s3 + $0xaa8] sm:$0xff]
      %v1323 = vld [vmem:[%s3 + $0xab0] sm:$0xff]
      %v1324 = vld [vmem:[%s3 + $0xab8] sm:$0xff]
      %v1325 = vld [vmem:[%s3 + $0xac0] sm:$0xff]
      %v1326 = vld [vmem:[%s3 + $0xac8] sm:$0xff]
      %v1327 = vld [vmem:[%s3 + $0xad0] sm:$0xff]
      %v1328 = vld [vmem:[%s3 + $0xad8] sm:$0xff]
      %v1329 = vld [vmem:[%s3 + $0xae0] sm:$0xff]
      %v1330 = vld [vmem:[%s3 + $0xae8] sm:$0xff]
      %v1331 = vld [vmem:[%s3 + $0xaf0] sm:$0xff]
      %v1332 = vld [vmem:[%s3 + $0xaf8] sm:$0xff]
      %v1333 = vld [vmem:[%s3 + $0xb00] sm:$0xff]
      %v1334 = vld [vmem:[%s3 + $0xb08] sm:$0xff]
      %v1335 = vld [vmem:[%s3 + $0xb10] sm:$0xff]
      %v1336 = vld [vmem:[%s3 + $0xb18] sm:$0xff]
      %v1337 = vld [vmem:[%s3 + $0xb20] sm:$0xff]
      %v1338 = vld [vmem:[%s3 + $0xb28] sm:$0xff]
      %v1339 = vld [vmem:[%s3 + $0xb30] sm:$0xff]
      %v1340 = vld [vmem:[%s3 + $0xb38] sm:$0xff]
      %v1341 = vld [vmem:[%s3 + $0xb40] sm:$0xff]
      %v1342 = vld [vmem:[%s3 + $0xb48] sm:$0xff]
      %v1343 = vld [vmem:[%s3 + $0xb50] sm:$0xff]
      %v1344 = vld [vmem:[%s3 + $0xb58] sm:$0xff]
      %v1345 = vld [vmem:[%s3 + $0xb60] sm:$0xff]
      %v1346 = vld [vmem:[%s3 + $0xb68] sm:$0xff]
      %v1347 = vld [vmem:[%s3 + $0xb70] sm:$0xff]
      %v1348 = vld [vmem:[%s3 + $0xb78] sm:$0xff]
      %v1349 = vld [vmem:[%s3 + $0xb80] sm:$0xff]
      %v1350 = vld [vmem:[%s3 + $0xb88] sm:$0xff]
      %v1351 = vld [vmem:[%s3 + $0xb90] sm:$0xff]
      %v1352 = vld [vmem:[%s3 + $0xb98] sm:$0xff]
      %v1353 = vld [vmem:[%s3 + $0xba0] sm:$0xff]
      %v1354 = vld [vmem:[%s3 + $0xba8] sm:$0xff]
      %v1355 = vld [vmem:[%s3 + $0xbb0] sm:$0xff]
      %v1356 = vld [vmem:[%s3 + $0xbb8] sm:$0xff]
      %v1357 = vld [vmem:[%s3 + $0xbc0] sm:$0xff]
      %v1358 = vld [vmem:[%s3 + $0xbc8] sm:$0xff]
      %v1359 = vld [vmem:[%s3 + $0xbd0] sm:$0xff]
      %v1360 = vld [vmem:[%s3 + $0xbd8] sm:$0xff]
      %v1361 = vld [vmem:[%s3 + $0xbe0] sm:$0xff]
      %v1362 = vld [vmem:[%s3 + $0xbe8] sm:$0xff]
      %v1363 = vld [vmem:[%s3 + $0xbf0] sm:$0xff]
      %v1364 = vld [vmem:[%s3 + $0xbf8] sm:$0xff]
      %v1365 = vld [vmem:[%s3 + $0xc00] sm:$0xff]
      %v1366 = vld [vmem:[%s3 + $0xc08] sm:$0xff]
      %v1367 = vld [vmem:[%s3 + $0xc10] sm:$0xff]
      %v1368 = vld [vmem:[%s3 + $0xc18] sm:$0xff]
      %v1369 = vld [vmem:[%s3 + $0xc20] sm:$0xff]
      %v1370 = vld [vmem:[%s3 + $0xc28] sm:$0xff]
      %v1371 = vld [vmem:[%s3 + $0xc30] sm:$0xff]
      %v1372 = vld [vmem:[%s3 + $0xc38] sm:$0xff]
      %v1373 = vld [vmem:[%s3 + $0xc40] sm:$0xff]
      %v1374 = vld [vmem:[%s3 + $0xc48] sm:$0xff]
      %v1375 = vld [vmem:[%s3 + $0xc50] sm:$0xff]
      %v1376 = vld [vmem:[%s3 + $0xc58] sm:$0xff]
      %v1377 = vld [vmem:[%s3 + $0xc60] sm:$0xff]
      %v1378 = vld [vmem:[%s3 + $0xc68] sm:$0xff]
      %v1379 = vld [vmem:[%s3 + $0xc70] sm:$0xff]
      %v1380 = vld [vmem:[%s3 + $0xc78] sm:$0xff]
      %v1381 = vld [vmem:[%s3 + $0xc80] sm:$0xff]
      %v1382 = vld [vmem:[%s3 + $0xc88] sm:$0xff]
      %v1383 = vld [vmem:[%s3 + $0xc90] sm:$0xff]
      %v1384 = vld [vmem:[%s3 + $0xc98] sm:$0xff]
      %v1385 = vld [vmem:[%s3 + $0xca0] sm:$0xff]
      %v1386 = vld [vmem:[%s3 + $0xca8] sm:$0xff]
      %v1387 = vld [vmem:[%s3 + $0xcb0] sm:$0xff]
      %v1388 = vld [vmem:[%s3 + $0xcb8] sm:$0xff]
      %v1389 = vld [vmem:[%s3 + $0xcc0] sm:$0xff]
      %v1390 = vld [vmem:[%s3 + $0xcc8] sm:$0xff]
      %v1391 = vld [vmem:[%s3 + $0xcd0] sm:$0xff]
      %v1392 = vld [vmem:[%s3 + $0xcd8] sm:$0xff]
      %v1393 = vld [vmem:[%s3 + $0xce0] sm:$0xff]
      %v1394 = vld [vmem:[%s3 + $0xce8] sm:$0xff]
      %v1395 = vld [vmem:[%s3 + $0xcf0] sm:$0xff]
      %v1396 = vld [vmem:[%s3 + $0xcf8] sm:$0xff]
      %v1397 = vld [vmem:[%s3 + $0xd00] sm:$0xff]
      %v1398 = vld [vmem:[%s3 + $0xd08] sm:$0xff]
      %v1399 = vld [vmem:[%s3 + $0xd10] sm:$0xff]
      %v1400 = vld [vmem:[%s3 + $0xd18] sm:$0xff]
      %v1401 = vld [vmem:[%s3 + $0xd20] sm:$0xff]
      %v1402 = vld [vmem:[%s3 + $0xd28] sm:$0xff]
      %v1403 = vld [vmem:[%s3 + $0xd30] sm:$0xff]
      %v1404 = vld [vmem:[%s3 + $0xd38] sm:$0xff]
      %v1405 = vld [vmem:[%s3 + $0xd40] sm:$0xff]
      %v1406 = vld [vmem:[%s3 + $0xd48] sm:$0xff]
      %v1407 = vld [vmem:[%s3 + $0xd50] sm:$0xff]
      %v1408 = vld [vmem:[%s3 + $0xd58] sm:$0xff]
      %v1409 = vld [vmem:[%s3 + $0xd60] sm:$0xff]
      %v1410 = vld [vmem:[%s3 + $0xd68] sm:$0xff]
      %v1411 = vld [vmem:[%s3 + $0xd70] sm:$0xff]
      %v1412 = vld [vmem:[%s3 + $0xd78] sm:$0xff]
      %v1413 = vld [vmem:[%s3 + $0xd80] sm:$0xff]
      %v1414 = vld [vmem:[%s3 + $0xd88] sm:$0xff]
      %v1415 = vld [vmem:[%s3 + $0xd90] sm:$0xff]
      %v1416 = vld [vmem:[%s3 + $0xd98] sm:$0xff]
      %v1417 = vld [vmem:[%s3 + $0xda0] sm:$0xff]
      %v1418 = vld [vmem:[%s3 + $0xda8] sm:$0xff]
      %v1419 = vld [vmem:[%s3 + $0xdb0] sm:$0xff]
      %v1420 = vld [vmem:[%s3 + $0xdb8] sm:$0xff]
      %v1421 = vld [vmem:[%s3 + $0xdc0] sm:$0xff]
      %v1422 = vld [vmem:[%s3 + $0xdc8] sm:$0xff]
      %v1423 = vld [vmem:[%s3 + $0xdd0] sm:$0xff]
      %v1424 = vld [vmem:[%s3 + $0xdd8] sm:$0xff]
      %v1425 = vld [vmem:[%s3 + $0xde0] sm:$0xff]
      %v1426 = vld [vmem:[%s3 + $0xde8] sm:$0xff]
      %v1427 = vld [vmem:[%s3 + $0xdf0] sm:$0xff]
      %v1428 = vld [vmem:[%s3 + $0xdf8] sm:$0xff]
      %v1429 = vld [vmem:[%s3 + $0xe00] sm:$0xff]
      %v1430 = vld [vmem:[%s3 + $0xe08] sm:$0xff]
      %v1431 = vld [vmem:[%s3 + $0xe10] sm:$0xff]
      %v1432 = vld [vmem:[%s3 + $0xe18] sm:$0xff]
      %v1433 = vld [vmem:[%s3 + $0xe20] sm:$0xff]
      %v1434 = vld [vmem:[%s3 + $0xe28] sm:$0xff]
      %v1435 = vld [vmem:[%s3 + $0xe30] sm:$0xff]
      %v1436 = vld [vmem:[%s3 + $0xe38] sm:$0xff]
      %v1437 = vld [vmem:[%s3 + $0xe40] sm:$0xff]
      %v1438 = vld [vmem:[%s3 + $0xe48] sm:$0xff]
      %v1439 = vld [vmem:[%s3 + $0xe50] sm:$0xff]
      %v1440 = vld [vmem:[%s3 + $0xe58] sm:$0xff]
      %v1441 = vld [vmem:[%s3 + $0xe60] sm:$0xff]
      %v1442 = vld [vmem:[%s3 + $0xe68] sm:$0xff]
      %v1443 = vld [vmem:[%s3 + $0xe70] sm:$0xff]
      %v1444 = vld [vmem:[%s3 + $0xe78] sm:$0xff]
      %v1445 = vld [vmem:[%s3 + $0xe80] sm:$0xff]
      %v1446 = vld [vmem:[%s3 + $0xe88] sm:$0xff]
      %v1447 = vld [vmem:[%s3 + $0xe90] sm:$0xff]
      %v1448 = vld [vmem:[%s3 + $0xe98] sm:$0xff]
      %v1449 = vld [vmem:[%s3 + $0xea0] sm:$0xff]
      %v1450 = vld [vmem:[%s3 + $0xea8] sm:$0xff]
      %v1451 = vld [vmem:[%s3 + $0xeb0] sm:$0xff]
      %v1452 = vld [vmem:[%s3 + $0xeb8] sm:$0xff]
      %v1453 = vld [vmem:[%s3 + $0xec0] sm:$0xff]
      %v1454 = vld [vmem:[%s3 + $0xec8] sm:$0xff]
      %v1455 = vld [vmem:[%s3 + $0xed0] sm:$0xff]
      %v1456 = vld [vmem:[%s3 + $0xed8] sm:$0xff]
      %v1457 = vld [vmem:[%s3 + $0xee0] sm:$0xff]
      %v1458 = vld [vmem:[%s3 + $0xee8] sm:$0xff]
      %v1459 = vld [vmem:[%s3 + $0xef0] sm:$0xff]
      %v1460 = vld [vmem:[%s3 + $0xef8] sm:$0xff]
      %v1461 = vld [vmem:[%s3 + $0xf00] sm:$0xff]
      %v1462 = vld [vmem:[%s3 + $0xf08] sm:$0xff]
      %v1463 = vld [vmem:[%s3 + $0xf10] sm:$0xff]
      %v1464 = vld [vmem:[%s3 + $0xf18] sm:$0xff]
      %v1465 = vld [vmem:[%s3 + $0xf20] sm:$0xff]
      %v1466 = vld [vmem:[%s3 + $0xf28] sm:$0xff]
      %v1467 = vld [vmem:[%s3 + $0xf30] sm:$0xff]
      %v1468 = vld [vmem:[%s3 + $0xf38] sm:$0xff]
      %v1469 = vld [vmem:[%s3 + $0xf40] sm:$0xff]
      %v1470 = vld [vmem:[%s3 + $0xf48] sm:$0xff]
      %v1471 = vld [vmem:[%s3 + $0xf50] sm:$0xff]
      %v1472 = vld [vmem:[%s3 + $0xf58] sm:$0xff]
      %v1473 = vld [vmem:[%s3 + $0xf60] sm:$0xff]
      %v1474 = vld [vmem:[%s3 + $0xf68] sm:$0xff]
      %v1475 = vld [vmem:[%s3 + $0xf70] sm:$0xff]
      %v1476 = vld [vmem:[%s3 + $0xf78] sm:$0xff]
      %v1477 = vld [vmem:[%s3 + $0xf80] sm:$0xff]
      %v1478 = vld [vmem:[%s3 + $0xf88] sm:$0xff]
      %v1479 = vld [vmem:[%s3 + $0xf90] sm:$0xff]
      %v1480 = vld [vmem:[%s3 + $0xf98] sm:$0xff]
      %v1481 = vld [vmem:[%s3 + $0xfa0] sm:$0xff]
      %v1482 = vld [vmem:[%s3 + $0xfa8] sm:$0xff]
      %v1483 = vld [vmem:[%s3 + $0xfb0] sm:$0xff]
      %v1484 = vld [vmem:[%s3 + $0xfb8] sm:$0xff]
      %v1485 = vld [vmem:[%s3 + $0xfc0] sm:$0xff]
      %v1486 = vld [vmem:[%s3 + $0xfc8] sm:$0xff]
      %v1487 = vld [vmem:[%s3 + $0xfd0] sm:$0xff]
      %v1488 = vld [vmem:[%s3 + $0xfd8] sm:$0xff]
      %v1489 = vld [vmem:[%s3 + $0xfe0] sm:$0xff]
      %v1490 = vld [vmem:[%s3 + $0xfe8] sm:$0xff]
      %v1491 = vld [vmem:[%s3 + $0xff0] sm:$0xff]
      %v1492 = vld [vmem:[%s3 + $0xff8] sm:$0xff]
      %v1493 = vld [vmem:[%s3 + $0x1000] sm:$0xff]
      %v1494 = vld [vmem:[%s3 + $0x1008] sm:$0xff]
      %v1495 = vld [vmem:[%s3 + $0x1010] sm:$0xff]
      %v1496 = vld [vmem:[%s3 + $0x1018] sm:$0xff]
      %v1497 = vld [vmem:[%s3 + $0x1020] sm:$0xff]
      %v1498 = vld [vmem:[%s3 + $0x1028] sm:$0xff]
      %v1499 = vld [vmem:[%s3 + $0x1030] sm:$0xff]
      %v1500 = vld [vmem:[%s3 + $0x1038] sm:$0xff]
      %v1501 = vld [vmem:[%s3 + $0x1040] sm:$0xff]
      %v1502 = vld [vmem:[%s3 + $0x1048] sm:$0xff]
      %v1503 = vld [vmem:[%s3 + $0x1050] sm:$0xff]
      %v1504 = vld [vmem:[%s3 + $0x1058] sm:$0xff]
      %v1505 = vld [vmem:[%s3 + $0x1060] sm:$0xff]
      %v1506 = vld [vmem:[%s3 + $0x1068] sm:$0xff]
      %v1507 = vld [vmem:[%s3 + $0x1070] sm:$0xff]
      %v1508 = vld [vmem:[%s3 + $0x1078] sm:$0xff]
      %v1509 = vld [vmem:[%s3 + $0x1080] sm:$0xff]
      %v1510 = vld [vmem:[%s3 + $0x1088] sm:$0xff]
      %v1511 = vld [vmem:[%s3 + $0x1090] sm:$0xff]
      %v1512 = vld [vmem:[%s3 + $0x1098] sm:$0xff]
      %v1513 = vld [vmem:[%s3 + $0x10a0] sm:$0xff]
      %v1514 = vld [vmem:[%s3 + $0x10a8] sm:$0xff]
      %v1515 = vld [vmem:[%s3 + $0x10b0] sm:$0xff]
      %v1516 = vld [vmem:[%s3 + $0x10b8] sm:$0xff]
      %v1517 = vld [vmem:[%s3 + $0x10c0] sm:$0xff]
      %v1518 = vld [vmem:[%s3 + $0x10c8] sm:$0xff]
      %v1519 = vld [vmem:[%s3 + $0x10d0] sm:$0xff]
      %v1520 = vld [vmem:[%s3 + $0x10d8] sm:$0xff]
      %v1521 = vld [vmem:[%s3 + $0x10e0] sm:$0xff]
      %v1522 = vld [vmem:[%s3 + $0x10e8] sm:$0xff]
      %v1523 = vld [vmem:[%s3 + $0x10f0] sm:$0xff]
      %v1524 = vld [vmem:[%s3 + $0x10f8] sm:$0xff]
      %v1525 = vld [vmem:[%s3 + $0x1100] sm:$0xff]
      %v1526 = vld [vmem:[%s3 + $0x1108] sm:$0xff]
      %v1527 = vld [vmem:[%s3 + $0x1110] sm:$0xff]
      %v1528 = vld [vmem:[%s3 + $0x1118] sm:$0xff]
      %v1529 = vld [vmem:[%s3 + $0x1120] sm:$0xff]
      %v1530 = vld [vmem:[%s3 + $0x1128] sm:$0xff]
      %v1531 = vld [vmem:[%s3 + $0x1130] sm:$0xff]
      %v1532 = vld [vmem:[%s3 + $0x1138] sm:$0xff]
      %v1533 = vld [vmem:[%s3 + $0x1140] sm:$0xff]
      %v1534 = vld [vmem:[%s3 + $0x1148] sm:$0xff]
      %v1535 = vld [vmem:[%s3 + $0x1150] sm:$0xff]
      %v1536 = vld [vmem:[%s3 + $0x1158] sm:$0xff]
      %v1537 = vld [vmem:[%s3 + $0x1160] sm:$0xff]
      %v1538 = vld [vmem:[%s3 + $0x1168] sm:$0xff]
      %v1539 = vld [vmem:[%s3 + $0x1170] sm:$0xff]
      %v1540 = vld [vmem:[%s3 + $0x1178] sm:$0xff]
      %v1541 = vld [vmem:[%s3 + $0x1180] sm:$0xff]
      %v1542 = vld [vmem:[%s3 + $0x1188] sm:$0xff]
      %v1543 = vld [vmem:[%s3 + $0x1190] sm:$0xff]
      %v1544 = vld [vmem:[%s3 + $0x1198] sm:$0xff]
      %v1545 = vld [vmem:[%s3 + $0x11a0] sm:$0xff]
      %v1546 = vld [vmem:[%s3 + $0x11a8] sm:$0xff]
      %v1547 = vld [vmem:[%s3 + $0x11b0] sm:$0xff]
      %v1548 = vld [vmem:[%s3 + $0x11b8] sm:$0xff]
      %v1549 = vld [vmem:[%s3 + $0x11c0] sm:$0xff]
      %v1550 = vld [vmem:[%s3 + $0x11c8] sm:$0xff]
      %v1551 = vld [vmem:[%s3 + $0x11d0] sm:$0xff]
      %v1552 = vld [vmem:[%s3 + $0x11d8] sm:$0xff]
      %v1553 = vld [vmem:[%s3 + $0x11e0] sm:$0xff]
      %v1554 = vld [vmem:[%s3 + $0x11e8] sm:$0xff]
      %v1555 = vld [vmem:[%s3 + $0x11f0] sm:$0xff]
      %v1556 = vld [vmem:[%s3 + $0x11f8] sm:$0xff]
      %v1557 = vld [vmem:[%s3 + $0x1200] sm:$0xff]
      %v1558 = vld [vmem:[%s3 + $0x1208] sm:$0xff]
      %v1559 = vld [vmem:[%s3 + $0x1210] sm:$0xff]
      %v1560 = vld [vmem:[%s3 + $0x1218] sm:$0xff]
      %v1561 = vld [vmem:[%s3 + $0x1220] sm:$0xff]
      %v1562 = vld [vmem:[%s3 + $0x1228] sm:$0xff]
      %v1563 = vld [vmem:[%s3 + $0x1230] sm:$0xff]
      %v1564 = vld [vmem:[%s3 + $0x1238] sm:$0xff]
      %v1565 = vld [vmem:[%s3 + $0x1240] sm:$0xff]
      %v1566 = vld [vmem:[%s3 + $0x1248] sm:$0xff]
      %v1567 = vld [vmem:[%s3 + $0x1250] sm:$0xff]
      %v1568 = vld [vmem:[%s3 + $0x1258] sm:$0xff]
      %v1569 = vld [vmem:[%s3 + $0x1260] sm:$0xff]
      %v1570 = vld [vmem:[%s3 + $0x1268] sm:$0xff]
      %v1571 = vld [vmem:[%s3 + $0x1270] sm:$0xff]
      %v1572 = vld [vmem:[%s3 + $0x1278] sm:$0xff]
      %v1573 = vld [vmem:[%s3 + $0x1280] sm:$0xff]
      %v1574 = vld [vmem:[%s3 + $0x1288] sm:$0xff]
      %v1575 = vld [vmem:[%s3 + $0x1290] sm:$0xff]
      %v1576 = vld [vmem:[%s3 + $0x1298] sm:$0xff]
      %v1577 = vld [vmem:[%s3 + $0x12a0] sm:$0xff]
      %v1578 = vld [vmem:[%s3 + $0x12a8] sm:$0xff]
      %v1579 = vld [vmem:[%s3 + $0x12b0] sm:$0xff]
      %v1580 = vld [vmem:[%s3 + $0x12b8] sm:$0xff]
      %v1581 = vld [vmem:[%s3 + $0x12c0] sm:$0xff]
      %v1582 = vld [vmem:[%s3 + $0x12c8] sm:$0xff]
      %v1583 = vld [vmem:[%s3 + $0x12d0] sm:$0xff]
      %v1584 = vld [vmem:[%s3 + $0x12d8] sm:$0xff]
      %v1585 = vld [vmem:[%s3 + $0x12e0] sm:$0xff]
      %v1586 = vld [vmem:[%s3 + $0x12e8] sm:$0xff]
      %v1587 = vld [vmem:[%s3 + $0x12f0] sm:$0xff]
      %v1588 = vld [vmem:[%s3 + $0x12f8] sm:$0xff]
      %v1589 = vld [vmem:[%s3 + $0x1300] sm:$0xff]
      %v1590 = vld [vmem:[%s3 + $0x1308] sm:$0xff]
      %v1591 = vld [vmem:[%s3 + $0x1310] sm:$0xff]
      %v1592 = vld [vmem:[%s3 + $0x1318] sm:$0xff]
      %v1593 = vld [vmem:[%s3 + $0x1320] sm:$0xff]
      %v1594 = vld [vmem:[%s3 + $0x1328] sm:$0xff]
      %v1595 = vld [vmem:[%s3 + $0x1330] sm:$0xff]
      %v1596 = vld [vmem:[%s3 + $0x1338] sm:$0xff]
      %v1597 = vld [vmem:[%s3 + $0x1340] sm:$0xff]
      %v1598 = vld [vmem:[%s3 + $0x1348] sm:$0xff]
      %v1599 = vld [vmem:[%s3 + $0x1350] sm:$0xff]
      %v1600 = vld [vmem:[%s3 + $0x1358] sm:$0xff]
      %v1601 = vld [vmem:[%s3 + $0x1360] sm:$0xff]
      %v1602 = vld [vmem:[%s3 + $0x1368] sm:$0xff]
      %v1603 = vld [vmem:[%s3 + $0x1370] sm:$0xff]
      %v1604 = vld [vmem:[%s3 + $0x1378] sm:$0xff]
      %v1605 = vld [vmem:[%s3 + $0x1380] sm:$0xff]
      %v1606 = vld [vmem:[%s3 + $0x1388] sm:$0xff]
      %v1607 = vld [vmem:[%s3 + $0x1390] sm:$0xff]
      %v1608 = vld [vmem:[%s3 + $0x1398] sm:$0xff]
      %v1609 = vld [vmem:[%s3 + $0x13a0] sm:$0xff]
      %v1610 = vld [vmem:[%s3 + $0x13a8] sm:$0xff]
      %v1611 = vld [vmem:[%s3 + $0x13b0] sm:$0xff]
      %v1612 = vld [vmem:[%s3 + $0x13b8] sm:$0xff]
      %v1613 = vld [vmem:[%s3 + $0x13c0] sm:$0xff]
      %v1614 = vld [vmem:[%s3 + $0x13c8] sm:$0xff]
      %v1615 = vld [vmem:[%s3 + $0x13d0] sm:$0xff]
      %v1616 = vld [vmem:[%s3 + $0x13d8] sm:$0xff]
      %v1617 = vld [vmem:[%s3 + $0x13e0] sm:$0xff]
      %v1618 = vld [vmem:[%s3 + $0x13e8] sm:$0xff]
      %v1619 = vld [vmem:[%s3 + $0x13f0] sm:$0xff]
      %v1620 = vld [vmem:[%s3 + $0x13f8] sm:$0xff]
      %v1621 = vld [vmem:[%s3 + $0x1400] sm:$0xff]
      %v1622 = vld [vmem:[%s3 + $0x1408] sm:$0xff]
      %v1623 = vld [vmem:[%s3 + $0x1410] sm:$0xff]
      %v1624 = vld [vmem:[%s3 + $0x1418] sm:$0xff]
      %v1625 = vld [vmem:[%s3 + $0x1420] sm:$0xff]
      %v1626 = vld [vmem:[%s3 + $0x1428] sm:$0xff]
      %v1627 = vld [vmem:[%s3 + $0x1430] sm:$0xff]
      %v1628 = vld [vmem:[%s3 + $0x1438] sm:$0xff]
      %v1629 = vld [vmem:[%s3 + $0x1440] sm:$0xff]
      %v1630 = vld [vmem:[%s3 + $0x1448] sm:$0xff]
      %v1631 = vld [vmem:[%s3 + $0x1450] sm:$0xff]
      %v1632 = vld [vmem:[%s3 + $0x1458] sm:$0xff]
      %v1633 = vld [vmem:[%s3 + $0x1460] sm:$0xff]
      %v1634 = vld [vmem:[%s3 + $0x1468] sm:$0xff]
      %v1635 = vld [vmem:[%s3 + $0x1470] sm:$0xff]
      %v1636 = vld [vmem:[%s3 + $0x1478] sm:$0xff]
      %v1637 = vld [vmem:[%s3 + $0x1480] sm:$0xff]
      %v1638 = vld [vmem:[%s3 + $0x1488] sm:$0xff]
      %v1639 = vld [vmem:[%s3 + $0x1490] sm:$0xff]
      %v1640 = vld [vmem:[%s3 + $0x1498] sm:$0xff]
      %v1641 = vld [vmem:[%s3 + $0x14a0] sm:$0xff]
      %v1642 = vld [vmem:[%s3 + $0x14a8] sm:$0xff]
      %v1643 = vld [vmem:[%s3 + $0x14b0] sm:$0xff]
      %v1644 = vld [vmem:[%s3 + $0x14b8] sm:$0xff]
      %v1645 = vld [vmem:[%s3 + $0x14c0] sm:$0xff]
      %v1646 = vld [vmem:[%s3 + $0x14c8] sm:$0xff]
      %v1647 = vld [vmem:[%s3 + $0x14d0] sm:$0xff]
      %v1648 = vld [vmem:[%s3 + $0x14d8] sm:$0xff]
      %v1649 = vld [vmem:[%s3 + $0x14e0] sm:$0xff]
      %v1650 = vld [vmem:[%s3 + $0x14e8] sm:$0xff]
      %v1651 = vld [vmem:[%s3 + $0x14f0] sm:$0xff]
      %v1652 = vld [vmem:[%s3 + $0x14f8] sm:$0xff]
      %v1653 = vld [vmem:[%s3 + $0x1500] sm:$0xff]
      %v1654 = vld [vmem:[%s3 + $0x1508] sm:$0xff]
      %v1655 = vld [vmem:[%s3 + $0x1510] sm:$0xff]
      %v1656 = vld [vmem:[%s3 + $0x1518] sm:$0xff]
      %v1657 = vld [vmem:[%s3 + $0x1520] sm:$0xff]
      %v1658 = vld [vmem:[%s3 + $0x1528] sm:$0xff]
      %v1659 = vld [vmem:[%s3 + $0x1530] sm:$0xff]
      %v1660 = vld [vmem:[%s3 + $0x1538] sm:$0xff]
      %v1661 = vld [vmem:[%s3 + $0x1540] sm:$0xff]
      %v1662 = vld [vmem:[%s3 + $0x1548] sm:$0xff]
      %v1663 = vld [vmem:[%s3 + $0x1550] sm:$0xff]
      %v1664 = vld [vmem:[%s3 + $0x1558] sm:$0xff]
      %v1665 = vld [vmem:[%s3 + $0x1560] sm:$0xff]
      %v1666 = vld [vmem:[%s3 + $0x1568] sm:$0xff]
      %v1667 = vld [vmem:[%s3 + $0x1570] sm:$0xff]
      %v1668 = vld [vmem:[%s3 + $0x1578] sm:$0xff]
      %v1669 = vld [vmem:[%s3 + $0x1580] sm:$0xff]
      %v1670 = vld [vmem:[%s3 + $0x1588] sm:$0xff]
      %v1671 = vld [vmem:[%s3 + $0x1590] sm:$0xff]
      %v1672 = vld [vmem:[%s3 + $0x1598] sm:$0xff]
      %v1673 = vld [vmem:[%s3 + $0x15a0] sm:$0xff]
      %v1674 = vld [vmem:[%s3 + $0x15a8] sm:$0xff]
      %v1675 = vld [vmem:[%s3 + $0x15b0] sm:$0xff]
      %v1676 = vld [vmem:[%s3 + $0x15b8] sm:$0xff]
      %v1677 = vld [vmem:[%s3 + $0x15c0] sm:$0xff]
      %v1678 = vld [vmem:[%s3 + $0x15c8] sm:$0xff]
      %v1679 = vld [vmem:[%s3 + $0x15d0] sm:$0xff]
      %v1680 = vld [vmem:[%s3 + $0x15d8] sm:$0xff]
      %v1681 = vld [vmem:[%s3 + $0x15e0] sm:$0xff]
      %v1682 = vld [vmem:[%s3 + $0x15e8] sm:$0xff]
      %v1683 = vld [vmem:[%s3 + $0x15f0] sm:$0xff]
      %v1684 = vld [vmem:[%s3 + $0x15f8] sm:$0xff]
      %v1685 = vld [vmem:[%s3 + $0x1600] sm:$0xff]
      %v1686 = vld [vmem:[%s3 + $0x1608] sm:$0xff]
      %v1687 = vld [vmem:[%s3 + $0x1610] sm:$0xff]
      %v1688 = vld [vmem:[%s3 + $0x1618] sm:$0xff]
      %v1689 = vld [vmem:[%s3 + $0x1620] sm:$0xff]
      %v1690 = vld [vmem:[%s3 + $0x1628] sm:$0xff]
      %v1691 = vld [vmem:[%s3 + $0x1630] sm:$0xff]
      %v1692 = vld [vmem:[%s3 + $0x1638] sm:$0xff]
      %v1693 = vld [vmem:[%s3 + $0x1640] sm:$0xff]
      %v1694 = vld [vmem:[%s3 + $0x1648] sm:$0xff]
      %v1695 = vld [vmem:[%s3 + $0x1650] sm:$0xff]
      %v1696 = vld [vmem:[%s3 + $0x1658] sm:$0xff]
      %v1697 = vld [vmem:[%s3 + $0x1660] sm:$0xff]
      %v1698 = vld [vmem:[%s3 + $0x1668] sm:$0xff]
      %v1699 = vld [vmem:[%s3 + $0x1670] sm:$0xff]
      %v1700 = vld [vmem:[%s3 + $0x1678] sm:$0xff]
      %v1701 = vld [vmem:[%s3 + $0x1680] sm:$0xff]
      %v1702 = vld [vmem:[%s3 + $0x1688] sm:$0xff]
      %v1703 = vld [vmem:[%s3 + $0x1690] sm:$0xff]
      %v1704 = vld [vmem:[%s3 + $0x1698] sm:$0xff]
      %v1705 = vld [vmem:[%s3 + $0x16a0] sm:$0xff]
      %v1706 = vld [vmem:[%s3 + $0x16a8] sm:$0xff]
      %v1707 = vld [vmem:[%s3 + $0x16b0] sm:$0xff]
      %v1708 = vld [vmem:[%s3 + $0x16b8] sm:$0xff]
      %v1709 = vld [vmem:[%s3 + $0x16c0] sm:$0xff]
      %v1710 = vld [vmem:[%s3 + $0x16c8] sm:$0xff]
      %v1711 = vld [vmem:[%s3 + $0x16d0] sm:$0xff]
      %v1712 = vld [vmem:[%s3 + $0x16d8] sm:$0xff]
      %v1713 = vld [vmem:[%s3 + $0x16e0] sm:$0xff]
      %v1714 = vld [vmem:[%s3 + $0x16e8] sm:$0xff]
      %v1715 = vld [vmem:[%s3 + $0x16f0] sm:$0xff]
      %v1716 = vld [vmem:[%s3 + $0x16f8] sm:$0xff]
      %v1717 = vld [vmem:[%s3 + $0x1700] sm:$0xff]
      %v1718 = vld [vmem:[%s3 + $0x1708] sm:$0xff]
      %v1719 = vld [vmem:[%s3 + $0x1710] sm:$0xff]
      %v1720 = vld [vmem:[%s3 + $0x1718] sm:$0xff]
      %v1721 = vld [vmem:[%s3 + $0x1720] sm:$0xff]
      %v1722 = vld [vmem:[%s3 + $0x1728] sm:$0xff]
      %v1723 = vld [vmem:[%s3 + $0x1730] sm:$0xff]
      %v1724 = vld [vmem:[%s3 + $0x1738] sm:$0xff]
      %v1725 = vld [vmem:[%s3 + $0x1740] sm:$0xff]
      %v1726 = vld [vmem:[%s3 + $0x1748] sm:$0xff]
      %v1727 = vld [vmem:[%s3 + $0x1750] sm:$0xff]
      %v1728 = vld [vmem:[%s3 + $0x1758] sm:$0xff]
      %v1729 = vld [vmem:[%s3 + $0x1760] sm:$0xff]
      %v1730 = vld [vmem:[%s3 + $0x1768] sm:$0xff]
      %v1731 = vld [vmem:[%s3 + $0x1770] sm:$0xff]
      %v1732 = vld [vmem:[%s3 + $0x1778] sm:$0xff]
      %v1733 = vld [vmem:[%s3 + $0x1780] sm:$0xff]
      %v1734 = vld [vmem:[%s3 + $0x1788] sm:$0xff]
      %v1735 = vld [vmem:[%s3 + $0x1790] sm:$0xff]
      %v1736 = vld [vmem:[%s3 + $0x1798] sm:$0xff]
      %v1737 = vld [vmem:[%s3 + $0x17a0] sm:$0xff]
      %v1738 = vld [vmem:[%s3 + $0x17a8] sm:$0xff]
      %v1739 = vld [vmem:[%s3 + $0x17b0] sm:$0xff]
      %v1740 = vld [vmem:[%s3 + $0x17b8] sm:$0xff]
      %v1741 = vld [vmem:[%s3 + $0x17c0] sm:$0xff]
      %v1742 = vld [vmem:[%s3 + $0x17c8] sm:$0xff]
      %v1743 = vld [vmem:[%s3 + $0x17d0] sm:$0xff]
      %v1744 = vld [vmem:[%s3 + $0x17d8] sm:$0xff]
      %v1745 = vld [vmem:[%s3 + $0x17e0] sm:$0xff]
      %v1746 = vld [vmem:[%s3 + $0x17e8] sm:$0xff]
      %v1747 = vld [vmem:[%s3 + $0x17f0] sm:$0xff]
      %v1748 = vld [vmem:[%s3 + $0x17f8] sm:$0xff]
      %v1749 = vld [vmem:[%s3 + $0x1800] sm:$0xff]
      %v1750 = vld [vmem:[%s3 + $0x1808] sm:$0xff]
      %v1751 = vld [vmem:[%s3 + $0x1810] sm:$0xff]
      %v1752 = vld [vmem:[%s3 + $0x1818] sm:$0xff]
      %v1753 = vld [vmem:[%s3 + $0x1820] sm:$0xff]
      %v1754 = vld [vmem:[%s3 + $0x1828] sm:$0xff]
      %v1755 = vld [vmem:[%s3 + $0x1830] sm:$0xff]
      %v1756 = vld [vmem:[%s3 + $0x1838] sm:$0xff]
      %v1757 = vld [vmem:[%s3 + $0x1840] sm:$0xff]
      %v1758 = vld [vmem:[%s3 + $0x1848] sm:$0xff]
      %v1759 = vld [vmem:[%s3 + $0x1850] sm:$0xff]
      %v1760 = vld [vmem:[%s3 + $0x1858] sm:$0xff]
      %v1761 = vld [vmem:[%s3 + $0x1860] sm:$0xff]
      %v1762 = vld [vmem:[%s3 + $0x1868] sm:$0xff]
      %v1763 = vld [vmem:[%s3 + $0x1870] sm:$0xff]
      %v1764 = vld [vmem:[%s3 + $0x1878] sm:$0xff]
      %v1765 = vld [vmem:[%s3 + $0x1880] sm:$0xff]
      %v1766 = vld [vmem:[%s3 + $0x1888] sm:$0xff]
      %v1767 = vld [vmem:[%s3 + $0x1890] sm:$0xff]
      %v1768 = vld [vmem:[%s3 + $0x1898] sm:$0xff]
      %v1769 = vld [vmem:[%s3 + $0x18a0] sm:$0xff]
      %v1770 = vld [vmem:[%s3 + $0x18a8] sm:$0xff]
      %v1771 = vld [vmem:[%s3 + $0x18b0] sm:$0xff]
      %v1772 = vld [vmem:[%s3 + $0x18b8] sm:$0xff]
      %v1773 = vld [vmem:[%s3 + $0x18c0] sm:$0xff]
      %v1774 = vld [vmem:[%s3 + $0x18c8] sm:$0xff]
      %v1775 = vld [vmem:[%s3 + $0x18d0] sm:$0xff]
      %v1776 = vld [vmem:[%s3 + $0x18d8] sm:$0xff]
      %v1777 = vld [vmem:[%s3 + $0x18e0] sm:$0xff]
      %v1778 = vld [vmem:[%s3 + $0x18e8] sm:$0xff]
      %v1779 = vld [vmem:[%s3 + $0x18f0] sm:$0xff]
      %v1780 = vld [vmem:[%s3 + $0x18f8] sm:$0xff]
      %v1781 = vld [vmem:[%s3 + $0x1900] sm:$0xff]
      %v1782 = vld [vmem:[%s3 + $0x1908] sm:$0xff]
      %v1783 = vld [vmem:[%s3 + $0x1910] sm:$0xff]
      %v1784 = vld [vmem:[%s3 + $0x1918] sm:$0xff]
      %v1785 = vld [vmem:[%s3 + $0x1920] sm:$0xff]
      %v1786 = vld [vmem:[%s3 + $0x1928] sm:$0xff]
      %v1787 = vld [vmem:[%s3 + $0x1930] sm:$0xff]
      %v1788 = vld [vmem:[%s3 + $0x1938] sm:$0xff]
      %v1789 = vld [vmem:[%s3 + $0x1940] sm:$0xff]
      %v1790 = vld [vmem:[%s3 + $0x1948] sm:$0xff]
      %v1791 = vld [vmem:[%s3 + $0x1950] sm:$0xff]
      %v1792 = vld [vmem:[%s3 + $0x1958] sm:$0xff]
      %v1793 = vld [vmem:[%s3 + $0x1960] sm:$0xff]
      %v1794 = vld [vmem:[%s3 + $0x1968] sm:$0xff]
      %v1795 = vld [vmem:[%s3 + $0x1970] sm:$0xff]
      %v1796 = vld [vmem:[%s3 + $0x1978] sm:$0xff]
      %v1797 = vld [vmem:[%s3 + $0x1980] sm:$0xff]
      %v1798 = vld [vmem:[%s3 + $0x1988] sm:$0xff]
      %v1799 = vld [vmem:[%s3 + $0x1990] sm:$0xff]
      %v1800 = vld [vmem:[%s3 + $0x1998] sm:$0xff]
      %v1801 = vld [vmem:[%s3 + $0x19a0] sm:$0xff]
      %v1802 = vld [vmem:[%s3 + $0x19a8] sm:$0xff]
      %v1803 = vld [vmem:[%s3 + $0x19b0] sm:$0xff]
      %v1804 = vld [vmem:[%s3 + $0x19b8] sm:$0xff]
      %v1805 = vld [vmem:[%s3 + $0x19c0] sm:$0xff]
      %v1806 = vld [vmem:[%s3 + $0x19c8] sm:$0xff]
      %v1807 = vld [vmem:[%s3 + $0x19d0] sm:$0xff]
      %v1808 = vld [vmem:[%s3 + $0x19d8] sm:$0xff]
      %v1809 = vld [vmem:[%s3 + $0x19e0] sm:$0xff]
      %v1810 = vld [vmem:[%s3 + $0x19e8] sm:$0xff]
      %v1811 = vld [vmem:[%s3 + $0x19f0] sm:$0xff]
      %v1812 = vld [vmem:[%s3 + $0x19f8] sm:$0xff]
      %v1813 = vld [vmem:[%s3 + $0x1a00] sm:$0xff]
      %v1814 = vld [vmem:[%s3 + $0x1a08] sm:$0xff]
      %v1815 = vld [vmem:[%s3 + $0x1a10] sm:$0xff]
      %v1816 = vld [vmem:[%s3 + $0x1a18] sm:$0xff]
      %v1817 = vld [vmem:[%s3 + $0x1a20] sm:$0xff]
      %v1818 = vld [vmem:[%s3 + $0x1a28] sm:$0xff]
      %v1819 = vld [vmem:[%s3 + $0x1a30] sm:$0xff]
      %v1820 = vld [vmem:[%s3 + $0x1a38] sm:$0xff]
      %v1821 = vld [vmem:[%s3 + $0x1a40] sm:$0xff]
      %v1822 = vld [vmem:[%s3 + $0x1a48] sm:$0xff]
      %v1823 = vld [vmem:[%s3 + $0x1a50] sm:$0xff]
      %v1824 = vld [vmem:[%s3 + $0x1a58] sm:$0xff]
      %v1825 = vld [vmem:[%s3 + $0x1a60] sm:$0xff]
      %v1826 = vld [vmem:[%s3 + $0x1a68] sm:$0xff]
      %v1827 = vld [vmem:[%s3 + $0x1a70] sm:$0xff]
      %v1828 = vld [vmem:[%s3 + $0x1a78] sm:$0xff]
      %v1829 = vld [vmem:[%s3 + $0x1a80] sm:$0xff]
      %v1830 = vld [vmem:[%s3 + $0x1a88] sm:$0xff]
      %v1831 = vld [vmem:[%s3 + $0x1a90] sm:$0xff]
      %v1832 = vld [vmem:[%s3 + $0x1a98] sm:$0xff]
      %v1833 = vld [vmem:[%s3 + $0x1aa0] sm:$0xff]
      %v1834 = vld [vmem:[%s3 + $0x1aa8] sm:$0xff]
      %v1835 = vld [vmem:[%s3 + $0x1ab0] sm:$0xff]
      %v1836 = vld [vmem:[%s3 + $0x1ab8] sm:$0xff]
      %v1837 = vld [vmem:[%s3 + $0x1ac0] sm:$0xff]
      %v1838 = vld [vmem:[%s3 + $0x1ac8] sm:$0xff]
      %v1839 = vld [vmem:[%s3 + $0x1ad0] sm:$0xff]
      %v1840 = vld [vmem:[%s3 + $0x1ad8] sm:$0xff]
      %v1841 = vld [vmem:[%s3 + $0x1ae0] sm:$0xff]
      %v1842 = vld [vmem:[%s3 + $0x1ae8] sm:$0xff]
      %v1843 = vld [vmem:[%s3 + $0x1af0] sm:$0xff]
      %v1844 = vld [vmem:[%s3 + $0x1af8] sm:$0xff]
      %v1845 = vld [vmem:[%s3 + $0x1b00] sm:$0xff]
      %v1846 = vld [vmem:[%s3 + $0x1b08] sm:$0xff]
      %v1847 = vld [vmem:[%s3 + $0x1b10] sm:$0xff]
      %v1848 = vld [vmem:[%s3 + $0x1b18] sm:$0xff]
      %v1849 = vld [vmem:[%s3 + $0x1b20] sm:$0xff]
      %v1850 = vld [vmem:[%s3 + $0x1b28] sm:$0xff]
      %v1851 = vld [vmem:[%s3 + $0x1b30] sm:$0xff]
      %v1852 = vld [vmem:[%s3 + $0x1b38] sm:$0xff]
      %v1853 = vld [vmem:[%s3 + $0x1b40] sm:$0xff]
      %v1854 = vld [vmem:[%s3 + $0x1b48] sm:$0xff]
      %v1855 = vld [vmem:[%s3 + $0x1b50] sm:$0xff]
      %v1856 = vld [vmem:[%s3 + $0x1b58] sm:$0xff]
      %v1857 = vld [vmem:[%s3 + $0x1b60] sm:$0xff]
      %v1858 = vld [vmem:[%s3 + $0x1b68] sm:$0xff]
      %v1859 = vld [vmem:[%s3 + $0x1b70] sm:$0xff]
      %v1860 = vld [vmem:[%s3 + $0x1b78] sm:$0xff]
      %v1861 = vld [vmem:[%s3 + $0x1b80] sm:$0xff]
      %v1862 = vld [vmem:[%s3 + $0x1b88] sm:$0xff]
      %v1863 = vld [vmem:[%s3 + $0x1b90] sm:$0xff]
      %v1864 = vld [vmem:[%s3 + $0x1b98] sm:$0xff]
      %v1865 = vld [vmem:[%s3 + $0x1ba0] sm:$0xff]
      %v1866 = vld [vmem:[%s3 + $0x1ba8] sm:$0xff]
      %v1867 = vld [vmem:[%s3 + $0x1bb0] sm:$0xff]
      %v1868 = vld [vmem:[%s3 + $0x1bb8] sm:$0xff]
      %v1869 = vld [vmem:[%s3 + $0x1bc0] sm:$0xff]
      %v1870 = vld [vmem:[%s3 + $0x1bc8] sm:$0xff]
      %v1871 = vld [vmem:[%s3 + $0x1bd0] sm:$0xff]
      %v1872 = vld [vmem:[%s3 + $0x1bd8] sm:$0xff]
      %v1873 = vld [vmem:[%s3 + $0x1be0] sm:$0xff]
      %v1874 = vld [vmem:[%s3 + $0x1be8] sm:$0xff]
      %v1875 = vld [vmem:[%s3 + $0x1bf0] sm:$0xff]
      %v1876 = vld [vmem:[%s3 + $0x1bf8] sm:$0xff]
      %v1877 = vld [vmem:[%s3 + $0x1c00] sm:$0xff]
      %v1878 = vld [vmem:[%s3 + $0x1c08] sm:$0xff]
      %v1879 = vld [vmem:[%s3 + $0x1c10] sm:$0xff]
      %v1880 = vld [vmem:[%s3 + $0x1c18] sm:$0xff]
      %v1881 = vld [vmem:[%s3 + $0x1c20] sm:$0xff]
      %v1882 = vld [vmem:[%s3 + $0x1c28] sm:$0xff]
      %v1883 = vld [vmem:[%s3 + $0x1c30] sm:$0xff]
      %v1884 = vld [vmem:[%s3 + $0x1c38] sm:$0xff]
      %v1885 = vld [vmem:[%s3 + $0x1c40] sm:$0xff]
      %v1886 = vld [vmem:[%s3 + $0x1c48] sm:$0xff]
      %v1887 = vld [vmem:[%s3 + $0x1c50] sm:$0xff]
      %v1888 = vld [vmem:[%s3 + $0x1c58] sm:$0xff]
      %v1889 = vld [vmem:[%s3 + $0x1c60] sm:$0xff]
      %v1890 = vld [vmem:[%s3 + $0x1c68] sm:$0xff]
      %v1891 = vld [vmem:[%s3 + $0x1c70] sm:$0xff]
      %v1892 = vld [vmem:[%s3 + $0x1c78] sm:$0xff]
      %v1893 = vld [vmem:[%s3 + $0x1c80] sm:$0xff]
      %v1894 = vld [vmem:[%s3 + $0x1c88] sm:$0xff]
      %v1895 = vld [vmem:[%s3 + $0x1c90] sm:$0xff]
      %v1896 = vld [vmem:[%s3 + $0x1c98] sm:$0xff]
      %v1897 = vld [vmem:[%s3 + $0x1ca0] sm:$0xff]
      %v1898 = vld [vmem:[%s3 + $0x1ca8] sm:$0xff]
      %v1899 = vld [vmem:[%s3 + $0x1cb0] sm:$0xff]
      %v1900 = vld [vmem:[%s3 + $0x1cb8] sm:$0xff]
      %v1901 = vld [vmem:[%s3 + $0x1cc0] sm:$0xff]
      %v1902 = vld [vmem:[%s3 + $0x1cc8] sm:$0xff]
      %v1903 = vld [vmem:[%s3 + $0x1cd0] sm:$0xff]
      %v1904 = vld [vmem:[%s3 + $0x1cd8] sm:$0xff]
      %v1905 = vld [vmem:[%s3 + $0x1ce0] sm:$0xff]
      %v1906 = vld [vmem:[%s3 + $0x1ce8] sm:$0xff]
      %v1907 = vld [vmem:[%s3 + $0x1cf0] sm:$0xff]
      %v1908 = vld [vmem:[%s3 + $0x1cf8] sm:$0xff]
      %v1909 = vld [vmem:[%s3 + $0x1d00] sm:$0xff]
      %v1910 = vld [vmem:[%s3 + $0x1d08] sm:$0xff]
      %v1911 = vld [vmem:[%s3 + $0x1d10] sm:$0xff]
      %v1912 = vld [vmem:[%s3 + $0x1d18] sm:$0xff]
      %v1913 = vld [vmem:[%s3 + $0x1d20] sm:$0xff]
      %v1914 = vld [vmem:[%s3 + $0x1d28] sm:$0xff]
      %v1915 = vld [vmem:[%s3 + $0x1d30] sm:$0xff]
      %v1916 = vld [vmem:[%s3 + $0x1d38] sm:$0xff]
      %v1917 = vld [vmem:[%s3 + $0x1d40] sm:$0xff]
      %v1918 = vld [vmem:[%s3 + $0x1d48] sm:$0xff]
      %v1919 = vld [vmem:[%s3 + $0x1d50] sm:$0xff]
      %v1920 = vld [vmem:[%s3 + $0x1d58] sm:$0xff]
      %v1921 = vld [vmem:[%s3 + $0x1d60] sm:$0xff]
      %v1922 = vld [vmem:[%s3 + $0x1d68] sm:$0xff]
      %v1923 = vld [vmem:[%s3 + $0x1d70] sm:$0xff]
      %v1924 = vld [vmem:[%s3 + $0x1d78] sm:$0xff]
      %v1925 = vld [vmem:[%s3 + $0x1d80] sm:$0xff]
      %v1926 = vld [vmem:[%s3 + $0x1d88] sm:$0xff]
      %v1927 = vld [vmem:[%s3 + $0x1d90] sm:$0xff]
      %v1928 = vld [vmem:[%s3 + $0x1d98] sm:$0xff]
      %v1929 = vld [vmem:[%s3 + $0x1da0] sm:$0xff]
      %v1930 = vld [vmem:[%s3 + $0x1da8] sm:$0xff]
      %v1931 = vld [vmem:[%s3 + $0x1db0] sm:$0xff]
      %v1932 = vld [vmem:[%s3 + $0x1db8] sm:$0xff]
      %v1933 = vld [vmem:[%s3 + $0x1dc0] sm:$0xff]
      %v1934 = vld [vmem:[%s3 + $0x1dc8] sm:$0xff]
      %v1935 = vld [vmem:[%s3 + $0x1dd0] sm:$0xff]
      %v1936 = vld [vmem:[%s3 + $0x1dd8] sm:$0xff]
      %v1937 = vld [vmem:[%s3 + $0x1de0] sm:$0xff]
      %v1938 = vld [vmem:[%s3 + $0x1de8] sm:$0xff]
      %v1939 = vld [vmem:[%s3 + $0x1df0] sm:$0xff]
      %v1940 = vld [vmem:[%s3 + $0x1df8] sm:$0xff]
      %v1941 = vld [vmem:[%s3 + $0x1e00] sm:$0xff]
      %v1942 = vld [vmem:[%s3 + $0x1e08] sm:$0xff]
      %v1943 = vld [vmem:[%s3 + $0x1e10] sm:$0xff]
      %v1944 = vld [vmem:[%s3 + $0x1e18] sm:$0xff]
      %v1945 = vld [vmem:[%s3 + $0x1e20] sm:$0xff]
      %v1946 = vld [vmem:[%s3 + $0x1e28] sm:$0xff]
      %v1947 = vld [vmem:[%s3 + $0x1e30] sm:$0xff]
      %v1948 = vld [vmem:[%s3 + $0x1e38] sm:$0xff]
      %v1949 = vld [vmem:[%s3 + $0x1e40] sm:$0xff]
      %v1950 = vld [vmem:[%s3 + $0x1e48] sm:$0xff]
      %v1951 = vld [vmem:[%s3 + $0x1e50] sm:$0xff]
      %v1952 = vld [vmem:[%s3 + $0x1e58] sm:$0xff]
      %v1953 = vld [vmem:[%s3 + $0x1e60] sm:$0xff]
      %v1954 = vld [vmem:[%s3 + $0x1e68] sm:$0xff]
      %v1955 = vld [vmem:[%s3 + $0x1e70] sm:$0xff]
      %v1956 = vld [vmem:[%s3 + $0x1e78] sm:$0xff]
      %v1957 = vld [vmem:[%s3 + $0x1e80] sm:$0xff]
      %v1958 = vld [vmem:[%s3 + $0x1e88] sm:$0xff]
      %v1959 = vld [vmem:[%s3 + $0x1e90] sm:$0xff]
      %v1960 = vld [vmem:[%s3 + $0x1e98] sm:$0xff]
      %v1961 = vld [vmem:[%s3 + $0x1ea0] sm:$0xff]
      %v1962 = vld [vmem:[%s3 + $0x1ea8] sm:$0xff]
      %v1963 = vld [vmem:[%s3 + $0x1eb0] sm:$0xff]
      %v1964 = vld [vmem:[%s3 + $0x1eb8] sm:$0xff]
      %v1965 = vld [vmem:[%s3 + $0x1ec0] sm:$0xff]
      %v1966 = vld [vmem:[%s3 + $0x1ec8] sm:$0xff]
      %v1967 = vld [vmem:[%s3 + $0x1ed0] sm:$0xff]
      %v1968 = vld [vmem:[%s3 + $0x1ed8] sm:$0xff]
      %v1969 = vld [vmem:[%s3 + $0x1ee0] sm:$0xff]
      %v1970 = vld [vmem:[%s3 + $0x1ee8] sm:$0xff]
      %v1971 = vld [vmem:[%s3 + $0x1ef0] sm:$0xff]
      %v1972 = vld [vmem:[%s3 + $0x1ef8] sm:$0xff]
      %v1973 = vld [vmem:[%s3 + $0x1f00] sm:$0xff]
      %v1974 = vld [vmem:[%s3 + $0x1f08] sm:$0xff]
      %v1975 = vld [vmem:[%s3 + $0x1f10] sm:$0xff]
      %v1976 = vld [vmem:[%s3 + $0x1f18] sm:$0xff]
      %v1977 = vld [vmem:[%s3 + $0x1f20] sm:$0xff]
      %v1978 = vld [vmem:[%s3 + $0x1f28] sm:$0xff]
      %v1979 = vld [vmem:[%s3 + $0x1f30] sm:$0xff]
      %v1980 = vld [vmem:[%s3 + $0x1f38] sm:$0xff]
      %v1981 = vld [vmem:[%s3 + $0x1f40] sm:$0xff]
      %v1982 = vld [vmem:[%s3 + $0x1f48] sm:$0xff]
      %v1983 = vld [vmem:[%s3 + $0x1f50] sm:$0xff]
      %v1984 = vld [vmem:[%s3 + $0x1f58] sm:$0xff]
      %v1985 = vld [vmem:[%s3 + $0x1f60] sm:$0xff]
      %v1986 = vld [vmem:[%s3 + $0x1f68] sm:$0xff]
      %v1987 = vld [vmem:[%s3 + $0x1f70] sm:$0xff]
      %v1988 = vld [vmem:[%s3 + $0x1f78] sm:$0xff]
      %v1989 = vld [vmem:[%s3 + $0x1f80] sm:$0xff]
      %v1990 = vld [vmem:[%s3 + $0x1f88] sm:$0xff]
      %v1991 = vld [vmem:[%s3 + $0x1f90] sm:$0xff]
      %v1992 = vld [vmem:[%s3 + $0x1f98] sm:$0xff]
      %v1993 = vld [vmem:[%s3 + $0x1fa0] sm:$0xff]
      %v1994 = vld [vmem:[%s3 + $0x1fa8] sm:$0xff]
      %v1995 = vld [vmem:[%s3 + $0x1fb0] sm:$0xff]
      %v1996 = vld [vmem:[%s3 + $0x1fb8] sm:$0xff]
      %v1997 = vld [vmem:[%s3 + $0x1fc0] sm:$0xff]
      %v1998 = vld [vmem:[%s3 + $0x1fc8] sm:$0xff]
      %v1999 = vld [vmem:[%s3 + $0x1fd0] sm:$0xff]
      %v2000 = vld [vmem:[%s3 + $0x1fd8] sm:$0xff]
      %v2001 = vld [vmem:[%s3 + $0x1fe0] sm:$0xff]
      %v2002 = vld [vmem:[%s3 + $0x1fe8] sm:$0xff]
      %v2003 = vld [vmem:[%s3 + $0x1ff0] sm:$0xff]
      %v2004 = vld [vmem:[%s3 + $0x1ff8] sm:$0xff]
      %v2005 = vld [vmem:[%s3 + $0x2000] sm:$0xff]
      %v2006 = vld [vmem:[%s3 + $0x2008] sm:$0xff]
      %v2007 = vld [vmem:[%s3 + $0x2010] sm:$0xff]
      %v2008 = vld [vmem:[%s3 + $0x2018] sm:$0xff]
      %v2009 = vld [vmem:[%s3 + $0x2020] sm:$0xff]
      %v2010 = vld [vmem:[%s3 + $0x2028] sm:$0xff]
      %v2011 = vld [vmem:[%s3 + $0x2030] sm:$0xff]
      %v2012 = vld [vmem:[%s3 + $0x2038] sm:$0xff]
      %v2013 = vld [vmem:[%s3 + $0x2040] sm:$0xff]
      %v2014 = vld [vmem:[%s3 + $0x2048] sm:$0xff]
      %v2015 = vld [vmem:[%s3 + $0x2050] sm:$0xff]
      %v2016 = vld [vmem:[%s3 + $0x2058] sm:$0xff]
      %v2017 = vld [vmem:[%s3 + $0x2060] sm:$0xff]
      %v2018 = vld [vmem:[%s3 + $0x2068] sm:$0xff]
      %v2019 = vld [vmem:[%s3 + $0x2070] sm:$0xff]
      %v2020 = vld [vmem:[%s3 + $0x2078] sm:$0xff]
      %v2021 = vld [vmem:[%s3 + $0x2080] sm:$0xff]
      %v2022 = vld [vmem:[%s3 + $0x2088] sm:$0xff]
      %v2023 = vld [vmem:[%s3 + $0x2090] sm:$0xff]
      %v2024 = vld [vmem:[%s3 + $0x2098] sm:$0xff]
      %v2025 = vld [vmem:[%s3 + $0x20a0] sm:$0xff]
      %v2026 = vld [vmem:[%s3 + $0x20a8] sm:$0xff]
      %v2027 = vld [vmem:[%s3 + $0x20b0] sm:$0xff]
      %v2028 = vld [vmem:[%s3 + $0x20b8] sm:$0xff]
      %v2029 = vld [vmem:[%s3 + $0x20c0] sm:$0xff]
      %v2030 = vld [vmem:[%s3 + $0x20c8] sm:$0xff]
      %v2031 = vld [vmem:[%s3 + $0x20d0] sm:$0xff]
      %v2032 = vld [vmem:[%s3 + $0x20d8] sm:$0xff]
      %v2033 = vld [vmem:[%s3 + $0x20e0] sm:$0xff]
      %v2034 = vld [vmem:[%s3 + $0x20e8] sm:$0xff]
      %v2035 = vld [vmem:[%s3 + $0x20f0] sm:$0xff]
      %v2036 = vld [vmem:[%s3 + $0x20f8] sm:$0xff]
      %v2037 = vld [vmem:[%s3 + $0x2100] sm:$0xff]
      %v2038 = vld [vmem:[%s3 + $0x2108] sm:$0xff]
      %v2039 = vld [vmem:[%s3 + $0x2110] sm:$0xff]
      %v2040 = vld [vmem:[%s3 + $0x2118] sm:$0xff]
      %v2041 = vld [vmem:[%s3 + $0x2120] sm:$0xff]
      %v2042 = vld [vmem:[%s3 + $0x2128] sm:$0xff]
      %v2043 = vld [vmem:[%s3 + $0x2130] sm:$0xff]
      %v2044 = vld [vmem:[%s3 + $0x2138] sm:$0xff]
      %v2045 = vld [vmem:[%s3 + $0x2140] sm:$0xff]
      %v2046 = vld [vmem:[%s3 + $0x2148] sm:$0xff]
      %v2047 = vld [vmem:[%s3 + $0x2150] sm:$0xff]
      %v2048 = vld [vmem:[%s3 + $0x2158] sm:$0xff]
      %v2049 = vld [vmem:[%s3 + $0x2160] sm:$0xff]
      %v2050 = vld [vmem:[%s3 + $0x2168] sm:$0xff]
      %v2051 = vld [vmem:[%s3 + $0x2170] sm:$0xff]
      %v2052 = vld [vmem:[%s3 + $0x2178] sm:$0xff]
      %v2053 = vld [vmem:[%s3 + $0x2180] sm:$0xff]
      %v2054 = vld [vmem:[%s3 + $0x2188] sm:$0xff]
      %v2055 = vld [vmem:[%s3 + $0x2190] sm:$0xff]
      %v2056 = vld [vmem:[%s3 + $0x2198] sm:$0xff]
      %v2057 = vld [vmem:[%s3 + $0x21a0] sm:$0xff]
      %v2058 = vld [vmem:[%s3 + $0x21a8] sm:$0xff]
      %v2059 = vld [vmem:[%s3 + $0x21b0] sm:$0xff]
      %v2060 = vld [vmem:[%s3 + $0x21b8] sm:$0xff]
      %v2061 = vld [vmem:[%s3 + $0x21c0] sm:$0xff]
      %v2062 = vld [vmem:[%s3 + $0x21c8] sm:$0xff]
      %v2063 = vld [vmem:[%s3 + $0x21d0] sm:$0xff]
      %v2064 = vld [vmem:[%s3 + $0x21d8] sm:$0xff]
      %v2065 = vld [vmem:[%s3 + $0x21e0] sm:$0xff]
      %v2066 = vld [vmem:[%s3 + $0x21e8] sm:$0xff]
      %v2067 = vld [vmem:[%s3 + $0x21f0] sm:$0xff]
      %v2068 = vld [vmem:[%s3 + $0x21f8] sm:$0xff]
      %v2069 = vld [vmem:[%s3 + $0x2200] sm:$0xff]
      %v2070 = vld [vmem:[%s3 + $0x2208] sm:$0xff]
      %v2071 = vld [vmem:[%s3 + $0x2210] sm:$0xff]
      %v2072 = vld [vmem:[%s3 + $0x2218] sm:$0xff]
      %v2073 = vld [vmem:[%s3 + $0x2220] sm:$0xff]
      %v2074 = vld [vmem:[%s3 + $0x2228] sm:$0xff]
      %v2075 = vld [vmem:[%s3 + $0x2230] sm:$0xff]
      %v2076 = vld [vmem:[%s3 + $0x2238] sm:$0xff]
      %v2077 = vld [vmem:[%s3 + $0x2240] sm:$0xff]
      %v2078 = vld [vmem:[%s3 + $0x2248] sm:$0xff]
      %v2079 = vld [vmem:[%s3 + $0x2250] sm:$0xff]
      %v2080 = vld [vmem:[%s3 + $0x2258] sm:$0xff]
      %v2081 = vld [vmem:[%s3 + $0x2260] sm:$0xff]
      %v2082 = vld [vmem:[%s3 + $0x2268] sm:$0xff]
      %v2083 = vld [vmem:[%s3 + $0x2270] sm:$0xff]
      %v2084 = vld [vmem:[%s3 + $0x2278] sm:$0xff]
      %v2085 = vld [vmem:[%s3 + $0x2280] sm:$0xff]
      %v2086 = vld [vmem:[%s3 + $0x2288] sm:$0xff]
      %v2087 = vld [vmem:[%s3 + $0x2290] sm:$0xff]
      %v2088 = vld [vmem:[%s3 + $0x2298] sm:$0xff]
      %v2089 = vld [vmem:[%s3 + $0x22a0] sm:$0xff]
      %v2090 = vld [vmem:[%s3 + $0x22a8] sm:$0xff]
      %v2091 = vld [vmem:[%s3 + $0x22b0] sm:$0xff]
      %v2092 = vld [vmem:[%s3 + $0x22b8] sm:$0xff]
      %v2093 = vld [vmem:[%s3 + $0x22c0] sm:$0xff]
      %v2094 = vld [vmem:[%s3 + $0x22c8] sm:$0xff]
      %v2095 = vld [vmem:[%s3 + $0x22d0] sm:$0xff]
      %v2096 = vld [vmem:[%s3 + $0x22d8] sm:$0xff]
      %v2097 = vld [vmem:[%s3 + $0x22e0] sm:$0xff]
      %v2098 = vld [vmem:[%s3 + $0x22e8] sm:$0xff]
      %v2099 = vld [vmem:[%s3 + $0x22f0] sm:$0xff]
      %v2100 = vld [vmem:[%s3 + $0x22f8] sm:$0xff]
      %v2101 = vld [vmem:[%s3 + $0x2300] sm:$0xff]
      %v2102 = vld [vmem:[%s3 + $0x2308] sm:$0xff]
      %v2103 = vld [vmem:[%s3 + $0x2310] sm:$0xff]
      %v2104 = vld [vmem:[%s3 + $0x2318] sm:$0xff]
      %v2105 = vld [vmem:[%s3 + $0x2320] sm:$0xff]
      %v2106 = vld [vmem:[%s3 + $0x2328] sm:$0xff]
      %v2107 = vld [vmem:[%s3 + $0x2330] sm:$0xff]
      %v2108 = vld [vmem:[%s3 + $0x2338] sm:$0xff]
      %v2109 = vld [vmem:[%s3 + $0x2340] sm:$0xff]
      %v2110 = vld [vmem:[%s3 + $0x2348] sm:$0xff]
      %v2111 = vld [vmem:[%s3 + $0x2350] sm:$0xff]
      %v2112 = vld [vmem:[%s3 + $0x2358] sm:$0xff]
      %v2113 = vld [vmem:[%s3 + $0x2360] sm:$0xff]
      %v2114 = vld [vmem:[%s3 + $0x2368] sm:$0xff]
      %v2115 = vld [vmem:[%s3 + $0x2370] sm:$0xff]
      %v2116 = vld [vmem:[%s3 + $0x2378] sm:$0xff]
      %v2117 = vld [vmem:[%s3 + $0x2380] sm:$0xff]
      %v2118 = vld [vmem:[%s3 + $0x2388] sm:$0xff]
      %v2119 = vld [vmem:[%s3 + $0x2390] sm:$0xff]
      %v2120 = vld [vmem:[%s3 + $0x2398] sm:$0xff]
      %v2121 = vld [vmem:[%s3 + $0x23a0] sm:$0xff]
      %v2122 = vld [vmem:[%s3 + $0x23a8] sm:$0xff]
      %v2123 = vld [vmem:[%s3 + $0x23b0] sm:$0xff]
      %v2124 = vld [vmem:[%s3 + $0x23b8] sm:$0xff]
      %v2125 = vld [vmem:[%s3 + $0x23c0] sm:$0xff]
      %v2126 = vld [vmem:[%s3 + $0x23c8] sm:$0xff]
      %v2127 = vld [vmem:[%s3 + $0x23d0] sm:$0xff]
      %v2128 = vld [vmem:[%s3 + $0x23d8] sm:$0xff]
      %v2129 = vld [vmem:[%s3 + $0x23e0] sm:$0xff]
      %v2130 = vld [vmem:[%s3 + $0x23e8] sm:$0xff]
      %v2131 = vld [vmem:[%s3 + $0x23f0] sm:$0xff]
      %v2132 = vld [vmem:[%s3 + $0x23f8] sm:$0xff]
      %v3285 = vunpack.c.l.b16 %v981
      %v3286 = vunpack.c.h.b16 %v981
      %v3287 = vunpack.c.l.b16 %v982
      %v3288 = vunpack.c.h.b16 %v982
      %v3289 = vunpack.c.l.b16 %v983
      %v3290 = vunpack.c.h.b16 %v983
      %v3291 = vunpack.c.l.b16 %v984
      %v3292 = vunpack.c.h.b16 %v984
      %v3293 = vunpack.c.l.b16 %v985
      %v3294 = vunpack.c.h.b16 %v985
      %v3295 = vunpack.c.l.b16 %v986
      %v3296 = vunpack.c.h.b16 %v986
      %v3297 = vunpack.c.l.b16 %v987
      %v3298 = vunpack.c.h.b16 %v987
      %v3299 = vunpack.c.l.b16 %v988
      %v3300 = vunpack.c.h.b16 %v988
      %v3301 = vunpack.c.l.b16 %v989
      %v3302 = vunpack.c.h.b16 %v989
      %v3303 = vunpack.c.l.b16 %v990
      %v3304 = vunpack.c.h.b16 %v990
      %v3305 = vunpack.c.l.b16 %v991
      %v3306 = vunpack.c.h.b16 %v991
      %v3307 = vunpack.c.l.b16 %v992
      %v3308 = vunpack.c.h.b16 %v992
      %v3309 = vunpack.c.l.b16 %v993
      %v3310 = vunpack.c.h.b16 %v993
      %v3311 = vunpack.c.l.b16 %v994
      %v3312 = vunpack.c.h.b16 %v994
      %v3313 = vunpack.c.l.b16 %v995
      %v3314 = vunpack.c.h.b16 %v995
      %v3315 = vunpack.c.l.b16 %v996
      %v3316 = vunpack.c.h.b16 %v996
      %v3317 = vunpack.c.l.b16 %v997
      %v3318 = vunpack.c.h.b16 %v997
      %v3319 = vunpack.c.l.b16 %v998
      %v3320 = vunpack.c.h.b16 %v998
      %v3321 = vunpack.c.l.b16 %v999
      %v3322 = vunpack.c.h.b16 %v999
      %v3323 = vunpack.c.l.b16 %v1000
      %v3324 = vunpack.c.h.b16 %v1000
      %v3325 = vunpack.c.l.b16 %v1001
      %v3326 = vunpack.c.h.b16 %v1001
      %v3327 = vunpack.c.l.b16 %v1002
      %v3328 = vunpack.c.h.b16 %v1002
      %v3329 = vunpack.c.l.b16 %v1003
      %v3330 = vunpack.c.h.b16 %v1003
      %v3331 = vunpack.c.l.b16 %v1004
      %v3332 = vunpack.c.h.b16 %v1004
      %v3333 = vunpack.c.l.b16 %v1005
      %v3334 = vunpack.c.h.b16 %v1005
      %v3335 = vunpack.c.l.b16 %v1006
      %v3336 = vunpack.c.h.b16 %v1006
      %v3337 = vunpack.c.l.b16 %v1007
      %v3338 = vunpack.c.h.b16 %v1007
      %v3339 = vunpack.c.l.b16 %v1008
      %v3340 = vunpack.c.h.b16 %v1008
      %v3341 = vunpack.c.l.b16 %v1009
      %v3342 = vunpack.c.h.b16 %v1009
      %v3343 = vunpack.c.l.b16 %v1010
      %v3344 = vunpack.c.h.b16 %v1010
      %v3345 = vunpack.c.l.b16 %v1011
      %v3346 = vunpack.c.h.b16 %v1011
      %v3347 = vunpack.c.l.b16 %v1012
      %v3348 = vunpack.c.h.b16 %v1012
      %v3349 = vunpack.c.l.b16 %v1013
      %v3350 = vunpack.c.h.b16 %v1013
      %v3351 = vunpack.c.l.b16 %v1014
      %v3352 = vunpack.c.h.b16 %v1014
      %v3353 = vunpack.c.l.b16 %v1015
      %v3354 = vunpack.c.h.b16 %v1015
      %v3355 = vunpack.c.l.b16 %v1016
      %v3356 = vunpack.c.h.b16 %v1016
      %v3357 = vunpack.c.l.b16 %v1017
      %v3358 = vunpack.c.h.b16 %v1017
      %v3359 = vunpack.c.l.b16 %v1018
      %v3360 = vunpack.c.h.b16 %v1018
      %v3361 = vunpack.c.l.b16 %v1019
      %v3362 = vunpack.c.h.b16 %v1019
      %v3363 = vunpack.c.l.b16 %v1020
      %v3364 = vunpack.c.h.b16 %v1020
      %v3365 = vunpack.c.l.b16 %v1021
      %v3366 = vunpack.c.h.b16 %v1021
      %v3367 = vunpack.c.l.b16 %v1022
      %v3368 = vunpack.c.h.b16 %v1022
      %v3369 = vunpack.c.l.b16 %v1023
      %v3370 = vunpack.c.h.b16 %v1023
      %v3371 = vunpack.c.l.b16 %v1024
      %v3372 = vunpack.c.h.b16 %v1024
      %v3373 = vunpack.c.l.b16 %v1025
      %v3374 = vunpack.c.h.b16 %v1025
      %v3375 = vunpack.c.l.b16 %v1026
      %v3376 = vunpack.c.h.b16 %v1026
      %v3377 = vunpack.c.l.b16 %v1027
      %v3378 = vunpack.c.h.b16 %v1027
      %v3379 = vunpack.c.l.b16 %v1028
      %v3380 = vunpack.c.h.b16 %v1028
      %v3381 = vunpack.c.l.b16 %v1029
      %v3382 = vunpack.c.h.b16 %v1029
      %v3383 = vunpack.c.l.b16 %v1030
      %v3384 = vunpack.c.h.b16 %v1030
      %v3385 = vunpack.c.l.b16 %v1031
      %v3386 = vunpack.c.h.b16 %v1031
      %v3387 = vunpack.c.l.b16 %v1032
      %v3388 = vunpack.c.h.b16 %v1032
      %v3389 = vunpack.c.l.b16 %v1033
      %v3390 = vunpack.c.h.b16 %v1033
      %v3391 = vunpack.c.l.b16 %v1034
      %v3392 = vunpack.c.h.b16 %v1034
      %v3393 = vunpack.c.l.b16 %v1035
      %v3394 = vunpack.c.h.b16 %v1035
      %v3395 = vunpack.c.l.b16 %v1036
      %v3396 = vunpack.c.h.b16 %v1036
      %v3397 = vunpack.c.l.b16 %v1037
      %v3398 = vunpack.c.h.b16 %v1037
      %v3399 = vunpack.c.l.b16 %v1038
      %v3400 = vunpack.c.h.b16 %v1038
      %v3401 = vunpack.c.l.b16 %v1039
      %v3402 = vunpack.c.h.b16 %v1039
      %v3403 = vunpack.c.l.b16 %v1040
      %v3404 = vunpack.c.h.b16 %v1040
      %v3405 = vunpack.c.l.b16 %v1041
      %v3406 = vunpack.c.h.b16 %v1041
      %v3407 = vunpack.c.l.b16 %v1042
      %v3408 = vunpack.c.h.b16 %v1042
      %v3409 = vunpack.c.l.b16 %v1043
      %v3410 = vunpack.c.h.b16 %v1043
      %v3411 = vunpack.c.l.b16 %v1044
      %v3412 = vunpack.c.h.b16 %v1044
      %v3413 = vunpack.c.l.b16 %v1045
      %v3414 = vunpack.c.h.b16 %v1045
      %v3415 = vunpack.c.l.b16 %v1046
      %v3416 = vunpack.c.h.b16 %v1046
      %v3417 = vunpack.c.l.b16 %v1047
      %v3418 = vunpack.c.h.b16 %v1047
      %v3419 = vunpack.c.l.b16 %v1048
      %v3420 = vunpack.c.h.b16 %v1048
      %v3421 = vunpack.c.l.b16 %v1049
      %v3422 = vunpack.c.h.b16 %v1049
      %v3423 = vunpack.c.l.b16 %v1050
      %v3424 = vunpack.c.h.b16 %v1050
      %v3425 = vunpack.c.l.b16 %v1051
      %v3426 = vunpack.c.h.b16 %v1051
      %v3427 = vunpack.c.l.b16 %v1052
      %v3428 = vunpack.c.h.b16 %v1052
      %v3429 = vunpack.c.l.b16 %v1053
      %v3430 = vunpack.c.h.b16 %v1053
      %v3431 = vunpack.c.l.b16 %v1054
      %v3432 = vunpack.c.h.b16 %v1054
      %v3433 = vunpack.c.l.b16 %v1055
      %v3434 = vunpack.c.h.b16 %v1055
      %v3435 = vunpack.c.l.b16 %v1056
      %v3436 = vunpack.c.h.b16 %v1056
      %v3437 = vunpack.c.l.b16 %v1057
      %v3438 = vunpack.c.h.b16 %v1057
      %v3439 = vunpack.c.l.b16 %v1058
      %v3440 = vunpack.c.h.b16 %v1058
      %v3441 = vunpack.c.l.b16 %v1059
      %v3442 = vunpack.c.h.b16 %v1059
      %v3443 = vunpack.c.l.b16 %v1060
      %v3444 = vunpack.c.h.b16 %v1060
      %v3445 = vunpack.c.l.b16 %v1061
      %v3446 = vunpack.c.h.b16 %v1061
      %v3447 = vunpack.c.l.b16 %v1062
      %v3448 = vunpack.c.h.b16 %v1062
      %v3449 = vunpack.c.l.b16 %v1063
      %v3450 = vunpack.c.h.b16 %v1063
      %v3451 = vunpack.c.l.b16 %v1064
      %v3452 = vunpack.c.h.b16 %v1064
      %v3453 = vunpack.c.l.b16 %v1065
      %v3454 = vunpack.c.h.b16 %v1065
      %v3455 = vunpack.c.l.b16 %v1066
      %v3456 = vunpack.c.h.b16 %v1066
      %v3457 = vunpack.c.l.b16 %v1067
      %v3458 = vunpack.c.h.b16 %v1067
      %v3459 = vunpack.c.l.b16 %v1068
      %v3460 = vunpack.c.h.b16 %v1068
      %v3461 = vunpack.c.l.b16 %v1069
      %v3462 = vunpack.c.h.b16 %v1069
      %v3463 = vunpack.c.l.b16 %v1070
      %v3464 = vunpack.c.h.b16 %v1070
      %v3465 = vunpack.c.l.b16 %v1071
      %v3466 = vunpack.c.h.b16 %v1071
      %v3467 = vunpack.c.l.b16 %v1072
      %v3468 = vunpack.c.h.b16 %v1072
      %v3469 = vunpack.c.l.b16 %v1073
      %v3470 = vunpack.c.h.b16 %v1073
      %v3471 = vunpack.c.l.b16 %v1074
      %v3472 = vunpack.c.h.b16 %v1074
      %v3473 = vunpack.c.l.b16 %v1075
      %v3474 = vunpack.c.h.b16 %v1075
      %v3475 = vunpack.c.l.b16 %v1076
      %v3476 = vunpack.c.h.b16 %v1076
      %v3477 = vunpack.c.l.b16 %v1077
      %v3478 = vunpack.c.h.b16 %v1077
      %v3479 = vunpack.c.l.b16 %v1078
      %v3480 = vunpack.c.h.b16 %v1078
      %v3481 = vunpack.c.l.b16 %v1079
      %v3482 = vunpack.c.h.b16 %v1079
      %v3483 = vunpack.c.l.b16 %v1080
      %v3484 = vunpack.c.h.b16 %v1080
      %v3485 = vunpack.c.l.b16 %v1081
      %v3486 = vunpack.c.h.b16 %v1081
      %v3487 = vunpack.c.l.b16 %v1082
      %v3488 = vunpack.c.h.b16 %v1082
      %v3489 = vunpack.c.l.b16 %v1083
      %v3490 = vunpack.c.h.b16 %v1083
      %v3491 = vunpack.c.l.b16 %v1084
      %v3492 = vunpack.c.h.b16 %v1084
      %v3493 = vunpack.c.l.b16 %v1085
      %v3494 = vunpack.c.h.b16 %v1085
      %v3495 = vunpack.c.l.b16 %v1086
      %v3496 = vunpack.c.h.b16 %v1086
      %v3497 = vunpack.c.l.b16 %v1087
      %v3498 = vunpack.c.h.b16 %v1087
      %v3499 = vunpack.c.l.b16 %v1088
      %v3500 = vunpack.c.h.b16 %v1088
      %v3501 = vunpack.c.l.b16 %v1089
      %v3502 = vunpack.c.h.b16 %v1089
      %v3503 = vunpack.c.l.b16 %v1090
      %v3504 = vunpack.c.h.b16 %v1090
      %v3505 = vunpack.c.l.b16 %v1091
      %v3506 = vunpack.c.h.b16 %v1091
      %v3507 = vunpack.c.l.b16 %v1092
      %v3508 = vunpack.c.h.b16 %v1092
      %v3509 = vunpack.c.l.b16 %v1093
      %v3510 = vunpack.c.h.b16 %v1093
      %v3511 = vunpack.c.l.b16 %v1094
      %v3512 = vunpack.c.h.b16 %v1094
      %v3513 = vunpack.c.l.b16 %v1095
      %v3514 = vunpack.c.h.b16 %v1095
      %v3515 = vunpack.c.l.b16 %v1096
      %v3516 = vunpack.c.h.b16 %v1096
      %v3517 = vunpack.c.l.b16 %v1097
      %v3518 = vunpack.c.h.b16 %v1097
      %v3519 = vunpack.c.l.b16 %v1098
      %v3520 = vunpack.c.h.b16 %v1098
      %v3521 = vunpack.c.l.b16 %v1099
      %v3522 = vunpack.c.h.b16 %v1099
      %v3523 = vunpack.c.l.b16 %v1100
      %v3524 = vunpack.c.h.b16 %v1100
      %v3525 = vunpack.c.l.b16 %v1101
      %v3526 = vunpack.c.h.b16 %v1101
      %v3527 = vunpack.c.l.b16 %v1102
      %v3528 = vunpack.c.h.b16 %v1102
      %v3529 = vunpack.c.l.b16 %v1103
      %v3530 = vunpack.c.h.b16 %v1103
      %v3531 = vunpack.c.l.b16 %v1104
      %v3532 = vunpack.c.h.b16 %v1104
      %v3533 = vunpack.c.l.b16 %v1105
      %v3534 = vunpack.c.h.b16 %v1105
      %v3535 = vunpack.c.l.b16 %v1106
      %v3536 = vunpack.c.h.b16 %v1106
      %v3537 = vunpack.c.l.b16 %v1107
      %v3538 = vunpack.c.h.b16 %v1107
      %v3539 = vunpack.c.l.b16 %v1108
      %v3540 = vunpack.c.h.b16 %v1108
      %v3541 = vunpack.c.l.b16 %v1109
      %v3542 = vunpack.c.h.b16 %v1109
      %v3543 = vunpack.c.l.b16 %v1110
      %v3544 = vunpack.c.h.b16 %v1110
      %v3545 = vunpack.c.l.b16 %v1111
      %v3546 = vunpack.c.h.b16 %v1111
      %v3547 = vunpack.c.l.b16 %v1112
      %v3548 = vunpack.c.h.b16 %v1112
      %v3549 = vunpack.c.l.b16 %v1113
      %v3550 = vunpack.c.h.b16 %v1113
      %v3551 = vunpack.c.l.b16 %v1114
      %v3552 = vunpack.c.h.b16 %v1114
      %v3553 = vunpack.c.l.b16 %v1115
      %v3554 = vunpack.c.h.b16 %v1115
      %v3555 = vunpack.c.l.b16 %v1116
      %v3556 = vunpack.c.h.b16 %v1116
      %v3557 = vunpack.c.l.b16 %v1117
      %v3558 = vunpack.c.h.b16 %v1117
      %v3559 = vunpack.c.l.b16 %v1118
      %v3560 = vunpack.c.h.b16 %v1118
      %v3561 = vunpack.c.l.b16 %v1119
      %v3562 = vunpack.c.h.b16 %v1119
      %v3563 = vunpack.c.l.b16 %v1120
      %v3564 = vunpack.c.h.b16 %v1120
      %v3565 = vunpack.c.l.b16 %v1121
      %v3566 = vunpack.c.h.b16 %v1121
      %v3567 = vunpack.c.l.b16 %v1122
      %v3568 = vunpack.c.h.b16 %v1122
      %v3569 = vunpack.c.l.b16 %v1123
      %v3570 = vunpack.c.h.b16 %v1123
      %v3571 = vunpack.c.l.b16 %v1124
      %v3572 = vunpack.c.h.b16 %v1124
      %v3573 = vunpack.c.l.b16 %v1125
      %v3574 = vunpack.c.h.b16 %v1125
      %v3575 = vunpack.c.l.b16 %v1126
      %v3576 = vunpack.c.h.b16 %v1126
      %v3577 = vunpack.c.l.b16 %v1127
      %v3578 = vunpack.c.h.b16 %v1127
      %v3579 = vunpack.c.l.b16 %v1128
      %v3580 = vunpack.c.h.b16 %v1128
      %v3581 = vunpack.c.l.b16 %v1129
      %v3582 = vunpack.c.h.b16 %v1129
      %v3583 = vunpack.c.l.b16 %v1130
      %v3584 = vunpack.c.h.b16 %v1130
      %v3585 = vunpack.c.l.b16 %v1131
      %v3586 = vunpack.c.h.b16 %v1131
      %v3587 = vunpack.c.l.b16 %v1132
      %v3588 = vunpack.c.h.b16 %v1132
      %v3589 = vunpack.c.l.b16 %v1133
      %v3590 = vunpack.c.h.b16 %v1133
      %v3591 = vunpack.c.l.b16 %v1134
      %v3592 = vunpack.c.h.b16 %v1134
      %v3593 = vunpack.c.l.b16 %v1135
      %v3594 = vunpack.c.h.b16 %v1135
      %v3595 = vunpack.c.l.b16 %v1136
      %v3596 = vunpack.c.h.b16 %v1136
      %v3597 = vunpack.c.l.b16 %v1137
      %v3598 = vunpack.c.h.b16 %v1137
      %v3599 = vunpack.c.l.b16 %v1138
      %v3600 = vunpack.c.h.b16 %v1138
      %v3601 = vunpack.c.l.b16 %v1139
      %v3602 = vunpack.c.h.b16 %v1139
      %v3603 = vunpack.c.l.b16 %v1140
      %v3604 = vunpack.c.h.b16 %v1140
      %v3605 = vunpack.c.l.b16 %v1141
      %v3606 = vunpack.c.h.b16 %v1141
      %v3607 = vunpack.c.l.b16 %v1142
      %v3608 = vunpack.c.h.b16 %v1142
      %v3609 = vunpack.c.l.b16 %v1143
      %v3610 = vunpack.c.h.b16 %v1143
      %v3611 = vunpack.c.l.b16 %v1144
      %v3612 = vunpack.c.h.b16 %v1144
      %v3613 = vunpack.c.l.b16 %v1145
      %v3614 = vunpack.c.h.b16 %v1145
      %v3615 = vunpack.c.l.b16 %v1146
      %v3616 = vunpack.c.h.b16 %v1146
      %v3617 = vunpack.c.l.b16 %v1147
      %v3618 = vunpack.c.h.b16 %v1147
      %v3619 = vunpack.c.l.b16 %v1148
      %v3620 = vunpack.c.h.b16 %v1148
      %v3621 = vunpack.c.l.b16 %v1149
      %v3622 = vunpack.c.h.b16 %v1149
      %v3623 = vunpack.c.l.b16 %v1150
      %v3624 = vunpack.c.h.b16 %v1150
      %v3625 = vunpack.c.l.b16 %v1151
      %v3626 = vunpack.c.h.b16 %v1151
      %v3627 = vunpack.c.l.b16 %v1152
      %v3628 = vunpack.c.h.b16 %v1152
      %v3629 = vunpack.c.l.b16 %v1153
      %v3630 = vunpack.c.h.b16 %v1153
      %v3631 = vunpack.c.l.b16 %v1154
      %v3632 = vunpack.c.h.b16 %v1154
      %v3633 = vunpack.c.l.b16 %v1155
      %v3634 = vunpack.c.h.b16 %v1155
      %v3635 = vunpack.c.l.b16 %v1156
      %v3636 = vunpack.c.h.b16 %v1156
      %v3637 = vunpack.c.l.b16 %v1157
      %v3638 = vunpack.c.h.b16 %v1157
      %v3639 = vunpack.c.l.b16 %v1158
      %v3640 = vunpack.c.h.b16 %v1158
      %v3641 = vunpack.c.l.b16 %v1159
      %v3642 = vunpack.c.h.b16 %v1159
      %v3643 = vunpack.c.l.b16 %v1160
      %v3644 = vunpack.c.h.b16 %v1160
      %v3645 = vunpack.c.l.b16 %v1161
      %v3646 = vunpack.c.h.b16 %v1161
      %v3647 = vunpack.c.l.b16 %v1162
      %v3648 = vunpack.c.h.b16 %v1162
      %v3649 = vunpack.c.l.b16 %v1163
      %v3650 = vunpack.c.h.b16 %v1163
      %v3651 = vunpack.c.l.b16 %v1164
      %v3652 = vunpack.c.h.b16 %v1164
      %v3653 = vunpack.c.l.b16 %v1165
      %v3654 = vunpack.c.h.b16 %v1165
      %v3655 = vunpack.c.l.b16 %v1166
      %v3656 = vunpack.c.h.b16 %v1166
      %v3657 = vunpack.c.l.b16 %v1167
      %v3658 = vunpack.c.h.b16 %v1167
      %v3659 = vunpack.c.l.b16 %v1168
      %v3660 = vunpack.c.h.b16 %v1168
      %v3661 = vunpack.c.l.b16 %v1169
      %v3662 = vunpack.c.h.b16 %v1169
      %v3663 = vunpack.c.l.b16 %v1170
      %v3664 = vunpack.c.h.b16 %v1170
      %v3665 = vunpack.c.l.b16 %v1171
      %v3666 = vunpack.c.h.b16 %v1171
      %v3667 = vunpack.c.l.b16 %v1172
      %v3668 = vunpack.c.h.b16 %v1172
      %v3669 = vunpack.c.l.b16 %v1173
      %v3670 = vunpack.c.h.b16 %v1173
      %v3671 = vunpack.c.l.b16 %v1174
      %v3672 = vunpack.c.h.b16 %v1174
      %v3673 = vunpack.c.l.b16 %v1175
      %v3674 = vunpack.c.h.b16 %v1175
      %v3675 = vunpack.c.l.b16 %v1176
      %v3676 = vunpack.c.h.b16 %v1176
      %v3677 = vunpack.c.l.b16 %v1177
      %v3678 = vunpack.c.h.b16 %v1177
      %v3679 = vunpack.c.l.b16 %v1178
      %v3680 = vunpack.c.h.b16 %v1178
      %v3681 = vunpack.c.l.b16 %v1179
      %v3682 = vunpack.c.h.b16 %v1179
      %v3683 = vunpack.c.l.b16 %v1180
      %v3684 = vunpack.c.h.b16 %v1180
      %v3685 = vunpack.c.l.b16 %v1181
      %v3686 = vunpack.c.h.b16 %v1181
      %v3687 = vunpack.c.l.b16 %v1182
      %v3688 = vunpack.c.h.b16 %v1182
      %v3689 = vunpack.c.l.b16 %v1183
      %v3690 = vunpack.c.h.b16 %v1183
      %v3691 = vunpack.c.l.b16 %v1184
      %v3692 = vunpack.c.h.b16 %v1184
      %v3693 = vunpack.c.l.b16 %v1185
      %v3694 = vunpack.c.h.b16 %v1185
      %v3695 = vunpack.c.l.b16 %v1186
      %v3696 = vunpack.c.h.b16 %v1186
      %v3697 = vunpack.c.l.b16 %v1187
      %v3698 = vunpack.c.h.b16 %v1187
      %v3699 = vunpack.c.l.b16 %v1188
      %v3700 = vunpack.c.h.b16 %v1188
      %v3701 = vunpack.c.l.b16 %v1189
      %v3702 = vunpack.c.h.b16 %v1189
      %v3703 = vunpack.c.l.b16 %v1190
      %v3704 = vunpack.c.h.b16 %v1190
      %v3705 = vunpack.c.l.b16 %v1191
      %v3706 = vunpack.c.h.b16 %v1191
      %v3707 = vunpack.c.l.b16 %v1192
      %v3708 = vunpack.c.h.b16 %v1192
      %v3709 = vunpack.c.l.b16 %v1193
      %v3710 = vunpack.c.h.b16 %v1193
      %v3711 = vunpack.c.l.b16 %v1194
      %v3712 = vunpack.c.h.b16 %v1194
      %v3713 = vunpack.c.l.b16 %v1195
      %v3714 = vunpack.c.h.b16 %v1195
      %v3715 = vunpack.c.l.b16 %v1196
      %v3716 = vunpack.c.h.b16 %v1196
      %v3717 = vunpack.c.l.b16 %v1197
      %v3718 = vunpack.c.h.b16 %v1197
      %v3719 = vunpack.c.l.b16 %v1198
      %v3720 = vunpack.c.h.b16 %v1198
      %v3721 = vunpack.c.l.b16 %v1199
      %v3722 = vunpack.c.h.b16 %v1199
      %v3723 = vunpack.c.l.b16 %v1200
      %v3724 = vunpack.c.h.b16 %v1200
      %v3725 = vunpack.c.l.b16 %v1201
      %v3726 = vunpack.c.h.b16 %v1201
      %v3727 = vunpack.c.l.b16 %v1202
      %v3728 = vunpack.c.h.b16 %v1202
      %v3729 = vunpack.c.l.b16 %v1203
      %v3730 = vunpack.c.h.b16 %v1203
      %v3731 = vunpack.c.l.b16 %v1204
      %v3732 = vunpack.c.h.b16 %v1204
      %v3733 = vunpack.c.l.b16 %v1205
      %v3734 = vunpack.c.h.b16 %v1205
      %v3735 = vunpack.c.l.b16 %v1206
      %v3736 = vunpack.c.h.b16 %v1206
      %v3737 = vunpack.c.l.b16 %v1207
      %v3738 = vunpack.c.h.b16 %v1207
      %v3739 = vunpack.c.l.b16 %v1208
      %v3740 = vunpack.c.h.b16 %v1208
      %v3741 = vunpack.c.l.b16 %v1209
      %v3742 = vunpack.c.h.b16 %v1209
      %v3743 = vunpack.c.l.b16 %v1210
      %v3744 = vunpack.c.h.b16 %v1210
      %v3745 = vunpack.c.l.b16 %v1211
      %v3746 = vunpack.c.h.b16 %v1211
      %v3747 = vunpack.c.l.b16 %v1212
      %v3748 = vunpack.c.h.b16 %v1212
      %v3749 = vunpack.c.l.b16 %v1213
      %v3750 = vunpack.c.h.b16 %v1213
      %v3751 = vunpack.c.l.b16 %v1214
      %v3752 = vunpack.c.h.b16 %v1214
      %v3753 = vunpack.c.l.b16 %v1215
      %v3754 = vunpack.c.h.b16 %v1215
      %v3755 = vunpack.c.l.b16 %v1216
      %v3756 = vunpack.c.h.b16 %v1216
      %v3757 = vunpack.c.l.b16 %v1217
      %v3758 = vunpack.c.h.b16 %v1217
      %v3759 = vunpack.c.l.b16 %v1218
      %v3760 = vunpack.c.h.b16 %v1218
      %v3761 = vunpack.c.l.b16 %v1219
      %v3762 = vunpack.c.h.b16 %v1219
      %v3763 = vunpack.c.l.b16 %v1220
      %v3764 = vunpack.c.h.b16 %v1220
      %v3765 = vunpack.c.l.b16 %v1221
      %v3766 = vunpack.c.h.b16 %v1221
      %v3767 = vunpack.c.l.b16 %v1222
      %v3768 = vunpack.c.h.b16 %v1222
      %v3769 = vunpack.c.l.b16 %v1223
      %v3770 = vunpack.c.h.b16 %v1223
      %v3771 = vunpack.c.l.b16 %v1224
      %v3772 = vunpack.c.h.b16 %v1224
      %v3773 = vunpack.c.l.b16 %v1225
      %v3774 = vunpack.c.h.b16 %v1225
      %v3775 = vunpack.c.l.b16 %v1226
      %v3776 = vunpack.c.h.b16 %v1226
      %v3777 = vunpack.c.l.b16 %v1227
      %v3778 = vunpack.c.h.b16 %v1227
      %v3779 = vunpack.c.l.b16 %v1228
      %v3780 = vunpack.c.h.b16 %v1228
      %v3781 = vunpack.c.l.b16 %v1229
      %v3782 = vunpack.c.h.b16 %v1229
      %v3783 = vunpack.c.l.b16 %v1230
      %v3784 = vunpack.c.h.b16 %v1230
      %v3785 = vunpack.c.l.b16 %v1231
      %v3786 = vunpack.c.h.b16 %v1231
      %v3787 = vunpack.c.l.b16 %v1232
      %v3788 = vunpack.c.h.b16 %v1232
      %v3789 = vunpack.c.l.b16 %v1233
      %v3790 = vunpack.c.h.b16 %v1233
      %v3791 = vunpack.c.l.b16 %v1234
      %v3792 = vunpack.c.h.b16 %v1234
      %v3793 = vunpack.c.l.b16 %v1235
      %v3794 = vunpack.c.h.b16 %v1235
      %v3795 = vunpack.c.l.b16 %v1236
      %v3796 = vunpack.c.h.b16 %v1236
      %v3797 = vunpack.c.l.b16 %v1237
      %v3798 = vunpack.c.h.b16 %v1237
      %v3799 = vunpack.c.l.b16 %v1238
      %v3800 = vunpack.c.h.b16 %v1238
      %v3801 = vunpack.c.l.b16 %v1239
      %v3802 = vunpack.c.h.b16 %v1239
      %v3803 = vunpack.c.l.b16 %v1240
      %v3804 = vunpack.c.h.b16 %v1240
      %v3805 = vunpack.c.l.b16 %v1241
      %v3806 = vunpack.c.h.b16 %v1241
      %v3807 = vunpack.c.l.b16 %v1242
      %v3808 = vunpack.c.h.b16 %v1242
      %v3809 = vunpack.c.l.b16 %v1243
      %v3810 = vunpack.c.h.b16 %v1243
      %v3811 = vunpack.c.l.b16 %v1244
      %v3812 = vunpack.c.h.b16 %v1244
      %v3813 = vunpack.c.l.b16 %v1245
      %v3814 = vunpack.c.h.b16 %v1245
      %v3815 = vunpack.c.l.b16 %v1246
      %v3816 = vunpack.c.h.b16 %v1246
      %v3817 = vunpack.c.l.b16 %v1247
      %v3818 = vunpack.c.h.b16 %v1247
      %v3819 = vunpack.c.l.b16 %v1248
      %v3820 = vunpack.c.h.b16 %v1248
      %v3821 = vunpack.c.l.b16 %v1249
      %v3822 = vunpack.c.h.b16 %v1249
      %v3823 = vunpack.c.l.b16 %v1250
      %v3824 = vunpack.c.h.b16 %v1250
      %v3825 = vunpack.c.l.b16 %v1251
      %v3826 = vunpack.c.h.b16 %v1251
      %v3827 = vunpack.c.l.b16 %v1252
      %v3828 = vunpack.c.h.b16 %v1252
      %v3829 = vunpack.c.l.b16 %v1253
      %v3830 = vunpack.c.h.b16 %v1253
      %v3831 = vunpack.c.l.b16 %v1254
      %v3832 = vunpack.c.h.b16 %v1254
      %v3833 = vunpack.c.l.b16 %v1255
      %v3834 = vunpack.c.h.b16 %v1255
      %v3835 = vunpack.c.l.b16 %v1256
      %v3836 = vunpack.c.h.b16 %v1256
      %v3837 = vunpack.c.l.b16 %v1257
      %v3838 = vunpack.c.h.b16 %v1257
      %v3839 = vunpack.c.l.b16 %v1258
      %v3840 = vunpack.c.h.b16 %v1258
      %v3841 = vunpack.c.l.b16 %v1259
      %v3842 = vunpack.c.h.b16 %v1259
      %v3843 = vunpack.c.l.b16 %v1260
      %v3844 = vunpack.c.h.b16 %v1260
      %v3845 = vunpack.c.l.b16 %v1261
      %v3846 = vunpack.c.h.b16 %v1261
      %v3847 = vunpack.c.l.b16 %v1262
      %v3848 = vunpack.c.h.b16 %v1262
      %v3849 = vunpack.c.l.b16 %v1263
      %v3850 = vunpack.c.h.b16 %v1263
      %v3851 = vunpack.c.l.b16 %v1264
      %v3852 = vunpack.c.h.b16 %v1264
      %v3853 = vunpack.c.l.b16 %v1265
      %v3854 = vunpack.c.h.b16 %v1265
      %v3855 = vunpack.c.l.b16 %v1266
      %v3856 = vunpack.c.h.b16 %v1266
      %v3857 = vunpack.c.l.b16 %v1267
      %v3858 = vunpack.c.h.b16 %v1267
      %v3859 = vunpack.c.l.b16 %v1268
      %v3860 = vunpack.c.h.b16 %v1268
      %v3861 = vunpack.c.l.b16 %v1269
      %v3862 = vunpack.c.h.b16 %v1269
      %v3863 = vunpack.c.l.b16 %v1270
      %v3864 = vunpack.c.h.b16 %v1270
      %v3865 = vunpack.c.l.b16 %v1271
      %v3866 = vunpack.c.h.b16 %v1271
      %v3867 = vunpack.c.l.b16 %v1272
      %v3868 = vunpack.c.h.b16 %v1272
      %v3869 = vunpack.c.l.b16 %v1273
      %v3870 = vunpack.c.h.b16 %v1273
      %v3871 = vunpack.c.l.b16 %v1274
      %v3872 = vunpack.c.h.b16 %v1274
      %v3873 = vunpack.c.l.b16 %v1275
      %v3874 = vunpack.c.h.b16 %v1275
      %v3875 = vunpack.c.l.b16 %v1276
      %v3876 = vunpack.c.h.b16 %v1276
      %v3877 = vunpack.c.l.b16 %v1277
      %v3878 = vunpack.c.h.b16 %v1277
      %v3879 = vunpack.c.l.b16 %v1278
      %v3880 = vunpack.c.h.b16 %v1278
      %v3881 = vunpack.c.l.b16 %v1279
      %v3882 = vunpack.c.h.b16 %v1279
      %v3883 = vunpack.c.l.b16 %v1280
      %v3884 = vunpack.c.h.b16 %v1280
      %v3885 = vunpack.c.l.b16 %v1281
      %v3886 = vunpack.c.h.b16 %v1281
      %v3887 = vunpack.c.l.b16 %v1282
      %v3888 = vunpack.c.h.b16 %v1282
      %v3889 = vunpack.c.l.b16 %v1283
      %v3890 = vunpack.c.h.b16 %v1283
      %v3891 = vunpack.c.l.b16 %v1284
      %v3892 = vunpack.c.h.b16 %v1284
      %v3893 = vunpack.c.l.b16 %v1285
      %v3894 = vunpack.c.h.b16 %v1285
      %v3895 = vunpack.c.l.b16 %v1286
      %v3896 = vunpack.c.h.b16 %v1286
      %v3897 = vunpack.c.l.b16 %v1287
      %v3898 = vunpack.c.h.b16 %v1287
      %v3899 = vunpack.c.l.b16 %v1288
      %v3900 = vunpack.c.h.b16 %v1288
      %v3901 = vunpack.c.l.b16 %v1289
      %v3902 = vunpack.c.h.b16 %v1289
      %v3903 = vunpack.c.l.b16 %v1290
      %v3904 = vunpack.c.h.b16 %v1290
      %v3905 = vunpack.c.l.b16 %v1291
      %v3906 = vunpack.c.h.b16 %v1291
      %v3907 = vunpack.c.l.b16 %v1292
      %v3908 = vunpack.c.h.b16 %v1292
      %v3909 = vunpack.c.l.b16 %v1293
      %v3910 = vunpack.c.h.b16 %v1293
      %v3911 = vunpack.c.l.b16 %v1294
      %v3912 = vunpack.c.h.b16 %v1294
      %v3913 = vunpack.c.l.b16 %v1295
      %v3914 = vunpack.c.h.b16 %v1295
      %v3915 = vunpack.c.l.b16 %v1296
      %v3916 = vunpack.c.h.b16 %v1296
      %v3917 = vunpack.c.l.b16 %v1297
      %v3918 = vunpack.c.h.b16 %v1297
      %v3919 = vunpack.c.l.b16 %v1298
      %v3920 = vunpack.c.h.b16 %v1298
      %v3921 = vunpack.c.l.b16 %v1299
      %v3922 = vunpack.c.h.b16 %v1299
      %v3923 = vunpack.c.l.b16 %v1300
      %v3924 = vunpack.c.h.b16 %v1300
      %v3925 = vunpack.c.l.b16 %v1301
      %v3926 = vunpack.c.h.b16 %v1301
      %v3927 = vunpack.c.l.b16 %v1302
      %v3928 = vunpack.c.h.b16 %v1302
      %v3929 = vunpack.c.l.b16 %v1303
      %v3930 = vunpack.c.h.b16 %v1303
      %v3931 = vunpack.c.l.b16 %v1304
      %v3932 = vunpack.c.h.b16 %v1304
      %v3933 = vunpack.c.l.b16 %v1305
      %v3934 = vunpack.c.h.b16 %v1305
      %v3935 = vunpack.c.l.b16 %v1306
      %v3936 = vunpack.c.h.b16 %v1306
      %v3937 = vunpack.c.l.b16 %v1307
      %v3938 = vunpack.c.h.b16 %v1307
      %v3939 = vunpack.c.l.b16 %v1308
      %v3940 = vunpack.c.h.b16 %v1308
      %v3941 = vunpack.c.l.b16 %v1309
      %v3942 = vunpack.c.h.b16 %v1309
      %v3943 = vunpack.c.l.b16 %v1310
      %v3944 = vunpack.c.h.b16 %v1310
      %v3945 = vunpack.c.l.b16 %v1311
      %v3946 = vunpack.c.h.b16 %v1311
      %v3947 = vunpack.c.l.b16 %v1312
      %v3948 = vunpack.c.h.b16 %v1312
      %v3949 = vunpack.c.l.b16 %v1313
      %v3950 = vunpack.c.h.b16 %v1313
      %v3951 = vunpack.c.l.b16 %v1314
      %v3952 = vunpack.c.h.b16 %v1314
      %v3953 = vunpack.c.l.b16 %v1315
      %v3954 = vunpack.c.h.b16 %v1315
      %v3955 = vunpack.c.l.b16 %v1316
      %v3956 = vunpack.c.h.b16 %v1316
      %v3957 = vunpack.c.l.b16 %v1317
      %v3958 = vunpack.c.h.b16 %v1317
      %v3959 = vunpack.c.l.b16 %v1318
      %v3960 = vunpack.c.h.b16 %v1318
      %v3961 = vunpack.c.l.b16 %v1319
      %v3962 = vunpack.c.h.b16 %v1319
      %v3963 = vunpack.c.l.b16 %v1320
      %v3964 = vunpack.c.h.b16 %v1320
      %v3965 = vunpack.c.l.b16 %v1321
      %v3966 = vunpack.c.h.b16 %v1321
      %v3967 = vunpack.c.l.b16 %v1322
      %v3968 = vunpack.c.h.b16 %v1322
      %v3969 = vunpack.c.l.b16 %v1323
      %v3970 = vunpack.c.h.b16 %v1323
      %v3971 = vunpack.c.l.b16 %v1324
      %v3972 = vunpack.c.h.b16 %v1324
      %v3973 = vunpack.c.l.b16 %v1325
      %v3974 = vunpack.c.h.b16 %v1325
      %v3975 = vunpack.c.l.b16 %v1326
      %v3976 = vunpack.c.h.b16 %v1326
      %v3977 = vunpack.c.l.b16 %v1327
      %v3978 = vunpack.c.h.b16 %v1327
      %v3979 = vunpack.c.l.b16 %v1328
      %v3980 = vunpack.c.h.b16 %v1328
      %v3981 = vunpack.c.l.b16 %v1329
      %v3982 = vunpack.c.h.b16 %v1329
      %v3983 = vunpack.c.l.b16 %v1330
      %v3984 = vunpack.c.h.b16 %v1330
      %v3985 = vunpack.c.l.b16 %v1331
      %v3986 = vunpack.c.h.b16 %v1331
      %v3987 = vunpack.c.l.b16 %v1332
      %v3988 = vunpack.c.h.b16 %v1332
      %v3989 = vunpack.c.l.b16 %v1333
      %v3990 = vunpack.c.h.b16 %v1333
      %v3991 = vunpack.c.l.b16 %v1334
      %v3992 = vunpack.c.h.b16 %v1334
      %v3993 = vunpack.c.l.b16 %v1335
      %v3994 = vunpack.c.h.b16 %v1335
      %v3995 = vunpack.c.l.b16 %v1336
      %v3996 = vunpack.c.h.b16 %v1336
      %v3997 = vunpack.c.l.b16 %v1337
      %v3998 = vunpack.c.h.b16 %v1337
      %v3999 = vunpack.c.l.b16 %v1338
      %v4000 = vunpack.c.h.b16 %v1338
      %v4001 = vunpack.c.l.b16 %v1339
      %v4002 = vunpack.c.h.b16 %v1339
      %v4003 = vunpack.c.l.b16 %v1340
      %v4004 = vunpack.c.h.b16 %v1340
      %v4005 = vunpack.c.l.b16 %v1341
      %v4006 = vunpack.c.h.b16 %v1341
      %v4007 = vunpack.c.l.b16 %v1342
      %v4008 = vunpack.c.h.b16 %v1342
      %v4009 = vunpack.c.l.b16 %v1343
      %v4010 = vunpack.c.h.b16 %v1343
      %v4011 = vunpack.c.l.b16 %v1344
      %v4012 = vunpack.c.h.b16 %v1344
      %v4013 = vunpack.c.l.b16 %v1345
      %v4014 = vunpack.c.h.b16 %v1345
      %v4015 = vunpack.c.l.b16 %v1346
      %v4016 = vunpack.c.h.b16 %v1346
      %v4017 = vunpack.c.l.b16 %v1347
      %v4018 = vunpack.c.h.b16 %v1347
      %v4019 = vunpack.c.l.b16 %v1348
      %v4020 = vunpack.c.h.b16 %v1348
      %v4021 = vunpack.c.l.b16 %v1349
      %v4022 = vunpack.c.h.b16 %v1349
      %v4023 = vunpack.c.l.b16 %v1350
      %v4024 = vunpack.c.h.b16 %v1350
      %v4025 = vunpack.c.l.b16 %v1351
      %v4026 = vunpack.c.h.b16 %v1351
      %v4027 = vunpack.c.l.b16 %v1352
      %v4028 = vunpack.c.h.b16 %v1352
      %v4029 = vunpack.c.l.b16 %v1353
      %v4030 = vunpack.c.h.b16 %v1353
      %v4031 = vunpack.c.l.b16 %v1354
      %v4032 = vunpack.c.h.b16 %v1354
      %v4033 = vunpack.c.l.b16 %v1355
      %v4034 = vunpack.c.h.b16 %v1355
      %v4035 = vunpack.c.l.b16 %v1356
      %v4036 = vunpack.c.h.b16 %v1356
      %v4037 = vunpack.c.l.b16 %v1357
      %v4038 = vunpack.c.h.b16 %v1357
      %v4039 = vunpack.c.l.b16 %v1358
      %v4040 = vunpack.c.h.b16 %v1358
      %v4041 = vunpack.c.l.b16 %v1359
      %v4042 = vunpack.c.h.b16 %v1359
      %v4043 = vunpack.c.l.b16 %v1360
      %v4044 = vunpack.c.h.b16 %v1360
      %v4045 = vunpack.c.l.b16 %v1361
      %v4046 = vunpack.c.h.b16 %v1361
      %v4047 = vunpack.c.l.b16 %v1362
      %v4048 = vunpack.c.h.b16 %v1362
      %v4049 = vunpack.c.l.b16 %v1363
      %v4050 = vunpack.c.h.b16 %v1363
      %v4051 = vunpack.c.l.b16 %v1364
      %v4052 = vunpack.c.h.b16 %v1364
      %v4053 = vunpack.c.l.b16 %v1365
      %v4054 = vunpack.c.h.b16 %v1365
      %v4055 = vunpack.c.l.b16 %v1366
      %v4056 = vunpack.c.h.b16 %v1366
      %v4057 = vunpack.c.l.b16 %v1367
      %v4058 = vunpack.c.h.b16 %v1367
      %v4059 = vunpack.c.l.b16 %v1368
      %v4060 = vunpack.c.h.b16 %v1368
      %v4061 = vunpack.c.l.b16 %v1369
      %v4062 = vunpack.c.h.b16 %v1369
      %v4063 = vunpack.c.l.b16 %v1370
      %v4064 = vunpack.c.h.b16 %v1370
      %v4065 = vunpack.c.l.b16 %v1371
      %v4066 = vunpack.c.h.b16 %v1371
      %v4067 = vunpack.c.l.b16 %v1372
      %v4068 = vunpack.c.h.b16 %v1372
      %v4069 = vunpack.c.l.b16 %v1373
      %v4070 = vunpack.c.h.b16 %v1373
      %v4071 = vunpack.c.l.b16 %v1374
      %v4072 = vunpack.c.h.b16 %v1374
      %v4073 = vunpack.c.l.b16 %v1375
      %v4074 = vunpack.c.h.b16 %v1375
      %v4075 = vunpack.c.l.b16 %v1376
      %v4076 = vunpack.c.h.b16 %v1376
      %v4077 = vunpack.c.l.b16 %v1377
      %v4078 = vunpack.c.h.b16 %v1377
      %v4079 = vunpack.c.l.b16 %v1378
      %v4080 = vunpack.c.h.b16 %v1378
      %v4081 = vunpack.c.l.b16 %v1379
      %v4082 = vunpack.c.h.b16 %v1379
      %v4083 = vunpack.c.l.b16 %v1380
      %v4084 = vunpack.c.h.b16 %v1380
      %v4085 = vunpack.c.l.b16 %v1381
      %v4086 = vunpack.c.h.b16 %v1381
      %v4087 = vunpack.c.l.b16 %v1382
      %v4088 = vunpack.c.h.b16 %v1382
      %v4089 = vunpack.c.l.b16 %v1383
      %v4090 = vunpack.c.h.b16 %v1383
      %v4091 = vunpack.c.l.b16 %v1384
      %v4092 = vunpack.c.h.b16 %v1384
      %v4093 = vunpack.c.l.b16 %v1385
      %v4094 = vunpack.c.h.b16 %v1385
      %v4095 = vunpack.c.l.b16 %v1386
      %v4096 = vunpack.c.h.b16 %v1386
      %v4097 = vunpack.c.l.b16 %v1387
      %v4098 = vunpack.c.h.b16 %v1387
      %v4099 = vunpack.c.l.b16 %v1388
      %v4100 = vunpack.c.h.b16 %v1388
      %v4101 = vunpack.c.l.b16 %v1389
      %v4102 = vunpack.c.h.b16 %v1389
      %v4103 = vunpack.c.l.b16 %v1390
      %v4104 = vunpack.c.h.b16 %v1390
      %v4105 = vunpack.c.l.b16 %v1391
      %v4106 = vunpack.c.h.b16 %v1391
      %v4107 = vunpack.c.l.b16 %v1392
      %v4108 = vunpack.c.h.b16 %v1392
      %v4109 = vunpack.c.l.b16 %v1393
      %v4110 = vunpack.c.h.b16 %v1393
      %v4111 = vunpack.c.l.b16 %v1394
      %v4112 = vunpack.c.h.b16 %v1394
      %v4113 = vunpack.c.l.b16 %v1395
      %v4114 = vunpack.c.h.b16 %v1395
      %v4115 = vunpack.c.l.b16 %v1396
      %v4116 = vunpack.c.h.b16 %v1396
      %v4117 = vunpack.c.l.b16 %v1397
      %v4118 = vunpack.c.h.b16 %v1397
      %v4119 = vunpack.c.l.b16 %v1398
      %v4120 = vunpack.c.h.b16 %v1398
      %v4121 = vunpack.c.l.b16 %v1399
      %v4122 = vunpack.c.h.b16 %v1399
      %v4123 = vunpack.c.l.b16 %v1400
      %v4124 = vunpack.c.h.b16 %v1400
      %v4125 = vunpack.c.l.b16 %v1401
      %v4126 = vunpack.c.h.b16 %v1401
      %v4127 = vunpack.c.l.b16 %v1402
      %v4128 = vunpack.c.h.b16 %v1402
      %v4129 = vunpack.c.l.b16 %v1403
      %v4130 = vunpack.c.h.b16 %v1403
      %v4131 = vunpack.c.l.b16 %v1404
      %v4132 = vunpack.c.h.b16 %v1404
      %v4133 = vunpack.c.l.b16 %v1405
      %v4134 = vunpack.c.h.b16 %v1405
      %v4135 = vunpack.c.l.b16 %v1406
      %v4136 = vunpack.c.h.b16 %v1406
      %v4137 = vunpack.c.l.b16 %v1407
      %v4138 = vunpack.c.h.b16 %v1407
      %v4139 = vunpack.c.l.b16 %v1408
      %v4140 = vunpack.c.h.b16 %v1408
      %v4141 = vunpack.c.l.b16 %v1409
      %v4142 = vunpack.c.h.b16 %v1409
      %v4143 = vunpack.c.l.b16 %v1410
      %v4144 = vunpack.c.h.b16 %v1410
      %v4145 = vunpack.c.l.b16 %v1411
      %v4146 = vunpack.c.h.b16 %v1411
      %v4147 = vunpack.c.l.b16 %v1412
      %v4148 = vunpack.c.h.b16 %v1412
      %v4149 = vunpack.c.l.b16 %v1413
      %v4150 = vunpack.c.h.b16 %v1413
      %v4151 = vunpack.c.l.b16 %v1414
      %v4152 = vunpack.c.h.b16 %v1414
      %v4153 = vunpack.c.l.b16 %v1415
      %v4154 = vunpack.c.h.b16 %v1415
      %v4155 = vunpack.c.l.b16 %v1416
      %v4156 = vunpack.c.h.b16 %v1416
      %v4157 = vunpack.c.l.b16 %v1417
      %v4158 = vunpack.c.h.b16 %v1417
      %v4159 = vunpack.c.l.b16 %v1418
      %v4160 = vunpack.c.h.b16 %v1418
      %v4161 = vunpack.c.l.b16 %v1419
      %v4162 = vunpack.c.h.b16 %v1419
      %v4163 = vunpack.c.l.b16 %v1420
      %v4164 = vunpack.c.h.b16 %v1420
      %v4165 = vunpack.c.l.b16 %v1421
      %v4166 = vunpack.c.h.b16 %v1421
      %v4167 = vunpack.c.l.b16 %v1422
      %v4168 = vunpack.c.h.b16 %v1422
      %v4169 = vunpack.c.l.b16 %v1423
      %v4170 = vunpack.c.h.b16 %v1423
      %v4171 = vunpack.c.l.b16 %v1424
      %v4172 = vunpack.c.h.b16 %v1424
      %v4173 = vunpack.c.l.b16 %v1425
      %v4174 = vunpack.c.h.b16 %v1425
      %v4175 = vunpack.c.l.b16 %v1426
      %v4176 = vunpack.c.h.b16 %v1426
      %v4177 = vunpack.c.l.b16 %v1427
      %v4178 = vunpack.c.h.b16 %v1427
      %v4179 = vunpack.c.l.b16 %v1428
      %v4180 = vunpack.c.h.b16 %v1428
      %v4181 = vunpack.c.l.b16 %v1429
      %v4182 = vunpack.c.h.b16 %v1429
      %v4183 = vunpack.c.l.b16 %v1430
      %v4184 = vunpack.c.h.b16 %v1430
      %v4185 = vunpack.c.l.b16 %v1431
      %v4186 = vunpack.c.h.b16 %v1431
      %v4187 = vunpack.c.l.b16 %v1432
      %v4188 = vunpack.c.h.b16 %v1432
      %v4189 = vunpack.c.l.b16 %v1433
      %v4190 = vunpack.c.h.b16 %v1433
      %v4191 = vunpack.c.l.b16 %v1434
      %v4192 = vunpack.c.h.b16 %v1434
      %v4193 = vunpack.c.l.b16 %v1435
      %v4194 = vunpack.c.h.b16 %v1435
      %v4195 = vunpack.c.l.b16 %v1436
      %v4196 = vunpack.c.h.b16 %v1436
      %v4197 = vunpack.c.l.b16 %v1437
      %v4198 = vunpack.c.h.b16 %v1437
      %v4199 = vunpack.c.l.b16 %v1438
      %v4200 = vunpack.c.h.b16 %v1438
      %v4201 = vunpack.c.l.b16 %v1439
      %v4202 = vunpack.c.h.b16 %v1439
      %v4203 = vunpack.c.l.b16 %v1440
      %v4204 = vunpack.c.h.b16 %v1440
      %v4205 = vunpack.c.l.b16 %v1441
      %v4206 = vunpack.c.h.b16 %v1441
      %v4207 = vunpack.c.l.b16 %v1442
      %v4208 = vunpack.c.h.b16 %v1442
      %v4209 = vunpack.c.l.b16 %v1443
      %v4210 = vunpack.c.h.b16 %v1443
      %v4211 = vunpack.c.l.b16 %v1444
      %v4212 = vunpack.c.h.b16 %v1444
      %v4213 = vunpack.c.l.b16 %v1445
      %v4214 = vunpack.c.h.b16 %v1445
      %v4215 = vunpack.c.l.b16 %v1446
      %v4216 = vunpack.c.h.b16 %v1446
      %v4217 = vunpack.c.l.b16 %v1447
      %v4218 = vunpack.c.h.b16 %v1447
      %v4219 = vunpack.c.l.b16 %v1448
      %v4220 = vunpack.c.h.b16 %v1448
      %v4221 = vunpack.c.l.b16 %v1449
      %v4222 = vunpack.c.h.b16 %v1449
      %v4223 = vunpack.c.l.b16 %v1450
      %v4224 = vunpack.c.h.b16 %v1450
      %v4225 = vunpack.c.l.b16 %v1451
      %v4226 = vunpack.c.h.b16 %v1451
      %v4227 = vunpack.c.l.b16 %v1452
      %v4228 = vunpack.c.h.b16 %v1452
      %v4229 = vunpack.c.l.b16 %v1453
      %v4230 = vunpack.c.h.b16 %v1453
      %v4231 = vunpack.c.l.b16 %v1454
      %v4232 = vunpack.c.h.b16 %v1454
      %v4233 = vunpack.c.l.b16 %v1455
      %v4234 = vunpack.c.h.b16 %v1455
      %v4235 = vunpack.c.l.b16 %v1456
      %v4236 = vunpack.c.h.b16 %v1456
      %v4237 = vunpack.c.l.b16 %v1457
      %v4238 = vunpack.c.h.b16 %v1457
      %v4239 = vunpack.c.l.b16 %v1458
      %v4240 = vunpack.c.h.b16 %v1458
      %v4241 = vunpack.c.l.b16 %v1459
      %v4242 = vunpack.c.h.b16 %v1459
      %v4243 = vunpack.c.l.b16 %v1460
      %v4244 = vunpack.c.h.b16 %v1460
      %v4245 = vunpack.c.l.b16 %v1461
      %v4246 = vunpack.c.h.b16 %v1461
      %v4247 = vunpack.c.l.b16 %v1462
      %v4248 = vunpack.c.h.b16 %v1462
      %v4249 = vunpack.c.l.b16 %v1463
      %v4250 = vunpack.c.h.b16 %v1463
      %v4251 = vunpack.c.l.b16 %v1464
      %v4252 = vunpack.c.h.b16 %v1464
      %v4253 = vunpack.c.l.b16 %v1465
      %v4254 = vunpack.c.h.b16 %v1465
      %v4255 = vunpack.c.l.b16 %v1466
      %v4256 = vunpack.c.h.b16 %v1466
      %v4257 = vunpack.c.l.b16 %v1467
      %v4258 = vunpack.c.h.b16 %v1467
      %v4259 = vunpack.c.l.b16 %v1468
      %v4260 = vunpack.c.h.b16 %v1468
      %v4261 = vunpack.c.l.b16 %v1469
      %v4262 = vunpack.c.h.b16 %v1469
      %v4263 = vunpack.c.l.b16 %v1470
      %v4264 = vunpack.c.h.b16 %v1470
      %v4265 = vunpack.c.l.b16 %v1471
      %v4266 = vunpack.c.h.b16 %v1471
      %v4267 = vunpack.c.l.b16 %v1472
      %v4268 = vunpack.c.h.b16 %v1472
      %v4269 = vunpack.c.l.b16 %v1473
      %v4270 = vunpack.c.h.b16 %v1473
      %v4271 = vunpack.c.l.b16 %v1474
      %v4272 = vunpack.c.h.b16 %v1474
      %v4273 = vunpack.c.l.b16 %v1475
      %v4274 = vunpack.c.h.b16 %v1475
      %v4275 = vunpack.c.l.b16 %v1476
      %v4276 = vunpack.c.h.b16 %v1476
      %v4277 = vunpack.c.l.b16 %v1477
      %v4278 = vunpack.c.h.b16 %v1477
      %v4279 = vunpack.c.l.b16 %v1478
      %v4280 = vunpack.c.h.b16 %v1478
      %v4281 = vunpack.c.l.b16 %v1479
      %v4282 = vunpack.c.h.b16 %v1479
      %v4283 = vunpack.c.l.b16 %v1480
      %v4284 = vunpack.c.h.b16 %v1480
      %v4285 = vunpack.c.l.b16 %v1481
      %v4286 = vunpack.c.h.b16 %v1481
      %v4287 = vunpack.c.l.b16 %v1482
      %v4288 = vunpack.c.h.b16 %v1482
      %v4289 = vunpack.c.l.b16 %v1483
      %v4290 = vunpack.c.h.b16 %v1483
      %v4291 = vunpack.c.l.b16 %v1484
      %v4292 = vunpack.c.h.b16 %v1484
      %v4293 = vunpack.c.l.b16 %v1485
      %v4294 = vunpack.c.h.b16 %v1485
      %v4295 = vunpack.c.l.b16 %v1486
      %v4296 = vunpack.c.h.b16 %v1486
      %v4297 = vunpack.c.l.b16 %v1487
      %v4298 = vunpack.c.h.b16 %v1487
      %v4299 = vunpack.c.l.b16 %v1488
      %v4300 = vunpack.c.h.b16 %v1488
      %v4301 = vunpack.c.l.b16 %v1489
      %v4302 = vunpack.c.h.b16 %v1489
      %v4303 = vunpack.c.l.b16 %v1490
      %v4304 = vunpack.c.h.b16 %v1490
      %v4305 = vunpack.c.l.b16 %v1491
      %v4306 = vunpack.c.h.b16 %v1491
      %v4307 = vunpack.c.l.b16 %v1492
      %v4308 = vunpack.c.h.b16 %v1492
      %v4309 = vunpack.c.l.b16 %v1493
      %v4310 = vunpack.c.h.b16 %v1493
      %v4311 = vunpack.c.l.b16 %v1494
      %v4312 = vunpack.c.h.b16 %v1494
      %v4313 = vunpack.c.l.b16 %v1495
      %v4314 = vunpack.c.h.b16 %v1495
      %v4315 = vunpack.c.l.b16 %v1496
      %v4316 = vunpack.c.h.b16 %v1496
      %v4317 = vunpack.c.l.b16 %v1497
      %v4318 = vunpack.c.h.b16 %v1497
      %v4319 = vunpack.c.l.b16 %v1498
      %v4320 = vunpack.c.h.b16 %v1498
      %v4321 = vunpack.c.l.b16 %v1499
      %v4322 = vunpack.c.h.b16 %v1499
      %v4323 = vunpack.c.l.b16 %v1500
      %v4324 = vunpack.c.h.b16 %v1500
      %v4325 = vunpack.c.l.b16 %v1501
      %v4326 = vunpack.c.h.b16 %v1501
      %v4327 = vunpack.c.l.b16 %v1502
      %v4328 = vunpack.c.h.b16 %v1502
      %v4329 = vunpack.c.l.b16 %v1503
      %v4330 = vunpack.c.h.b16 %v1503
      %v4331 = vunpack.c.l.b16 %v1504
      %v4332 = vunpack.c.h.b16 %v1504
      %v4333 = vunpack.c.l.b16 %v1505
      %v4334 = vunpack.c.h.b16 %v1505
      %v4335 = vunpack.c.l.b16 %v1506
      %v4336 = vunpack.c.h.b16 %v1506
      %v4337 = vunpack.c.l.b16 %v1507
      %v4338 = vunpack.c.h.b16 %v1507
      %v4339 = vunpack.c.l.b16 %v1508
      %v4340 = vunpack.c.h.b16 %v1508
      %v4341 = vunpack.c.l.b16 %v1509
      %v4342 = vunpack.c.h.b16 %v1509
      %v4343 = vunpack.c.l.b16 %v1510
      %v4344 = vunpack.c.h.b16 %v1510
      %v4345 = vunpack.c.l.b16 %v1511
      %v4346 = vunpack.c.h.b16 %v1511
      %v4347 = vunpack.c.l.b16 %v1512
      %v4348 = vunpack.c.h.b16 %v1512
      %v4349 = vunpack.c.l.b16 %v1513
      %v4350 = vunpack.c.h.b16 %v1513
      %v4351 = vunpack.c.l.b16 %v1514
      %v4352 = vunpack.c.h.b16 %v1514
      %v4353 = vunpack.c.l.b16 %v1515
      %v4354 = vunpack.c.h.b16 %v1515
      %v4355 = vunpack.c.l.b16 %v1516
      %v4356 = vunpack.c.h.b16 %v1516
      %v4357 = vunpack.c.l.b16 %v1517
      %v4358 = vunpack.c.h.b16 %v1517
      %v4359 = vunpack.c.l.b16 %v1518
      %v4360 = vunpack.c.h.b16 %v1518
      %v4361 = vunpack.c.l.b16 %v1519
      %v4362 = vunpack.c.h.b16 %v1519
      %v4363 = vunpack.c.l.b16 %v1520
      %v4364 = vunpack.c.h.b16 %v1520
      %v4365 = vunpack.c.l.b16 %v1521
      %v4366 = vunpack.c.h.b16 %v1521
      %v4367 = vunpack.c.l.b16 %v1522
      %v4368 = vunpack.c.h.b16 %v1522
      %v4369 = vunpack.c.l.b16 %v1523
      %v4370 = vunpack.c.h.b16 %v1523
      %v4371 = vunpack.c.l.b16 %v1524
      %v4372 = vunpack.c.h.b16 %v1524
      %v4373 = vunpack.c.l.b16 %v1525
      %v4374 = vunpack.c.h.b16 %v1525
      %v4375 = vunpack.c.l.b16 %v1526
      %v4376 = vunpack.c.h.b16 %v1526
      %v4377 = vunpack.c.l.b16 %v1527
      %v4378 = vunpack.c.h.b16 %v1527
      %v4379 = vunpack.c.l.b16 %v1528
      %v4380 = vunpack.c.h.b16 %v1528
      %v4381 = vunpack.c.l.b16 %v1529
      %v4382 = vunpack.c.h.b16 %v1529
      %v4383 = vunpack.c.l.b16 %v1530
      %v4384 = vunpack.c.h.b16 %v1530
      %v4385 = vunpack.c.l.b16 %v1531
      %v4386 = vunpack.c.h.b16 %v1531
      %v4387 = vunpack.c.l.b16 %v1532
      %v4388 = vunpack.c.h.b16 %v1532
      %v4389 = vunpack.c.l.b16 %v1533
      %v4390 = vunpack.c.h.b16 %v1533
      %v4391 = vunpack.c.l.b16 %v1534
      %v4392 = vunpack.c.h.b16 %v1534
      %v4393 = vunpack.c.l.b16 %v1535
      %v4394 = vunpack.c.h.b16 %v1535
      %v4395 = vunpack.c.l.b16 %v1536
      %v4396 = vunpack.c.h.b16 %v1536
      %v4397 = vunpack.c.l.b16 %v1537
      %v4398 = vunpack.c.h.b16 %v1537
      %v4399 = vunpack.c.l.b16 %v1538
      %v4400 = vunpack.c.h.b16 %v1538
      %v4401 = vunpack.c.l.b16 %v1539
      %v4402 = vunpack.c.h.b16 %v1539
      %v4403 = vunpack.c.l.b16 %v1540
      %v4404 = vunpack.c.h.b16 %v1540
      %v4405 = vunpack.c.l.b16 %v1541
      %v4406 = vunpack.c.h.b16 %v1541
      %v4407 = vunpack.c.l.b16 %v1542
      %v4408 = vunpack.c.h.b16 %v1542
      %v4409 = vunpack.c.l.b16 %v1543
      %v4410 = vunpack.c.h.b16 %v1543
      %v4411 = vunpack.c.l.b16 %v1544
      %v4412 = vunpack.c.h.b16 %v1544
      %v4413 = vunpack.c.l.b16 %v1545
      %v4414 = vunpack.c.h.b16 %v1545
      %v4415 = vunpack.c.l.b16 %v1546
      %v4416 = vunpack.c.h.b16 %v1546
      %v4417 = vunpack.c.l.b16 %v1547
      %v4418 = vunpack.c.h.b16 %v1547
      %v4419 = vunpack.c.l.b16 %v1548
      %v4420 = vunpack.c.h.b16 %v1548
      %v4421 = vunpack.c.l.b16 %v1549
      %v4422 = vunpack.c.h.b16 %v1549
      %v4423 = vunpack.c.l.b16 %v1550
      %v4424 = vunpack.c.h.b16 %v1550
      %v4425 = vunpack.c.l.b16 %v1551
      %v4426 = vunpack.c.h.b16 %v1551
      %v4427 = vunpack.c.l.b16 %v1552
      %v4428 = vunpack.c.h.b16 %v1552
      %v4429 = vunpack.c.l.b16 %v1553
      %v4430 = vunpack.c.h.b16 %v1553
      %v4431 = vunpack.c.l.b16 %v1554
      %v4432 = vunpack.c.h.b16 %v1554
      %v4433 = vunpack.c.l.b16 %v1555
      %v4434 = vunpack.c.h.b16 %v1555
      %v4435 = vunpack.c.l.b16 %v1556
      %v4436 = vunpack.c.h.b16 %v1556
      %v4437 = vunpack.c.l.b16 %v1557
      %v4438 = vunpack.c.h.b16 %v1557
      %v4439 = vunpack.c.l.b16 %v1558
      %v4440 = vunpack.c.h.b16 %v1558
      %v4441 = vunpack.c.l.b16 %v1559
      %v4442 = vunpack.c.h.b16 %v1559
      %v4443 = vunpack.c.l.b16 %v1560
      %v4444 = vunpack.c.h.b16 %v1560
      %v4445 = vunpack.c.l.b16 %v1561
      %v4446 = vunpack.c.h.b16 %v1561
      %v4447 = vunpack.c.l.b16 %v1562
      %v4448 = vunpack.c.h.b16 %v1562
      %v4449 = vunpack.c.l.b16 %v1563
      %v4450 = vunpack.c.h.b16 %v1563
      %v4451 = vunpack.c.l.b16 %v1564
      %v4452 = vunpack.c.h.b16 %v1564
      %v4453 = vunpack.c.l.b16 %v1565
      %v4454 = vunpack.c.h.b16 %v1565
      %v4455 = vunpack.c.l.b16 %v1566
      %v4456 = vunpack.c.h.b16 %v1566
      %v4457 = vunpack.c.l.b16 %v1567
      %v4458 = vunpack.c.h.b16 %v1567
      %v4459 = vunpack.c.l.b16 %v1568
      %v4460 = vunpack.c.h.b16 %v1568
      %v4461 = vunpack.c.l.b16 %v1569
      %v4462 = vunpack.c.h.b16 %v1569
      %v4463 = vunpack.c.l.b16 %v1570
      %v4464 = vunpack.c.h.b16 %v1570
      %v4465 = vunpack.c.l.b16 %v1571
      %v4466 = vunpack.c.h.b16 %v1571
      %v4467 = vunpack.c.l.b16 %v1572
      %v4468 = vunpack.c.h.b16 %v1572
      %v4469 = vunpack.c.l.b16 %v1573
      %v4470 = vunpack.c.h.b16 %v1573
      %v4471 = vunpack.c.l.b16 %v1574
      %v4472 = vunpack.c.h.b16 %v1574
      %v4473 = vunpack.c.l.b16 %v1575
      %v4474 = vunpack.c.h.b16 %v1575
      %v4475 = vunpack.c.l.b16 %v1576
      %v4476 = vunpack.c.h.b16 %v1576
      %v4477 = vunpack.c.l.b16 %v1577
      %v4478 = vunpack.c.h.b16 %v1577
      %v4479 = vunpack.c.l.b16 %v1578
      %v4480 = vunpack.c.h.b16 %v1578
      %v4481 = vunpack.c.l.b16 %v1579
      %v4482 = vunpack.c.h.b16 %v1579
      %v4483 = vunpack.c.l.b16 %v1580
      %v4484 = vunpack.c.h.b16 %v1580
      %v4485 = vunpack.c.l.b16 %v1581
      %v4486 = vunpack.c.h.b16 %v1581
      %v4487 = vunpack.c.l.b16 %v1582
      %v4488 = vunpack.c.h.b16 %v1582
      %v4489 = vunpack.c.l.b16 %v1583
      %v4490 = vunpack.c.h.b16 %v1583
      %v4491 = vunpack.c.l.b16 %v1584
      %v4492 = vunpack.c.h.b16 %v1584
      %v4493 = vunpack.c.l.b16 %v1585
      %v4494 = vunpack.c.h.b16 %v1585
      %v4495 = vunpack.c.l.b16 %v1586
      %v4496 = vunpack.c.h.b16 %v1586
      %v4497 = vunpack.c.l.b16 %v1587
      %v4498 = vunpack.c.h.b16 %v1587
      %v4499 = vunpack.c.l.b16 %v1588
      %v4500 = vunpack.c.h.b16 %v1588
      %v4501 = vunpack.c.l.b16 %v1589
      %v4502 = vunpack.c.h.b16 %v1589
      %v4503 = vunpack.c.l.b16 %v1590
      %v4504 = vunpack.c.h.b16 %v1590
      %v4505 = vunpack.c.l.b16 %v1591
      %v4506 = vunpack.c.h.b16 %v1591
      %v4507 = vunpack.c.l.b16 %v1592
      %v4508 = vunpack.c.h.b16 %v1592
      %v4509 = vunpack.c.l.b16 %v1593
      %v4510 = vunpack.c.h.b16 %v1593
      %v4511 = vunpack.c.l.b16 %v1594
      %v4512 = vunpack.c.h.b16 %v1594
      %v4513 = vunpack.c.l.b16 %v1595
      %v4514 = vunpack.c.h.b16 %v1595
      %v4515 = vunpack.c.l.b16 %v1596
      %v4516 = vunpack.c.h.b16 %v1596
      %v4517 = vunpack.c.l.b16 %v1597
      %v4518 = vunpack.c.h.b16 %v1597
      %v4519 = vunpack.c.l.b16 %v1598
      %v4520 = vunpack.c.h.b16 %v1598
      %v4521 = vunpack.c.l.b16 %v1599
      %v4522 = vunpack.c.h.b16 %v1599
      %v4523 = vunpack.c.l.b16 %v1600
      %v4524 = vunpack.c.h.b16 %v1600
      %v4525 = vunpack.c.l.b16 %v1601
      %v4526 = vunpack.c.h.b16 %v1601
      %v4527 = vunpack.c.l.b16 %v1602
      %v4528 = vunpack.c.h.b16 %v1602
      %v4529 = vunpack.c.l.b16 %v1603
      %v4530 = vunpack.c.h.b16 %v1603
      %v4531 = vunpack.c.l.b16 %v1604
      %v4532 = vunpack.c.h.b16 %v1604
      %v4533 = vunpack.c.l.b16 %v1605
      %v4534 = vunpack.c.h.b16 %v1605
      %v4535 = vunpack.c.l.b16 %v1606
      %v4536 = vunpack.c.h.b16 %v1606
      %v4537 = vunpack.c.l.b16 %v1607
      %v4538 = vunpack.c.h.b16 %v1607
      %v4539 = vunpack.c.l.b16 %v1608
      %v4540 = vunpack.c.h.b16 %v1608
      %v4541 = vunpack.c.l.b16 %v1609
      %v4542 = vunpack.c.h.b16 %v1609
      %v4543 = vunpack.c.l.b16 %v1610
      %v4544 = vunpack.c.h.b16 %v1610
      %v4545 = vunpack.c.l.b16 %v1611
      %v4546 = vunpack.c.h.b16 %v1611
      %v4547 = vunpack.c.l.b16 %v1612
      %v4548 = vunpack.c.h.b16 %v1612
      %v4549 = vunpack.c.l.b16 %v1613
      %v4550 = vunpack.c.h.b16 %v1613
      %v4551 = vunpack.c.l.b16 %v1614
      %v4552 = vunpack.c.h.b16 %v1614
      %v4553 = vunpack.c.l.b16 %v1615
      %v4554 = vunpack.c.h.b16 %v1615
      %v4555 = vunpack.c.l.b16 %v1616
      %v4556 = vunpack.c.h.b16 %v1616
      %v4557 = vunpack.c.l.b16 %v1617
      %v4558 = vunpack.c.h.b16 %v1617
      %v4559 = vunpack.c.l.b16 %v1618
      %v4560 = vunpack.c.h.b16 %v1618
      %v4561 = vunpack.c.l.b16 %v1619
      %v4562 = vunpack.c.h.b16 %v1619
      %v4563 = vunpack.c.l.b16 %v1620
      %v4564 = vunpack.c.h.b16 %v1620
      %v4565 = vunpack.c.l.b16 %v1621
      %v4566 = vunpack.c.h.b16 %v1621
      %v4567 = vunpack.c.l.b16 %v1622
      %v4568 = vunpack.c.h.b16 %v1622
      %v4569 = vunpack.c.l.b16 %v1623
      %v4570 = vunpack.c.h.b16 %v1623
      %v4571 = vunpack.c.l.b16 %v1624
      %v4572 = vunpack.c.h.b16 %v1624
      %v4573 = vunpack.c.l.b16 %v1625
      %v4574 = vunpack.c.h.b16 %v1625
      %v4575 = vunpack.c.l.b16 %v1626
      %v4576 = vunpack.c.h.b16 %v1626
      %v4577 = vunpack.c.l.b16 %v1627
      %v4578 = vunpack.c.h.b16 %v1627
      %v4579 = vunpack.c.l.b16 %v1628
      %v4580 = vunpack.c.h.b16 %v1628
      %v4581 = vunpack.c.l.b16 %v1629
      %v4582 = vunpack.c.h.b16 %v1629
      %v4583 = vunpack.c.l.b16 %v1630
      %v4584 = vunpack.c.h.b16 %v1630
      %v4585 = vunpack.c.l.b16 %v1631
      %v4586 = vunpack.c.h.b16 %v1631
      %v4587 = vunpack.c.l.b16 %v1632
      %v4588 = vunpack.c.h.b16 %v1632
      %v4589 = vunpack.c.l.b16 %v1633
      %v4590 = vunpack.c.h.b16 %v1633
      %v4591 = vunpack.c.l.b16 %v1634
      %v4592 = vunpack.c.h.b16 %v1634
      %v4593 = vunpack.c.l.b16 %v1635
      %v4594 = vunpack.c.h.b16 %v1635
      %v4595 = vunpack.c.l.b16 %v1636
      %v4596 = vunpack.c.h.b16 %v1636
      %v4597 = vunpack.c.l.b16 %v1637
      %v4598 = vunpack.c.h.b16 %v1637
      %v4599 = vunpack.c.l.b16 %v1638
      %v4600 = vunpack.c.h.b16 %v1638
      %v4601 = vunpack.c.l.b16 %v1639
      %v4602 = vunpack.c.h.b16 %v1639
      %v4603 = vunpack.c.l.b16 %v1640
      %v4604 = vunpack.c.h.b16 %v1640
      %v4605 = vunpack.c.l.b16 %v1641
      %v4606 = vunpack.c.h.b16 %v1641
      %v4607 = vunpack.c.l.b16 %v1642
      %v4608 = vunpack.c.h.b16 %v1642
      %v4609 = vunpack.c.l.b16 %v1643
      %v4610 = vunpack.c.h.b16 %v1643
      %v4611 = vunpack.c.l.b16 %v1644
      %v4612 = vunpack.c.h.b16 %v1644
      %v4613 = vunpack.c.l.b16 %v1645
      %v4614 = vunpack.c.h.b16 %v1645
      %v4615 = vunpack.c.l.b16 %v1646
      %v4616 = vunpack.c.h.b16 %v1646
      %v4617 = vunpack.c.l.b16 %v1647
      %v4618 = vunpack.c.h.b16 %v1647
      %v4619 = vunpack.c.l.b16 %v1648
      %v4620 = vunpack.c.h.b16 %v1648
      %v4621 = vunpack.c.l.b16 %v1649
      %v4622 = vunpack.c.h.b16 %v1649
      %v4623 = vunpack.c.l.b16 %v1650
      %v4624 = vunpack.c.h.b16 %v1650
      %v4625 = vunpack.c.l.b16 %v1651
      %v4626 = vunpack.c.h.b16 %v1651
      %v4627 = vunpack.c.l.b16 %v1652
      %v4628 = vunpack.c.h.b16 %v1652
      %v4629 = vunpack.c.l.b16 %v1653
      %v4630 = vunpack.c.h.b16 %v1653
      %v4631 = vunpack.c.l.b16 %v1654
      %v4632 = vunpack.c.h.b16 %v1654
      %v4633 = vunpack.c.l.b16 %v1655
      %v4634 = vunpack.c.h.b16 %v1655
      %v4635 = vunpack.c.l.b16 %v1656
      %v4636 = vunpack.c.h.b16 %v1656
      %v4637 = vunpack.c.l.b16 %v1657
      %v4638 = vunpack.c.h.b16 %v1657
      %v4639 = vunpack.c.l.b16 %v1658
      %v4640 = vunpack.c.h.b16 %v1658
      %v4641 = vunpack.c.l.b16 %v1659
      %v4642 = vunpack.c.h.b16 %v1659
      %v4643 = vunpack.c.l.b16 %v1660
      %v4644 = vunpack.c.h.b16 %v1660
      %v4645 = vunpack.c.l.b16 %v1661
      %v4646 = vunpack.c.h.b16 %v1661
      %v4647 = vunpack.c.l.b16 %v1662
      %v4648 = vunpack.c.h.b16 %v1662
      %v4649 = vunpack.c.l.b16 %v1663
      %v4650 = vunpack.c.h.b16 %v1663
      %v4651 = vunpack.c.l.b16 %v1664
      %v4652 = vunpack.c.h.b16 %v1664
      %v4653 = vunpack.c.l.b16 %v1665
      %v4654 = vunpack.c.h.b16 %v1665
      %v4655 = vunpack.c.l.b16 %v1666
      %v4656 = vunpack.c.h.b16 %v1666
      %v4657 = vunpack.c.l.b16 %v1667
      %v4658 = vunpack.c.h.b16 %v1667
      %v4659 = vunpack.c.l.b16 %v1668
      %v4660 = vunpack.c.h.b16 %v1668
      %v4661 = vunpack.c.l.b16 %v1669
      %v4662 = vunpack.c.h.b16 %v1669
      %v4663 = vunpack.c.l.b16 %v1670
      %v4664 = vunpack.c.h.b16 %v1670
      %v4665 = vunpack.c.l.b16 %v1671
      %v4666 = vunpack.c.h.b16 %v1671
      %v4667 = vunpack.c.l.b16 %v1672
      %v4668 = vunpack.c.h.b16 %v1672
      %v4669 = vunpack.c.l.b16 %v1673
      %v4670 = vunpack.c.h.b16 %v1673
      %v4671 = vunpack.c.l.b16 %v1674
      %v4672 = vunpack.c.h.b16 %v1674
      %v4673 = vunpack.c.l.b16 %v1675
      %v4674 = vunpack.c.h.b16 %v1675
      %v4675 = vunpack.c.l.b16 %v1676
      %v4676 = vunpack.c.h.b16 %v1676
      %v4677 = vunpack.c.l.b16 %v1677
      %v4678 = vunpack.c.h.b16 %v1677
      %v4679 = vunpack.c.l.b16 %v1678
      %v4680 = vunpack.c.h.b16 %v1678
      %v4681 = vunpack.c.l.b16 %v1679
      %v4682 = vunpack.c.h.b16 %v1679
      %v4683 = vunpack.c.l.b16 %v1680
      %v4684 = vunpack.c.h.b16 %v1680
      %v4685 = vunpack.c.l.b16 %v1681
      %v4686 = vunpack.c.h.b16 %v1681
      %v4687 = vunpack.c.l.b16 %v1682
      %v4688 = vunpack.c.h.b16 %v1682
      %v4689 = vunpack.c.l.b16 %v1683
      %v4690 = vunpack.c.h.b16 %v1683
      %v4691 = vunpack.c.l.b16 %v1684
      %v4692 = vunpack.c.h.b16 %v1684
      %v4693 = vunpack.c.l.b16 %v1685
      %v4694 = vunpack.c.h.b16 %v1685
      %v4695 = vunpack.c.l.b16 %v1686
      %v4696 = vunpack.c.h.b16 %v1686
      %v4697 = vunpack.c.l.b16 %v1687
      %v4698 = vunpack.c.h.b16 %v1687
      %v4699 = vunpack.c.l.b16 %v1688
      %v4700 = vunpack.c.h.b16 %v1688
      %v4701 = vunpack.c.l.b16 %v1689
      %v4702 = vunpack.c.h.b16 %v1689
      %v4703 = vunpack.c.l.b16 %v1690
      %v4704 = vunpack.c.h.b16 %v1690
      %v4705 = vunpack.c.l.b16 %v1691
      %v4706 = vunpack.c.h.b16 %v1691
      %v4707 = vunpack.c.l.b16 %v1692
      %v4708 = vunpack.c.h.b16 %v1692
      %v4709 = vunpack.c.l.b16 %v1693
      %v4710 = vunpack.c.h.b16 %v1693
      %v4711 = vunpack.c.l.b16 %v1694
      %v4712 = vunpack.c.h.b16 %v1694
      %v4713 = vunpack.c.l.b16 %v1695
      %v4714 = vunpack.c.h.b16 %v1695
      %v4715 = vunpack.c.l.b16 %v1696
      %v4716 = vunpack.c.h.b16 %v1696
      %v4717 = vunpack.c.l.b16 %v1697
      %v4718 = vunpack.c.h.b16 %v1697
      %v4719 = vunpack.c.l.b16 %v1698
      %v4720 = vunpack.c.h.b16 %v1698
      %v4721 = vunpack.c.l.b16 %v1699
      %v4722 = vunpack.c.h.b16 %v1699
      %v4723 = vunpack.c.l.b16 %v1700
      %v4724 = vunpack.c.h.b16 %v1700
      %v4725 = vunpack.c.l.b16 %v1701
      %v4726 = vunpack.c.h.b16 %v1701
      %v4727 = vunpack.c.l.b16 %v1702
      %v4728 = vunpack.c.h.b16 %v1702
      %v4729 = vunpack.c.l.b16 %v1703
      %v4730 = vunpack.c.h.b16 %v1703
      %v4731 = vunpack.c.l.b16 %v1704
      %v4732 = vunpack.c.h.b16 %v1704
      %v4733 = vunpack.c.l.b16 %v1705
      %v4734 = vunpack.c.h.b16 %v1705
      %v4735 = vunpack.c.l.b16 %v1706
      %v4736 = vunpack.c.h.b16 %v1706
      %v4737 = vunpack.c.l.b16 %v1707
      %v4738 = vunpack.c.h.b16 %v1707
      %v4739 = vunpack.c.l.b16 %v1708
      %v4740 = vunpack.c.h.b16 %v1708
      %v4741 = vunpack.c.l.b16 %v1709
      %v4742 = vunpack.c.h.b16 %v1709
      %v4743 = vunpack.c.l.b16 %v1710
      %v4744 = vunpack.c.h.b16 %v1710
      %v4745 = vunpack.c.l.b16 %v1711
      %v4746 = vunpack.c.h.b16 %v1711
      %v4747 = vunpack.c.l.b16 %v1712
      %v4748 = vunpack.c.h.b16 %v1712
      %v4749 = vunpack.c.l.b16 %v1713
      %v4750 = vunpack.c.h.b16 %v1713
      %v4751 = vunpack.c.l.b16 %v1714
      %v4752 = vunpack.c.h.b16 %v1714
      %v4753 = vunpack.c.l.b16 %v1715
      %v4754 = vunpack.c.h.b16 %v1715
      %v4755 = vunpack.c.l.b16 %v1716
      %v4756 = vunpack.c.h.b16 %v1716
      %v4757 = vunpack.c.l.b16 %v1717
      %v4758 = vunpack.c.h.b16 %v1717
      %v4759 = vunpack.c.l.b16 %v1718
      %v4760 = vunpack.c.h.b16 %v1718
      %v4761 = vunpack.c.l.b16 %v1719
      %v4762 = vunpack.c.h.b16 %v1719
      %v4763 = vunpack.c.l.b16 %v1720
      %v4764 = vunpack.c.h.b16 %v1720
      %v4765 = vunpack.c.l.b16 %v1721
      %v4766 = vunpack.c.h.b16 %v1721
      %v4767 = vunpack.c.l.b16 %v1722
      %v4768 = vunpack.c.h.b16 %v1722
      %v4769 = vunpack.c.l.b16 %v1723
      %v4770 = vunpack.c.h.b16 %v1723
      %v4771 = vunpack.c.l.b16 %v1724
      %v4772 = vunpack.c.h.b16 %v1724
      %v4773 = vunpack.c.l.b16 %v1725
      %v4774 = vunpack.c.h.b16 %v1725
      %v4775 = vunpack.c.l.b16 %v1726
      %v4776 = vunpack.c.h.b16 %v1726
      %v4777 = vunpack.c.l.b16 %v1727
      %v4778 = vunpack.c.h.b16 %v1727
      %v4779 = vunpack.c.l.b16 %v1728
      %v4780 = vunpack.c.h.b16 %v1728
      %v4781 = vunpack.c.l.b16 %v1729
      %v4782 = vunpack.c.h.b16 %v1729
      %v4783 = vunpack.c.l.b16 %v1730
      %v4784 = vunpack.c.h.b16 %v1730
      %v4785 = vunpack.c.l.b16 %v1731
      %v4786 = vunpack.c.h.b16 %v1731
      %v4787 = vunpack.c.l.b16 %v1732
      %v4788 = vunpack.c.h.b16 %v1732
      %v4789 = vunpack.c.l.b16 %v1733
      %v4790 = vunpack.c.h.b16 %v1733
      %v4791 = vunpack.c.l.b16 %v1734
      %v4792 = vunpack.c.h.b16 %v1734
      %v4793 = vunpack.c.l.b16 %v1735
      %v4794 = vunpack.c.h.b16 %v1735
      %v4795 = vunpack.c.l.b16 %v1736
      %v4796 = vunpack.c.h.b16 %v1736
      %v4797 = vunpack.c.l.b16 %v1737
      %v4798 = vunpack.c.h.b16 %v1737
      %v4799 = vunpack.c.l.b16 %v1738
      %v4800 = vunpack.c.h.b16 %v1738
      %v4801 = vunpack.c.l.b16 %v1739
      %v4802 = vunpack.c.h.b16 %v1739
      %v4803 = vunpack.c.l.b16 %v1740
      %v4804 = vunpack.c.h.b16 %v1740
      %v4805 = vunpack.c.l.b16 %v1741
      %v4806 = vunpack.c.h.b16 %v1741
      %v4807 = vunpack.c.l.b16 %v1742
      %v4808 = vunpack.c.h.b16 %v1742
      %v4809 = vunpack.c.l.b16 %v1743
      %v4810 = vunpack.c.h.b16 %v1743
      %v4811 = vunpack.c.l.b16 %v1744
      %v4812 = vunpack.c.h.b16 %v1744
      %v4813 = vunpack.c.l.b16 %v1745
      %v4814 = vunpack.c.h.b16 %v1745
      %v4815 = vunpack.c.l.b16 %v1746
      %v4816 = vunpack.c.h.b16 %v1746
      %v4817 = vunpack.c.l.b16 %v1747
      %v4818 = vunpack.c.h.b16 %v1747
      %v4819 = vunpack.c.l.b16 %v1748
      %v4820 = vunpack.c.h.b16 %v1748
      %v4821 = vunpack.c.l.b16 %v1749
      %v4822 = vunpack.c.h.b16 %v1749
      %v4823 = vunpack.c.l.b16 %v1750
      %v4824 = vunpack.c.h.b16 %v1750
      %v4825 = vunpack.c.l.b16 %v1751
      %v4826 = vunpack.c.h.b16 %v1751
      %v4827 = vunpack.c.l.b16 %v1752
      %v4828 = vunpack.c.h.b16 %v1752
      %v4829 = vunpack.c.l.b16 %v1753
      %v4830 = vunpack.c.h.b16 %v1753
      %v4831 = vunpack.c.l.b16 %v1754
      %v4832 = vunpack.c.h.b16 %v1754
      %v4833 = vunpack.c.l.b16 %v1755
      %v4834 = vunpack.c.h.b16 %v1755
      %v4835 = vunpack.c.l.b16 %v1756
      %v4836 = vunpack.c.h.b16 %v1756
      %v4837 = vunpack.c.l.b16 %v1757
      %v4838 = vunpack.c.h.b16 %v1757
      %v4839 = vunpack.c.l.b16 %v1758
      %v4840 = vunpack.c.h.b16 %v1758
      %v4841 = vunpack.c.l.b16 %v1759
      %v4842 = vunpack.c.h.b16 %v1759
      %v4843 = vunpack.c.l.b16 %v1760
      %v4844 = vunpack.c.h.b16 %v1760
      %v4845 = vunpack.c.l.b16 %v1761
      %v4846 = vunpack.c.h.b16 %v1761
      %v4847 = vunpack.c.l.b16 %v1762
      %v4848 = vunpack.c.h.b16 %v1762
      %v4849 = vunpack.c.l.b16 %v1763
      %v4850 = vunpack.c.h.b16 %v1763
      %v4851 = vunpack.c.l.b16 %v1764
      %v4852 = vunpack.c.h.b16 %v1764
      %v4853 = vunpack.c.l.b16 %v1765
      %v4854 = vunpack.c.h.b16 %v1765
      %v4855 = vunpack.c.l.b16 %v1766
      %v4856 = vunpack.c.h.b16 %v1766
      %v4857 = vunpack.c.l.b16 %v1767
      %v4858 = vunpack.c.h.b16 %v1767
      %v4859 = vunpack.c.l.b16 %v1768
      %v4860 = vunpack.c.h.b16 %v1768
      %v4861 = vunpack.c.l.b16 %v1769
      %v4862 = vunpack.c.h.b16 %v1769
      %v4863 = vunpack.c.l.b16 %v1770
      %v4864 = vunpack.c.h.b16 %v1770
      %v4865 = vunpack.c.l.b16 %v1771
      %v4866 = vunpack.c.h.b16 %v1771
      %v4867 = vunpack.c.l.b16 %v1772
      %v4868 = vunpack.c.h.b16 %v1772
      %v4869 = vunpack.c.l.b16 %v1773
      %v4870 = vunpack.c.h.b16 %v1773
      %v4871 = vunpack.c.l.b16 %v1774
      %v4872 = vunpack.c.h.b16 %v1774
      %v4873 = vunpack.c.l.b16 %v1775
      %v4874 = vunpack.c.h.b16 %v1775
      %v4875 = vunpack.c.l.b16 %v1776
      %v4876 = vunpack.c.h.b16 %v1776
      %v4877 = vunpack.c.l.b16 %v1777
      %v4878 = vunpack.c.h.b16 %v1777
      %v4879 = vunpack.c.l.b16 %v1778
      %v4880 = vunpack.c.h.b16 %v1778
      %v4881 = vunpack.c.l.b16 %v1779
      %v4882 = vunpack.c.h.b16 %v1779
      %v4883 = vunpack.c.l.b16 %v1780
      %v4884 = vunpack.c.h.b16 %v1780
      %v4885 = vunpack.c.l.b16 %v1781
      %v4886 = vunpack.c.h.b16 %v1781
      %v4887 = vunpack.c.l.b16 %v1782
      %v4888 = vunpack.c.h.b16 %v1782
      %v4889 = vunpack.c.l.b16 %v1783
      %v4890 = vunpack.c.h.b16 %v1783
      %v4891 = vunpack.c.l.b16 %v1784
      %v4892 = vunpack.c.h.b16 %v1784
      %v4893 = vunpack.c.l.b16 %v1785
      %v4894 = vunpack.c.h.b16 %v1785
      %v4895 = vunpack.c.l.b16 %v1786
      %v4896 = vunpack.c.h.b16 %v1786
      %v4897 = vunpack.c.l.b16 %v1787
      %v4898 = vunpack.c.h.b16 %v1787
      %v4899 = vunpack.c.l.b16 %v1788
      %v4900 = vunpack.c.h.b16 %v1788
      %v4901 = vunpack.c.l.b16 %v1789
      %v4902 = vunpack.c.h.b16 %v1789
      %v4903 = vunpack.c.l.b16 %v1790
      %v4904 = vunpack.c.h.b16 %v1790
      %v4905 = vunpack.c.l.b16 %v1791
      %v4906 = vunpack.c.h.b16 %v1791
      %v4907 = vunpack.c.l.b16 %v1792
      %v4908 = vunpack.c.h.b16 %v1792
      %v4909 = vunpack.c.l.b16 %v1793
      %v4910 = vunpack.c.h.b16 %v1793
      %v4911 = vunpack.c.l.b16 %v1794
      %v4912 = vunpack.c.h.b16 %v1794
      %v4913 = vunpack.c.l.b16 %v1795
      %v4914 = vunpack.c.h.b16 %v1795
      %v4915 = vunpack.c.l.b16 %v1796
      %v4916 = vunpack.c.h.b16 %v1796
      %v4917 = vunpack.c.l.b16 %v1797
      %v4918 = vunpack.c.h.b16 %v1797
      %v4919 = vunpack.c.l.b16 %v1798
      %v4920 = vunpack.c.h.b16 %v1798
      %v4921 = vunpack.c.l.b16 %v1799
      %v4922 = vunpack.c.h.b16 %v1799
      %v4923 = vunpack.c.l.b16 %v1800
      %v4924 = vunpack.c.h.b16 %v1800
      %v4925 = vunpack.c.l.b16 %v1801
      %v4926 = vunpack.c.h.b16 %v1801
      %v4927 = vunpack.c.l.b16 %v1802
      %v4928 = vunpack.c.h.b16 %v1802
      %v4929 = vunpack.c.l.b16 %v1803
      %v4930 = vunpack.c.h.b16 %v1803
      %v4931 = vunpack.c.l.b16 %v1804
      %v4932 = vunpack.c.h.b16 %v1804
      %v4933 = vunpack.c.l.b16 %v1805
      %v4934 = vunpack.c.h.b16 %v1805
      %v4935 = vunpack.c.l.b16 %v1806
      %v4936 = vunpack.c.h.b16 %v1806
      %v4937 = vunpack.c.l.b16 %v1807
      %v4938 = vunpack.c.h.b16 %v1807
      %v4939 = vunpack.c.l.b16 %v1808
      %v4940 = vunpack.c.h.b16 %v1808
      %v4941 = vunpack.c.l.b16 %v1809
      %v4942 = vunpack.c.h.b16 %v1809
      %v4943 = vunpack.c.l.b16 %v1810
      %v4944 = vunpack.c.h.b16 %v1810
      %v4945 = vunpack.c.l.b16 %v1811
      %v4946 = vunpack.c.h.b16 %v1811
      %v4947 = vunpack.c.l.b16 %v1812
      %v4948 = vunpack.c.h.b16 %v1812
      %v4949 = vunpack.c.l.b16 %v1813
      %v4950 = vunpack.c.h.b16 %v1813
      %v4951 = vunpack.c.l.b16 %v1814
      %v4952 = vunpack.c.h.b16 %v1814
      %v4953 = vunpack.c.l.b16 %v1815
      %v4954 = vunpack.c.h.b16 %v1815
      %v4955 = vunpack.c.l.b16 %v1816
      %v4956 = vunpack.c.h.b16 %v1816
      %v4957 = vunpack.c.l.b16 %v1817
      %v4958 = vunpack.c.h.b16 %v1817
      %v4959 = vunpack.c.l.b16 %v1818
      %v4960 = vunpack.c.h.b16 %v1818
      %v4961 = vunpack.c.l.b16 %v1819
      %v4962 = vunpack.c.h.b16 %v1819
      %v4963 = vunpack.c.l.b16 %v1820
      %v4964 = vunpack.c.h.b16 %v1820
      %v4965 = vunpack.c.l.b16 %v1821
      %v4966 = vunpack.c.h.b16 %v1821
      %v4967 = vunpack.c.l.b16 %v1822
      %v4968 = vunpack.c.h.b16 %v1822
      %v4969 = vunpack.c.l.b16 %v1823
      %v4970 = vunpack.c.h.b16 %v1823
      %v4971 = vunpack.c.l.b16 %v1824
      %v4972 = vunpack.c.h.b16 %v1824
      %v4973 = vunpack.c.l.b16 %v1825
      %v4974 = vunpack.c.h.b16 %v1825
      %v4975 = vunpack.c.l.b16 %v1826
      %v4976 = vunpack.c.h.b16 %v1826
      %v4977 = vunpack.c.l.b16 %v1827
      %v4978 = vunpack.c.h.b16 %v1827
      %v4979 = vunpack.c.l.b16 %v1828
      %v4980 = vunpack.c.h.b16 %v1828
      %v4981 = vunpack.c.l.b16 %v1829
      %v4982 = vunpack.c.h.b16 %v1829
      %v4983 = vunpack.c.l.b16 %v1830
      %v4984 = vunpack.c.h.b16 %v1830
      %v4985 = vunpack.c.l.b16 %v1831
      %v4986 = vunpack.c.h.b16 %v1831
      %v4987 = vunpack.c.l.b16 %v1832
      %v4988 = vunpack.c.h.b16 %v1832
      %v4989 = vunpack.c.l.b16 %v1833
      %v4990 = vunpack.c.h.b16 %v1833
      %v4991 = vunpack.c.l.b16 %v1834
      %v4992 = vunpack.c.h.b16 %v1834
      %v4993 = vunpack.c.l.b16 %v1835
      %v4994 = vunpack.c.h.b16 %v1835
      %v4995 = vunpack.c.l.b16 %v1836
      %v4996 = vunpack.c.h.b16 %v1836
      %v4997 = vunpack.c.l.b16 %v1837
      %v4998 = vunpack.c.h.b16 %v1837
      %v4999 = vunpack.c.l.b16 %v1838
      %v5000 = vunpack.c.h.b16 %v1838
      %v5001 = vunpack.c.l.b16 %v1839
      %v5002 = vunpack.c.h.b16 %v1839
      %v5003 = vunpack.c.l.b16 %v1840
      %v5004 = vunpack.c.h.b16 %v1840
      %v5005 = vunpack.c.l.b16 %v1841
      %v5006 = vunpack.c.h.b16 %v1841
      %v5007 = vunpack.c.l.b16 %v1842
      %v5008 = vunpack.c.h.b16 %v1842
      %v5009 = vunpack.c.l.b16 %v1843
      %v5010 = vunpack.c.h.b16 %v1843
      %v5011 = vunpack.c.l.b16 %v1844
      %v5012 = vunpack.c.h.b16 %v1844
      %v5013 = vunpack.c.l.b16 %v1845
      %v5014 = vunpack.c.h.b16 %v1845
      %v5015 = vunpack.c.l.b16 %v1846
      %v5016 = vunpack.c.h.b16 %v1846
      %v5017 = vunpack.c.l.b16 %v1847
      %v5018 = vunpack.c.h.b16 %v1847
      %v5019 = vunpack.c.l.b16 %v1848
      %v5020 = vunpack.c.h.b16 %v1848
      %v5021 = vunpack.c.l.b16 %v1849
      %v5022 = vunpack.c.h.b16 %v1849
      %v5023 = vunpack.c.l.b16 %v1850
      %v5024 = vunpack.c.h.b16 %v1850
      %v5025 = vunpack.c.l.b16 %v1851
      %v5026 = vunpack.c.h.b16 %v1851
      %v5027 = vunpack.c.l.b16 %v1852
      %v5028 = vunpack.c.h.b16 %v1852
      %v5029 = vunpack.c.l.b16 %v1853
      %v5030 = vunpack.c.h.b16 %v1853
      %v5031 = vunpack.c.l.b16 %v1854
      %v5032 = vunpack.c.h.b16 %v1854
      %v5033 = vunpack.c.l.b16 %v1855
      %v5034 = vunpack.c.h.b16 %v1855
      %v5035 = vunpack.c.l.b16 %v1856
      %v5036 = vunpack.c.h.b16 %v1856
      %v5037 = vunpack.c.l.b16 %v1857
      %v5038 = vunpack.c.h.b16 %v1857
      %v5039 = vunpack.c.l.b16 %v1858
      %v5040 = vunpack.c.h.b16 %v1858
      %v5041 = vunpack.c.l.b16 %v1859
      %v5042 = vunpack.c.h.b16 %v1859
      %v5043 = vunpack.c.l.b16 %v1860
      %v5044 = vunpack.c.h.b16 %v1860
      %v5045 = vunpack.c.l.b16 %v1861
      %v5046 = vunpack.c.h.b16 %v1861
      %v5047 = vunpack.c.l.b16 %v1862
      %v5048 = vunpack.c.h.b16 %v1862
      %v5049 = vunpack.c.l.b16 %v1863
      %v5050 = vunpack.c.h.b16 %v1863
      %v5051 = vunpack.c.l.b16 %v1864
      %v5052 = vunpack.c.h.b16 %v1864
      %v5053 = vunpack.c.l.b16 %v1865
      %v5054 = vunpack.c.h.b16 %v1865
      %v5055 = vunpack.c.l.b16 %v1866
      %v5056 = vunpack.c.h.b16 %v1866
      %v5057 = vunpack.c.l.b16 %v1867
      %v5058 = vunpack.c.h.b16 %v1867
      %v5059 = vunpack.c.l.b16 %v1868
      %v5060 = vunpack.c.h.b16 %v1868
      %v5061 = vunpack.c.l.b16 %v1869
      %v5062 = vunpack.c.h.b16 %v1869
      %v5063 = vunpack.c.l.b16 %v1870
      %v5064 = vunpack.c.h.b16 %v1870
      %v5065 = vunpack.c.l.b16 %v1871
      %v5066 = vunpack.c.h.b16 %v1871
      %v5067 = vunpack.c.l.b16 %v1872
      %v5068 = vunpack.c.h.b16 %v1872
      %v5069 = vunpack.c.l.b16 %v1873
      %v5070 = vunpack.c.h.b16 %v1873
      %v5071 = vunpack.c.l.b16 %v1874
      %v5072 = vunpack.c.h.b16 %v1874
      %v5073 = vunpack.c.l.b16 %v1875
      %v5074 = vunpack.c.h.b16 %v1875
      %v5075 = vunpack.c.l.b16 %v1876
      %v5076 = vunpack.c.h.b16 %v1876
      %v5077 = vunpack.c.l.b16 %v1877
      %v5078 = vunpack.c.h.b16 %v1877
      %v5079 = vunpack.c.l.b16 %v1878
      %v5080 = vunpack.c.h.b16 %v1878
      %v5081 = vunpack.c.l.b16 %v1879
      %v5082 = vunpack.c.h.b16 %v1879
      %v5083 = vunpack.c.l.b16 %v1880
      %v5084 = vunpack.c.h.b16 %v1880
      %v5085 = vunpack.c.l.b16 %v1881
      %v5086 = vunpack.c.h.b16 %v1881
      %v5087 = vunpack.c.l.b16 %v1882
      %v5088 = vunpack.c.h.b16 %v1882
      %v5089 = vunpack.c.l.b16 %v1883
      %v5090 = vunpack.c.h.b16 %v1883
      %v5091 = vunpack.c.l.b16 %v1884
      %v5092 = vunpack.c.h.b16 %v1884
      %v5093 = vunpack.c.l.b16 %v1885
      %v5094 = vunpack.c.h.b16 %v1885
      %v5095 = vunpack.c.l.b16 %v1886
      %v5096 = vunpack.c.h.b16 %v1886
      %v5097 = vunpack.c.l.b16 %v1887
      %v5098 = vunpack.c.h.b16 %v1887
      %v5099 = vunpack.c.l.b16 %v1888
      %v5100 = vunpack.c.h.b16 %v1888
      %v5101 = vunpack.c.l.b16 %v1889
      %v5102 = vunpack.c.h.b16 %v1889
      %v5103 = vunpack.c.l.b16 %v1890
      %v5104 = vunpack.c.h.b16 %v1890
      %v5105 = vunpack.c.l.b16 %v1891
      %v5106 = vunpack.c.h.b16 %v1891
      %v5107 = vunpack.c.l.b16 %v1892
      %v5108 = vunpack.c.h.b16 %v1892
      %v5109 = vunpack.c.l.b16 %v1893
      %v5110 = vunpack.c.h.b16 %v1893
      %v5111 = vunpack.c.l.b16 %v1894
      %v5112 = vunpack.c.h.b16 %v1894
      %v5113 = vunpack.c.l.b16 %v1895
      %v5114 = vunpack.c.h.b16 %v1895
      %v5115 = vunpack.c.l.b16 %v1896
      %v5116 = vunpack.c.h.b16 %v1896
      %v5117 = vunpack.c.l.b16 %v1897
      %v5118 = vunpack.c.h.b16 %v1897
      %v5119 = vunpack.c.l.b16 %v1898
      %v5120 = vunpack.c.h.b16 %v1898
      %v5121 = vunpack.c.l.b16 %v1899
      %v5122 = vunpack.c.h.b16 %v1899
      %v5123 = vunpack.c.l.b16 %v1900
      %v5124 = vunpack.c.h.b16 %v1900
      %v5125 = vunpack.c.l.b16 %v1901
      %v5126 = vunpack.c.h.b16 %v1901
      %v5127 = vunpack.c.l.b16 %v1902
      %v5128 = vunpack.c.h.b16 %v1902
      %v5129 = vunpack.c.l.b16 %v1903
      %v5130 = vunpack.c.h.b16 %v1903
      %v5131 = vunpack.c.l.b16 %v1904
      %v5132 = vunpack.c.h.b16 %v1904
      %v5133 = vunpack.c.l.b16 %v1905
      %v5134 = vunpack.c.h.b16 %v1905
      %v5135 = vunpack.c.l.b16 %v1906
      %v5136 = vunpack.c.h.b16 %v1906
      %v5137 = vunpack.c.l.b16 %v1907
      %v5138 = vunpack.c.h.b16 %v1907
      %v5139 = vunpack.c.l.b16 %v1908
      %v5140 = vunpack.c.h.b16 %v1908
      %v5141 = vunpack.c.l.b16 %v1909
      %v5142 = vunpack.c.h.b16 %v1909
      %v5143 = vunpack.c.l.b16 %v1910
      %v5144 = vunpack.c.h.b16 %v1910
      %v5145 = vunpack.c.l.b16 %v1911
      %v5146 = vunpack.c.h.b16 %v1911
      %v5147 = vunpack.c.l.b16 %v1912
      %v5148 = vunpack.c.h.b16 %v1912
      %v5149 = vunpack.c.l.b16 %v1913
      %v5150 = vunpack.c.h.b16 %v1913
      %v5151 = vunpack.c.l.b16 %v1914
      %v5152 = vunpack.c.h.b16 %v1914
      %v5153 = vunpack.c.l.b16 %v1915
      %v5154 = vunpack.c.h.b16 %v1915
      %v5155 = vunpack.c.l.b16 %v1916
      %v5156 = vunpack.c.h.b16 %v1916
      %v5157 = vunpack.c.l.b16 %v1917
      %v5158 = vunpack.c.h.b16 %v1917
      %v5159 = vunpack.c.l.b16 %v1918
      %v5160 = vunpack.c.h.b16 %v1918
      %v5161 = vunpack.c.l.b16 %v1919
      %v5162 = vunpack.c.h.b16 %v1919
      %v5163 = vunpack.c.l.b16 %v1920
      %v5164 = vunpack.c.h.b16 %v1920
      %v5165 = vunpack.c.l.b16 %v1921
      %v5166 = vunpack.c.h.b16 %v1921
      %v5167 = vunpack.c.l.b16 %v1922
      %v5168 = vunpack.c.h.b16 %v1922
      %v5169 = vunpack.c.l.b16 %v1923
      %v5170 = vunpack.c.h.b16 %v1923
      %v5171 = vunpack.c.l.b16 %v1924
      %v5172 = vunpack.c.h.b16 %v1924
      %v5173 = vunpack.c.l.b16 %v1925
      %v5174 = vunpack.c.h.b16 %v1925
      %v5175 = vunpack.c.l.b16 %v1926
      %v5176 = vunpack.c.h.b16 %v1926
      %v5177 = vunpack.c.l.b16 %v1927
      %v5178 = vunpack.c.h.b16 %v1927
      %v5179 = vunpack.c.l.b16 %v1928
      %v5180 = vunpack.c.h.b16 %v1928
      %v5181 = vunpack.c.l.b16 %v1929
      %v5182 = vunpack.c.h.b16 %v1929
      %v5183 = vunpack.c.l.b16 %v1930
      %v5184 = vunpack.c.h.b16 %v1930
      %v5185 = vunpack.c.l.b16 %v1931
      %v5186 = vunpack.c.h.b16 %v1931
      %v5187 = vunpack.c.l.b16 %v1932
      %v5188 = vunpack.c.h.b16 %v1932
      %v5189 = vunpack.c.l.b16 %v1933
      %v5190 = vunpack.c.h.b16 %v1933
      %v5191 = vunpack.c.l.b16 %v1934
      %v5192 = vunpack.c.h.b16 %v1934
      %v5193 = vunpack.c.l.b16 %v1935
      %v5194 = vunpack.c.h.b16 %v1935
      %v5195 = vunpack.c.l.b16 %v1936
      %v5196 = vunpack.c.h.b16 %v1936
      %v5197 = vunpack.c.l.b16 %v1937
      %v5198 = vunpack.c.h.b16 %v1937
      %v5199 = vunpack.c.l.b16 %v1938
      %v5200 = vunpack.c.h.b16 %v1938
      %v5201 = vunpack.c.l.b16 %v1939
      %v5202 = vunpack.c.h.b16 %v1939
      %v5203 = vunpack.c.l.b16 %v1940
      %v5204 = vunpack.c.h.b16 %v1940
      %v5205 = vunpack.c.l.b16 %v1941
      %v5206 = vunpack.c.h.b16 %v1941
      %v5207 = vunpack.c.l.b16 %v1942
      %v5208 = vunpack.c.h.b16 %v1942
      %v5209 = vunpack.c.l.b16 %v1943
      %v5210 = vunpack.c.h.b16 %v1943
      %v5211 = vunpack.c.l.b16 %v1944
      %v5212 = vunpack.c.h.b16 %v1944
      %v5213 = vunpack.c.l.b16 %v1945
      %v5214 = vunpack.c.h.b16 %v1945
      %v5215 = vunpack.c.l.b16 %v1946
      %v5216 = vunpack.c.h.b16 %v1946
      %v5217 = vunpack.c.l.b16 %v1947
      %v5218 = vunpack.c.h.b16 %v1947
      %v5219 = vunpack.c.l.b16 %v1948
      %v5220 = vunpack.c.h.b16 %v1948
      %v5221 = vunpack.c.l.b16 %v1949
      %v5222 = vunpack.c.h.b16 %v1949
      %v5223 = vunpack.c.l.b16 %v1950
      %v5224 = vunpack.c.h.b16 %v1950
      %v5225 = vunpack.c.l.b16 %v1951
      %v5226 = vunpack.c.h.b16 %v1951
      %v5227 = vunpack.c.l.b16 %v1952
      %v5228 = vunpack.c.h.b16 %v1952
      %v5229 = vunpack.c.l.b16 %v1953
      %v5230 = vunpack.c.h.b16 %v1953
      %v5231 = vunpack.c.l.b16 %v1954
      %v5232 = vunpack.c.h.b16 %v1954
      %v5233 = vunpack.c.l.b16 %v1955
      %v5234 = vunpack.c.h.b16 %v1955
      %v5235 = vunpack.c.l.b16 %v1956
      %v5236 = vunpack.c.h.b16 %v1956
      %v5237 = vunpack.c.l.b16 %v1957
      %v5238 = vunpack.c.h.b16 %v1957
      %v5239 = vunpack.c.l.b16 %v1958
      %v5240 = vunpack.c.h.b16 %v1958
      %v5241 = vunpack.c.l.b16 %v1959
      %v5242 = vunpack.c.h.b16 %v1959
      %v5243 = vunpack.c.l.b16 %v1960
      %v5244 = vunpack.c.h.b16 %v1960
      %v5245 = vunpack.c.l.b16 %v1961
      %v5246 = vunpack.c.h.b16 %v1961
      %v5247 = vunpack.c.l.b16 %v1962
      %v5248 = vunpack.c.h.b16 %v1962
      %v5249 = vunpack.c.l.b16 %v1963
      %v5250 = vunpack.c.h.b16 %v1963
      %v5251 = vunpack.c.l.b16 %v1964
      %v5252 = vunpack.c.h.b16 %v1964
      %v5253 = vunpack.c.l.b16 %v1965
      %v5254 = vunpack.c.h.b16 %v1965
      %v5255 = vunpack.c.l.b16 %v1966
      %v5256 = vunpack.c.h.b16 %v1966
      %v5257 = vunpack.c.l.b16 %v1967
      %v5258 = vunpack.c.h.b16 %v1967
      %v5259 = vunpack.c.l.b16 %v1968
      %v5260 = vunpack.c.h.b16 %v1968
      %v5261 = vunpack.c.l.b16 %v1969
      %v5262 = vunpack.c.h.b16 %v1969
      %v5263 = vunpack.c.l.b16 %v1970
      %v5264 = vunpack.c.h.b16 %v1970
      %v5265 = vunpack.c.l.b16 %v1971
      %v5266 = vunpack.c.h.b16 %v1971
      %v5267 = vunpack.c.l.b16 %v1972
      %v5268 = vunpack.c.h.b16 %v1972
      %v5269 = vunpack.c.l.b16 %v1973
      %v5270 = vunpack.c.h.b16 %v1973
      %v5271 = vunpack.c.l.b16 %v1974
      %v5272 = vunpack.c.h.b16 %v1974
      %v5273 = vunpack.c.l.b16 %v1975
      %v5274 = vunpack.c.h.b16 %v1975
      %v5275 = vunpack.c.l.b16 %v1976
      %v5276 = vunpack.c.h.b16 %v1976
      %v5277 = vunpack.c.l.b16 %v1977
      %v5278 = vunpack.c.h.b16 %v1977
      %v5279 = vunpack.c.l.b16 %v1978
      %v5280 = vunpack.c.h.b16 %v1978
      %v5281 = vunpack.c.l.b16 %v1979
      %v5282 = vunpack.c.h.b16 %v1979
      %v5283 = vunpack.c.l.b16 %v1980
      %v5284 = vunpack.c.h.b16 %v1980
      %v5285 = vunpack.c.l.b16 %v1981
      %v5286 = vunpack.c.h.b16 %v1981
      %v5287 = vunpack.c.l.b16 %v1982
      %v5288 = vunpack.c.h.b16 %v1982
      %v5289 = vunpack.c.l.b16 %v1983
      %v5290 = vunpack.c.h.b16 %v1983
      %v5291 = vunpack.c.l.b16 %v1984
      %v5292 = vunpack.c.h.b16 %v1984
      %v5293 = vunpack.c.l.b16 %v1985
      %v5294 = vunpack.c.h.b16 %v1985
      %v5295 = vunpack.c.l.b16 %v1986
      %v5296 = vunpack.c.h.b16 %v1986
      %v5297 = vunpack.c.l.b16 %v1987
      %v5298 = vunpack.c.h.b16 %v1987
      %v5299 = vunpack.c.l.b16 %v1988
      %v5300 = vunpack.c.h.b16 %v1988
      %v5301 = vunpack.c.l.b16 %v1989
      %v5302 = vunpack.c.h.b16 %v1989
      %v5303 = vunpack.c.l.b16 %v1990
      %v5304 = vunpack.c.h.b16 %v1990
      %v5305 = vunpack.c.l.b16 %v1991
      %v5306 = vunpack.c.h.b16 %v1991
      %v5307 = vunpack.c.l.b16 %v1992
      %v5308 = vunpack.c.h.b16 %v1992
      %v5309 = vunpack.c.l.b16 %v1993
      %v5310 = vunpack.c.h.b16 %v1993
      %v5311 = vunpack.c.l.b16 %v1994
      %v5312 = vunpack.c.h.b16 %v1994
      %v5313 = vunpack.c.l.b16 %v1995
      %v5314 = vunpack.c.h.b16 %v1995
      %v5315 = vunpack.c.l.b16 %v1996
      %v5316 = vunpack.c.h.b16 %v1996
      %v5317 = vunpack.c.l.b16 %v1997
      %v5318 = vunpack.c.h.b16 %v1997
      %v5319 = vunpack.c.l.b16 %v1998
      %v5320 = vunpack.c.h.b16 %v1998
      %v5321 = vunpack.c.l.b16 %v1999
      %v5322 = vunpack.c.h.b16 %v1999
      %v5323 = vunpack.c.l.b16 %v2000
      %v5324 = vunpack.c.h.b16 %v2000
      %v5325 = vunpack.c.l.b16 %v2001
      %v5326 = vunpack.c.h.b16 %v2001
      %v5327 = vunpack.c.l.b16 %v2002
      %v5328 = vunpack.c.h.b16 %v2002
      %v5329 = vunpack.c.l.b16 %v2003
      %v5330 = vunpack.c.h.b16 %v2003
      %v5331 = vunpack.c.l.b16 %v2004
      %v5332 = vunpack.c.h.b16 %v2004
      %v5333 = vunpack.c.l.b16 %v2005
      %v5334 = vunpack.c.h.b16 %v2005
      %v5335 = vunpack.c.l.b16 %v2006
      %v5336 = vunpack.c.h.b16 %v2006
      %v5337 = vunpack.c.l.b16 %v2007
      %v5338 = vunpack.c.h.b16 %v2007
      %v5339 = vunpack.c.l.b16 %v2008
      %v5340 = vunpack.c.h.b16 %v2008
      %v5341 = vunpack.c.l.b16 %v2009
      %v5342 = vunpack.c.h.b16 %v2009
      %v5343 = vunpack.c.l.b16 %v2010
      %v5344 = vunpack.c.h.b16 %v2010
      %v5345 = vunpack.c.l.b16 %v2011
      %v5346 = vunpack.c.h.b16 %v2011
      %v5347 = vunpack.c.l.b16 %v2012
      %v5348 = vunpack.c.h.b16 %v2012
      %v5349 = vunpack.c.l.b16 %v2013
      %v5350 = vunpack.c.h.b16 %v2013
      %v5351 = vunpack.c.l.b16 %v2014
      %v5352 = vunpack.c.h.b16 %v2014
      %v5353 = vunpack.c.l.b16 %v2015
      %v5354 = vunpack.c.h.b16 %v2015
      %v5355 = vunpack.c.l.b16 %v2016
      %v5356 = vunpack.c.h.b16 %v2016
      %v5357 = vunpack.c.l.b16 %v2017
      %v5358 = vunpack.c.h.b16 %v2017
      %v5359 = vunpack.c.l.b16 %v2018
      %v5360 = vunpack.c.h.b16 %v2018
      %v5361 = vunpack.c.l.b16 %v2019
      %v5362 = vunpack.c.h.b16 %v2019
      %v5363 = vunpack.c.l.b16 %v2020
      %v5364 = vunpack.c.h.b16 %v2020
      %v5365 = vunpack.c.l.b16 %v2021
      %v5366 = vunpack.c.h.b16 %v2021
      %v5367 = vunpack.c.l.b16 %v2022
      %v5368 = vunpack.c.h.b16 %v2022
      %v5369 = vunpack.c.l.b16 %v2023
      %v5370 = vunpack.c.h.b16 %v2023
      %v5371 = vunpack.c.l.b16 %v2024
      %v5372 = vunpack.c.h.b16 %v2024
      %v5373 = vunpack.c.l.b16 %v2025
      %v5374 = vunpack.c.h.b16 %v2025
      %v5375 = vunpack.c.l.b16 %v2026
      %v5376 = vunpack.c.h.b16 %v2026
      %v5377 = vunpack.c.l.b16 %v2027
      %v5378 = vunpack.c.h.b16 %v2027
      %v5379 = vunpack.c.l.b16 %v2028
      %v5380 = vunpack.c.h.b16 %v2028
      %v5381 = vunpack.c.l.b16 %v2029
      %v5382 = vunpack.c.h.b16 %v2029
      %v5383 = vunpack.c.l.b16 %v2030
      %v5384 = vunpack.c.h.b16 %v2030
      %v5385 = vunpack.c.l.b16 %v2031
      %v5386 = vunpack.c.h.b16 %v2031
      %v5387 = vunpack.c.l.b16 %v2032
      %v5388 = vunpack.c.h.b16 %v2032
      %v5389 = vunpack.c.l.b16 %v2033
      %v5390 = vunpack.c.h.b16 %v2033
      %v5391 = vunpack.c.l.b16 %v2034
      %v5392 = vunpack.c.h.b16 %v2034
      %v5393 = vunpack.c.l.b16 %v2035
      %v5394 = vunpack.c.h.b16 %v2035
      %v5395 = vunpack.c.l.b16 %v2036
      %v5396 = vunpack.c.h.b16 %v2036
      %v5397 = vunpack.c.l.b16 %v2037
      %v5398 = vunpack.c.h.b16 %v2037
      %v5399 = vunpack.c.l.b16 %v2038
      %v5400 = vunpack.c.h.b16 %v2038
      %v5401 = vunpack.c.l.b16 %v2039
      %v5402 = vunpack.c.h.b16 %v2039
      %v5403 = vunpack.c.l.b16 %v2040
      %v5404 = vunpack.c.h.b16 %v2040
      %v5405 = vunpack.c.l.b16 %v2041
      %v5406 = vunpack.c.h.b16 %v2041
      %v5407 = vunpack.c.l.b16 %v2042
      %v5408 = vunpack.c.h.b16 %v2042
      %v5409 = vunpack.c.l.b16 %v2043
      %v5410 = vunpack.c.h.b16 %v2043
      %v5411 = vunpack.c.l.b16 %v2044
      %v5412 = vunpack.c.h.b16 %v2044
      %v5413 = vunpack.c.l.b16 %v2045
      %v5414 = vunpack.c.h.b16 %v2045
      %v5415 = vunpack.c.l.b16 %v2046
      %v5416 = vunpack.c.h.b16 %v2046
      %v5417 = vunpack.c.l.b16 %v2047
      %v5418 = vunpack.c.h.b16 %v2047
      %v5419 = vunpack.c.l.b16 %v2048
      %v5420 = vunpack.c.h.b16 %v2048
      %v5421 = vunpack.c.l.b16 %v2049
      %v5422 = vunpack.c.h.b16 %v2049
      %v5423 = vunpack.c.l.b16 %v2050
      %v5424 = vunpack.c.h.b16 %v2050
      %v5425 = vunpack.c.l.b16 %v2051
      %v5426 = vunpack.c.h.b16 %v2051
      %v5427 = vunpack.c.l.b16 %v2052
      %v5428 = vunpack.c.h.b16 %v2052
      %v5429 = vunpack.c.l.b16 %v2053
      %v5430 = vunpack.c.h.b16 %v2053
      %v5431 = vunpack.c.l.b16 %v2054
      %v5432 = vunpack.c.h.b16 %v2054
      %v5433 = vunpack.c.l.b16 %v2055
      %v5434 = vunpack.c.h.b16 %v2055
      %v5435 = vunpack.c.l.b16 %v2056
      %v5436 = vunpack.c.h.b16 %v2056
      %v5437 = vunpack.c.l.b16 %v2057
      %v5438 = vunpack.c.h.b16 %v2057
      %v5439 = vunpack.c.l.b16 %v2058
      %v5440 = vunpack.c.h.b16 %v2058
      %v5441 = vunpack.c.l.b16 %v2059
      %v5442 = vunpack.c.h.b16 %v2059
      %v5443 = vunpack.c.l.b16 %v2060
      %v5444 = vunpack.c.h.b16 %v2060
      %v5445 = vunpack.c.l.b16 %v2061
      %v5446 = vunpack.c.h.b16 %v2061
      %v5447 = vunpack.c.l.b16 %v2062
      %v5448 = vunpack.c.h.b16 %v2062
      %v5449 = vunpack.c.l.b16 %v2063
      %v5450 = vunpack.c.h.b16 %v2063
      %v5451 = vunpack.c.l.b16 %v2064
      %v5452 = vunpack.c.h.b16 %v2064
      %v5453 = vunpack.c.l.b16 %v2065
      %v5454 = vunpack.c.h.b16 %v2065
      %v5455 = vunpack.c.l.b16 %v2066
      %v5456 = vunpack.c.h.b16 %v2066
      %v5457 = vunpack.c.l.b16 %v2067
      %v5458 = vunpack.c.h.b16 %v2067
      %v5459 = vunpack.c.l.b16 %v2068
      %v5460 = vunpack.c.h.b16 %v2068
      %v5461 = vunpack.c.l.b16 %v2069
      %v5462 = vunpack.c.h.b16 %v2069
      %v5463 = vunpack.c.l.b16 %v2070
      %v5464 = vunpack.c.h.b16 %v2070
      %v5465 = vunpack.c.l.b16 %v2071
      %v5466 = vunpack.c.h.b16 %v2071
      %v5467 = vunpack.c.l.b16 %v2072
      %v5468 = vunpack.c.h.b16 %v2072
      %v5469 = vunpack.c.l.b16 %v2073
      %v5470 = vunpack.c.h.b16 %v2073
      %v5471 = vunpack.c.l.b16 %v2074
      %v5472 = vunpack.c.h.b16 %v2074
      %v5473 = vunpack.c.l.b16 %v2075
      %v5474 = vunpack.c.h.b16 %v2075
      %v5475 = vunpack.c.l.b16 %v2076
      %v5476 = vunpack.c.h.b16 %v2076
      %v5477 = vunpack.c.l.b16 %v2077
      %v5478 = vunpack.c.h.b16 %v2077
      %v5479 = vunpack.c.l.b16 %v2078
      %v5480 = vunpack.c.h.b16 %v2078
      %v5481 = vunpack.c.l.b16 %v2079
      %v5482 = vunpack.c.h.b16 %v2079
      %v5483 = vunpack.c.l.b16 %v2080
      %v5484 = vunpack.c.h.b16 %v2080
      %v5485 = vunpack.c.l.b16 %v2081
      %v5486 = vunpack.c.h.b16 %v2081
      %v5487 = vunpack.c.l.b16 %v2082
      %v5488 = vunpack.c.h.b16 %v2082
      %v5489 = vunpack.c.l.b16 %v2083
      %v5490 = vunpack.c.h.b16 %v2083
      %v5491 = vunpack.c.l.b16 %v2084
      %v5492 = vunpack.c.h.b16 %v2084
      %v5493 = vunpack.c.l.b16 %v2085
      %v5494 = vunpack.c.h.b16 %v2085
      %v5495 = vunpack.c.l.b16 %v2086
      %v5496 = vunpack.c.h.b16 %v2086
      %v5497 = vunpack.c.l.b16 %v2087
      %v5498 = vunpack.c.h.b16 %v2087
      %v5499 = vunpack.c.l.b16 %v2088
      %v5500 = vunpack.c.h.b16 %v2088
      %v5501 = vunpack.c.l.b16 %v2089
      %v5502 = vunpack.c.h.b16 %v2089
      %v5503 = vunpack.c.l.b16 %v2090
      %v5504 = vunpack.c.h.b16 %v2090
      %v5505 = vunpack.c.l.b16 %v2091
      %v5506 = vunpack.c.h.b16 %v2091
      %v5507 = vunpack.c.l.b16 %v2092
      %v5508 = vunpack.c.h.b16 %v2092
      %v5509 = vunpack.c.l.b16 %v2093
      %v5510 = vunpack.c.h.b16 %v2093
      %v5511 = vunpack.c.l.b16 %v2094
      %v5512 = vunpack.c.h.b16 %v2094
      %v5513 = vunpack.c.l.b16 %v2095
      %v5514 = vunpack.c.h.b16 %v2095
      %v5515 = vunpack.c.l.b16 %v2096
      %v5516 = vunpack.c.h.b16 %v2096
      %v5517 = vunpack.c.l.b16 %v2097
      %v5518 = vunpack.c.h.b16 %v2097
      %v5519 = vunpack.c.l.b16 %v2098
      %v5520 = vunpack.c.h.b16 %v2098
      %v5521 = vunpack.c.l.b16 %v2099
      %v5522 = vunpack.c.h.b16 %v2099
      %v5523 = vunpack.c.l.b16 %v2100
      %v5524 = vunpack.c.h.b16 %v2100
      %v5525 = vunpack.c.l.b16 %v2101
      %v5526 = vunpack.c.h.b16 %v2101
      %v5527 = vunpack.c.l.b16 %v2102
      %v5528 = vunpack.c.h.b16 %v2102
      %v5529 = vunpack.c.l.b16 %v2103
      %v5530 = vunpack.c.h.b16 %v2103
      %v5531 = vunpack.c.l.b16 %v2104
      %v5532 = vunpack.c.h.b16 %v2104
      %v5533 = vunpack.c.l.b16 %v2105
      %v5534 = vunpack.c.h.b16 %v2105
      %v5535 = vunpack.c.l.b16 %v2106
      %v5536 = vunpack.c.h.b16 %v2106
      %v5537 = vunpack.c.l.b16 %v2107
      %v5538 = vunpack.c.h.b16 %v2107
      %v5539 = vunpack.c.l.b16 %v2108
      %v5540 = vunpack.c.h.b16 %v2108
      %v5541 = vunpack.c.l.b16 %v2109
      %v5542 = vunpack.c.h.b16 %v2109
      %v5543 = vunpack.c.l.b16 %v2110
      %v5544 = vunpack.c.h.b16 %v2110
      %v5545 = vunpack.c.l.b16 %v2111
      %v5546 = vunpack.c.h.b16 %v2111
      %v5547 = vunpack.c.l.b16 %v2112
      %v5548 = vunpack.c.h.b16 %v2112
      %v5549 = vunpack.c.l.b16 %v2113
      %v5550 = vunpack.c.h.b16 %v2113
      %v5551 = vunpack.c.l.b16 %v2114
      %v5552 = vunpack.c.h.b16 %v2114
      %v5553 = vunpack.c.l.b16 %v2115
      %v5554 = vunpack.c.h.b16 %v2115
      %v5555 = vunpack.c.l.b16 %v2116
      %v5556 = vunpack.c.h.b16 %v2116
      %v5557 = vunpack.c.l.b16 %v2117
      %v5558 = vunpack.c.h.b16 %v2117
      %v5559 = vunpack.c.l.b16 %v2118
      %v5560 = vunpack.c.h.b16 %v2118
      %v5561 = vunpack.c.l.b16 %v2119
      %v5562 = vunpack.c.h.b16 %v2119
      %v5563 = vunpack.c.l.b16 %v2120
      %v5564 = vunpack.c.h.b16 %v2120
      %v5565 = vunpack.c.l.b16 %v2121
      %v5566 = vunpack.c.h.b16 %v2121
      %v5567 = vunpack.c.l.b16 %v2122
      %v5568 = vunpack.c.h.b16 %v2122
      %v5569 = vunpack.c.l.b16 %v2123
      %v5570 = vunpack.c.h.b16 %v2123
      %v5571 = vunpack.c.l.b16 %v2124
      %v5572 = vunpack.c.h.b16 %v2124
      %v5573 = vunpack.c.l.b16 %v2125
      %v5574 = vunpack.c.h.b16 %v2125
      %v5575 = vunpack.c.l.b16 %v2126
      %v5576 = vunpack.c.h.b16 %v2126
      %v5577 = vunpack.c.l.b16 %v2127
      %v5578 = vunpack.c.h.b16 %v2127
      %v5579 = vunpack.c.l.b16 %v2128
      %v5580 = vunpack.c.h.b16 %v2128
      %v5581 = vunpack.c.l.b16 %v2129
      %v5582 = vunpack.c.h.b16 %v2129
      %v5583 = vunpack.c.l.b16 %v2130
      %v5584 = vunpack.c.h.b16 %v2130
      %v5585 = vunpack.c.l.b16 %v2131
      %v5586 = vunpack.c.h.b16 %v2131
      %v5587 = vunpack.c.l.b16 %v2132
      %v5588 = vunpack.c.h.b16 %v2132
      %v5589 = vpack.c.b16 %v3303, %v3285
      %v5590 = vpack.c.b16 %v3304, %v3286
      %v5591 = vpack.c.b16 %v3305, %v3287
      %v5592 = vpack.c.b16 %v3306, %v3288
      %v5593 = vpack.c.b16 %v3307, %v3289
      %v5594 = vpack.c.b16 %v3308, %v3290
      %v5595 = vpack.c.b16 %v3309, %v3291
      %v5596 = vpack.c.b16 %v3310, %v3292
      %v5597 = vpack.c.b16 %v3311, %v3293
      %v5598 = vpack.c.b16 %v3312, %v3294
      %v5599 = vpack.c.b16 %v3313, %v3295
      %v5600 = vpack.c.b16 %v3314, %v3296
      %v5601 = vpack.c.b16 %v3315, %v3297
      %v5602 = vpack.c.b16 %v3316, %v3298
      %v5603 = vpack.c.b16 %v3317, %v3299
      %v5604 = vpack.c.b16 %v3318, %v3300
      %v5605 = vpack.c.b16 %v3319, %v3301
      %v5606 = vpack.c.b16 %v3320, %v3302
      %v5607 = vpack.c.b16 %v3339, %v3321
      %v5608 = vpack.c.b16 %v3340, %v3322
      %v5609 = vpack.c.b16 %v3341, %v3323
      %v5610 = vpack.c.b16 %v3342, %v3324
      %v5611 = vpack.c.b16 %v3343, %v3325
      %v5612 = vpack.c.b16 %v3344, %v3326
      %v5613 = vpack.c.b16 %v3345, %v3327
      %v5614 = vpack.c.b16 %v3346, %v3328
      %v5615 = vpack.c.b16 %v3347, %v3329
      %v5616 = vpack.c.b16 %v3348, %v3330
      %v5617 = vpack.c.b16 %v3349, %v3331
      %v5618 = vpack.c.b16 %v3350, %v3332
      %v5619 = vpack.c.b16 %v3351, %v3333
      %v5620 = vpack.c.b16 %v3352, %v3334
      %v5621 = vpack.c.b16 %v3353, %v3335
      %v5622 = vpack.c.b16 %v3354, %v3336
      %v5623 = vpack.c.b16 %v3355, %v3337
      %v5624 = vpack.c.b16 %v3356, %v3338
      %v5625 = vpack.c.b16 %v3375, %v3357
      %v5626 = vpack.c.b16 %v3376, %v3358
      %v5627 = vpack.c.b16 %v3377, %v3359
      %v5628 = vpack.c.b16 %v3378, %v3360
      %v5629 = vpack.c.b16 %v3379, %v3361
      %v5630 = vpack.c.b16 %v3380, %v3362
      %v5631 = vpack.c.b16 %v3381, %v3363
      %v5632 = vpack.c.b16 %v3382, %v3364
      %v5633 = vpack.c.b16 %v3383, %v3365
      %v5634 = vpack.c.b16 %v3384, %v3366
      %v5635 = vpack.c.b16 %v3385, %v3367
      %v5636 = vpack.c.b16 %v3386, %v3368
      %v5637 = vpack.c.b16 %v3387, %v3369
      %v5638 = vpack.c.b16 %v3388, %v3370
      %v5639 = vpack.c.b16 %v3389, %v3371
      %v5640 = vpack.c.b16 %v3390, %v3372
      %v5641 = vpack.c.b16 %v3391, %v3373
      %v5642 = vpack.c.b16 %v3392, %v3374
      %v5643 = vpack.c.b16 %v3411, %v3393
      %v5644 = vpack.c.b16 %v3412, %v3394
      %v5645 = vpack.c.b16 %v3413, %v3395
      %v5646 = vpack.c.b16 %v3414, %v3396
      %v5647 = vpack.c.b16 %v3415, %v3397
      %v5648 = vpack.c.b16 %v3416, %v3398
      %v5649 = vpack.c.b16 %v3417, %v3399
      %v5650 = vpack.c.b16 %v3418, %v3400
      %v5651 = vpack.c.b16 %v3419, %v3401
      %v5652 = vpack.c.b16 %v3420, %v3402
      %v5653 = vpack.c.b16 %v3421, %v3403
      %v5654 = vpack.c.b16 %v3422, %v3404
      %v5655 = vpack.c.b16 %v3423, %v3405
      %v5656 = vpack.c.b16 %v3424, %v3406
      %v5657 = vpack.c.b16 %v3425, %v3407
      %v5658 = vpack.c.b16 %v3426, %v3408
      %v5659 = vpack.c.b16 %v3427, %v3409
      %v5660 = vpack.c.b16 %v3428, %v3410
      %v5661 = vpack.c.b16 %v3447, %v3429
      %v5662 = vpack.c.b16 %v3448, %v3430
      %v5663 = vpack.c.b16 %v3449, %v3431
      %v5664 = vpack.c.b16 %v3450, %v3432
      %v5665 = vpack.c.b16 %v3451, %v3433
      %v5666 = vpack.c.b16 %v3452, %v3434
      %v5667 = vpack.c.b16 %v3453, %v3435
      %v5668 = vpack.c.b16 %v3454, %v3436
      %v5669 = vpack.c.b16 %v3455, %v3437
      %v5670 = vpack.c.b16 %v3456, %v3438
      %v5671 = vpack.c.b16 %v3457, %v3439
      %v5672 = vpack.c.b16 %v3458, %v3440
      %v5673 = vpack.c.b16 %v3459, %v3441
      %v5674 = vpack.c.b16 %v3460, %v3442
      %v5675 = vpack.c.b16 %v3461, %v3443
      %v5676 = vpack.c.b16 %v3462, %v3444
      %v5677 = vpack.c.b16 %v3463, %v3445
      %v5678 = vpack.c.b16 %v3464, %v3446
      %v5679 = vpack.c.b16 %v3483, %v3465
      %v5680 = vpack.c.b16 %v3484, %v3466
      %v5681 = vpack.c.b16 %v3485, %v3467
      %v5682 = vpack.c.b16 %v3486, %v3468
      %v5683 = vpack.c.b16 %v3487, %v3469
      %v5684 = vpack.c.b16 %v3488, %v3470
      %v5685 = vpack.c.b16 %v3489, %v3471
      %v5686 = vpack.c.b16 %v3490, %v3472
      %v5687 = vpack.c.b16 %v3491, %v3473
      %v5688 = vpack.c.b16 %v3492, %v3474
      %v5689 = vpack.c.b16 %v3493, %v3475
      %v5690 = vpack.c.b16 %v3494, %v3476
      %v5691 = vpack.c.b16 %v3495, %v3477
      %v5692 = vpack.c.b16 %v3496, %v3478
      %v5693 = vpack.c.b16 %v3497, %v3479
      %v5694 = vpack.c.b16 %v3498, %v3480
      %v5695 = vpack.c.b16 %v3499, %v3481
      %v5696 = vpack.c.b16 %v3500, %v3482
      %v5697 = vpack.c.b16 %v3519, %v3501
      %v5698 = vpack.c.b16 %v3520, %v3502
      %v5699 = vpack.c.b16 %v3521, %v3503
      %v5700 = vpack.c.b16 %v3522, %v3504
      %v5701 = vpack.c.b16 %v3523, %v3505
      %v5702 = vpack.c.b16 %v3524, %v3506
      %v5703 = vpack.c.b16 %v3525, %v3507
      %v5704 = vpack.c.b16 %v3526, %v3508
      %v5705 = vpack.c.b16 %v3527, %v3509
      %v5706 = vpack.c.b16 %v3528, %v3510
      %v5707 = vpack.c.b16 %v3529, %v3511
      %v5708 = vpack.c.b16 %v3530, %v3512
      %v5709 = vpack.c.b16 %v3531, %v3513
      %v5710 = vpack.c.b16 %v3532, %v3514
      %v5711 = vpack.c.b16 %v3533, %v3515
      %v5712 = vpack.c.b16 %v3534, %v3516
      %v5713 = vpack.c.b16 %v3535, %v3517
      %v5714 = vpack.c.b16 %v3536, %v3518
      %v5715 = vpack.c.b16 %v3555, %v3537
      %v5716 = vpack.c.b16 %v3556, %v3538
      %v5717 = vpack.c.b16 %v3557, %v3539
      %v5718 = vpack.c.b16 %v3558, %v3540
      %v5719 = vpack.c.b16 %v3559, %v3541
      %v5720 = vpack.c.b16 %v3560, %v3542
      %v5721 = vpack.c.b16 %v3561, %v3543
      %v5722 = vpack.c.b16 %v3562, %v3544
      %v5723 = vpack.c.b16 %v3563, %v3545
      %v5724 = vpack.c.b16 %v3564, %v3546
      %v5725 = vpack.c.b16 %v3565, %v3547
      %v5726 = vpack.c.b16 %v3566, %v3548
      %v5727 = vpack.c.b16 %v3567, %v3549
      %v5728 = vpack.c.b16 %v3568, %v3550
      %v5729 = vpack.c.b16 %v3569, %v3551
      %v5730 = vpack.c.b16 %v3570, %v3552
      %v5731 = vpack.c.b16 %v3571, %v3553
      %v5732 = vpack.c.b16 %v3572, %v3554
      %v5733 = vpack.c.b16 %v3591, %v3573
      %v5734 = vpack.c.b16 %v3592, %v3574
      %v5735 = vpack.c.b16 %v3593, %v3575
      %v5736 = vpack.c.b16 %v3594, %v3576
      %v5737 = vpack.c.b16 %v3595, %v3577
      %v5738 = vpack.c.b16 %v3596, %v3578
      %v5739 = vpack.c.b16 %v3597, %v3579
      %v5740 = vpack.c.b16 %v3598, %v3580
      %v5741 = vpack.c.b16 %v3599, %v3581
      %v5742 = vpack.c.b16 %v3600, %v3582
      %v5743 = vpack.c.b16 %v3601, %v3583
      %v5744 = vpack.c.b16 %v3602, %v3584
      %v5745 = vpack.c.b16 %v3603, %v3585
      %v5746 = vpack.c.b16 %v3604, %v3586
      %v5747 = vpack.c.b16 %v3605, %v3587
      %v5748 = vpack.c.b16 %v3606, %v3588
      %v5749 = vpack.c.b16 %v3607, %v3589
      %v5750 = vpack.c.b16 %v3608, %v3590
      %v5751 = vpack.c.b16 %v3627, %v3609
      %v5752 = vpack.c.b16 %v3628, %v3610
      %v5753 = vpack.c.b16 %v3629, %v3611
      %v5754 = vpack.c.b16 %v3630, %v3612
      %v5755 = vpack.c.b16 %v3631, %v3613
      %v5756 = vpack.c.b16 %v3632, %v3614
      %v5757 = vpack.c.b16 %v3633, %v3615
      %v5758 = vpack.c.b16 %v3634, %v3616
      %v5759 = vpack.c.b16 %v3635, %v3617
      %v5760 = vpack.c.b16 %v3636, %v3618
      %v5761 = vpack.c.b16 %v3637, %v3619
      %v5762 = vpack.c.b16 %v3638, %v3620
      %v5763 = vpack.c.b16 %v3639, %v3621
      %v5764 = vpack.c.b16 %v3640, %v3622
      %v5765 = vpack.c.b16 %v3641, %v3623
      %v5766 = vpack.c.b16 %v3642, %v3624
      %v5767 = vpack.c.b16 %v3643, %v3625
      %v5768 = vpack.c.b16 %v3644, %v3626
      %v5769 = vpack.c.b16 %v3663, %v3645
      %v5770 = vpack.c.b16 %v3664, %v3646
      %v5771 = vpack.c.b16 %v3665, %v3647
      %v5772 = vpack.c.b16 %v3666, %v3648
      %v5773 = vpack.c.b16 %v3667, %v3649
      %v5774 = vpack.c.b16 %v3668, %v3650
      %v5775 = vpack.c.b16 %v3669, %v3651
      %v5776 = vpack.c.b16 %v3670, %v3652
      %v5777 = vpack.c.b16 %v3671, %v3653
      %v5778 = vpack.c.b16 %v3672, %v3654
      %v5779 = vpack.c.b16 %v3673, %v3655
      %v5780 = vpack.c.b16 %v3674, %v3656
      %v5781 = vpack.c.b16 %v3675, %v3657
      %v5782 = vpack.c.b16 %v3676, %v3658
      %v5783 = vpack.c.b16 %v3677, %v3659
      %v5784 = vpack.c.b16 %v3678, %v3660
      %v5785 = vpack.c.b16 %v3679, %v3661
      %v5786 = vpack.c.b16 %v3680, %v3662
      %v5787 = vpack.c.b16 %v3699, %v3681
      %v5788 = vpack.c.b16 %v3700, %v3682
      %v5789 = vpack.c.b16 %v3701, %v3683
      %v5790 = vpack.c.b16 %v3702, %v3684
      %v5791 = vpack.c.b16 %v3703, %v3685
      %v5792 = vpack.c.b16 %v3704, %v3686
      %v5793 = vpack.c.b16 %v3705, %v3687
      %v5794 = vpack.c.b16 %v3706, %v3688
      %v5795 = vpack.c.b16 %v3707, %v3689
      %v5796 = vpack.c.b16 %v3708, %v3690
      %v5797 = vpack.c.b16 %v3709, %v3691
      %v5798 = vpack.c.b16 %v3710, %v3692
      %v5799 = vpack.c.b16 %v3711, %v3693
      %v5800 = vpack.c.b16 %v3712, %v3694
      %v5801 = vpack.c.b16 %v3713, %v3695
      %v5802 = vpack.c.b16 %v3714, %v3696
      %v5803 = vpack.c.b16 %v3715, %v3697
      %v5804 = vpack.c.b16 %v3716, %v3698
      %v5805 = vpack.c.b16 %v3735, %v3717
      %v5806 = vpack.c.b16 %v3736, %v3718
      %v5807 = vpack.c.b16 %v3737, %v3719
      %v5808 = vpack.c.b16 %v3738, %v3720
      %v5809 = vpack.c.b16 %v3739, %v3721
      %v5810 = vpack.c.b16 %v3740, %v3722
      %v5811 = vpack.c.b16 %v3741, %v3723
      %v5812 = vpack.c.b16 %v3742, %v3724
      %v5813 = vpack.c.b16 %v3743, %v3725
      %v5814 = vpack.c.b16 %v3744, %v3726
      %v5815 = vpack.c.b16 %v3745, %v3727
      %v5816 = vpack.c.b16 %v3746, %v3728
      %v5817 = vpack.c.b16 %v3747, %v3729
      %v5818 = vpack.c.b16 %v3748, %v3730
      %v5819 = vpack.c.b16 %v3749, %v3731
      %v5820 = vpack.c.b16 %v3750, %v3732
      %v5821 = vpack.c.b16 %v3751, %v3733
      %v5822 = vpack.c.b16 %v3752, %v3734
      %v5823 = vpack.c.b16 %v3771, %v3753
      %v5824 = vpack.c.b16 %v3772, %v3754
      %v5825 = vpack.c.b16 %v3773, %v3755
      %v5826 = vpack.c.b16 %v3774, %v3756
      %v5827 = vpack.c.b16 %v3775, %v3757
      %v5828 = vpack.c.b16 %v3776, %v3758
      %v5829 = vpack.c.b16 %v3777, %v3759
      %v5830 = vpack.c.b16 %v3778, %v3760
      %v5831 = vpack.c.b16 %v3779, %v3761
      %v5832 = vpack.c.b16 %v3780, %v3762
      %v5833 = vpack.c.b16 %v3781, %v3763
      %v5834 = vpack.c.b16 %v3782, %v3764
      %v5835 = vpack.c.b16 %v3783, %v3765
      %v5836 = vpack.c.b16 %v3784, %v3766
      %v5837 = vpack.c.b16 %v3785, %v3767
      %v5838 = vpack.c.b16 %v3786, %v3768
      %v5839 = vpack.c.b16 %v3787, %v3769
      %v5840 = vpack.c.b16 %v3788, %v3770
      %v5841 = vpack.c.b16 %v3807, %v3789
      %v5842 = vpack.c.b16 %v3808, %v3790
      %v5843 = vpack.c.b16 %v3809, %v3791
      %v5844 = vpack.c.b16 %v3810, %v3792
      %v5845 = vpack.c.b16 %v3811, %v3793
      %v5846 = vpack.c.b16 %v3812, %v3794
      %v5847 = vpack.c.b16 %v3813, %v3795
      %v5848 = vpack.c.b16 %v3814, %v3796
      %v5849 = vpack.c.b16 %v3815, %v3797
      %v5850 = vpack.c.b16 %v3816, %v3798
      %v5851 = vpack.c.b16 %v3817, %v3799
      %v5852 = vpack.c.b16 %v3818, %v3800
      %v5853 = vpack.c.b16 %v3819, %v3801
      %v5854 = vpack.c.b16 %v3820, %v3802
      %v5855 = vpack.c.b16 %v3821, %v3803
      %v5856 = vpack.c.b16 %v3822, %v3804
      %v5857 = vpack.c.b16 %v3823, %v3805
      %v5858 = vpack.c.b16 %v3824, %v3806
      %v5859 = vpack.c.b16 %v3843, %v3825
      %v5860 = vpack.c.b16 %v3844, %v3826
      %v5861 = vpack.c.b16 %v3845, %v3827
      %v5862 = vpack.c.b16 %v3846, %v3828
      %v5863 = vpack.c.b16 %v3847, %v3829
      %v5864 = vpack.c.b16 %v3848, %v3830
      %v5865 = vpack.c.b16 %v3849, %v3831
      %v5866 = vpack.c.b16 %v3850, %v3832
      %v5867 = vpack.c.b16 %v3851, %v3833
      %v5868 = vpack.c.b16 %v3852, %v3834
      %v5869 = vpack.c.b16 %v3853, %v3835
      %v5870 = vpack.c.b16 %v3854, %v3836
      %v5871 = vpack.c.b16 %v3855, %v3837
      %v5872 = vpack.c.b16 %v3856, %v3838
      %v5873 = vpack.c.b16 %v3857, %v3839
      %v5874 = vpack.c.b16 %v3858, %v3840
      %v5875 = vpack.c.b16 %v3859, %v3841
      %v5876 = vpack.c.b16 %v3860, %v3842
      %v5877 = vpack.c.b16 %v3879, %v3861
      %v5878 = vpack.c.b16 %v3880, %v3862
      %v5879 = vpack.c.b16 %v3881, %v3863
      %v5880 = vpack.c.b16 %v3882, %v3864
      %v5881 = vpack.c.b16 %v3883, %v3865
      %v5882 = vpack.c.b16 %v3884, %v3866
      %v5883 = vpack.c.b16 %v3885, %v3867
      %v5884 = vpack.c.b16 %v3886, %v3868
      %v5885 = vpack.c.b16 %v3887, %v3869
      %v5886 = vpack.c.b16 %v3888, %v3870
      %v5887 = vpack.c.b16 %v3889, %v3871
      %v5888 = vpack.c.b16 %v3890, %v3872
      %v5889 = vpack.c.b16 %v3891, %v3873
      %v5890 = vpack.c.b16 %v3892, %v3874
      %v5891 = vpack.c.b16 %v3893, %v3875
      %v5892 = vpack.c.b16 %v3894, %v3876
      %v5893 = vpack.c.b16 %v3895, %v3877
      %v5894 = vpack.c.b16 %v3896, %v3878
      %v5895 = vpack.c.b16 %v3915, %v3897
      %v5896 = vpack.c.b16 %v3916, %v3898
      %v5897 = vpack.c.b16 %v3917, %v3899
      %v5898 = vpack.c.b16 %v3918, %v3900
      %v5899 = vpack.c.b16 %v3919, %v3901
      %v5900 = vpack.c.b16 %v3920, %v3902
      %v5901 = vpack.c.b16 %v3921, %v3903
      %v5902 = vpack.c.b16 %v3922, %v3904
      %v5903 = vpack.c.b16 %v3923, %v3905
      %v5904 = vpack.c.b16 %v3924, %v3906
      %v5905 = vpack.c.b16 %v3925, %v3907
      %v5906 = vpack.c.b16 %v3926, %v3908
      %v5907 = vpack.c.b16 %v3927, %v3909
      %v5908 = vpack.c.b16 %v3928, %v3910
      %v5909 = vpack.c.b16 %v3929, %v3911
      %v5910 = vpack.c.b16 %v3930, %v3912
      %v5911 = vpack.c.b16 %v3931, %v3913
      %v5912 = vpack.c.b16 %v3932, %v3914
      %v5913 = vpack.c.b16 %v3951, %v3933
      %v5914 = vpack.c.b16 %v3952, %v3934
      %v5915 = vpack.c.b16 %v3953, %v3935
      %v5916 = vpack.c.b16 %v3954, %v3936
      %v5917 = vpack.c.b16 %v3955, %v3937
      %v5918 = vpack.c.b16 %v3956, %v3938
      %v5919 = vpack.c.b16 %v3957, %v3939
      %v5920 = vpack.c.b16 %v3958, %v3940
      %v5921 = vpack.c.b16 %v3959, %v3941
      %v5922 = vpack.c.b16 %v3960, %v3942
      %v5923 = vpack.c.b16 %v3961, %v3943
      %v5924 = vpack.c.b16 %v3962, %v3944
      %v5925 = vpack.c.b16 %v3963, %v3945
      %v5926 = vpack.c.b16 %v3964, %v3946
      %v5927 = vpack.c.b16 %v3965, %v3947
      %v5928 = vpack.c.b16 %v3966, %v3948
      %v5929 = vpack.c.b16 %v3967, %v3949
      %v5930 = vpack.c.b16 %v3968, %v3950
      %v5931 = vpack.c.b16 %v3987, %v3969
      %v5932 = vpack.c.b16 %v3988, %v3970
      %v5933 = vpack.c.b16 %v3989, %v3971
      %v5934 = vpack.c.b16 %v3990, %v3972
      %v5935 = vpack.c.b16 %v3991, %v3973
      %v5936 = vpack.c.b16 %v3992, %v3974
      %v5937 = vpack.c.b16 %v3993, %v3975
      %v5938 = vpack.c.b16 %v3994, %v3976
      %v5939 = vpack.c.b16 %v3995, %v3977
      %v5940 = vpack.c.b16 %v3996, %v3978
      %v5941 = vpack.c.b16 %v3997, %v3979
      %v5942 = vpack.c.b16 %v3998, %v3980
      %v5943 = vpack.c.b16 %v3999, %v3981
      %v5944 = vpack.c.b16 %v4000, %v3982
      %v5945 = vpack.c.b16 %v4001, %v3983
      %v5946 = vpack.c.b16 %v4002, %v3984
      %v5947 = vpack.c.b16 %v4003, %v3985
      %v5948 = vpack.c.b16 %v4004, %v3986
      %v5949 = vpack.c.b16 %v4023, %v4005
      %v5950 = vpack.c.b16 %v4024, %v4006
      %v5951 = vpack.c.b16 %v4025, %v4007
      %v5952 = vpack.c.b16 %v4026, %v4008
      %v5953 = vpack.c.b16 %v4027, %v4009
      %v5954 = vpack.c.b16 %v4028, %v4010
      %v5955 = vpack.c.b16 %v4029, %v4011
      %v5956 = vpack.c.b16 %v4030, %v4012
      %v5957 = vpack.c.b16 %v4031, %v4013
      %v5958 = vpack.c.b16 %v4032, %v4014
      %v5959 = vpack.c.b16 %v4033, %v4015
      %v5960 = vpack.c.b16 %v4034, %v4016
      %v5961 = vpack.c.b16 %v4035, %v4017
      %v5962 = vpack.c.b16 %v4036, %v4018
      %v5963 = vpack.c.b16 %v4037, %v4019
      %v5964 = vpack.c.b16 %v4038, %v4020
      %v5965 = vpack.c.b16 %v4039, %v4021
      %v5966 = vpack.c.b16 %v4040, %v4022
      %v5967 = vpack.c.b16 %v4059, %v4041
      %v5968 = vpack.c.b16 %v4060, %v4042
      %v5969 = vpack.c.b16 %v4061, %v4043
      %v5970 = vpack.c.b16 %v4062, %v4044
      %v5971 = vpack.c.b16 %v4063, %v4045
      %v5972 = vpack.c.b16 %v4064, %v4046
      %v5973 = vpack.c.b16 %v4065, %v4047
      %v5974 = vpack.c.b16 %v4066, %v4048
      %v5975 = vpack.c.b16 %v4067, %v4049
      %v5976 = vpack.c.b16 %v4068, %v4050
      %v5977 = vpack.c.b16 %v4069, %v4051
      %v5978 = vpack.c.b16 %v4070, %v4052
      %v5979 = vpack.c.b16 %v4071, %v4053
      %v5980 = vpack.c.b16 %v4072, %v4054
      %v5981 = vpack.c.b16 %v4073, %v4055
      %v5982 = vpack.c.b16 %v4074, %v4056
      %v5983 = vpack.c.b16 %v4075, %v4057
      %v5984 = vpack.c.b16 %v4076, %v4058
      %v5985 = vpack.c.b16 %v4095, %v4077
      %v5986 = vpack.c.b16 %v4096, %v4078
      %v5987 = vpack.c.b16 %v4097, %v4079
      %v5988 = vpack.c.b16 %v4098, %v4080
      %v5989 = vpack.c.b16 %v4099, %v4081
      %v5990 = vpack.c.b16 %v4100, %v4082
      %v5991 = vpack.c.b16 %v4101, %v4083
      %v5992 = vpack.c.b16 %v4102, %v4084
      %v5993 = vpack.c.b16 %v4103, %v4085
      %v5994 = vpack.c.b16 %v4104, %v4086
      %v5995 = vpack.c.b16 %v4105, %v4087
      %v5996 = vpack.c.b16 %v4106, %v4088
      %v5997 = vpack.c.b16 %v4107, %v4089
      %v5998 = vpack.c.b16 %v4108, %v4090
      %v5999 = vpack.c.b16 %v4109, %v4091
      %v6000 = vpack.c.b16 %v4110, %v4092
      %v6001 = vpack.c.b16 %v4111, %v4093
      %v6002 = vpack.c.b16 %v4112, %v4094
      %v6003 = vpack.c.b16 %v4131, %v4113
      %v6004 = vpack.c.b16 %v4132, %v4114
      %v6005 = vpack.c.b16 %v4133, %v4115
      %v6006 = vpack.c.b16 %v4134, %v4116
      %v6007 = vpack.c.b16 %v4135, %v4117
      %v6008 = vpack.c.b16 %v4136, %v4118
      %v6009 = vpack.c.b16 %v4137, %v4119
      %v6010 = vpack.c.b16 %v4138, %v4120
      %v6011 = vpack.c.b16 %v4139, %v4121
      %v6012 = vpack.c.b16 %v4140, %v4122
      %v6013 = vpack.c.b16 %v4141, %v4123
      %v6014 = vpack.c.b16 %v4142, %v4124
      %v6015 = vpack.c.b16 %v4143, %v4125
      %v6016 = vpack.c.b16 %v4144, %v4126
      %v6017 = vpack.c.b16 %v4145, %v4127
      %v6018 = vpack.c.b16 %v4146, %v4128
      %v6019 = vpack.c.b16 %v4147, %v4129
      %v6020 = vpack.c.b16 %v4148, %v4130
      %v6021 = vpack.c.b16 %v4167, %v4149
      %v6022 = vpack.c.b16 %v4168, %v4150
      %v6023 = vpack.c.b16 %v4169, %v4151
      %v6024 = vpack.c.b16 %v4170, %v4152
      %v6025 = vpack.c.b16 %v4171, %v4153
      %v6026 = vpack.c.b16 %v4172, %v4154
      %v6027 = vpack.c.b16 %v4173, %v4155
      %v6028 = vpack.c.b16 %v4174, %v4156
      %v6029 = vpack.c.b16 %v4175, %v4157
      %v6030 = vpack.c.b16 %v4176, %v4158
      %v6031 = vpack.c.b16 %v4177, %v4159
      %v6032 = vpack.c.b16 %v4178, %v4160
      %v6033 = vpack.c.b16 %v4179, %v4161
      %v6034 = vpack.c.b16 %v4180, %v4162
      %v6035 = vpack.c.b16 %v4181, %v4163
      %v6036 = vpack.c.b16 %v4182, %v4164
      %v6037 = vpack.c.b16 %v4183, %v4165
      %v6038 = vpack.c.b16 %v4184, %v4166
      %v6039 = vpack.c.b16 %v4203, %v4185
      %v6040 = vpack.c.b16 %v4204, %v4186
      %v6041 = vpack.c.b16 %v4205, %v4187
      %v6042 = vpack.c.b16 %v4206, %v4188
      %v6043 = vpack.c.b16 %v4207, %v4189
      %v6044 = vpack.c.b16 %v4208, %v4190
      %v6045 = vpack.c.b16 %v4209, %v4191
      %v6046 = vpack.c.b16 %v4210, %v4192
      %v6047 = vpack.c.b16 %v4211, %v4193
      %v6048 = vpack.c.b16 %v4212, %v4194
      %v6049 = vpack.c.b16 %v4213, %v4195
      %v6050 = vpack.c.b16 %v4214, %v4196
      %v6051 = vpack.c.b16 %v4215, %v4197
      %v6052 = vpack.c.b16 %v4216, %v4198
      %v6053 = vpack.c.b16 %v4217, %v4199
      %v6054 = vpack.c.b16 %v4218, %v4200
      %v6055 = vpack.c.b16 %v4219, %v4201
      %v6056 = vpack.c.b16 %v4220, %v4202
      %v6057 = vpack.c.b16 %v4239, %v4221
      %v6058 = vpack.c.b16 %v4240, %v4222
      %v6059 = vpack.c.b16 %v4241, %v4223
      %v6060 = vpack.c.b16 %v4242, %v4224
      %v6061 = vpack.c.b16 %v4243, %v4225
      %v6062 = vpack.c.b16 %v4244, %v4226
      %v6063 = vpack.c.b16 %v4245, %v4227
      %v6064 = vpack.c.b16 %v4246, %v4228
      %v6065 = vpack.c.b16 %v4247, %v4229
      %v6066 = vpack.c.b16 %v4248, %v4230
      %v6067 = vpack.c.b16 %v4249, %v4231
      %v6068 = vpack.c.b16 %v4250, %v4232
      %v6069 = vpack.c.b16 %v4251, %v4233
      %v6070 = vpack.c.b16 %v4252, %v4234
      %v6071 = vpack.c.b16 %v4253, %v4235
      %v6072 = vpack.c.b16 %v4254, %v4236
      %v6073 = vpack.c.b16 %v4255, %v4237
      %v6074 = vpack.c.b16 %v4256, %v4238
      %v6075 = vpack.c.b16 %v4275, %v4257
      %v6076 = vpack.c.b16 %v4276, %v4258
      %v6077 = vpack.c.b16 %v4277, %v4259
      %v6078 = vpack.c.b16 %v4278, %v4260
      %v6079 = vpack.c.b16 %v4279, %v4261
      %v6080 = vpack.c.b16 %v4280, %v4262
      %v6081 = vpack.c.b16 %v4281, %v4263
      %v6082 = vpack.c.b16 %v4282, %v4264
      %v6083 = vpack.c.b16 %v4283, %v4265
      %v6084 = vpack.c.b16 %v4284, %v4266
      %v6085 = vpack.c.b16 %v4285, %v4267
      %v6086 = vpack.c.b16 %v4286, %v4268
      %v6087 = vpack.c.b16 %v4287, %v4269
      %v6088 = vpack.c.b16 %v4288, %v4270
      %v6089 = vpack.c.b16 %v4289, %v4271
      %v6090 = vpack.c.b16 %v4290, %v4272
      %v6091 = vpack.c.b16 %v4291, %v4273
      %v6092 = vpack.c.b16 %v4292, %v4274
      %v6093 = vpack.c.b16 %v4311, %v4293
      %v6094 = vpack.c.b16 %v4312, %v4294
      %v6095 = vpack.c.b16 %v4313, %v4295
      %v6096 = vpack.c.b16 %v4314, %v4296
      %v6097 = vpack.c.b16 %v4315, %v4297
      %v6098 = vpack.c.b16 %v4316, %v4298
      %v6099 = vpack.c.b16 %v4317, %v4299
      %v6100 = vpack.c.b16 %v4318, %v4300
      %v6101 = vpack.c.b16 %v4319, %v4301
      %v6102 = vpack.c.b16 %v4320, %v4302
      %v6103 = vpack.c.b16 %v4321, %v4303
      %v6104 = vpack.c.b16 %v4322, %v4304
      %v6105 = vpack.c.b16 %v4323, %v4305
      %v6106 = vpack.c.b16 %v4324, %v4306
      %v6107 = vpack.c.b16 %v4325, %v4307
      %v6108 = vpack.c.b16 %v4326, %v4308
      %v6109 = vpack.c.b16 %v4327, %v4309
      %v6110 = vpack.c.b16 %v4328, %v4310
      %v6111 = vpack.c.b16 %v4347, %v4329
      %v6112 = vpack.c.b16 %v4348, %v4330
      %v6113 = vpack.c.b16 %v4349, %v4331
      %v6114 = vpack.c.b16 %v4350, %v4332
      %v6115 = vpack.c.b16 %v4351, %v4333
      %v6116 = vpack.c.b16 %v4352, %v4334
      %v6117 = vpack.c.b16 %v4353, %v4335
      %v6118 = vpack.c.b16 %v4354, %v4336
      %v6119 = vpack.c.b16 %v4355, %v4337
      %v6120 = vpack.c.b16 %v4356, %v4338
      %v6121 = vpack.c.b16 %v4357, %v4339
      %v6122 = vpack.c.b16 %v4358, %v4340
      %v6123 = vpack.c.b16 %v4359, %v4341
      %v6124 = vpack.c.b16 %v4360, %v4342
      %v6125 = vpack.c.b16 %v4361, %v4343
      %v6126 = vpack.c.b16 %v4362, %v4344
      %v6127 = vpack.c.b16 %v4363, %v4345
      %v6128 = vpack.c.b16 %v4364, %v4346
      %v6129 = vpack.c.b16 %v4383, %v4365
      %v6130 = vpack.c.b16 %v4384, %v4366
      %v6131 = vpack.c.b16 %v4385, %v4367
      %v6132 = vpack.c.b16 %v4386, %v4368
      %v6133 = vpack.c.b16 %v4387, %v4369
      %v6134 = vpack.c.b16 %v4388, %v4370
      %v6135 = vpack.c.b16 %v4389, %v4371
      %v6136 = vpack.c.b16 %v4390, %v4372
      %v6137 = vpack.c.b16 %v4391, %v4373
      %v6138 = vpack.c.b16 %v4392, %v4374
      %v6139 = vpack.c.b16 %v4393, %v4375
      %v6140 = vpack.c.b16 %v4394, %v4376
      %v6141 = vpack.c.b16 %v4395, %v4377
      %v6142 = vpack.c.b16 %v4396, %v4378
      %v6143 = vpack.c.b16 %v4397, %v4379
      %v6144 = vpack.c.b16 %v4398, %v4380
      %v6145 = vpack.c.b16 %v4399, %v4381
      %v6146 = vpack.c.b16 %v4400, %v4382
      %v6147 = vpack.c.b16 %v4419, %v4401
      %v6148 = vpack.c.b16 %v4420, %v4402
      %v6149 = vpack.c.b16 %v4421, %v4403
      %v6150 = vpack.c.b16 %v4422, %v4404
      %v6151 = vpack.c.b16 %v4423, %v4405
      %v6152 = vpack.c.b16 %v4424, %v4406
      %v6153 = vpack.c.b16 %v4425, %v4407
      %v6154 = vpack.c.b16 %v4426, %v4408
      %v6155 = vpack.c.b16 %v4427, %v4409
      %v6156 = vpack.c.b16 %v4428, %v4410
      %v6157 = vpack.c.b16 %v4429, %v4411
      %v6158 = vpack.c.b16 %v4430, %v4412
      %v6159 = vpack.c.b16 %v4431, %v4413
      %v6160 = vpack.c.b16 %v4432, %v4414
      %v6161 = vpack.c.b16 %v4433, %v4415
      %v6162 = vpack.c.b16 %v4434, %v4416
      %v6163 = vpack.c.b16 %v4435, %v4417
      %v6164 = vpack.c.b16 %v4436, %v4418
      %v6165 = vpack.c.b16 %v4455, %v4437
      %v6166 = vpack.c.b16 %v4456, %v4438
      %v6167 = vpack.c.b16 %v4457, %v4439
      %v6168 = vpack.c.b16 %v4458, %v4440
      %v6169 = vpack.c.b16 %v4459, %v4441
      %v6170 = vpack.c.b16 %v4460, %v4442
      %v6171 = vpack.c.b16 %v4461, %v4443
      %v6172 = vpack.c.b16 %v4462, %v4444
      %v6173 = vpack.c.b16 %v4463, %v4445
      %v6174 = vpack.c.b16 %v4464, %v4446
      %v6175 = vpack.c.b16 %v4465, %v4447
      %v6176 = vpack.c.b16 %v4466, %v4448
      %v6177 = vpack.c.b16 %v4467, %v4449
      %v6178 = vpack.c.b16 %v4468, %v4450
      %v6179 = vpack.c.b16 %v4469, %v4451
      %v6180 = vpack.c.b16 %v4470, %v4452
      %v6181 = vpack.c.b16 %v4471, %v4453
      %v6182 = vpack.c.b16 %v4472, %v4454
      %v6183 = vpack.c.b16 %v4491, %v4473
      %v6184 = vpack.c.b16 %v4492, %v4474
      %v6185 = vpack.c.b16 %v4493, %v4475
      %v6186 = vpack.c.b16 %v4494, %v4476
      %v6187 = vpack.c.b16 %v4495, %v4477
      %v6188 = vpack.c.b16 %v4496, %v4478
      %v6189 = vpack.c.b16 %v4497, %v4479
      %v6190 = vpack.c.b16 %v4498, %v4480
      %v6191 = vpack.c.b16 %v4499, %v4481
      %v6192 = vpack.c.b16 %v4500, %v4482
      %v6193 = vpack.c.b16 %v4501, %v4483
      %v6194 = vpack.c.b16 %v4502, %v4484
      %v6195 = vpack.c.b16 %v4503, %v4485
      %v6196 = vpack.c.b16 %v4504, %v4486
      %v6197 = vpack.c.b16 %v4505, %v4487
      %v6198 = vpack.c.b16 %v4506, %v4488
      %v6199 = vpack.c.b16 %v4507, %v4489
      %v6200 = vpack.c.b16 %v4508, %v4490
      %v6201 = vpack.c.b16 %v4527, %v4509
      %v6202 = vpack.c.b16 %v4528, %v4510
      %v6203 = vpack.c.b16 %v4529, %v4511
      %v6204 = vpack.c.b16 %v4530, %v4512
      %v6205 = vpack.c.b16 %v4531, %v4513
      %v6206 = vpack.c.b16 %v4532, %v4514
      %v6207 = vpack.c.b16 %v4533, %v4515
      %v6208 = vpack.c.b16 %v4534, %v4516
      %v6209 = vpack.c.b16 %v4535, %v4517
      %v6210 = vpack.c.b16 %v4536, %v4518
      %v6211 = vpack.c.b16 %v4537, %v4519
      %v6212 = vpack.c.b16 %v4538, %v4520
      %v6213 = vpack.c.b16 %v4539, %v4521
      %v6214 = vpack.c.b16 %v4540, %v4522
      %v6215 = vpack.c.b16 %v4541, %v4523
      %v6216 = vpack.c.b16 %v4542, %v4524
      %v6217 = vpack.c.b16 %v4543, %v4525
      %v6218 = vpack.c.b16 %v4544, %v4526
      %v6219 = vpack.c.b16 %v4563, %v4545
      %v6220 = vpack.c.b16 %v4564, %v4546
      %v6221 = vpack.c.b16 %v4565, %v4547
      %v6222 = vpack.c.b16 %v4566, %v4548
      %v6223 = vpack.c.b16 %v4567, %v4549
      %v6224 = vpack.c.b16 %v4568, %v4550
      %v6225 = vpack.c.b16 %v4569, %v4551
      %v6226 = vpack.c.b16 %v4570, %v4552
      %v6227 = vpack.c.b16 %v4571, %v4553
      %v6228 = vpack.c.b16 %v4572, %v4554
      %v6229 = vpack.c.b16 %v4573, %v4555
      %v6230 = vpack.c.b16 %v4574, %v4556
      %v6231 = vpack.c.b16 %v4575, %v4557
      %v6232 = vpack.c.b16 %v4576, %v4558
      %v6233 = vpack.c.b16 %v4577, %v4559
      %v6234 = vpack.c.b16 %v4578, %v4560
      %v6235 = vpack.c.b16 %v4579, %v4561
      %v6236 = vpack.c.b16 %v4580, %v4562
      %v6237 = vpack.c.b16 %v4599, %v4581
      %v6238 = vpack.c.b16 %v4600, %v4582
      %v6239 = vpack.c.b16 %v4601, %v4583
      %v6240 = vpack.c.b16 %v4602, %v4584
      %v6241 = vpack.c.b16 %v4603, %v4585
      %v6242 = vpack.c.b16 %v4604, %v4586
      %v6243 = vpack.c.b16 %v4605, %v4587
      %v6244 = vpack.c.b16 %v4606, %v4588
      %v6245 = vpack.c.b16 %v4607, %v4589
      %v6246 = vpack.c.b16 %v4608, %v4590
      %v6247 = vpack.c.b16 %v4609, %v4591
      %v6248 = vpack.c.b16 %v4610, %v4592
      %v6249 = vpack.c.b16 %v4611, %v4593
      %v6250 = vpack.c.b16 %v4612, %v4594
      %v6251 = vpack.c.b16 %v4613, %v4595
      %v6252 = vpack.c.b16 %v4614, %v4596
      %v6253 = vpack.c.b16 %v4615, %v4597
      %v6254 = vpack.c.b16 %v4616, %v4598
      %v6255 = vpack.c.b16 %v4635, %v4617
      %v6256 = vpack.c.b16 %v4636, %v4618
      %v6257 = vpack.c.b16 %v4637, %v4619
      %v6258 = vpack.c.b16 %v4638, %v4620
      %v6259 = vpack.c.b16 %v4639, %v4621
      %v6260 = vpack.c.b16 %v4640, %v4622
      %v6261 = vpack.c.b16 %v4641, %v4623
      %v6262 = vpack.c.b16 %v4642, %v4624
      %v6263 = vpack.c.b16 %v4643, %v4625
      %v6264 = vpack.c.b16 %v4644, %v4626
      %v6265 = vpack.c.b16 %v4645, %v4627
      %v6266 = vpack.c.b16 %v4646, %v4628
      %v6267 = vpack.c.b16 %v4647, %v4629
      %v6268 = vpack.c.b16 %v4648, %v4630
      %v6269 = vpack.c.b16 %v4649, %v4631
      %v6270 = vpack.c.b16 %v4650, %v4632
      %v6271 = vpack.c.b16 %v4651, %v4633
      %v6272 = vpack.c.b16 %v4652, %v4634
      %v6273 = vpack.c.b16 %v4671, %v4653
      %v6274 = vpack.c.b16 %v4672, %v4654
      %v6275 = vpack.c.b16 %v4673, %v4655
      %v6276 = vpack.c.b16 %v4674, %v4656
      %v6277 = vpack.c.b16 %v4675, %v4657
      %v6278 = vpack.c.b16 %v4676, %v4658
      %v6279 = vpack.c.b16 %v4677, %v4659
      %v6280 = vpack.c.b16 %v4678, %v4660
      %v6281 = vpack.c.b16 %v4679, %v4661
      %v6282 = vpack.c.b16 %v4680, %v4662
      %v6283 = vpack.c.b16 %v4681, %v4663
      %v6284 = vpack.c.b16 %v4682, %v4664
      %v6285 = vpack.c.b16 %v4683, %v4665
      %v6286 = vpack.c.b16 %v4684, %v4666
      %v6287 = vpack.c.b16 %v4685, %v4667
      %v6288 = vpack.c.b16 %v4686, %v4668
      %v6289 = vpack.c.b16 %v4687, %v4669
      %v6290 = vpack.c.b16 %v4688, %v4670
      %v6291 = vpack.c.b16 %v4707, %v4689
      %v6292 = vpack.c.b16 %v4708, %v4690
      %v6293 = vpack.c.b16 %v4709, %v4691
      %v6294 = vpack.c.b16 %v4710, %v4692
      %v6295 = vpack.c.b16 %v4711, %v4693
      %v6296 = vpack.c.b16 %v4712, %v4694
      %v6297 = vpack.c.b16 %v4713, %v4695
      %v6298 = vpack.c.b16 %v4714, %v4696
      %v6299 = vpack.c.b16 %v4715, %v4697
      %v6300 = vpack.c.b16 %v4716, %v4698
      %v6301 = vpack.c.b16 %v4717, %v4699
      %v6302 = vpack.c.b16 %v4718, %v4700
      %v6303 = vpack.c.b16 %v4719, %v4701
      %v6304 = vpack.c.b16 %v4720, %v4702
      %v6305 = vpack.c.b16 %v4721, %v4703
      %v6306 = vpack.c.b16 %v4722, %v4704
      %v6307 = vpack.c.b16 %v4723, %v4705
      %v6308 = vpack.c.b16 %v4724, %v4706
      %v6309 = vpack.c.b16 %v4743, %v4725
      %v6310 = vpack.c.b16 %v4744, %v4726
      %v6311 = vpack.c.b16 %v4745, %v4727
      %v6312 = vpack.c.b16 %v4746, %v4728
      %v6313 = vpack.c.b16 %v4747, %v4729
      %v6314 = vpack.c.b16 %v4748, %v4730
      %v6315 = vpack.c.b16 %v4749, %v4731
      %v6316 = vpack.c.b16 %v4750, %v4732
      %v6317 = vpack.c.b16 %v4751, %v4733
      %v6318 = vpack.c.b16 %v4752, %v4734
      %v6319 = vpack.c.b16 %v4753, %v4735
      %v6320 = vpack.c.b16 %v4754, %v4736
      %v6321 = vpack.c.b16 %v4755, %v4737
      %v6322 = vpack.c.b16 %v4756, %v4738
      %v6323 = vpack.c.b16 %v4757, %v4739
      %v6324 = vpack.c.b16 %v4758, %v4740
      %v6325 = vpack.c.b16 %v4759, %v4741
      %v6326 = vpack.c.b16 %v4760, %v4742
      %v6327 = vpack.c.b16 %v4779, %v4761
      %v6328 = vpack.c.b16 %v4780, %v4762
      %v6329 = vpack.c.b16 %v4781, %v4763
      %v6330 = vpack.c.b16 %v4782, %v4764
      %v6331 = vpack.c.b16 %v4783, %v4765
      %v6332 = vpack.c.b16 %v4784, %v4766
      %v6333 = vpack.c.b16 %v4785, %v4767
      %v6334 = vpack.c.b16 %v4786, %v4768
      %v6335 = vpack.c.b16 %v4787, %v4769
      %v6336 = vpack.c.b16 %v4788, %v4770
      %v6337 = vpack.c.b16 %v4789, %v4771
      %v6338 = vpack.c.b16 %v4790, %v4772
      %v6339 = vpack.c.b16 %v4791, %v4773
      %v6340 = vpack.c.b16 %v4792, %v4774
      %v6341 = vpack.c.b16 %v4793, %v4775
      %v6342 = vpack.c.b16 %v4794, %v4776
      %v6343 = vpack.c.b16 %v4795, %v4777
      %v6344 = vpack.c.b16 %v4796, %v4778
      %v6345 = vpack.c.b16 %v4815, %v4797
      %v6346 = vpack.c.b16 %v4816, %v4798
      %v6347 = vpack.c.b16 %v4817, %v4799
      %v6348 = vpack.c.b16 %v4818, %v4800
      %v6349 = vpack.c.b16 %v4819, %v4801
      %v6350 = vpack.c.b16 %v4820, %v4802
      %v6351 = vpack.c.b16 %v4821, %v4803
      %v6352 = vpack.c.b16 %v4822, %v4804
      %v6353 = vpack.c.b16 %v4823, %v4805
      %v6354 = vpack.c.b16 %v4824, %v4806
      %v6355 = vpack.c.b16 %v4825, %v4807
      %v6356 = vpack.c.b16 %v4826, %v4808
      %v6357 = vpack.c.b16 %v4827, %v4809
      %v6358 = vpack.c.b16 %v4828, %v4810
      %v6359 = vpack.c.b16 %v4829, %v4811
      %v6360 = vpack.c.b16 %v4830, %v4812
      %v6361 = vpack.c.b16 %v4831, %v4813
      %v6362 = vpack.c.b16 %v4832, %v4814
      %v6363 = vpack.c.b16 %v4851, %v4833
      %v6364 = vpack.c.b16 %v4852, %v4834
      %v6365 = vpack.c.b16 %v4853, %v4835
      %v6366 = vpack.c.b16 %v4854, %v4836
      %v6367 = vpack.c.b16 %v4855, %v4837
      %v6368 = vpack.c.b16 %v4856, %v4838
      %v6369 = vpack.c.b16 %v4857, %v4839
      %v6370 = vpack.c.b16 %v4858, %v4840
      %v6371 = vpack.c.b16 %v4859, %v4841
      %v6372 = vpack.c.b16 %v4860, %v4842
      %v6373 = vpack.c.b16 %v4861, %v4843
      %v6374 = vpack.c.b16 %v4862, %v4844
      %v6375 = vpack.c.b16 %v4863, %v4845
      %v6376 = vpack.c.b16 %v4864, %v4846
      %v6377 = vpack.c.b16 %v4865, %v4847
      %v6378 = vpack.c.b16 %v4866, %v4848
      %v6379 = vpack.c.b16 %v4867, %v4849
      %v6380 = vpack.c.b16 %v4868, %v4850
      %v6381 = vpack.c.b16 %v4887, %v4869
      %v6382 = vpack.c.b16 %v4888, %v4870
      %v6383 = vpack.c.b16 %v4889, %v4871
      %v6384 = vpack.c.b16 %v4890, %v4872
      %v6385 = vpack.c.b16 %v4891, %v4873
      %v6386 = vpack.c.b16 %v4892, %v4874
      %v6387 = vpack.c.b16 %v4893, %v4875
      %v6388 = vpack.c.b16 %v4894, %v4876
      %v6389 = vpack.c.b16 %v4895, %v4877
      %v6390 = vpack.c.b16 %v4896, %v4878
      %v6391 = vpack.c.b16 %v4897, %v4879
      %v6392 = vpack.c.b16 %v4898, %v4880
      %v6393 = vpack.c.b16 %v4899, %v4881
      %v6394 = vpack.c.b16 %v4900, %v4882
      %v6395 = vpack.c.b16 %v4901, %v4883
      %v6396 = vpack.c.b16 %v4902, %v4884
      %v6397 = vpack.c.b16 %v4903, %v4885
      %v6398 = vpack.c.b16 %v4904, %v4886
      %v6399 = vpack.c.b16 %v4923, %v4905
      %v6400 = vpack.c.b16 %v4924, %v4906
      %v6401 = vpack.c.b16 %v4925, %v4907
      %v6402 = vpack.c.b16 %v4926, %v4908
      %v6403 = vpack.c.b16 %v4927, %v4909
      %v6404 = vpack.c.b16 %v4928, %v4910
      %v6405 = vpack.c.b16 %v4929, %v4911
      %v6406 = vpack.c.b16 %v4930, %v4912
      %v6407 = vpack.c.b16 %v4931, %v4913
      %v6408 = vpack.c.b16 %v4932, %v4914
      %v6409 = vpack.c.b16 %v4933, %v4915
      %v6410 = vpack.c.b16 %v4934, %v4916
      %v6411 = vpack.c.b16 %v4935, %v4917
      %v6412 = vpack.c.b16 %v4936, %v4918
      %v6413 = vpack.c.b16 %v4937, %v4919
      %v6414 = vpack.c.b16 %v4938, %v4920
      %v6415 = vpack.c.b16 %v4939, %v4921
      %v6416 = vpack.c.b16 %v4940, %v4922
      %v6417 = vpack.c.b16 %v4959, %v4941
      %v6418 = vpack.c.b16 %v4960, %v4942
      %v6419 = vpack.c.b16 %v4961, %v4943
      %v6420 = vpack.c.b16 %v4962, %v4944
      %v6421 = vpack.c.b16 %v4963, %v4945
      %v6422 = vpack.c.b16 %v4964, %v4946
      %v6423 = vpack.c.b16 %v4965, %v4947
      %v6424 = vpack.c.b16 %v4966, %v4948
      %v6425 = vpack.c.b16 %v4967, %v4949
      %v6426 = vpack.c.b16 %v4968, %v4950
      %v6427 = vpack.c.b16 %v4969, %v4951
      %v6428 = vpack.c.b16 %v4970, %v4952
      %v6429 = vpack.c.b16 %v4971, %v4953
      %v6430 = vpack.c.b16 %v4972, %v4954
      %v6431 = vpack.c.b16 %v4973, %v4955
      %v6432 = vpack.c.b16 %v4974, %v4956
      %v6433 = vpack.c.b16 %v4975, %v4957
      %v6434 = vpack.c.b16 %v4976, %v4958
      %v6435 = vpack.c.b16 %v4995, %v4977
      %v6436 = vpack.c.b16 %v4996, %v4978
      %v6437 = vpack.c.b16 %v4997, %v4979
      %v6438 = vpack.c.b16 %v4998, %v4980
      %v6439 = vpack.c.b16 %v4999, %v4981
      %v6440 = vpack.c.b16 %v5000, %v4982
      %v6441 = vpack.c.b16 %v5001, %v4983
      %v6442 = vpack.c.b16 %v5002, %v4984
      %v6443 = vpack.c.b16 %v5003, %v4985
      %v6444 = vpack.c.b16 %v5004, %v4986
      %v6445 = vpack.c.b16 %v5005, %v4987
      %v6446 = vpack.c.b16 %v5006, %v4988
      %v6447 = vpack.c.b16 %v5007, %v4989
      %v6448 = vpack.c.b16 %v5008, %v4990
      %v6449 = vpack.c.b16 %v5009, %v4991
      %v6450 = vpack.c.b16 %v5010, %v4992
      %v6451 = vpack.c.b16 %v5011, %v4993
      %v6452 = vpack.c.b16 %v5012, %v4994
      %v6453 = vpack.c.b16 %v5031, %v5013
      %v6454 = vpack.c.b16 %v5032, %v5014
      %v6455 = vpack.c.b16 %v5033, %v5015
      %v6456 = vpack.c.b16 %v5034, %v5016
      %v6457 = vpack.c.b16 %v5035, %v5017
      %v6458 = vpack.c.b16 %v5036, %v5018
      %v6459 = vpack.c.b16 %v5037, %v5019
      %v6460 = vpack.c.b16 %v5038, %v5020
      %v6461 = vpack.c.b16 %v5039, %v5021
      %v6462 = vpack.c.b16 %v5040, %v5022
      %v6463 = vpack.c.b16 %v5041, %v5023
      %v6464 = vpack.c.b16 %v5042, %v5024
      %v6465 = vpack.c.b16 %v5043, %v5025
      %v6466 = vpack.c.b16 %v5044, %v5026
      %v6467 = vpack.c.b16 %v5045, %v5027
      %v6468 = vpack.c.b16 %v5046, %v5028
      %v6469 = vpack.c.b16 %v5047, %v5029
      %v6470 = vpack.c.b16 %v5048, %v5030
      %v6471 = vpack.c.b16 %v5067, %v5049
      %v6472 = vpack.c.b16 %v5068, %v5050
      %v6473 = vpack.c.b16 %v5069, %v5051
      %v6474 = vpack.c.b16 %v5070, %v5052
      %v6475 = vpack.c.b16 %v5071, %v5053
      %v6476 = vpack.c.b16 %v5072, %v5054
      %v6477 = vpack.c.b16 %v5073, %v5055
      %v6478 = vpack.c.b16 %v5074, %v5056
      %v6479 = vpack.c.b16 %v5075, %v5057
      %v6480 = vpack.c.b16 %v5076, %v5058
      %v6481 = vpack.c.b16 %v5077, %v5059
      %v6482 = vpack.c.b16 %v5078, %v5060
      %v6483 = vpack.c.b16 %v5079, %v5061
      %v6484 = vpack.c.b16 %v5080, %v5062
      %v6485 = vpack.c.b16 %v5081, %v5063
      %v6486 = vpack.c.b16 %v5082, %v5064
      %v6487 = vpack.c.b16 %v5083, %v5065
      %v6488 = vpack.c.b16 %v5084, %v5066
      %v6489 = vpack.c.b16 %v5103, %v5085
      %v6490 = vpack.c.b16 %v5104, %v5086
      %v6491 = vpack.c.b16 %v5105, %v5087
      %v6492 = vpack.c.b16 %v5106, %v5088
      %v6493 = vpack.c.b16 %v5107, %v5089
      %v6494 = vpack.c.b16 %v5108, %v5090
      %v6495 = vpack.c.b16 %v5109, %v5091
      %v6496 = vpack.c.b16 %v5110, %v5092
      %v6497 = vpack.c.b16 %v5111, %v5093
      %v6498 = vpack.c.b16 %v5112, %v5094
      %v6499 = vpack.c.b16 %v5113, %v5095
      %v6500 = vpack.c.b16 %v5114, %v5096
      %v6501 = vpack.c.b16 %v5115, %v5097
      %v6502 = vpack.c.b16 %v5116, %v5098
      %v6503 = vpack.c.b16 %v5117, %v5099
      %v6504 = vpack.c.b16 %v5118, %v5100
      %v6505 = vpack.c.b16 %v5119, %v5101
      %v6506 = vpack.c.b16 %v5120, %v5102
      %v6507 = vpack.c.b16 %v5139, %v5121
      %v6508 = vpack.c.b16 %v5140, %v5122
      %v6509 = vpack.c.b16 %v5141, %v5123
      %v6510 = vpack.c.b16 %v5142, %v5124
      %v6511 = vpack.c.b16 %v5143, %v5125
      %v6512 = vpack.c.b16 %v5144, %v5126
      %v6513 = vpack.c.b16 %v5145, %v5127
      %v6514 = vpack.c.b16 %v5146, %v5128
      %v6515 = vpack.c.b16 %v5147, %v5129
      %v6516 = vpack.c.b16 %v5148, %v5130
      %v6517 = vpack.c.b16 %v5149, %v5131
      %v6518 = vpack.c.b16 %v5150, %v5132
      %v6519 = vpack.c.b16 %v5151, %v5133
      %v6520 = vpack.c.b16 %v5152, %v5134
      %v6521 = vpack.c.b16 %v5153, %v5135
      %v6522 = vpack.c.b16 %v5154, %v5136
      %v6523 = vpack.c.b16 %v5155, %v5137
      %v6524 = vpack.c.b16 %v5156, %v5138
      %v6525 = vpack.c.b16 %v5175, %v5157
      %v6526 = vpack.c.b16 %v5176, %v5158
      %v6527 = vpack.c.b16 %v5177, %v5159
      %v6528 = vpack.c.b16 %v5178, %v5160
      %v6529 = vpack.c.b16 %v5179, %v5161
      %v6530 = vpack.c.b16 %v5180, %v5162
      %v6531 = vpack.c.b16 %v5181, %v5163
      %v6532 = vpack.c.b16 %v5182, %v5164
      %v6533 = vpack.c.b16 %v5183, %v5165
      %v6534 = vpack.c.b16 %v5184, %v5166
      %v6535 = vpack.c.b16 %v5185, %v5167
      %v6536 = vpack.c.b16 %v5186, %v5168
      %v6537 = vpack.c.b16 %v5187, %v5169
      %v6538 = vpack.c.b16 %v5188, %v5170
      %v6539 = vpack.c.b16 %v5189, %v5171
      %v6540 = vpack.c.b16 %v5190, %v5172
      %v6541 = vpack.c.b16 %v5191, %v5173
      %v6542 = vpack.c.b16 %v5192, %v5174
      %v6543 = vpack.c.b16 %v5211, %v5193
      %v6544 = vpack.c.b16 %v5212, %v5194
      %v6545 = vpack.c.b16 %v5213, %v5195
      %v6546 = vpack.c.b16 %v5214, %v5196
      %v6547 = vpack.c.b16 %v5215, %v5197
      %v6548 = vpack.c.b16 %v5216, %v5198
      %v6549 = vpack.c.b16 %v5217, %v5199
      %v6550 = vpack.c.b16 %v5218, %v5200
      %v6551 = vpack.c.b16 %v5219, %v5201
      %v6552 = vpack.c.b16 %v5220, %v5202
      %v6553 = vpack.c.b16 %v5221, %v5203
      %v6554 = vpack.c.b16 %v5222, %v5204
      %v6555 = vpack.c.b16 %v5223, %v5205
      %v6556 = vpack.c.b16 %v5224, %v5206
      %v6557 = vpack.c.b16 %v5225, %v5207
      %v6558 = vpack.c.b16 %v5226, %v5208
      %v6559 = vpack.c.b16 %v5227, %v5209
      %v6560 = vpack.c.b16 %v5228, %v5210
      %v6561 = vpack.c.b16 %v5247, %v5229
      %v6562 = vpack.c.b16 %v5248, %v5230
      %v6563 = vpack.c.b16 %v5249, %v5231
      %v6564 = vpack.c.b16 %v5250, %v5232
      %v6565 = vpack.c.b16 %v5251, %v5233
      %v6566 = vpack.c.b16 %v5252, %v5234
      %v6567 = vpack.c.b16 %v5253, %v5235
      %v6568 = vpack.c.b16 %v5254, %v5236
      %v6569 = vpack.c.b16 %v5255, %v5237
      %v6570 = vpack.c.b16 %v5256, %v5238
      %v6571 = vpack.c.b16 %v5257, %v5239
      %v6572 = vpack.c.b16 %v5258, %v5240
      %v6573 = vpack.c.b16 %v5259, %v5241
      %v6574 = vpack.c.b16 %v5260, %v5242
      %v6575 = vpack.c.b16 %v5261, %v5243
      %v6576 = vpack.c.b16 %v5262, %v5244
      %v6577 = vpack.c.b16 %v5263, %v5245
      %v6578 = vpack.c.b16 %v5264, %v5246
      %v6579 = vpack.c.b16 %v5283, %v5265
      %v6580 = vpack.c.b16 %v5284, %v5266
      %v6581 = vpack.c.b16 %v5285, %v5267
      %v6582 = vpack.c.b16 %v5286, %v5268
      %v6583 = vpack.c.b16 %v5287, %v5269
      %v6584 = vpack.c.b16 %v5288, %v5270
      %v6585 = vpack.c.b16 %v5289, %v5271
      %v6586 = vpack.c.b16 %v5290, %v5272
      %v6587 = vpack.c.b16 %v5291, %v5273
      %v6588 = vpack.c.b16 %v5292, %v5274
      %v6589 = vpack.c.b16 %v5293, %v5275
      %v6590 = vpack.c.b16 %v5294, %v5276
      %v6591 = vpack.c.b16 %v5295, %v5277
      %v6592 = vpack.c.b16 %v5296, %v5278
      %v6593 = vpack.c.b16 %v5297, %v5279
      %v6594 = vpack.c.b16 %v5298, %v5280
      %v6595 = vpack.c.b16 %v5299, %v5281
      %v6596 = vpack.c.b16 %v5300, %v5282
      %v6597 = vpack.c.b16 %v5319, %v5301
      %v6598 = vpack.c.b16 %v5320, %v5302
      %v6599 = vpack.c.b16 %v5321, %v5303
      %v6600 = vpack.c.b16 %v5322, %v5304
      %v6601 = vpack.c.b16 %v5323, %v5305
      %v6602 = vpack.c.b16 %v5324, %v5306
      %v6603 = vpack.c.b16 %v5325, %v5307
      %v6604 = vpack.c.b16 %v5326, %v5308
      %v6605 = vpack.c.b16 %v5327, %v5309
      %v6606 = vpack.c.b16 %v5328, %v5310
      %v6607 = vpack.c.b16 %v5329, %v5311
      %v6608 = vpack.c.b16 %v5330, %v5312
      %v6609 = vpack.c.b16 %v5331, %v5313
      %v6610 = vpack.c.b16 %v5332, %v5314
      %v6611 = vpack.c.b16 %v5333, %v5315
      %v6612 = vpack.c.b16 %v5334, %v5316
      %v6613 = vpack.c.b16 %v5335, %v5317
      %v6614 = vpack.c.b16 %v5336, %v5318
      %v6615 = vpack.c.b16 %v5355, %v5337
      %v6616 = vpack.c.b16 %v5356, %v5338
      %v6617 = vpack.c.b16 %v5357, %v5339
      %v6618 = vpack.c.b16 %v5358, %v5340
      %v6619 = vpack.c.b16 %v5359, %v5341
      %v6620 = vpack.c.b16 %v5360, %v5342
      %v6621 = vpack.c.b16 %v5361, %v5343
      %v6622 = vpack.c.b16 %v5362, %v5344
      %v6623 = vpack.c.b16 %v5363, %v5345
      %v6624 = vpack.c.b16 %v5364, %v5346
      %v6625 = vpack.c.b16 %v5365, %v5347
      %v6626 = vpack.c.b16 %v5366, %v5348
      %v6627 = vpack.c.b16 %v5367, %v5349
      %v6628 = vpack.c.b16 %v5368, %v5350
      %v6629 = vpack.c.b16 %v5369, %v5351
      %v6630 = vpack.c.b16 %v5370, %v5352
      %v6631 = vpack.c.b16 %v5371, %v5353
      %v6632 = vpack.c.b16 %v5372, %v5354
      %v6633 = vpack.c.b16 %v5391, %v5373
      %v6634 = vpack.c.b16 %v5392, %v5374
      %v6635 = vpack.c.b16 %v5393, %v5375
      %v6636 = vpack.c.b16 %v5394, %v5376
      %v6637 = vpack.c.b16 %v5395, %v5377
      %v6638 = vpack.c.b16 %v5396, %v5378
      %v6639 = vpack.c.b16 %v5397, %v5379
      %v6640 = vpack.c.b16 %v5398, %v5380
      %v6641 = vpack.c.b16 %v5399, %v5381
      %v6642 = vpack.c.b16 %v5400, %v5382
      %v6643 = vpack.c.b16 %v5401, %v5383
      %v6644 = vpack.c.b16 %v5402, %v5384
      %v6645 = vpack.c.b16 %v5403, %v5385
      %v6646 = vpack.c.b16 %v5404, %v5386
      %v6647 = vpack.c.b16 %v5405, %v5387
      %v6648 = vpack.c.b16 %v5406, %v5388
      %v6649 = vpack.c.b16 %v5407, %v5389
      %v6650 = vpack.c.b16 %v5408, %v5390
      %v6651 = vpack.c.b16 %v5427, %v5409
      %v6652 = vpack.c.b16 %v5428, %v5410
      %v6653 = vpack.c.b16 %v5429, %v5411
      %v6654 = vpack.c.b16 %v5430, %v5412
      %v6655 = vpack.c.b16 %v5431, %v5413
      %v6656 = vpack.c.b16 %v5432, %v5414
      %v6657 = vpack.c.b16 %v5433, %v5415
      %v6658 = vpack.c.b16 %v5434, %v5416
      %v6659 = vpack.c.b16 %v5435, %v5417
      %v6660 = vpack.c.b16 %v5436, %v5418
      %v6661 = vpack.c.b16 %v5437, %v5419
      %v6662 = vpack.c.b16 %v5438, %v5420
      %v6663 = vpack.c.b16 %v5439, %v5421
      %v6664 = vpack.c.b16 %v5440, %v5422
      %v6665 = vpack.c.b16 %v5441, %v5423
      %v6666 = vpack.c.b16 %v5442, %v5424
      %v6667 = vpack.c.b16 %v5443, %v5425
      %v6668 = vpack.c.b16 %v5444, %v5426
      %v6669 = vpack.c.b16 %v5463, %v5445
      %v6670 = vpack.c.b16 %v5464, %v5446
      %v6671 = vpack.c.b16 %v5465, %v5447
      %v6672 = vpack.c.b16 %v5466, %v5448
      %v6673 = vpack.c.b16 %v5467, %v5449
      %v6674 = vpack.c.b16 %v5468, %v5450
      %v6675 = vpack.c.b16 %v5469, %v5451
      %v6676 = vpack.c.b16 %v5470, %v5452
      %v6677 = vpack.c.b16 %v5471, %v5453
      %v6678 = vpack.c.b16 %v5472, %v5454
      %v6679 = vpack.c.b16 %v5473, %v5455
      %v6680 = vpack.c.b16 %v5474, %v5456
      %v6681 = vpack.c.b16 %v5475, %v5457
      %v6682 = vpack.c.b16 %v5476, %v5458
      %v6683 = vpack.c.b16 %v5477, %v5459
      %v6684 = vpack.c.b16 %v5478, %v5460
      %v6685 = vpack.c.b16 %v5479, %v5461
      %v6686 = vpack.c.b16 %v5480, %v5462
      %v6687 = vpack.c.b16 %v5499, %v5481
      %v6688 = vpack.c.b16 %v5500, %v5482
      %v6689 = vpack.c.b16 %v5501, %v5483
      %v6690 = vpack.c.b16 %v5502, %v5484
      %v6691 = vpack.c.b16 %v5503, %v5485
      %v6692 = vpack.c.b16 %v5504, %v5486
      %v6693 = vpack.c.b16 %v5505, %v5487
      %v6694 = vpack.c.b16 %v5506, %v5488
      %v6695 = vpack.c.b16 %v5507, %v5489
      %v6696 = vpack.c.b16 %v5508, %v5490
      %v6697 = vpack.c.b16 %v5509, %v5491
      %v6698 = vpack.c.b16 %v5510, %v5492
      %v6699 = vpack.c.b16 %v5511, %v5493
      %v6700 = vpack.c.b16 %v5512, %v5494
      %v6701 = vpack.c.b16 %v5513, %v5495
      %v6702 = vpack.c.b16 %v5514, %v5496
      %v6703 = vpack.c.b16 %v5515, %v5497
      %v6704 = vpack.c.b16 %v5516, %v5498
      %v6705 = vpack.c.b16 %v5535, %v5517
      %v6706 = vpack.c.b16 %v5536, %v5518
      %v6707 = vpack.c.b16 %v5537, %v5519
      %v6708 = vpack.c.b16 %v5538, %v5520
      %v6709 = vpack.c.b16 %v5539, %v5521
      %v6710 = vpack.c.b16 %v5540, %v5522
      %v6711 = vpack.c.b16 %v5541, %v5523
      %v6712 = vpack.c.b16 %v5542, %v5524
      %v6713 = vpack.c.b16 %v5543, %v5525
      %v6714 = vpack.c.b16 %v5544, %v5526
      %v6715 = vpack.c.b16 %v5545, %v5527
      %v6716 = vpack.c.b16 %v5546, %v5528
      %v6717 = vpack.c.b16 %v5547, %v5529
      %v6718 = vpack.c.b16 %v5548, %v5530
      %v6719 = vpack.c.b16 %v5549, %v5531
      %v6720 = vpack.c.b16 %v5550, %v5532
      %v6721 = vpack.c.b16 %v5551, %v5533
      %v6722 = vpack.c.b16 %v5552, %v5534
      %v6723 = vpack.c.b16 %v5571, %v5553
      %v6724 = vpack.c.b16 %v5572, %v5554
      %v6725 = vpack.c.b16 %v5573, %v5555
      %v6726 = vpack.c.b16 %v5574, %v5556
      %v6727 = vpack.c.b16 %v5575, %v5557
      %v6728 = vpack.c.b16 %v5576, %v5558
      %v6729 = vpack.c.b16 %v5577, %v5559
      %v6730 = vpack.c.b16 %v5578, %v5560
      %v6731 = vpack.c.b16 %v5579, %v5561
      %v6732 = vpack.c.b16 %v5580, %v5562
      %v6733 = vpack.c.b16 %v5581, %v5563
      %v6734 = vpack.c.b16 %v5582, %v5564
      %v6735 = vpack.c.b16 %v5583, %v5565
      %v6736 = vpack.c.b16 %v5584, %v5566
      %v6737 = vpack.c.b16 %v5585, %v5567
      %v6738 = vpack.c.b16 %v5586, %v5568
      %v6739 = vpack.c.b16 %v5587, %v5569
      %v6740 = vpack.c.b16 %v5588, %v5570
      %7893 = vmatprep.subr.bf16.mxu0 %v5590
      %7894 = vmatpush1.bf16.msra.mxu0 %v5589
      %7895 = vmatprep.subr.bf16.mxu0 %v5608
      %7896 = vmatpush1.bf16.msra.mxu0 %v5607
      %7897 = vmatprep.subr.bf16.mxu0 %v5626
      %7898 = vmatpush1.bf16.msra.mxu0 %v5625
      %7899 = vmatprep.subr.bf16.mxu0 %v5644
      %7900 = vmatpush1.bf16.msra.mxu0 %v5643
      %7901 = vmatprep.subr.bf16.mxu0 %v5662
      %7902 = vmatpush1.bf16.msra.mxu0 %v5661
      %7903 = vmatprep.subr.bf16.mxu0 %v5680
      %7904 = vmatpush1.bf16.msra.mxu0 %v5679
      %7905 = vmatprep.subr.bf16.mxu0 %v5698
      %7906 = vmatpush1.bf16.msra.mxu0 %v5697
      %7907 = vmatprep.subr.bf16.mxu0 %v5716
      %7908 = vmatpush1.bf16.msra.mxu0 %v5715
      %7909 = vmatprep.subr.bf16.mxu0 %v5734
      %7910 = vmatpush1.bf16.msra.mxu0 %v5733
      %7911 = vmatprep.subr.bf16.mxu0 %v5752
      %7912 = vmatpush1.bf16.msra.mxu0 %v5751
      %7913 = vmatprep.subr.bf16.mxu0 %v5770
      %7914 = vmatpush1.bf16.msra.mxu0 %v5769
      %7915 = vmatprep.subr.bf16.mxu0 %v5788
      %7916 = vmatpush1.bf16.msra.mxu0 %v5787
      %7917 = vmatprep.subr.bf16.mxu0 %v5806
      %7918 = vmatpush1.bf16.msra.mxu0 %v5805
      %7919 = vmatprep.subr.bf16.mxu0 %v5824
      %7920 = vmatpush1.bf16.msra.mxu0 %v5823
      %7921 = vmatprep.subr.bf16.mxu0 %v5842
      %7922 = vmatpush1.bf16.msra.mxu0 %v5841
      %7923 = vmatprep.subr.bf16.mxu0 %v5860
      %7924 = vmatpush1.bf16.msra.mxu0 %v5859
      %7925 = vmatprep.mubr.bf16.mxu0 %v974
      %7926 = vmatmul.mubr.bf16.gmra.mrb[0].mxu0 %v973
      %v7927 = vpop.f32.mrb[0].mxu0
      %v7928 = vadd.f32 0.0, %v7927
      %v7929 = vpop.f32.mrb[0].mxu0
      %v7930 = vadd.f32 0.0, %v7929
      %v7931 = vpop.f32.mrb[0].mxu0
      %v7932 = vpop.f32.mrb[0].mxu0
      %7933 = vdwg.mxu0
      %7934 = vmatprep.subr.bf16.mxu0 %v5878
      %7935 = vmatpush1.bf16.msra.mxu0 %v5877
      %7936 = vmatprep.subr.bf16.mxu0 %v5896
      %7937 = vmatpush1.bf16.msra.mxu0 %v5895
      %7938 = vmatprep.subr.bf16.mxu0 %v5914
      %7939 = vmatpush1.bf16.msra.mxu0 %v5913
      %7940 = vmatprep.subr.bf16.mxu0 %v5932
      %7941 = vmatpush1.bf16.msra.mxu0 %v5931
      %7942 = vmatprep.subr.bf16.mxu0 %v5950
      %7943 = vmatpush1.bf16.msra.mxu0 %v5949
      %7944 = vmatprep.subr.bf16.mxu0 %v5968
      %7945 = vmatpush1.bf16.msra.mxu0 %v5967
      %7946 = vmatprep.subr.bf16.mxu0 %v5986
      %7947 = vmatpush1.bf16.msra.mxu0 %v5985
      %7948 = vmatprep.subr.bf16.mxu0 %v6004
      %7949 = vmatpush1.bf16.msra.mxu0 %v6003
      %7950 = vmatprep.subr.bf16.mxu0 %v6022
      %7951 = vmatpush1.bf16.msra.mxu0 %v6021
      %7952 = vmatprep.subr.bf16.mxu0 %v6040
      %7953 = vmatpush1.bf16.msra.mxu0 %v6039
      %7954 = vmatprep.subr.bf16.mxu0 %v6058
      %7955 = vmatpush1.bf16.msra.mxu0 %v6057
      %7956 = vmatprep.subr.bf16.mxu0 %v6076
      %7957 = vmatpush1.bf16.msra.mxu0 %v6075
      %7958 = vmatprep.subr.bf16.mxu0 %v6094
      %7959 = vmatpush1.bf16.msra.mxu0 %v6093
      %7960 = vmatprep.subr.bf16.mxu0 %v6112
      %7961 = vmatpush1.bf16.msra.mxu0 %v6111
      %7962 = vmatprep.subr.bf16.mxu0 %v6130
      %7963 = vmatpush1.bf16.msra.mxu0 %v6129
      %7964 = vmatprep.subr.bf16.mxu0 %v6148
      %7965 = vmatpush1.bf16.msra.mxu0 %v6147
      %7966 = vmatprep.mubr.bf16.mxu0 %v976
      %7967 = vmatmul.mubr.bf16.gmra.mrb[0].mxu0 %v975
      %v7968 = vpop.f32.mrb[0].mxu0
      %v7969 = vadd.f32 %v7928, %v7968
      %v7970 = vpop.f32.mrb[0].mxu0
      %v7971 = vadd.f32 %v7930, %v7970
      %v7972 = vpop.f32.mrb[0].mxu0
      %v7973 = vpop.f32.mrb[0].mxu0
      %7974 = vdwg.mxu0
      %7975 = vmatprep.subr.bf16.mxu0 %v6166
      %7976 = vmatpush1.bf16.msra.mxu0 %v6165
      %7977 = vmatprep.subr.bf16.mxu0 %v6184
      %7978 = vmatpush1.bf16.msra.mxu0 %v6183
      %7979 = vmatprep.subr.bf16.mxu0 %v6202
      %7980 = vmatpush1.bf16.msra.mxu0 %v6201
      %7981 = vmatprep.subr.bf16.mxu0 %v6220
      %7982 = vmatpush1.bf16.msra.mxu0 %v6219
      %7983 = vmatprep.subr.bf16.mxu0 %v6238
      %7984 = vmatpush1.bf16.msra.mxu0 %v6237
      %7985 = vmatprep.subr.bf16.mxu0 %v6256
      %7986 = vmatpush1.bf16.msra.mxu0 %v6255
      %7987 = vmatprep.subr.bf16.mxu0 %v6274
      %7988 = vmatpush1.bf16.msra.mxu0 %v6273
      %7989 = vmatprep.subr.bf16.mxu0 %v6292
      %7990 = vmatpush1.bf16.msra.mxu0 %v6291
      %7991 = vmatprep.subr.bf16.mxu0 %v6310
      %7992 = vmatpush1.bf16.msra.mxu0 %v6309
      %7993 = vmatprep.subr.bf16.mxu0 %v6328
      %7994 = vmatpush1.bf16.msra.mxu0 %v6327
      %7995 = vmatprep.subr.bf16.mxu0 %v6346
      %7996 = vmatpush1.bf16.msra.mxu0 %v6345
      %7997 = vmatprep.subr.bf16.mxu0 %v6364
      %7998 = vmatpush1.bf16.msra.mxu0 %v6363
      %7999 = vmatprep.subr.bf16.mxu0 %v6382
      %8000 = vmatpush1.bf16.msra.mxu0 %v6381
      %8001 = vmatprep.subr.bf16.mxu0 %v6400
      %8002 = vmatpush1.bf16.msra.mxu0 %v6399
      %8003 = vmatprep.subr.bf16.mxu0 %v6418
      %8004 = vmatpush1.bf16.msra.mxu0 %v6417
      %8005 = vmatprep.subr.bf16.mxu0 %v6436
      %8006 = vmatpush1.bf16.msra.mxu0 %v6435
      %8007 = vmatprep.mubr.bf16.mxu0 %v978
      %8008 = vmatmul.mubr.bf16.gmra.mrb[0].mxu0 %v977
      %v8009 = vpop.f32.mrb[0].mxu0
      %v8010 = vadd.f32 %v7969, %v8009
      %v8011 = vpop.f32.mrb[0].mxu0
      %v8012 = vadd.f32 %v7971, %v8011
      %v8013 = vpop.f32.mrb[0].mxu0
      %v8014 = vpop.f32.mrb[0].mxu0
      %8015 = vdwg.mxu0
      %8016 = vmatprep.subr.bf16.mxu0 %v6454
      %8017 = vmatpush1.bf16.msra.mxu0 %v6453
      %8018 = vmatprep.subr.bf16.mxu0 %v6472
      %8019 = vmatpush1.bf16.msra.mxu0 %v6471
      %8020 = vmatprep.subr.bf16.mxu0 %v6490
      %8021 = vmatpush1.bf16.msra.mxu0 %v6489
      %8022 = vmatprep.subr.bf16.mxu0 %v6508
      %8023 = vmatpush1.bf16.msra.mxu0 %v6507
      %8024 = vmatprep.subr.bf16.mxu0 %v6526
      %8025 = vmatpush1.bf16.msra.mxu0 %v6525
      %8026 = vmatprep.subr.bf16.mxu0 %v6544
      %8027 = vmatpush1.bf16.msra.mxu0 %v6543
      %8028 = vmatprep.subr.bf16.mxu0 %v6562
      %8029 = vmatpush1.bf16.msra.mxu0 %v6561
      %8030 = vmatprep.subr.bf16.mxu0 %v6580
      %8031 = vmatpush1.bf16.msra.mxu0 %v6579
      %8032 = vmatprep.subr.bf16.mxu0 %v6598
      %8033 = vmatpush1.bf16.msra.mxu0 %v6597
      %8034 = vmatprep.subr.bf16.mxu0 %v6616
      %8035 = vmatpush1.bf16.msra.mxu0 %v6615
      %8036 = vmatprep.subr.bf16.mxu0 %v6634
      %8037 = vmatpush1.bf16.msra.mxu0 %v6633
      %8038 = vmatprep.subr.bf16.mxu0 %v6652
      %8039 = vmatpush1.bf16.msra.mxu0 %v6651
      %8040 = vmatprep.subr.bf16.mxu0 %v6670
      %8041 = vmatpush1.bf16.msra.mxu0 %v6669
      %8042 = vmatprep.subr.bf16.mxu0 %v6688
      %8043 = vmatpush1.bf16.msra.mxu0 %v6687
      %8044 = vmatprep.subr.bf16.mxu0 %v6706
      %8045 = vmatpush1.bf16.msra.mxu0 %v6705
      %8046 = vmatprep.subr.bf16.mxu0 %v6724
      %8047 = vmatpush1.bf16.msra.mxu0 %v6723
      %8048 = vmatprep.mubr.bf16.mxu0 %v980
      %8049 = vmatmul.mubr.bf16.gmra.mrb[0].mxu0 %v979
      %v8050 = vpop.f32.mrb[0].mxu0
      %v8051 = vadd.f32 %v8010, %v8050
      %v8052 = vpop.f32.mrb[0].mxu0
      %v8053 = vadd.f32 %v8012, %v8052
      %v8054 = vpop.f32.mrb[0].mxu0
      %v8055 = vpop.f32.mrb[0].mxu0
      %8056 = vdwg.mxu0
      %8057 = vmatprep.subr.bf16.mxu0 %v5592
      %8058 = vmatpush1.bf16.msra.mxu0 %v5591
      %8059 = vmatprep.subr.bf16.mxu0 %v5610
      %8060 = vmatpush1.bf16.msra.mxu0 %v5609
      %8061 = vmatprep.subr.bf16.mxu0 %v5628
      %8062 = vmatpush1.bf16.msra.mxu0 %v5627
      %8063 = vmatprep.subr.bf16.mxu0 %v5646
      %8064 = vmatpush1.bf16.msra.mxu0 %v5645
      %8065 = vmatprep.subr.bf16.mxu0 %v5664
      %8066 = vmatpush1.bf16.msra.mxu0 %v5663
      %8067 = vmatprep.subr.bf16.mxu0 %v5682
      %8068 = vmatpush1.bf16.msra.mxu0 %v5681
      %8069 = vmatprep.subr.bf16.mxu0 %v5700
      %8070 = vmatpush1.bf16.msra.mxu0 %v5699
      %8071 = vmatprep.subr.bf16.mxu0 %v5718
      %8072 = vmatpush1.bf16.msra.mxu0 %v5717
      %8073 = vmatprep.subr.bf16.mxu0 %v5736
      %8074 = vmatpush1.bf16.msra.mxu0 %v5735
      %8075 = vmatprep.subr.bf16.mxu0 %v5754
      %8076 = vmatpush1.bf16.msra.mxu0 %v5753
      %8077 = vmatprep.subr.bf16.mxu0 %v5772
      %8078 = vmatpush1.bf16.msra.mxu0 %v5771
      %8079 = vmatprep.subr.bf16.mxu0 %v5790
      %8080 = vmatpush1.bf16.msra.mxu0 %v5789
      %8081 = vmatprep.subr.bf16.mxu0 %v5808
      %8082 = vmatpush1.bf16.msra.mxu0 %v5807
      %8083 = vmatprep.subr.bf16.mxu0 %v5826
      %8084 = vmatpush1.bf16.msra.mxu0 %v5825
      %8085 = vmatprep.subr.bf16.mxu0 %v5844
      %8086 = vmatpush1.bf16.msra.mxu0 %v5843
      %8087 = vmatprep.subr.bf16.mxu0 %v5862
      %8088 = vmatpush1.bf16.msra.mxu0 %v5861
      %8089 = vmatprep.mubr.bf16.mxu0 %v974
      %8090 = vmatmul.mubr.bf16.gmra.mrb[0].mxu0 %v973
      %v8091 = vpop.f32.mrb[0].mxu0
      %v8092 = vadd.f32 0.0, %v8091
      %v8093 = vpop.f32.mrb[0].mxu0
      %v8094 = vadd.f32 0.0, %v8093
      %v8095 = vpop.f32.mrb[0].mxu0
      %v8096 = vpop.f32.mrb[0].mxu0
      %8097 = vdwg.mxu0
      %8098 = vmatprep.subr.bf16.mxu0 %v5880
      %8099 = vmatpush1.bf16.msra.mxu0 %v5879
      %8100 = vmatprep.subr.bf16.mxu0 %v5898
      %8101 = vmatpush1.bf16.msra.mxu0 %v5897
      %8102 = vmatprep.subr.bf16.mxu0 %v5916
      %8103 = vmatpush1.bf16.msra.mxu0 %v5915
      %8104 = vmatprep.subr.bf16.mxu0 %v5934
      %8105 = vmatpush1.bf16.msra.mxu0 %v5933
      %8106 = vmatprep.subr.bf16.mxu0 %v5952
      %8107 = vmatpush1.bf16.msra.mxu0 %v5951
      %8108 = vmatprep.subr.bf16.mxu0 %v5970
      %8109 = vmatpush1.bf16.msra.mxu0 %v5969
      %8110 = vmatprep.subr.bf16.mxu0 %v5988
      %8111 = vmatpush1.bf16.msra.mxu0 %v5987
      %8112 = vmatprep.subr.bf16.mxu0 %v6006
      %8113 = vmatpush1.bf16.msra.mxu0 %v6005
      %8114 = vmatprep.subr.bf16.mxu0 %v6024
      %8115 = vmatpush1.bf16.msra.mxu0 %v6023
      %8116 = vmatprep.subr.bf16.mxu0 %v6042
      %8117 = vmatpush1.bf16.msra.mxu0 %v6041
      %8118 = vmatprep.subr.bf16.mxu0 %v6060
      %8119 = vmatpush1.bf16.msra.mxu0 %v6059
      %8120 = vmatprep.subr.bf16.mxu0 %v6078
      %8121 = vmatpush1.bf16.msra.mxu0 %v6077
      %8122 = vmatprep.subr.bf16.mxu0 %v6096
      %8123 = vmatpush1.bf16.msra.mxu0 %v6095
      %8124 = vmatprep.subr.bf16.mxu0 %v6114
      %8125 = vmatpush1.bf16.msra.mxu0 %v6113
      %8126 = vmatprep.subr.bf16.mxu0 %v6132
      %8127 = vmatpush1.bf16.msra.mxu0 %v6131
      %8128 = vmatprep.subr.bf16.mxu0 %v6150
      %8129 = vmatpush1.bf16.msra.mxu0 %v6149
      %8130 = vmatprep.mubr.bf16.mxu0 %v976
      %8131 = vmatmul.mubr.bf16.gmra.mrb[0].mxu0 %v975
      %v8132 = vpop.f32.mrb[0].mxu0
      %v8133 = vadd.f32 %v8092, %v8132
      %v8134 = vpop.f32.mrb[0].mxu0
      %v8135 = vadd.f32 %v8094, %v8134
      %v8136 = vpop.f32.mrb[0].mxu0
      %v8137 = vpop.f32.mrb[0].mxu0
      %8138 = vdwg.mxu0
      %8139 = vmatprep.subr.bf16.mxu0 %v6168
      %8140 = vmatpush1.bf16.msra.mxu0 %v6167
      %8141 = vmatprep.subr.bf16.mxu0 %v6186
      %8142 = vmatpush1.bf16.msra.mxu0 %v6185
      %8143 = vmatprep.subr.bf16.mxu0 %v6204
      %8144 = vmatpush1.bf16.msra.mxu0 %v6203
      %8145 = vmatprep.subr.bf16.mxu0 %v6222
      %8146 = vmatpush1.bf16.msra.mxu0 %v6221
      %8147 = vmatprep.subr.bf16.mxu0 %v6240
      %8148 = vmatpush1.bf16.msra.mxu0 %v6239
      %8149 = vmatprep.subr.bf16.mxu0 %v6258
      %8150 = vmatpush1.bf16.msra.mxu0 %v6257
      %8151 = vmatprep.subr.bf16.mxu0 %v6276
      %8152 = vmatpush1.bf16.msra.mxu0 %v6275
      %8153 = vmatprep.subr.bf16.mxu0 %v6294
      %8154 = vmatpush1.bf16.msra.mxu0 %v6293
      %8155 = vmatprep.subr.bf16.mxu0 %v6312
      %8156 = vmatpush1.bf16.msra.mxu0 %v6311
      %8157 = vmatprep.subr.bf16.mxu0 %v6330
      %8158 = vmatpush1.bf16.msra.mxu0 %v6329
      %8159 = vmatprep.subr.bf16.mxu0 %v6348
      %8160 = vmatpush1.bf16.msra.mxu0 %v6347
      %8161 = vmatprep.subr.bf16.mxu0 %v6366
      %8162 = vmatpush1.bf16.msra.mxu0 %v6365
      %8163 = vmatprep.subr.bf16.mxu0 %v6384
      %8164 = vmatpush1.bf16.msra.mxu0 %v6383
      %8165 = vmatprep.subr.bf16.mxu0 %v6402
      %8166 = vmatpush1.bf16.msra.mxu0 %v6401
      %8167 = vmatprep.subr.bf16.mxu0 %v6420
      %8168 = vmatpush1.bf16.msra.mxu0 %v6419
      %8169 = vmatprep.subr.bf16.mxu0 %v6438
      %8170 = vmatpush1.bf16.msra.mxu0 %v6437
      %8171 = vmatprep.mubr.bf16.mxu0 %v978
      %8172 = vmatmul.mubr.bf16.gmra.mrb[0].mxu0 %v977
      %v8173 = vpop.f32.mrb[0].mxu0
      %v8174 = vadd.f32 %v8133, %v8173
      %v8175 = vpop.f32.mrb[0].mxu0
      %v8176 = vadd.f32 %v8135, %v8175
      %v8177 = vpop.f32.mrb[0].mxu0
      %v8178 = vpop.f32.mrb[0].mxu0
      %8179 = vdwg.mxu0
      %8180 = vmatprep.subr.bf16.mxu0 %v6456
      %8181 = vmatpush1.bf16.msra.mxu0 %v6455
      %8182 = vmatprep.subr.bf16.mxu0 %v6474
      %8183 = vmatpush1.bf16.msra.mxu0 %v6473
      %8184 = vmatprep.subr.bf16.mxu0 %v6492
      %8185 = vmatpush1.bf16.msra.mxu0 %v6491
      %8186 = vmatprep.subr.bf16.mxu0 %v6510
      %8187 = vmatpush1.bf16.msra.mxu0 %v6509
      %8188 = vmatprep.subr.bf16.mxu0 %v6528
      %8189 = vmatpush1.bf16.msra.mxu0 %v6527
      %8190 = vmatprep.subr.bf16.mxu0 %v6546
      %8191 = vmatpush1.bf16.msra.mxu0 %v6545
      %8192 = vmatprep.subr.bf16.mxu0 %v6564
      %8193 = vmatpush1.bf16.msra.mxu0 %v6563
      %8194 = vmatprep.subr.bf16.mxu0 %v6582
      %8195 = vmatpush1.bf16.msra.mxu0 %v6581
      %8196 = vmatprep.subr.bf16.mxu0 %v6600
      %8197 = vmatpush1.bf16.msra.mxu0 %v6599
      %8198 = vmatprep.subr.bf16.mxu0 %v6618
      %8199 = vmatpush1.bf16.msra.mxu0 %v6617
      %8200 = vmatprep.subr.bf16.mxu0 %v6636
      %8201 = vmatpush1.bf16.msra.mxu0 %v6635
      %8202 = vmatprep.subr.bf16.mxu0 %v6654
      %8203 = vmatpush1.bf16.msra.mxu0 %v6653
      %8204 = vmatprep.subr.bf16.mxu0 %v6672
      %8205 = vmatpush1.bf16.msra.mxu0 %v6671
      %8206 = vmatprep.subr.bf16.mxu0 %v6690
      %8207 = vmatpush1.bf16.msra.mxu0 %v6689
      %8208 = vmatprep.subr.bf16.mxu0 %v6708
      %8209 = vmatpush1.bf16.msra.mxu0 %v6707
      %8210 = vmatprep.subr.bf16.mxu0 %v6726
      %8211 = vmatpush1.bf16.msra.mxu0 %v6725
      %8212 = vmatprep.mubr.bf16.mxu0 %v980
      %8213 = vmatmul.mubr.bf16.gmra.mrb[0].mxu0 %v979
      %v8214 = vpop.f32.mrb[0].mxu0
      %v8215 = vadd.f32 %v8174, %v8214
      %v8216 = vpop.f32.mrb[0].mxu0
      %v8217 = vadd.f32 %v8176, %v8216
      %v8218 = vpop.f32.mrb[0].mxu0
      %v8219 = vpop.f32.mrb[0].mxu0
      %8220 = vdwg.mxu0
      %8221 = vmatprep.subr.bf16.mxu0 %v5594
      %8222 = vmatpush1.bf16.msra.mxu0 %v5593
      %8223 = vmatprep.subr.bf16.mxu0 %v5612
      %8224 = vmatpush1.bf16.msra.mxu0 %v5611
      %8225 = vmatprep.subr.bf16.mxu0 %v5630
      %8226 = vmatpush1.bf16.msra.mxu0 %v5629
      %8227 = vmatprep.subr.bf16.mxu0 %v5648
      %8228 = vmatpush1.bf16.msra.mxu0 %v5647
      %8229 = vmatprep.subr.bf16.mxu0 %v5666
      %8230 = vmatpush1.bf16.msra.mxu0 %v5665
      %8231 = vmatprep.subr.bf16.mxu0 %v5684
      %8232 = vmatpush1.bf16.msra.mxu0 %v5683
      %8233 = vmatprep.subr.bf16.mxu0 %v5702
      %8234 = vmatpush1.bf16.msra.mxu0 %v5701
      %8235 = vmatprep.subr.bf16.mxu0 %v5720
      %8236 = vmatpush1.bf16.msra.mxu0 %v5719
      %8237 = vmatprep.subr.bf16.mxu0 %v5738
      %8238 = vmatpush1.bf16.msra.mxu0 %v5737
      %8239 = vmatprep.subr.bf16.mxu0 %v5756
      %8240 = vmatpush1.bf16.msra.mxu0 %v5755
      %8241 = vmatprep.subr.bf16.mxu0 %v5774
      %8242 = vmatpush1.bf16.msra.mxu0 %v5773
      %8243 = vmatprep.subr.bf16.mxu0 %v5792
      %8244 = vmatpush1.bf16.msra.mxu0 %v5791
      %8245 = vmatprep.subr.bf16.mxu0 %v5810
      %8246 = vmatpush1.bf16.msra.mxu0 %v5809
      %8247 = vmatprep.subr.bf16.mxu0 %v5828
      %8248 = vmatpush1.bf16.msra.mxu0 %v5827
      %8249 = vmatprep.subr.bf16.mxu0 %v5846
      %8250 = vmatpush1.bf16.msra.mxu0 %v5845
      %8251 = vmatprep.subr.bf16.mxu0 %v5864
      %8252 = vmatpush1.bf16.msra.mxu0 %v5863
      %8253 = vmatprep.mubr.bf16.mxu0 %v974
      %8254 = vmatmul.mubr.bf16.gmra.mrb[0].mxu0 %v973
      %v8255 = vpop.f32.mrb[0].mxu0
      %v8256 = vadd.f32 0.0, %v8255
      %v8257 = vpop.f32.mrb[0].mxu0
      %v8258 = vadd.f32 0.0, %v8257
      %v8259 = vpop.f32.mrb[0].mxu0
      %v8260 = vpop.f32.mrb[0].mxu0
      %8261 = vdwg.mxu0
      %8262 = vmatprep.subr.bf16.mxu0 %v5882
      %8263 = vmatpush1.bf16.msra.mxu0 %v5881
      %8264 = vmatprep.subr.bf16.mxu0 %v5900
      %8265 = vmatpush1.bf16.msra.mxu0 %v5899
      %8266 = vmatprep.subr.bf16.mxu0 %v5918
      %8267 = vmatpush1.bf16.msra.mxu0 %v5917
      %8268 = vmatprep.subr.bf16.mxu0 %v5936
      %8269 = vmatpush1.bf16.msra.mxu0 %v5935
      %8270 = vmatprep.subr.bf16.mxu0 %v5954
      %8271 = vmatpush1.bf16.msra.mxu0 %v5953
      %8272 = vmatprep.subr.bf16.mxu0 %v5972
      %8273 = vmatpush1.bf16.msra.mxu0 %v5971
      %8274 = vmatprep.subr.bf16.mxu0 %v5990
      %8275 = vmatpush1.bf16.msra.mxu0 %v5989
      %8276 = vmatprep.subr.bf16.mxu0 %v6008
      %8277 = vmatpush1.bf16.msra.mxu0 %v6007
      %8278 = vmatprep.subr.bf16.mxu0 %v6026
      %8279 = vmatpush1.bf16.msra.mxu0 %v6025
      %8280 = vmatprep.subr.bf16.mxu0 %v6044
      %8281 = vmatpush1.bf16.msra.mxu0 %v6043
      %8282 = vmatprep.subr.bf16.mxu0 %v6062
      %8283 = vmatpush1.bf16.msra.mxu0 %v6061
      %8284 = vmatprep.subr.bf16.mxu0 %v6080
      %8285 = vmatpush1.bf16.msra.mxu0 %v6079
      %8286 = vmatprep.subr.bf16.mxu0 %v6098
      %8287 = vmatpush1.bf16.msra.mxu0 %v6097
      %8288 = vmatprep.subr.bf16.mxu0 %v6116
      %8289 = vmatpush1.bf16.msra.mxu0 %v6115
      %8290 = vmatprep.subr.bf16.mxu0 %v6134
      %8291 = vmatpush1.bf16.msra.mxu0 %v6133
      %8292 = vmatprep.subr.bf16.mxu0 %v6152
      %8293 = vmatpush1.bf16.msra.mxu0 %v6151
      %8294 = vmatprep.mubr.bf16.mxu0 %v976
      %8295 = vmatmul.mubr.bf16.gmra.mrb[0].mxu0 %v975
      %v8296 = vpop.f32.mrb[0].mxu0
      %v8297 = vadd.f32 %v8256, %v8296
      %v8298 = vpop.f32.mrb[0].mxu0
      %v8299 = vadd.f32 %v8258, %v8298
      %v8300 = vpop.f32.mrb[0].mxu0
      %v8301 = vpop.f32.mrb[0].mxu0
      %8302 = vdwg.mxu0
      %8303 = vmatprep.subr.bf16.mxu0 %v6170
      %8304 = vmatpush1.bf16.msra.mxu0 %v6169
      %8305 = vmatprep.subr.bf16.mxu0 %v6188
      %8306 = vmatpush1.bf16.msra.mxu0 %v6187
      %8307 = vmatprep.subr.bf16.mxu0 %v6206
      %8308 = vmatpush1.bf16.msra.mxu0 %v6205
      %8309 = vmatprep.subr.bf16.mxu0 %v6224
      %8310 = vmatpush1.bf16.msra.mxu0 %v6223
      %8311 = vmatprep.subr.bf16.mxu0 %v6242
      %8312 = vmatpush1.bf16.msra.mxu0 %v6241
      %8313 = vmatprep.subr.bf16.mxu0 %v6260
      %8314 = vmatpush1.bf16.msra.mxu0 %v6259
      %8315 = vmatprep.subr.bf16.mxu0 %v6278
      %8316 = vmatpush1.bf16.msra.mxu0 %v6277
      %8317 = vmatprep.subr.bf16.mxu0 %v6296
      %8318 = vmatpush1.bf16.msra.mxu0 %v6295
      %8319 = vmatprep.subr.bf16.mxu0 %v6314
      %8320 = vmatpush1.bf16.msra.mxu0 %v6313
      %8321 = vmatprep.subr.bf16.mxu0 %v6332
      %8322 = vmatpush1.bf16.msra.mxu0 %v6331
      %8323 = vmatprep.subr.bf16.mxu0 %v6350
      %8324 = vmatpush1.bf16.msra.mxu0 %v6349
      %8325 = vmatprep.subr.bf16.mxu0 %v6368
      %8326 = vmatpush1.bf16.msra.mxu0 %v6367
      %8327 = vmatprep.subr.bf16.mxu0 %v6386
      %8328 = vmatpush1.bf16.msra.mxu0 %v6385
      %8329 = vmatprep.subr.bf16.mxu0 %v6404
      %8330 = vmatpush1.bf16.msra.mxu0 %v6403
      %8331 = vmatprep.subr.bf16.mxu0 %v6422
      %8332 = vmatpush1.bf16.msra.mxu0 %v6421
      %8333 = vmatprep.subr.bf16.mxu0 %v6440
      %8334 = vmatpush1.bf16.msra.mxu0 %v6439
      %8335 = vmatprep.mubr.bf16.mxu0 %v978
      %8336 = vmatmul.mubr.bf16.gmra.mrb[0].mxu0 %v977
      %v8337 = vpop.f32.mrb[0].mxu0
      %v8338 = vadd.f32 %v8297, %v8337
      %v8339 = vpop.f32.mrb[0].mxu0
      %v8340 = vadd.f32 %v8299, %v8339
      %v8341 = vpop.f32.mrb[0].mxu0
      %v8342 = vpop.f32.mrb[0].mxu0
      %8343 = vdwg.mxu0
      %8344 = vmatprep.subr.bf16.mxu0 %v6458
      %8345 = vmatpush1.bf16.msra.mxu0 %v6457
      %8346 = vmatprep.subr.bf16.mxu0 %v6476
      %8347 = vmatpush1.bf16.msra.mxu0 %v6475
      %8348 = vmatprep.subr.bf16.mxu0 %v6494
      %8349 = vmatpush1.bf16.msra.mxu0 %v6493
      %8350 = vmatprep.subr.bf16.mxu0 %v6512
      %8351 = vmatpush1.bf16.msra.mxu0 %v6511
      %8352 = vmatprep.subr.bf16.mxu0 %v6530
      %8353 = vmatpush1.bf16.msra.mxu0 %v6529
      %8354 = vmatprep.subr.bf16.mxu0 %v6548
      %8355 = vmatpush1.bf16.msra.mxu0 %v6547
      %8356 = vmatprep.subr.bf16.mxu0 %v6566
      %8357 = vmatpush1.bf16.msra.mxu0 %v6565
      %8358 = vmatprep.subr.bf16.mxu0 %v6584
      %8359 = vmatpush1.bf16.msra.mxu0 %v6583
      %8360 = vmatprep.subr.bf16.mxu0 %v6602
      %8361 = vmatpush1.bf16.msra.mxu0 %v6601
      %8362 = vmatprep.subr.bf16.mxu0 %v6620
      %8363 = vmatpush1.bf16.msra.mxu0 %v6619
      %8364 = vmatprep.subr.bf16.mxu0 %v6638
      %8365 = vmatpush1.bf16.msra.mxu0 %v6637
      %8366 = vmatprep.subr.bf16.mxu0 %v6656
      %8367 = vmatpush1.bf16.msra.mxu0 %v6655
      %8368 = vmatprep.subr.bf16.mxu0 %v6674
      %8369 = vmatpush1.bf16.msra.mxu0 %v6673
      %8370 = vmatprep.subr.bf16.mxu0 %v6692
      %8371 = vmatpush1.bf16.msra.mxu0 %v6691
      %8372 = vmatprep.subr.bf16.mxu0 %v6710
      %8373 = vmatpush1.bf16.msra.mxu0 %v6709
      %8374 = vmatprep.subr.bf16.mxu0 %v6728
      %8375 = vmatpush1.bf16.msra.mxu0 %v6727
      %8376 = vmatprep.mubr.bf16.mxu0 %v980
      %8377 = vmatmul.mubr.bf16.gmra.mrb[0].mxu0 %v979
      %v8378 = vpop.f32.mrb[0].mxu0
      %v8379 = vadd.f32 %v8338, %v8378
      %v8380 = vpop.f32.mrb[0].mxu0
      %v8381 = vadd.f32 %v8340, %v8380
      %v8382 = vpop.f32.mrb[0].mxu0
      %v8383 = vpop.f32.mrb[0].mxu0
      %8384 = vdwg.mxu0
      %8385 = vmatprep.subr.bf16.mxu0 %v5596
      %8386 = vmatpush1.bf16.msra.mxu0 %v5595
      %8387 = vmatprep.subr.bf16.mxu0 %v5614
      %8388 = vmatpush1.bf16.msra.mxu0 %v5613
      %8389 = vmatprep.subr.bf16.mxu0 %v5632
      %8390 = vmatpush1.bf16.msra.mxu0 %v5631
      %8391 = vmatprep.subr.bf16.mxu0 %v5650
      %8392 = vmatpush1.bf16.msra.mxu0 %v5649
      %8393 = vmatprep.subr.bf16.mxu0 %v5668
      %8394 = vmatpush1.bf16.msra.mxu0 %v5667
      %8395 = vmatprep.subr.bf16.mxu0 %v5686
      %8396 = vmatpush1.bf16.msra.mxu0 %v5685
      %8397 = vmatprep.subr.bf16.mxu0 %v5704
      %8398 = vmatpush1.bf16.msra.mxu0 %v5703
      %8399 = vmatprep.subr.bf16.mxu0 %v5722
      %8400 = vmatpush1.bf16.msra.mxu0 %v5721
      %8401 = vmatprep.subr.bf16.mxu0 %v5740
      %8402 = vmatpush1.bf16.msra.mxu0 %v5739
      %8403 = vmatprep.subr.bf16.mxu0 %v5758
      %8404 = vmatpush1.bf16.msra.mxu0 %v5757
      %8405 = vmatprep.subr.bf16.mxu0 %v5776
      %8406 = vmatpush1.bf16.msra.mxu0 %v5775
      %8407 = vmatprep.subr.bf16.mxu0 %v5794
      %8408 = vmatpush1.bf16.msra.mxu0 %v5793
      %8409 = vmatprep.subr.bf16.mxu0 %v5812
      %8410 = vmatpush1.bf16.msra.mxu0 %v5811
      %8411 = vmatprep.subr.bf16.mxu0 %v5830
      %8412 = vmatpush1.bf16.msra.mxu0 %v5829
      %8413 = vmatprep.subr.bf16.mxu0 %v5848
      %8414 = vmatpush1.bf16.msra.mxu0 %v5847
      %8415 = vmatprep.subr.bf16.mxu0 %v5866
      %8416 = vmatpush1.bf16.msra.mxu0 %v5865
      %8417 = vmatprep.mubr.bf16.mxu0 %v974
      %8418 = vmatmul.mubr.bf16.gmra.mrb[0].mxu0 %v973
      %v8419 = vpop.f32.mrb[0].mxu0
      %v8420 = vadd.f32 0.0, %v8419
      %v8421 = vpop.f32.mrb[0].mxu0
      %v8422 = vadd.f32 0.0, %v8421
      %v8423 = vpop.f32.mrb[0].mxu0
      %v8424 = vpop.f32.mrb[0].mxu0
      %8425 = vdwg.mxu0
      %8426 = vmatprep.subr.bf16.mxu0 %v5884
      %8427 = vmatpush1.bf16.msra.mxu0 %v5883
      %8428 = vmatprep.subr.bf16.mxu0 %v5902
      %8429 = vmatpush1.bf16.msra.mxu0 %v5901
      %8430 = vmatprep.subr.bf16.mxu0 %v5920
      %8431 = vmatpush1.bf16.msra.mxu0 %v5919
      %8432 = vmatprep.subr.bf16.mxu0 %v5938
      %8433 = vmatpush1.bf16.msra.mxu0 %v5937
      %8434 = vmatprep.subr.bf16.mxu0 %v5956
      %8435 = vmatpush1.bf16.msra.mxu0 %v5955
      %8436 = vmatprep.subr.bf16.mxu0 %v5974
      %8437 = vmatpush1.bf16.msra.mxu0 %v5973
      %8438 = vmatprep.subr.bf16.mxu0 %v5992
      %8439 = vmatpush1.bf16.msra.mxu0 %v5991
      %8440 = vmatprep.subr.bf16.mxu0 %v6010
      %8441 = vmatpush1.bf16.msra.mxu0 %v6009
      %8442 = vmatprep.subr.bf16.mxu0 %v6028
      %8443 = vmatpush1.bf16.msra.mxu0 %v6027
      %8444 = vmatprep.subr.bf16.mxu0 %v6046
      %8445 = vmatpush1.bf16.msra.mxu0 %v6045
      %8446 = vmatprep.subr.bf16.mxu0 %v6064
      %8447 = vmatpush1.bf16.msra.mxu0 %v6063
      %8448 = vmatprep.subr.bf16.mxu0 %v6082
      %8449 = vmatpush1.bf16.msra.mxu0 %v6081
      %8450 = vmatprep.subr.bf16.mxu0 %v6100
      %8451 = vmatpush1.bf16.msra.mxu0 %v6099
      %8452 = vmatprep.subr.bf16.mxu0 %v6118
      %8453 = vmatpush1.bf16.msra.mxu0 %v6117
      %8454 = vmatprep.subr.bf16.mxu0 %v6136
      %8455 = vmatpush1.bf16.msra.mxu0 %v6135
      %8456 = vmatprep.subr.bf16.mxu0 %v6154
      %8457 = vmatpush1.bf16.msra.mxu0 %v6153
      %8458 = vmatprep.mubr.bf16.mxu0 %v976
      %8459 = vmatmul.mubr.bf16.gmra.mrb[0].mxu0 %v975
      %v8460 = vpop.f32.mrb[0].mxu0
      %v8461 = vadd.f32 %v8420, %v8460
      %v8462 = vpop.f32.mrb[0].mxu0
      %v8463 = vadd.f32 %v8422, %v8462
      %v8464 = vpop.f32.mrb[0].mxu0
      %v8465 = vpop.f32.mrb[0].mxu0
      %8466 = vdwg.mxu0
      %8467 = vmatprep.subr.bf16.mxu0 %v6172
      %8468 = vmatpush1.bf16.msra.mxu0 %v6171
      %8469 = vmatprep.subr.bf16.mxu0 %v6190
      %8470 = vmatpush1.bf16.msra.mxu0 %v6189
      %8471 = vmatprep.subr.bf16.mxu0 %v6208
      %8472 = vmatpush1.bf16.msra.mxu0 %v6207
      %8473 = vmatprep.subr.bf16.mxu0 %v6226
      %8474 = vmatpush1.bf16.msra.mxu0 %v6225
      %8475 = vmatprep.subr.bf16.mxu0 %v6244
      %8476 = vmatpush1.bf16.msra.mxu0 %v6243
      %8477 = vmatprep.subr.bf16.mxu0 %v6262
      %8478 = vmatpush1.bf16.msra.mxu0 %v6261
      %8479 = vmatprep.subr.bf16.mxu0 %v6280
      %8480 = vmatpush1.bf16.msra.mxu0 %v6279
      %8481 = vmatprep.subr.bf16.mxu0 %v6298
      %8482 = vmatpush1.bf16.msra.mxu0 %v6297
      %8483 = vmatprep.subr.bf16.mxu0 %v6316
      %8484 = vmatpush1.bf16.msra.mxu0 %v6315
      %8485 = vmatprep.subr.bf16.mxu0 %v6334
      %8486 = vmatpush1.bf16.msra.mxu0 %v6333
      %8487 = vmatprep.subr.bf16.mxu0 %v6352
      %8488 = vmatpush1.bf16.msra.mxu0 %v6351
      %8489 = vmatprep.subr.bf16.mxu0 %v6370
      %8490 = vmatpush1.bf16.msra.mxu0 %v6369
      %8491 = vmatprep.subr.bf16.mxu0 %v6388
      %8492 = vmatpush1.bf16.msra.mxu0 %v6387
      %8493 = vmatprep.subr.bf16.mxu0 %v6406
      %8494 = vmatpush1.bf16.msra.mxu0 %v6405
      %8495 = vmatprep.subr.bf16.mxu0 %v6424
      %8496 = vmatpush1.bf16.msra.mxu0 %v6423
      %8497 = vmatprep.subr.bf16.mxu0 %v6442
      %8498 = vmatpush1.bf16.msra.mxu0 %v6441
      %8499 = vmatprep.mubr.bf16.mxu0 %v978
      %8500 = vmatmul.mubr.bf16.gmra.mrb[0].mxu0 %v977
      %v8501 = vpop.f32.mrb[0].mxu0
      %v8502 = vadd.f32 %v8461, %v8501
      %v8503 = vpop.f32.mrb[0].mxu0
      %v8504 = vadd.f32 %v8463, %v8503
      %v8505 = vpop.f32.mrb[0].mxu0
      %v8506 = vpop.f32.mrb[0].mxu0
      %8507 = vdwg.mxu0
      %8508 = vmatprep.subr.bf16.mxu0 %v6460
      %8509 = vmatpush1.bf16.msra.mxu0 %v6459
      %8510 = vmatprep.subr.bf16.mxu0 %v6478
      %8511 = vmatpush1.bf16.msra.mxu0 %v6477
      %8512 = vmatprep.subr.bf16.mxu0 %v6496
      %8513 = vmatpush1.bf16.msra.mxu0 %v6495
      %8514 = vmatprep.subr.bf16.mxu0 %v6514
      %8515 = vmatpush1.bf16.msra.mxu0 %v6513
      %8516 = vmatprep.subr.bf16.mxu0 %v6532
      %8517 = vmatpush1.bf16.msra.mxu0 %v6531
      %8518 = vmatprep.subr.bf16.mxu0 %v6550
      %8519 = vmatpush1.bf16.msra.mxu0 %v6549
      %8520 = vmatprep.subr.bf16.mxu0 %v6568
      %8521 = vmatpush1.bf16.msra.mxu0 %v6567
      %8522 = vmatprep.subr.bf16.mxu0 %v6586
      %8523 = vmatpush1.bf16.msra.mxu0 %v6585
      %8524 = vmatprep.subr.bf16.mxu0 %v6604
      %8525 = vmatpush1.bf16.msra.mxu0 %v6603
      %8526 = vmatprep.subr.bf16.mxu0 %v6622
      %8527 = vmatpush1.bf16.msra.mxu0 %v6621
      %8528 = vmatprep.subr.bf16.mxu0 %v6640
      %8529 = vmatpush1.bf16.msra.mxu0 %v6639
      %8530 = vmatprep.subr.bf16.mxu0 %v6658
      %8531 = vmatpush1.bf16.msra.mxu0 %v6657
      %8532 = vmatprep.subr.bf16.mxu0 %v6676
      %8533 = vmatpush1.bf16.msra.mxu0 %v6675
      %8534 = vmatprep.subr.bf16.mxu0 %v6694
      %8535 = vmatpush1.bf16.msra.mxu0 %v6693
      %8536 = vmatprep.subr.bf16.mxu0 %v6712
      %8537 = vmatpush1.bf16.msra.mxu0 %v6711
      %8538 = vmatprep.subr.bf16.mxu0 %v6730
      %8539 = vmatpush1.bf16.msra.mxu0 %v6729
      %8540 = vmatprep.mubr.bf16.mxu0 %v980
      %8541 = vmatmul.mubr.bf16.gmra.mrb[0].mxu0 %v979
      %v8542 = vpop.f32.mrb[0].mxu0
      %v8543 = vadd.f32 %v8502, %v8542
      %v8544 = vpop.f32.mrb[0].mxu0
      %v8545 = vadd.f32 %v8504, %v8544
      %v8546 = vpop.f32.mrb[0].mxu0
      %v8547 = vpop.f32.mrb[0].mxu0
      %8548 = vdwg.mxu0
      %8549 = vmatprep.subr.bf16.mxu0 %v5598
      %8550 = vmatpush1.bf16.msra.mxu0 %v5597
      %8551 = vmatprep.subr.bf16.mxu0 %v5616
      %8552 = vmatpush1.bf16.msra.mxu0 %v5615
      %8553 = vmatprep.subr.bf16.mxu0 %v5634
      %8554 = vmatpush1.bf16.msra.mxu0 %v5633
      %8555 = vmatprep.subr.bf16.mxu0 %v5652
      %8556 = vmatpush1.bf16.msra.mxu0 %v5651
      %8557 = vmatprep.subr.bf16.mxu0 %v5670
      %8558 = vmatpush1.bf16.msra.mxu0 %v5669
      %8559 = vmatprep.subr.bf16.mxu0 %v5688
      %8560 = vmatpush1.bf16.msra.mxu0 %v5687
      %8561 = vmatprep.subr.bf16.mxu0 %v5706
      %8562 = vmatpush1.bf16.msra.mxu0 %v5705
      %8563 = vmatprep.subr.bf16.mxu0 %v5724
      %8564 = vmatpush1.bf16.msra.mxu0 %v5723
      %8565 = vmatprep.subr.bf16.mxu0 %v5742
      %8566 = vmatpush1.bf16.msra.mxu0 %v5741
      %8567 = vmatprep.subr.bf16.mxu0 %v5760
      %8568 = vmatpush1.bf16.msra.mxu0 %v5759
      %8569 = vmatprep.subr.bf16.mxu0 %v5778
      %8570 = vmatpush1.bf16.msra.mxu0 %v5777
      %8571 = vmatprep.subr.bf16.mxu0 %v5796
      %8572 = vmatpush1.bf16.msra.mxu0 %v5795
      %8573 = vmatprep.subr.bf16.mxu0 %v5814
      %8574 = vmatpush1.bf16.msra.mxu0 %v5813
      %8575 = vmatprep.subr.bf16.mxu0 %v5832
      %8576 = vmatpush1.bf16.msra.mxu0 %v5831
      %8577 = vmatprep.subr.bf16.mxu0 %v5850
      %8578 = vmatpush1.bf16.msra.mxu0 %v5849
      %8579 = vmatprep.subr.bf16.mxu0 %v5868
      %8580 = vmatpush1.bf16.msra.mxu0 %v5867
      %8581 = vmatprep.mubr.bf16.mxu0 %v974
      %8582 = vmatmul.mubr.bf16.gmra.mrb[0].mxu0 %v973
      %v8583 = vpop.f32.mrb[0].mxu0
      %v8584 = vadd.f32 0.0, %v8583
      %v8585 = vpop.f32.mrb[0].mxu0
      %v8586 = vadd.f32 0.0, %v8585
      %v8587 = vpop.f32.mrb[0].mxu0
      %v8588 = vpop.f32.mrb[0].mxu0
      %8589 = vdwg.mxu0
      %8590 = vmatprep.subr.bf16.mxu0 %v5886
      %8591 = vmatpush1.bf16.msra.mxu0 %v5885
      %8592 = vmatprep.subr.bf16.mxu0 %v5904
      %8593 = vmatpush1.bf16.msra.mxu0 %v5903
      %8594 = vmatprep.subr.bf16.mxu0 %v5922
      %8595 = vmatpush1.bf16.msra.mxu0 %v5921
      %8596 = vmatprep.subr.bf16.mxu0 %v5940
      %8597 = vmatpush1.bf16.msra.mxu0 %v5939
      %8598 = vmatprep.subr.bf16.mxu0 %v5958
      %8599 = vmatpush1.bf16.msra.mxu0 %v5957
      %8600 = vmatprep.subr.bf16.mxu0 %v5976
      %8601 = vmatpush1.bf16.msra.mxu0 %v5975
      %8602 = vmatprep.subr.bf16.mxu0 %v5994
      %8603 = vmatpush1.bf16.msra.mxu0 %v5993
      %8604 = vmatprep.subr.bf16.mxu0 %v6012
      %8605 = vmatpush1.bf16.msra.mxu0 %v6011
      %8606 = vmatprep.subr.bf16.mxu0 %v6030
      %8607 = vmatpush1.bf16.msra.mxu0 %v6029
      %8608 = vmatprep.subr.bf16.mxu0 %v6048
      %8609 = vmatpush1.bf16.msra.mxu0 %v6047
      %8610 = vmatprep.subr.bf16.mxu0 %v6066
      %8611 = vmatpush1.bf16.msra.mxu0 %v6065
      %8612 = vmatprep.subr.bf16.mxu0 %v6084
      %8613 = vmatpush1.bf16.msra.mxu0 %v6083
      %8614 = vmatprep.subr.bf16.mxu0 %v6102
      %8615 = vmatpush1.bf16.msra.mxu0 %v6101
      %8616 = vmatprep.subr.bf16.mxu0 %v6120
      %8617 = vmatpush1.bf16.msra.mxu0 %v6119
      %8618 = vmatprep.subr.bf16.mxu0 %v6138
      %8619 = vmatpush1.bf16.msra.mxu0 %v6137
      %8620 = vmatprep.subr.bf16.mxu0 %v6156
      %8621 = vmatpush1.bf16.msra.mxu0 %v6155
      %8622 = vmatprep.mubr.bf16.mxu0 %v976
      %8623 = vmatmul.mubr.bf16.gmra.mrb[0].mxu0 %v975
      %v8624 = vpop.f32.mrb[0].mxu0
      %v8625 = vadd.f32 %v8584, %v8624
      %v8626 = vpop.f32.mrb[0].mxu0
      %v8627 = vadd.f32 %v8586, %v8626
      %v8628 = vpop.f32.mrb[0].mxu0
      %v8629 = vpop.f32.mrb[0].mxu0
      %8630 = vdwg.mxu0
      %8631 = vmatprep.subr.bf16.mxu0 %v6174
      %8632 = vmatpush1.bf16.msra.mxu0 %v6173
      %8633 = vmatprep.subr.bf16.mxu0 %v6192
      %8634 = vmatpush1.bf16.msra.mxu0 %v6191
      %8635 = vmatprep.subr.bf16.mxu0 %v6210
      %8636 = vmatpush1.bf16.msra.mxu0 %v6209
      %8637 = vmatprep.subr.bf16.mxu0 %v6228
      %8638 = vmatpush1.bf16.msra.mxu0 %v6227
      %8639 = vmatprep.subr.bf16.mxu0 %v6246
      %8640 = vmatpush1.bf16.msra.mxu0 %v6245
      %8641 = vmatprep.subr.bf16.mxu0 %v6264
      %8642 = vmatpush1.bf16.msra.mxu0 %v6263
      %8643 = vmatprep.subr.bf16.mxu0 %v6282
      %8644 = vmatpush1.bf16.msra.mxu0 %v6281
      %8645 = vmatprep.subr.bf16.mxu0 %v6300
      %8646 = vmatpush1.bf16.msra.mxu0 %v6299
      %8647 = vmatprep.subr.bf16.mxu0 %v6318
      %8648 = vmatpush1.bf16.msra.mxu0 %v6317
      %8649 = vmatprep.subr.bf16.mxu0 %v6336
      %8650 = vmatpush1.bf16.msra.mxu0 %v6335
      %8651 = vmatprep.subr.bf16.mxu0 %v6354
      %8652 = vmatpush1.bf16.msra.mxu0 %v6353
      %8653 = vmatprep.subr.bf16.mxu0 %v6372
      %8654 = vmatpush1.bf16.msra.mxu0 %v6371
      %8655 = vmatprep.subr.bf16.mxu0 %v6390
      %8656 = vmatpush1.bf16.msra.mxu0 %v6389
      %8657 = vmatprep.subr.bf16.mxu0 %v6408
      %8658 = vmatpush1.bf16.msra.mxu0 %v6407
      %8659 = vmatprep.subr.bf16.mxu0 %v6426
      %8660 = vmatpush1.bf16.msra.mxu0 %v6425
      %8661 = vmatprep.subr.bf16.mxu0 %v6444
      %8662 = vmatpush1.bf16.msra.mxu0 %v6443
      %8663 = vmatprep.mubr.bf16.mxu0 %v978
      %8664 = vmatmul.mubr.bf16.gmra.mrb[0].mxu0 %v977
      %v8665 = vpop.f32.mrb[0].mxu0
      %v8666 = vadd.f32 %v8625, %v8665
      %v8667 = vpop.f32.mrb[0].mxu0
      %v8668 = vadd.f32 %v8627, %v8667
      %v8669 = vpop.f32.mrb[0].mxu0
      %v8670 = vpop.f32.mrb[0].mxu0
      %8671 = vdwg.mxu0
      %8672 = vmatprep.subr.bf16.mxu0 %v6462
      %8673 = vmatpush1.bf16.msra.mxu0 %v6461
      %8674 = vmatprep.subr.bf16.mxu0 %v6480
      %8675 = vmatpush1.bf16.msra.mxu0 %v6479
      %8676 = vmatprep.subr.bf16.mxu0 %v6498
      %8677 = vmatpush1.bf16.msra.mxu0 %v6497
      %8678 = vmatprep.subr.bf16.mxu0 %v6516
      %8679 = vmatpush1.bf16.msra.mxu0 %v6515
      %8680 = vmatprep.subr.bf16.mxu0 %v6534
      %8681 = vmatpush1.bf16.msra.mxu0 %v6533
      %8682 = vmatprep.subr.bf16.mxu0 %v6552
      %8683 = vmatpush1.bf16.msra.mxu0 %v6551
      %8684 = vmatprep.subr.bf16.mxu0 %v6570
      %8685 = vmatpush1.bf16.msra.mxu0 %v6569
      %8686 = vmatprep.subr.bf16.mxu0 %v6588
      %8687 = vmatpush1.bf16.msra.mxu0 %v6587
      %8688 = vmatprep.subr.bf16.mxu0 %v6606
      %8689 = vmatpush1.bf16.msra.mxu0 %v6605
      %8690 = vmatprep.subr.bf16.mxu0 %v6624
      %8691 = vmatpush1.bf16.msra.mxu0 %v6623
      %8692 = vmatprep.subr.bf16.mxu0 %v6642
      %8693 = vmatpush1.bf16.msra.mxu0 %v6641
      %8694 = vmatprep.subr.bf16.mxu0 %v6660
      %8695 = vmatpush1.bf16.msra.mxu0 %v6659
      %8696 = vmatprep.subr.bf16.mxu0 %v6678
      %8697 = vmatpush1.bf16.msra.mxu0 %v6677
      %8698 = vmatprep.subr.bf16.mxu0 %v6696
      %8699 = vmatpush1.bf16.msra.mxu0 %v6695
      %8700 = vmatprep.subr.bf16.mxu0 %v6714
      %8701 = vmatpush1.bf16.msra.mxu0 %v6713
      %8702 = vmatprep.subr.bf16.mxu0 %v6732
      %8703 = vmatpush1.bf16.msra.mxu0 %v6731
      %8704 = vmatprep.mubr.bf16.mxu0 %v980
      %8705 = vmatmul.mubr.bf16.gmra.mrb[0].mxu0 %v979
      %v8706 = vpop.f32.mrb[0].mxu0
      %v8707 = vadd.f32 %v8666, %v8706
      %v8708 = vpop.f32.mrb[0].mxu0
      %v8709 = vadd.f32 %v8668, %v8708
      %v8710 = vpop.f32.mrb[0].mxu0
      %v8711 = vpop.f32.mrb[0].mxu0
      %8712 = vdwg.mxu0
      %8713 = vmatprep.subr.bf16.mxu0 %v5600
      %8714 = vmatpush1.bf16.msra.mxu0 %v5599
      %8715 = vmatprep.subr.bf16.mxu0 %v5618
      %8716 = vmatpush1.bf16.msra.mxu0 %v5617
      %8717 = vmatprep.subr.bf16.mxu0 %v5636
      %8718 = vmatpush1.bf16.msra.mxu0 %v5635
      %8719 = vmatprep.subr.bf16.mxu0 %v5654
      %8720 = vmatpush1.bf16.msra.mxu0 %v5653
      %8721 = vmatprep.subr.bf16.mxu0 %v5672
      %8722 = vmatpush1.bf16.msra.mxu0 %v5671
      %8723 = vmatprep.subr.bf16.mxu0 %v5690
      %8724 = vmatpush1.bf16.msra.mxu0 %v5689
      %8725 = vmatprep.subr.bf16.mxu0 %v5708
      %8726 = vmatpush1.bf16.msra.mxu0 %v5707
      %8727 = vmatprep.subr.bf16.mxu0 %v5726
      %8728 = vmatpush1.bf16.msra.mxu0 %v5725
      %8729 = vmatprep.subr.bf16.mxu0 %v5744
      %8730 = vmatpush1.bf16.msra.mxu0 %v5743
      %8731 = vmatprep.subr.bf16.mxu0 %v5762
      %8732 = vmatpush1.bf16.msra.mxu0 %v5761
      %8733 = vmatprep.subr.bf16.mxu0 %v5780
      %8734 = vmatpush1.bf16.msra.mxu0 %v5779
      %8735 = vmatprep.subr.bf16.mxu0 %v5798
      %8736 = vmatpush1.bf16.msra.mxu0 %v5797
      %8737 = vmatprep.subr.bf16.mxu0 %v5816
      %8738 = vmatpush1.bf16.msra.mxu0 %v5815
      %8739 = vmatprep.subr.bf16.mxu0 %v5834
      %8740 = vmatpush1.bf16.msra.mxu0 %v5833
      %8741 = vmatprep.subr.bf16.mxu0 %v5852
      %8742 = vmatpush1.bf16.msra.mxu0 %v5851
      %8743 = vmatprep.subr.bf16.mxu0 %v5870
      %8744 = vmatpush1.bf16.msra.mxu0 %v5869
      %8745 = vmatprep.mubr.bf16.mxu0 %v974
      %8746 = vmatmul.mubr.bf16.gmra.mrb[0].mxu0 %v973
      %v8747 = vpop.f32.mrb[0].mxu0
      %v8748 = vadd.f32 0.0, %v8747
      %v8749 = vpop.f32.mrb[0].mxu0
      %v8750 = vadd.f32 0.0, %v8749
      %v8751 = vpop.f32.mrb[0].mxu0
      %v8752 = vpop.f32.mrb[0].mxu0
      %8753 = vdwg.mxu0
      %8754 = vmatprep.subr.bf16.mxu0 %v5888
      %8755 = vmatpush1.bf16.msra.mxu0 %v5887
      %8756 = vmatprep.subr.bf16.mxu0 %v5906
      %8757 = vmatpush1.bf16.msra.mxu0 %v5905
      %8758 = vmatprep.subr.bf16.mxu0 %v5924
      %8759 = vmatpush1.bf16.msra.mxu0 %v5923
      %8760 = vmatprep.subr.bf16.mxu0 %v5942
      %8761 = vmatpush1.bf16.msra.mxu0 %v5941
      %8762 = vmatprep.subr.bf16.mxu0 %v5960
      %8763 = vmatpush1.bf16.msra.mxu0 %v5959
      %8764 = vmatprep.subr.bf16.mxu0 %v5978
      %8765 = vmatpush1.bf16.msra.mxu0 %v5977
      %8766 = vmatprep.subr.bf16.mxu0 %v5996
      %8767 = vmatpush1.bf16.msra.mxu0 %v5995
      %8768 = vmatprep.subr.bf16.mxu0 %v6014
      %8769 = vmatpush1.bf16.msra.mxu0 %v6013
      %8770 = vmatprep.subr.bf16.mxu0 %v6032
      %8771 = vmatpush1.bf16.msra.mxu0 %v6031
      %8772 = vmatprep.subr.bf16.mxu0 %v6050
      %8773 = vmatpush1.bf16.msra.mxu0 %v6049
      %8774 = vmatprep.subr.bf16.mxu0 %v6068
      %8775 = vmatpush1.bf16.msra.mxu0 %v6067
      %8776 = vmatprep.subr.bf16.mxu0 %v6086
      %8777 = vmatpush1.bf16.msra.mxu0 %v6085
      %8778 = vmatprep.subr.bf16.mxu0 %v6104
      %8779 = vmatpush1.bf16.msra.mxu0 %v6103
      %8780 = vmatprep.subr.bf16.mxu0 %v6122
      %8781 = vmatpush1.bf16.msra.mxu0 %v6121
      %8782 = vmatprep.subr.bf16.mxu0 %v6140
      %8783 = vmatpush1.bf16.msra.mxu0 %v6139
      %8784 = vmatprep.subr.bf16.mxu0 %v6158
      %8785 = vmatpush1.bf16.msra.mxu0 %v6157
      %8786 = vmatprep.mubr.bf16.mxu0 %v976
      %8787 = vmatmul.mubr.bf16.gmra.mrb[0].mxu0 %v975
      %v8788 = vpop.f32.mrb[0].mxu0
      %v8789 = vadd.f32 %v8748, %v8788
      %v8790 = vpop.f32.mrb[0].mxu0
      %v8791 = vadd.f32 %v8750, %v8790
      %v8792 = vpop.f32.mrb[0].mxu0
      %v8793 = vpop.f32.mrb[0].mxu0
      %8794 = vdwg.mxu0
      %8795 = vmatprep.subr.bf16.mxu0 %v6176
      %8796 = vmatpush1.bf16.msra.mxu0 %v6175
      %8797 = vmatprep.subr.bf16.mxu0 %v6194
      %8798 = vmatpush1.bf16.msra.mxu0 %v6193
      %8799 = vmatprep.subr.bf16.mxu0 %v6212
      %8800 = vmatpush1.bf16.msra.mxu0 %v6211
      %8801 = vmatprep.subr.bf16.mxu0 %v6230
      %8802 = vmatpush1.bf16.msra.mxu0 %v6229
      %8803 = vmatprep.subr.bf16.mxu0 %v6248
      %8804 = vmatpush1.bf16.msra.mxu0 %v6247
      %8805 = vmatprep.subr.bf16.mxu0 %v6266
      %8806 = vmatpush1.bf16.msra.mxu0 %v6265
      %8807 = vmatprep.subr.bf16.mxu0 %v6284
      %8808 = vmatpush1.bf16.msra.mxu0 %v6283
      %8809 = vmatprep.subr.bf16.mxu0 %v6302
      %8810 = vmatpush1.bf16.msra.mxu0 %v6301
      %8811 = vmatprep.subr.bf16.mxu0 %v6320
      %8812 = vmatpush1.bf16.msra.mxu0 %v6319
      %8813 = vmatprep.subr.bf16.mxu0 %v6338
      %8814 = vmatpush1.bf16.msra.mxu0 %v6337
      %8815 = vmatprep.subr.bf16.mxu0 %v6356
      %8816 = vmatpush1.bf16.msra.mxu0 %v6355
      %8817 = vmatprep.subr.bf16.mxu0 %v6374
      %8818 = vmatpush1.bf16.msra.mxu0 %v6373
      %8819 = vmatprep.subr.bf16.mxu0 %v6392
      %8820 = vmatpush1.bf16.msra.mxu0 %v6391
      %8821 = vmatprep.subr.bf16.mxu0 %v6410
      %8822 = vmatpush1.bf16.msra.mxu0 %v6409
      %8823 = vmatprep.subr.bf16.mxu0 %v6428
      %8824 = vmatpush1.bf16.msra.mxu0 %v6427
      %8825 = vmatprep.subr.bf16.mxu0 %v6446
      %8826 = vmatpush1.bf16.msra.mxu0 %v6445
      %8827 = vmatprep.mubr.bf16.mxu0 %v978
      %8828 = vmatmul.mubr.bf16.gmra.mrb[0].mxu0 %v977
      %v8829 = vpop.f32.mrb[0].mxu0
      %v8830 = vadd.f32 %v8789, %v8829
      %v8831 = vpop.f32.mrb[0].mxu0
      %v8832 = vadd.f32 %v8791, %v8831
      %v8833 = vpop.f32.mrb[0].mxu0
      %v8834 = vpop.f32.mrb[0].mxu0
      %8835 = vdwg.mxu0
      %8836 = vmatprep.subr.bf16.mxu0 %v6464
      %8837 = vmatpush1.bf16.msra.mxu0 %v6463
      %8838 = vmatprep.subr.bf16.mxu0 %v6482
      %8839 = vmatpush1.bf16.msra.mxu0 %v6481
      %8840 = vmatprep.subr.bf16.mxu0 %v6500
      %8841 = vmatpush1.bf16.msra.mxu0 %v6499
      %8842 = vmatprep.subr.bf16.mxu0 %v6518
      %8843 = vmatpush1.bf16.msra.mxu0 %v6517
      %8844 = vmatprep.subr.bf16.mxu0 %v6536
      %8845 = vmatpush1.bf16.msra.mxu0 %v6535
      %8846 = vmatprep.subr.bf16.mxu0 %v6554
      %8847 = vmatpush1.bf16.msra.mxu0 %v6553
      %8848 = vmatprep.subr.bf16.mxu0 %v6572
      %8849 = vmatpush1.bf16.msra.mxu0 %v6571
      %8850 = vmatprep.subr.bf16.mxu0 %v6590
      %8851 = vmatpush1.bf16.msra.mxu0 %v6589
      %8852 = vmatprep.subr.bf16.mxu0 %v6608
      %8853 = vmatpush1.bf16.msra.mxu0 %v6607
      %8854 = vmatprep.subr.bf16.mxu0 %v6626
      %8855 = vmatpush1.bf16.msra.mxu0 %v6625
      %8856 = vmatprep.subr.bf16.mxu0 %v6644
      %8857 = vmatpush1.bf16.msra.mxu0 %v6643
      %8858 = vmatprep.subr.bf16.mxu0 %v6662
      %8859 = vmatpush1.bf16.msra.mxu0 %v6661
      %8860 = vmatprep.subr.bf16.mxu0 %v6680
      %8861 = vmatpush1.bf16.msra.mxu0 %v6679
      %8862 = vmatprep.subr.bf16.mxu0 %v6698
      %8863 = vmatpush1.bf16.msra.mxu0 %v6697
      %8864 = vmatprep.subr.bf16.mxu0 %v6716
      %8865 = vmatpush1.bf16.msra.mxu0 %v6715
      %8866 = vmatprep.subr.bf16.mxu0 %v6734
      %8867 = vmatpush1.bf16.msra.mxu0 %v6733
      %8868 = vmatprep.mubr.bf16.mxu0 %v980
      %8869 = vmatmul.mubr.bf16.gmra.mrb[0].mxu0 %v979
      %v8870 = vpop.f32.mrb[0].mxu0
      %v8871 = vadd.f32 %v8830, %v8870
      %v8872 = vpop.f32.mrb[0].mxu0
      %v8873 = vadd.f32 %v8832, %v8872
      %v8874 = vpop.f32.mrb[0].mxu0
      %v8875 = vpop.f32.mrb[0].mxu0
      %8876 = vdwg.mxu0
      %8877 = vmatprep.subr.bf16.mxu0 %v5602
      %8878 = vmatpush1.bf16.msra.mxu0 %v5601
      %8879 = vmatprep.subr.bf16.mxu0 %v5620
      %8880 = vmatpush1.bf16.msra.mxu0 %v5619
      %8881 = vmatprep.subr.bf16.mxu0 %v5638
      %8882 = vmatpush1.bf16.msra.mxu0 %v5637
      %8883 = vmatprep.subr.bf16.mxu0 %v5656
      %8884 = vmatpush1.bf16.msra.mxu0 %v5655
      %8885 = vmatprep.subr.bf16.mxu0 %v5674
      %8886 = vmatpush1.bf16.msra.mxu0 %v5673
      %8887 = vmatprep.subr.bf16.mxu0 %v5692
      %8888 = vmatpush1.bf16.msra.mxu0 %v5691
      %8889 = vmatprep.subr.bf16.mxu0 %v5710
      %8890 = vmatpush1.bf16.msra.mxu0 %v5709
      %8891 = vmatprep.subr.bf16.mxu0 %v5728
      %8892 = vmatpush1.bf16.msra.mxu0 %v5727
      %8893 = vmatprep.subr.bf16.mxu0 %v5746
      %8894 = vmatpush1.bf16.msra.mxu0 %v5745
      %8895 = vmatprep.subr.bf16.mxu0 %v5764
      %8896 = vmatpush1.bf16.msra.mxu0 %v5763
      %8897 = vmatprep.subr.bf16.mxu0 %v5782
      %8898 = vmatpush1.bf16.msra.mxu0 %v5781
      %8899 = vmatprep.subr.bf16.mxu0 %v5800
      %8900 = vmatpush1.bf16.msra.mxu0 %v5799
      %8901 = vmatprep.subr.bf16.mxu0 %v5818
      %8902 = vmatpush1.bf16.msra.mxu0 %v5817
      %8903 = vmatprep.subr.bf16.mxu0 %v5836
      %8904 = vmatpush1.bf16.msra.mxu0 %v5835
      %8905 = vmatprep.subr.bf16.mxu0 %v5854
      %8906 = vmatpush1.bf16.msra.mxu0 %v5853
      %8907 = vmatprep.subr.bf16.mxu0 %v5872
      %8908 = vmatpush1.bf16.msra.mxu0 %v5871
      %8909 = vmatprep.mubr.bf16.mxu0 %v974
      %8910 = vmatmul.mubr.bf16.gmra.mrb[0].mxu0 %v973
      %v8911 = vpop.f32.mrb[0].mxu0
      %v8912 = vadd.f32 0.0, %v8911
      %v8913 = vpop.f32.mrb[0].mxu0
      %v8914 = vadd.f32 0.0, %v8913
      %v8915 = vpop.f32.mrb[0].mxu0
      %v8916 = vpop.f32.mrb[0].mxu0
      %8917 = vdwg.mxu0
      %8918 = vmatprep.subr.bf16.mxu0 %v5890
      %8919 = vmatpush1.bf16.msra.mxu0 %v5889
      %8920 = vmatprep.subr.bf16.mxu0 %v5908
      %8921 = vmatpush1.bf16.msra.mxu0 %v5907
      %8922 = vmatprep.subr.bf16.mxu0 %v5926
      %8923 = vmatpush1.bf16.msra.mxu0 %v5925
      %8924 = vmatprep.subr.bf16.mxu0 %v5944
      %8925 = vmatpush1.bf16.msra.mxu0 %v5943
      %8926 = vmatprep.subr.bf16.mxu0 %v5962
      %8927 = vmatpush1.bf16.msra.mxu0 %v5961
      %8928 = vmatprep.subr.bf16.mxu0 %v5980
      %8929 = vmatpush1.bf16.msra.mxu0 %v5979
      %8930 = vmatprep.subr.bf16.mxu0 %v5998
      %8931 = vmatpush1.bf16.msra.mxu0 %v5997
      %8932 = vmatprep.subr.bf16.mxu0 %v6016
      %8933 = vmatpush1.bf16.msra.mxu0 %v6015
      %8934 = vmatprep.subr.bf16.mxu0 %v6034
      %8935 = vmatpush1.bf16.msra.mxu0 %v6033
      %8936 = vmatprep.subr.bf16.mxu0 %v6052
      %8937 = vmatpush1.bf16.msra.mxu0 %v6051
      %8938 = vmatprep.subr.bf16.mxu0 %v6070
      %8939 = vmatpush1.bf16.msra.mxu0 %v6069
      %8940 = vmatprep.subr.bf16.mxu0 %v6088
      %8941 = vmatpush1.bf16.msra.mxu0 %v6087
      %8942 = vmatprep.subr.bf16.mxu0 %v6106
      %8943 = vmatpush1.bf16.msra.mxu0 %v6105
      %8944 = vmatprep.subr.bf16.mxu0 %v6124
      %8945 = vmatpush1.bf16.msra.mxu0 %v6123
      %8946 = vmatprep.subr.bf16.mxu0 %v6142
      %8947 = vmatpush1.bf16.msra.mxu0 %v6141
      %8948 = vmatprep.subr.bf16.mxu0 %v6160
      %8949 = vmatpush1.bf16.msra.mxu0 %v6159
      %8950 = vmatprep.mubr.bf16.mxu0 %v976
      %8951 = vmatmul.mubr.bf16.gmra.mrb[0].mxu0 %v975
      %v8952 = vpop.f32.mrb[0].mxu0
      %v8953 = vadd.f32 %v8912, %v8952
      %v8954 = vpop.f32.mrb[0].mxu0
      %v8955 = vadd.f32 %v8914, %v8954
      %v8956 = vpop.f32.mrb[0].mxu0
      %v8957 = vpop.f32.mrb[0].mxu0
      %8958 = vdwg.mxu0
      %8959 = vmatprep.subr.bf16.mxu0 %v6178
      %8960 = vmatpush1.bf16.msra.mxu0 %v6177
      %8961 = vmatprep.subr.bf16.mxu0 %v6196
      %8962 = vmatpush1.bf16.msra.mxu0 %v6195
      %8963 = vmatprep.subr.bf16.mxu0 %v6214
      %8964 = vmatpush1.bf16.msra.mxu0 %v6213
      %8965 = vmatprep.subr.bf16.mxu0 %v6232
      %8966 = vmatpush1.bf16.msra.mxu0 %v6231
      %8967 = vmatprep.subr.bf16.mxu0 %v6250
      %8968 = vmatpush1.bf16.msra.mxu0 %v6249
      %8969 = vmatprep.subr.bf16.mxu0 %v6268
      %8970 = vmatpush1.bf16.msra.mxu0 %v6267
      %8971 = vmatprep.subr.bf16.mxu0 %v6286
      %8972 = vmatpush1.bf16.msra.mxu0 %v6285
      %8973 = vmatprep.subr.bf16.mxu0 %v6304
      %8974 = vmatpush1.bf16.msra.mxu0 %v6303
      %8975 = vmatprep.subr.bf16.mxu0 %v6322
      %8976 = vmatpush1.bf16.msra.mxu0 %v6321
      %8977 = vmatprep.subr.bf16.mxu0 %v6340
      %8978 = vmatpush1.bf16.msra.mxu0 %v6339
      %8979 = vmatprep.subr.bf16.mxu0 %v6358
      %8980 = vmatpush1.bf16.msra.mxu0 %v6357
      %8981 = vmatprep.subr.bf16.mxu0 %v6376
      %8982 = vmatpush1.bf16.msra.mxu0 %v6375
      %8983 = vmatprep.subr.bf16.mxu0 %v6394
      %8984 = vmatpush1.bf16.msra.mxu0 %v6393
      %8985 = vmatprep.subr.bf16.mxu0 %v6412
      %8986 = vmatpush1.bf16.msra.mxu0 %v6411
      %8987 = vmatprep.subr.bf16.mxu0 %v6430
      %8988 = vmatpush1.bf16.msra.mxu0 %v6429
      %8989 = vmatprep.subr.bf16.mxu0 %v6448
      %8990 = vmatpush1.bf16.msra.mxu0 %v6447
      %8991 = vmatprep.mubr.bf16.mxu0 %v978
      %8992 = vmatmul.mubr.bf16.gmra.mrb[0].mxu0 %v977
      %v8993 = vpop.f32.mrb[0].mxu0
      %v8994 = vadd.f32 %v8953, %v8993
      %v8995 = vpop.f32.mrb[0].mxu0
      %v8996 = vadd.f32 %v8955, %v8995
      %v8997 = vpop.f32.mrb[0].mxu0
      %v8998 = vpop.f32.mrb[0].mxu0
      %8999 = vdwg.mxu0
      %9000 = vmatprep.subr.bf16.mxu0 %v6466
      %9001 = vmatpush1.bf16.msra.mxu0 %v6465
      %9002 = vmatprep.subr.bf16.mxu0 %v6484
      %9003 = vmatpush1.bf16.msra.mxu0 %v6483
      %9004 = vmatprep.subr.bf16.mxu0 %v6502
      %9005 = vmatpush1.bf16.msra.mxu0 %v6501
      %9006 = vmatprep.subr.bf16.mxu0 %v6520
      %9007 = vmatpush1.bf16.msra.mxu0 %v6519
      %9008 = vmatprep.subr.bf16.mxu0 %v6538
      %9009 = vmatpush1.bf16.msra.mxu0 %v6537
      %9010 = vmatprep.subr.bf16.mxu0 %v6556
      %9011 = vmatpush1.bf16.msra.mxu0 %v6555
      %9012 = vmatprep.subr.bf16.mxu0 %v6574
      %9013 = vmatpush1.bf16.msra.mxu0 %v6573
      %9014 = vmatprep.subr.bf16.mxu0 %v6592
      %9015 = vmatpush1.bf16.msra.mxu0 %v6591
      %9016 = vmatprep.subr.bf16.mxu0 %v6610
      %9017 = vmatpush1.bf16.msra.mxu0 %v6609
      %9018 = vmatprep.subr.bf16.mxu0 %v6628
      %9019 = vmatpush1.bf16.msra.mxu0 %v6627
      %9020 = vmatprep.subr.bf16.mxu0 %v6646
      %9021 = vmatpush1.bf16.msra.mxu0 %v6645
      %9022 = vmatprep.subr.bf16.mxu0 %v6664
      %9023 = vmatpush1.bf16.msra.mxu0 %v6663
      %9024 = vmatprep.subr.bf16.mxu0 %v6682
      %9025 = vmatpush1.bf16.msra.mxu0 %v6681
      %9026 = vmatprep.subr.bf16.mxu0 %v6700
      %9027 = vmatpush1.bf16.msra.mxu0 %v6699
      %9028 = vmatprep.subr.bf16.mxu0 %v6718
      %9029 = vmatpush1.bf16.msra.mxu0 %v6717
      %9030 = vmatprep.subr.bf16.mxu0 %v6736
      %9031 = vmatpush1.bf16.msra.mxu0 %v6735
      %9032 = vmatprep.mubr.bf16.mxu0 %v980
      %9033 = vmatmul.mubr.bf16.gmra.mrb[0].mxu0 %v979
      %v9034 = vpop.f32.mrb[0].mxu0
      %v9035 = vadd.f32 %v8994, %v9034
      %v9036 = vpop.f32.mrb[0].mxu0
      %v9037 = vadd.f32 %v8996, %v9036
      %v9038 = vpop.f32.mrb[0].mxu0
      %v9039 = vpop.f32.mrb[0].mxu0
      %9040 = vdwg.mxu0
      %9041 = vmatprep.subr.bf16.mxu0 %v5604
      %9042 = vmatpush1.bf16.msra.mxu0 %v5603
      %9043 = vmatprep.subr.bf16.mxu0 %v5622
      %9044 = vmatpush1.bf16.msra.mxu0 %v5621
      %9045 = vmatprep.subr.bf16.mxu0 %v5640
      %9046 = vmatpush1.bf16.msra.mxu0 %v5639
      %9047 = vmatprep.subr.bf16.mxu0 %v5658
      %9048 = vmatpush1.bf16.msra.mxu0 %v5657
      %9049 = vmatprep.subr.bf16.mxu0 %v5676
      %9050 = vmatpush1.bf16.msra.mxu0 %v5675
      %9051 = vmatprep.subr.bf16.mxu0 %v5694
      %9052 = vmatpush1.bf16.msra.mxu0 %v5693
      %9053 = vmatprep.subr.bf16.mxu0 %v5712
      %9054 = vmatpush1.bf16.msra.mxu0 %v5711
      %9055 = vmatprep.subr.bf16.mxu0 %v5730
      %9056 = vmatpush1.bf16.msra.mxu0 %v5729
      %9057 = vmatprep.subr.bf16.mxu0 %v5748
      %9058 = vmatpush1.bf16.msra.mxu0 %v5747
      %9059 = vmatprep.subr.bf16.mxu0 %v5766
      %9060 = vmatpush1.bf16.msra.mxu0 %v5765
      %9061 = vmatprep.subr.bf16.mxu0 %v5784
      %9062 = vmatpush1.bf16.msra.mxu0 %v5783
      %9063 = vmatprep.subr.bf16.mxu0 %v5802
      %9064 = vmatpush1.bf16.msra.mxu0 %v5801
      %9065 = vmatprep.subr.bf16.mxu0 %v5820
      %9066 = vmatpush1.bf16.msra.mxu0 %v5819
      %9067 = vmatprep.subr.bf16.mxu0 %v5838
      %9068 = vmatpush1.bf16.msra.mxu0 %v5837
      %9069 = vmatprep.subr.bf16.mxu0 %v5856
      %9070 = vmatpush1.bf16.msra.mxu0 %v5855
      %9071 = vmatprep.subr.bf16.mxu0 %v5874
      %9072 = vmatpush1.bf16.msra.mxu0 %v5873
      %9073 = vmatprep.mubr.bf16.mxu0 %v974
      %9074 = vmatmul.mubr.bf16.gmra.mrb[0].mxu0 %v973
      %v9075 = vpop.f32.mrb[0].mxu0
      %v9076 = vadd.f32 0.0, %v9075
      %v9077 = vpop.f32.mrb[0].mxu0
      %v9078 = vadd.f32 0.0, %v9077
      %v9079 = vpop.f32.mrb[0].mxu0
      %v9080 = vpop.f32.mrb[0].mxu0
      %9081 = vdwg.mxu0
      %9082 = vmatprep.subr.bf16.mxu0 %v5892
      %9083 = vmatpush1.bf16.msra.mxu0 %v5891
      %9084 = vmatprep.subr.bf16.mxu0 %v5910
      %9085 = vmatpush1.bf16.msra.mxu0 %v5909
      %9086 = vmatprep.subr.bf16.mxu0 %v5928
      %9087 = vmatpush1.bf16.msra.mxu0 %v5927
      %9088 = vmatprep.subr.bf16.mxu0 %v5946
      %9089 = vmatpush1.bf16.msra.mxu0 %v5945
      %9090 = vmatprep.subr.bf16.mxu0 %v5964
      %9091 = vmatpush1.bf16.msra.mxu0 %v5963
      %9092 = vmatprep.subr.bf16.mxu0 %v5982
      %9093 = vmatpush1.bf16.msra.mxu0 %v5981
      %9094 = vmatprep.subr.bf16.mxu0 %v6000
      %9095 = vmatpush1.bf16.msra.mxu0 %v5999
      %9096 = vmatprep.subr.bf16.mxu0 %v6018
      %9097 = vmatpush1.bf16.msra.mxu0 %v6017
      %9098 = vmatprep.subr.bf16.mxu0 %v6036
      %9099 = vmatpush1.bf16.msra.mxu0 %v6035
      %9100 = vmatprep.subr.bf16.mxu0 %v6054
      %9101 = vmatpush1.bf16.msra.mxu0 %v6053
      %9102 = vmatprep.subr.bf16.mxu0 %v6072
      %9103 = vmatpush1.bf16.msra.mxu0 %v6071
      %9104 = vmatprep.subr.bf16.mxu0 %v6090
      %9105 = vmatpush1.bf16.msra.mxu0 %v6089
      %9106 = vmatprep.subr.bf16.mxu0 %v6108
      %9107 = vmatpush1.bf16.msra.mxu0 %v6107
      %9108 = vmatprep.subr.bf16.mxu0 %v6126
      %9109 = vmatpush1.bf16.msra.mxu0 %v6125
      %9110 = vmatprep.subr.bf16.mxu0 %v6144
      %9111 = vmatpush1.bf16.msra.mxu0 %v6143
      %9112 = vmatprep.subr.bf16.mxu0 %v6162
      %9113 = vmatpush1.bf16.msra.mxu0 %v6161
      %9114 = vmatprep.mubr.bf16.mxu0 %v976
      %9115 = vmatmul.mubr.bf16.gmra.mrb[0].mxu0 %v975
      %v9116 = vpop.f32.mrb[0].mxu0
      %v9117 = vadd.f32 %v9076, %v9116
      %v9118 = vpop.f32.mrb[0].mxu0
      %v9119 = vadd.f32 %v9078, %v9118
      %v9120 = vpop.f32.mrb[0].mxu0
      %v9121 = vpop.f32.mrb[0].mxu0
      %9122 = vdwg.mxu0
      %9123 = vmatprep.subr.bf16.mxu0 %v6180
      %9124 = vmatpush1.bf16.msra.mxu0 %v6179
      %9125 = vmatprep.subr.bf16.mxu0 %v6198
      %9126 = vmatpush1.bf16.msra.mxu0 %v6197
      %9127 = vmatprep.subr.bf16.mxu0 %v6216
      %9128 = vmatpush1.bf16.msra.mxu0 %v6215
      %9129 = vmatprep.subr.bf16.mxu0 %v6234
      %9130 = vmatpush1.bf16.msra.mxu0 %v6233
      %9131 = vmatprep.subr.bf16.mxu0 %v6252
      %9132 = vmatpush1.bf16.msra.mxu0 %v6251
      %9133 = vmatprep.subr.bf16.mxu0 %v6270
      %9134 = vmatpush1.bf16.msra.mxu0 %v6269
      %9135 = vmatprep.subr.bf16.mxu0 %v6288
      %9136 = vmatpush1.bf16.msra.mxu0 %v6287
      %9137 = vmatprep.subr.bf16.mxu0 %v6306
      %9138 = vmatpush1.bf16.msra.mxu0 %v6305
      %9139 = vmatprep.subr.bf16.mxu0 %v6324
      %9140 = vmatpush1.bf16.msra.mxu0 %v6323
      %9141 = vmatprep.subr.bf16.mxu0 %v6342
      %9142 = vmatpush1.bf16.msra.mxu0 %v6341
      %9143 = vmatprep.subr.bf16.mxu0 %v6360
      %9144 = vmatpush1.bf16.msra.mxu0 %v6359
      %9145 = vmatprep.subr.bf16.mxu0 %v6378
      %9146 = vmatpush1.bf16.msra.mxu0 %v6377
      %9147 = vmatprep.subr.bf16.mxu0 %v6396
      %9148 = vmatpush1.bf16.msra.mxu0 %v6395
      %9149 = vmatprep.subr.bf16.mxu0 %v6414
      %9150 = vmatpush1.bf16.msra.mxu0 %v6413
      %9151 = vmatprep.subr.bf16.mxu0 %v6432
      %9152 = vmatpush1.bf16.msra.mxu0 %v6431
      %9153 = vmatprep.subr.bf16.mxu0 %v6450
      %9154 = vmatpush1.bf16.msra.mxu0 %v6449
      %9155 = vmatprep.mubr.bf16.mxu0 %v978
      %9156 = vmatmul.mubr.bf16.gmra.mrb[0].mxu0 %v977
      %v9157 = vpop.f32.mrb[0].mxu0
      %v9158 = vadd.f32 %v9117, %v9157
      %v9159 = vpop.f32.mrb[0].mxu0
      %v9160 = vadd.f32 %v9119, %v9159
      %v9161 = vpop.f32.mrb[0].mxu0
      %v9162 = vpop.f32.mrb[0].mxu0
      %9163 = vdwg.mxu0
      %9164 = vmatprep.subr.bf16.mxu0 %v6468
      %9165 = vmatpush1.bf16.msra.mxu0 %v6467
      %9166 = vmatprep.subr.bf16.mxu0 %v6486
      %9167 = vmatpush1.bf16.msra.mxu0 %v6485
      %9168 = vmatprep.subr.bf16.mxu0 %v6504
      %9169 = vmatpush1.bf16.msra.mxu0 %v6503
      %9170 = vmatprep.subr.bf16.mxu0 %v6522
      %9171 = vmatpush1.bf16.msra.mxu0 %v6521
      %9172 = vmatprep.subr.bf16.mxu0 %v6540
      %9173 = vmatpush1.bf16.msra.mxu0 %v6539
      %9174 = vmatprep.subr.bf16.mxu0 %v6558
      %9175 = vmatpush1.bf16.msra.mxu0 %v6557
      %9176 = vmatprep.subr.bf16.mxu0 %v6576
      %9177 = vmatpush1.bf16.msra.mxu0 %v6575
      %9178 = vmatprep.subr.bf16.mxu0 %v6594
      %9179 = vmatpush1.bf16.msra.mxu0 %v6593
      %9180 = vmatprep.subr.bf16.mxu0 %v6612
      %9181 = vmatpush1.bf16.msra.mxu0 %v6611
      %9182 = vmatprep.subr.bf16.mxu0 %v6630
      %9183 = vmatpush1.bf16.msra.mxu0 %v6629
      %9184 = vmatprep.subr.bf16.mxu0 %v6648
      %9185 = vmatpush1.bf16.msra.mxu0 %v6647
      %9186 = vmatprep.subr.bf16.mxu0 %v6666
      %9187 = vmatpush1.bf16.msra.mxu0 %v6665
      %9188 = vmatprep.subr.bf16.mxu0 %v6684
      %9189 = vmatpush1.bf16.msra.mxu0 %v6683
      %9190 = vmatprep.subr.bf16.mxu0 %v6702
      %9191 = vmatpush1.bf16.msra.mxu0 %v6701
      %9192 = vmatprep.subr.bf16.mxu0 %v6720
      %9193 = vmatpush1.bf16.msra.mxu0 %v6719
      %9194 = vmatprep.subr.bf16.mxu0 %v6738
      %9195 = vmatpush1.bf16.msra.mxu0 %v6737
      %9196 = vmatprep.mubr.bf16.mxu0 %v980
      %9197 = vmatmul.mubr.bf16.gmra.mrb[0].mxu0 %v979
      %v9198 = vpop.f32.mrb[0].mxu0
      %v9199 = vadd.f32 %v9158, %v9198
      %v9200 = vpop.f32.mrb[0].mxu0
      %v9201 = vadd.f32 %v9160, %v9200
      %v9202 = vpop.f32.mrb[0].mxu0
      %v9203 = vpop.f32.mrb[0].mxu0
      %9204 = vdwg.mxu0
      %9205 = vmatprep.subr.bf16.mxu0 %v5606
      %9206 = vmatpush1.bf16.msra.mxu0 %v5605
      %9207 = vmatprep.subr.bf16.mxu0 %v5624
      %9208 = vmatpush1.bf16.msra.mxu0 %v5623
      %9209 = vmatprep.subr.bf16.mxu0 %v5642
      %9210 = vmatpush1.bf16.msra.mxu0 %v5641
      %9211 = vmatprep.subr.bf16.mxu0 %v5660
      %9212 = vmatpush1.bf16.msra.mxu0 %v5659
      %9213 = vmatprep.subr.bf16.mxu0 %v5678
      %9214 = vmatpush1.bf16.msra.mxu0 %v5677
      %9215 = vmatprep.subr.bf16.mxu0 %v5696
      %9216 = vmatpush1.bf16.msra.mxu0 %v5695
      %9217 = vmatprep.subr.bf16.mxu0 %v5714
      %9218 = vmatpush1.bf16.msra.mxu0 %v5713
      %9219 = vmatprep.subr.bf16.mxu0 %v5732
      %9220 = vmatpush1.bf16.msra.mxu0 %v5731
      %9221 = vmatprep.subr.bf16.mxu0 %v5750
      %9222 = vmatpush1.bf16.msra.mxu0 %v5749
      %9223 = vmatprep.subr.bf16.mxu0 %v5768
      %9224 = vmatpush1.bf16.msra.mxu0 %v5767
      %9225 = vmatprep.subr.bf16.mxu0 %v5786
      %9226 = vmatpush1.bf16.msra.mxu0 %v5785
      %9227 = vmatprep.subr.bf16.mxu0 %v5804
      %9228 = vmatpush1.bf16.msra.mxu0 %v5803
      %9229 = vmatprep.subr.bf16.mxu0 %v5822
      %9230 = vmatpush1.bf16.msra.mxu0 %v5821
      %9231 = vmatprep.subr.bf16.mxu0 %v5840
      %9232 = vmatpush1.bf16.msra.mxu0 %v5839
      %9233 = vmatprep.subr.bf16.mxu0 %v5858
      %9234 = vmatpush1.bf16.msra.mxu0 %v5857
      %9235 = vmatprep.subr.bf16.mxu0 %v5876
      %9236 = vmatpush1.bf16.msra.mxu0 %v5875
      %9237 = vmatprep.mubr.bf16.mxu0 %v974
      %9238 = vmatmul.mubr.bf16.gmra.mrb[0].mxu0 %v973
      %v9239 = vpop.f32.mrb[0].mxu0
      %v9240 = vadd.f32 0.0, %v9239
      %v9241 = vpop.f32.mrb[0].mxu0
      %v9242 = vadd.f32 0.0, %v9241
      %v9243 = vpop.f32.mrb[0].mxu0
      %v9244 = vpop.f32.mrb[0].mxu0
      %9245 = vdwg.mxu0
      %9246 = vmatprep.subr.bf16.mxu0 %v5894
      %9247 = vmatpush1.bf16.msra.mxu0 %v5893
      %9248 = vmatprep.subr.bf16.mxu0 %v5912
      %9249 = vmatpush1.bf16.msra.mxu0 %v5911
      %9250 = vmatprep.subr.bf16.mxu0 %v5930
      %9251 = vmatpush1.bf16.msra.mxu0 %v5929
      %9252 = vmatprep.subr.bf16.mxu0 %v5948
      %9253 = vmatpush1.bf16.msra.mxu0 %v5947
      %9254 = vmatprep.subr.bf16.mxu0 %v5966
      %9255 = vmatpush1.bf16.msra.mxu0 %v5965
      %9256 = vmatprep.subr.bf16.mxu0 %v5984
      %9257 = vmatpush1.bf16.msra.mxu0 %v5983
      %9258 = vmatprep.subr.bf16.mxu0 %v6002
      %9259 = vmatpush1.bf16.msra.mxu0 %v6001
      %9260 = vmatprep.subr.bf16.mxu0 %v6020
      %9261 = vmatpush1.bf16.msra.mxu0 %v6019
      %9262 = vmatprep.subr.bf16.mxu0 %v6038
      %9263 = vmatpush1.bf16.msra.mxu0 %v6037
      %9264 = vmatprep.subr.bf16.mxu0 %v6056
      %9265 = vmatpush1.bf16.msra.mxu0 %v6055
      %9266 = vmatprep.subr.bf16.mxu0 %v6074
      %9267 = vmatpush1.bf16.msra.mxu0 %v6073
      %9268 = vmatprep.subr.bf16.mxu0 %v6092
      %9269 = vmatpush1.bf16.msra.mxu0 %v6091
      %9270 = vmatprep.subr.bf16.mxu0 %v6110
      %9271 = vmatpush1.bf16.msra.mxu0 %v6109
      %9272 = vmatprep.subr.bf16.mxu0 %v6128
      %9273 = vmatpush1.bf16.msra.mxu0 %v6127
      %9274 = vmatprep.subr.bf16.mxu0 %v6146
      %9275 = vmatpush1.bf16.msra.mxu0 %v6145
      %9276 = vmatprep.subr.bf16.mxu0 %v6164
      %9277 = vmatpush1.bf16.msra.mxu0 %v6163
      %9278 = vmatprep.mubr.bf16.mxu0 %v976
      %9279 = vmatmul.mubr.bf16.gmra.mrb[0].mxu0 %v975
      %v9280 = vpop.f32.mrb[0].mxu0
      %v9281 = vadd.f32 %v9240, %v9280
      %v9282 = vpop.f32.mrb[0].mxu0
      %v9283 = vadd.f32 %v9242, %v9282
      %v9284 = vpop.f32.mrb[0].mxu0
      %v9285 = vpop.f32.mrb[0].mxu0
      %9286 = vdwg.mxu0
      %9287 = vmatprep.subr.bf16.mxu0 %v6182
      %9288 = vmatpush1.bf16.msra.mxu0 %v6181
      %9289 = vmatprep.subr.bf16.mxu0 %v6200
      %9290 = vmatpush1.bf16.msra.mxu0 %v6199
      %9291 = vmatprep.subr.bf16.mxu0 %v6218
      %9292 = vmatpush1.bf16.msra.mxu0 %v6217
      %9293 = vmatprep.subr.bf16.mxu0 %v6236
      %9294 = vmatpush1.bf16.msra.mxu0 %v6235
      %9295 = vmatprep.subr.bf16.mxu0 %v6254
      %9296 = vmatpush1.bf16.msra.mxu0 %v6253
      %9297 = vmatprep.subr.bf16.mxu0 %v6272
      %9298 = vmatpush1.bf16.msra.mxu0 %v6271
      %9299 = vmatprep.subr.bf16.mxu0 %v6290
      %9300 = vmatpush1.bf16.msra.mxu0 %v6289
      %9301 = vmatprep.subr.bf16.mxu0 %v6308
      %9302 = vmatpush1.bf16.msra.mxu0 %v6307
      %9303 = vmatprep.subr.bf16.mxu0 %v6326
      %9304 = vmatpush1.bf16.msra.mxu0 %v6325
      %9305 = vmatprep.subr.bf16.mxu0 %v6344
      %9306 = vmatpush1.bf16.msra.mxu0 %v6343
      %9307 = vmatprep.subr.bf16.mxu0 %v6362
      %9308 = vmatpush1.bf16.msra.mxu0 %v6361
      %9309 = vmatprep.subr.bf16.mxu0 %v6380
      %9310 = vmatpush1.bf16.msra.mxu0 %v6379
      %9311 = vmatprep.subr.bf16.mxu0 %v6398
      %9312 = vmatpush1.bf16.msra.mxu0 %v6397
      %9313 = vmatprep.subr.bf16.mxu0 %v6416
      %9314 = vmatpush1.bf16.msra.mxu0 %v6415
      %9315 = vmatprep.subr.bf16.mxu0 %v6434
      %9316 = vmatpush1.bf16.msra.mxu0 %v6433
      %9317 = vmatprep.subr.bf16.mxu0 %v6452
      %9318 = vmatpush1.bf16.msra.mxu0 %v6451
      %9319 = vmatprep.mubr.bf16.mxu0 %v978
      %9320 = vmatmul.mubr.bf16.gmra.mrb[0].mxu0 %v977
      %v9321 = vpop.f32.mrb[0].mxu0
      %v9322 = vadd.f32 %v9281, %v9321
      %v9323 = vpop.f32.mrb[0].mxu0
      %v9324 = vadd.f32 %v9283, %v9323
      %v9325 = vpop.f32.mrb[0].mxu0
      %v9326 = vpop.f32.mrb[0].mxu0
      %9327 = vdwg.mxu0
      %9328 = vmatprep.subr.bf16.mxu0 %v6470
      %9329 = vmatpush1.bf16.msra.mxu0 %v6469
      %9330 = vmatprep.subr.bf16.mxu0 %v6488
      %9331 = vmatpush1.bf16.msra.mxu0 %v6487
      %9332 = vmatprep.subr.bf16.mxu0 %v6506
      %9333 = vmatpush1.bf16.msra.mxu0 %v6505
      %9334 = vmatprep.subr.bf16.mxu0 %v6524
      %9335 = vmatpush1.bf16.msra.mxu0 %v6523
      %9336 = vmatprep.subr.bf16.mxu0 %v6542
      %9337 = vmatpush1.bf16.msra.mxu0 %v6541
      %9338 = vmatprep.subr.bf16.mxu0 %v6560
      %9339 = vmatpush1.bf16.msra.mxu0 %v6559
      %9340 = vmatprep.subr.bf16.mxu0 %v6578
      %9341 = vmatpush1.bf16.msra.mxu0 %v6577
      %9342 = vmatprep.subr.bf16.mxu0 %v6596
      %9343 = vmatpush1.bf16.msra.mxu0 %v6595
      %9344 = vmatprep.subr.bf16.mxu0 %v6614
      %9345 = vmatpush1.bf16.msra.mxu0 %v6613
      %9346 = vmatprep.subr.bf16.mxu0 %v6632
      %9347 = vmatpush1.bf16.msra.mxu0 %v6631
      %9348 = vmatprep.subr.bf16.mxu0 %v6650
      %9349 = vmatpush1.bf16.msra.mxu0 %v6649
      %9350 = vmatprep.subr.bf16.mxu0 %v6668
      %9351 = vmatpush1.bf16.msra.mxu0 %v6667
      %9352 = vmatprep.subr.bf16.mxu0 %v6686
      %9353 = vmatpush1.bf16.msra.mxu0 %v6685
      %9354 = vmatprep.subr.bf16.mxu0 %v6704
      %9355 = vmatpush1.bf16.msra.mxu0 %v6703
      %9356 = vmatprep.subr.bf16.mxu0 %v6722
      %9357 = vmatpush1.bf16.msra.mxu0 %v6721
      %9358 = vmatprep.subr.bf16.mxu0 %v6740
      %9359 = vmatpush1.bf16.msra.mxu0 %v6739
      %9360 = vmatprep.mubr.bf16.mxu0 %v980
      %9361 = vmatmul.mubr.bf16.gmra.mrb[0].mxu0 %v979
      %v9362 = vpop.f32.mrb[0].mxu0
      %v9363 = vadd.f32 %v9322, %v9362
      %v9364 = vpop.f32.mrb[0].mxu0
      %v9365 = vadd.f32 %v9324, %v9364
      %v9366 = vpop.f32.mrb[0].mxu0
      %v9367 = vpop.f32.mrb[0].mxu0
      %9368 = vdwg.mxu0
      %v9371 = vrot.slane %v8215, 5
      %v9372 = vrot.slane %v8217, 5
      %v9377 = vrot.slane %v8379, 2
      %v9378 = vrot.slane %v8381, 2
      %v9383 = vrot.slane %v8543, 7
      %v9384 = vrot.slane %v8545, 7
      %v9389 = vrot.slane %v8707, 4
      %v9390 = vrot.slane %v8709, 4
      %v9395 = vrot.slane %v8871, 1
      %v9396 = vrot.slane %v8873, 1
      %v9401 = vrot.slane %v9035, 6
      %v9402 = vrot.slane %v9037, 6
      %v9407 = vrot.slane %v9199, 3
      %v9408 = vrot.slane %v9201, 3
      %vm9411 = vcmask 1042432
      %v9412 = vsel %vm9411, %v8051, %v9371
      %v9413 = vsel %vm9411, %v8053, %v9372
      %vm9414 = vcmask 1045504
      %v9415 = vsel %vm9414, %v9412, %v9377
      %v9416 = vsel %vm9414, %v9413, %v9378
      %vm9417 = vcmask 1040384
      %v9418 = vsel %vm9417, %v9377, %v9383
      %v9419 = vsel %vm9417, %v9378, %v9384
      %vm9420 = vcmask 1043456
      %v9421 = vsel %vm9420, %v9418, %v9389
      %v9422 = vsel %vm9420, %v9419, %v9390
      %vm9423 = vcmask 1046528
      %v9424 = vsel %vm9423, %v9421, %v9395
      %v9425 = vsel %vm9423, %v9422, %v9396
      %vm9426 = vcmask 1041408
      %v9427 = vsel %vm9426, %v9395, %v9401
      %v9428 = vsel %vm9426, %v9396, %v9402
      %vm9429 = vcmask 1044480
      %v9430 = vsel %vm9429, %v9427, %v9407
      %v9431 = vsel %vm9429, %v9428, %v9408
      %v9432 = vld [vmem:[%s5] sm:$0xf]
      %v9433 = vpack.c.bf16 %v9424, %v9415
      %v9434 = vpack.c.bf16 %v9425, %v9416
      %v9435 = vpack.c.bf16 %v9363, %v9430
      %v9436 = vpack.c.bf16 %v9365, %v9431
      %v9437 = vld [vmem:[%s7] sm:$0xff]
      %9439 = vset.pattern.permute.xlu0 0
      %9440 = vperm.xlu0 %9439, %v9437
      %v9441 = vpop.permute.xlu0 %9440
      %vm9443 = vcmask 220160
      %v9445 = vsel %vm9443, %v9432, 0
      %v9447 = vsel %vm9429, 4294967295, 65535
      %v9448 = vsel %vm9414, %v9447, 0
      %v9450 = vand.u32 %v9435, %v9448
      %v9453 = vand.u32 %v9436, %v9448
      %9455 = vmatprep.subr.bf16.mxu0 %v9434
      %9456 = vmatpush1.bf16.msra.mxu0 %v9433
      %9457 = vmatprep.subr.bf16.mxu0 %v9453
      %9458 = vmatpush1.bf16.msra.mxu0 %v9450
      %9459 = vmatprep.subr.bf16.mxu0 0
      %9460 = vmatpush1.bf16.msra.mxu0 0
      %9461 = vmatprep.subr.bf16.mxu0 0
      %9462 = vmatpush1.bf16.msra.mxu0 0
      %9463 = vmatprep.subr.bf16.mxu0 0
      %9464 = vmatpush1.bf16.msra.mxu0 0
      %9465 = vmatprep.subr.bf16.mxu0 0
      %9466 = vmatpush1.bf16.msra.mxu0 0
      %9467 = vmatprep.subr.bf16.mxu0 0
      %9468 = vmatpush1.bf16.msra.mxu0 0
      %9469 = vmatprep.subr.bf16.mxu0 0
      %9470 = vmatpush1.bf16.msra.mxu0 0
      %9471 = vmatprep.subr.bf16.mxu0 0
      %9472 = vmatpush1.bf16.msra.mxu0 0
      %9473 = vmatprep.subr.bf16.mxu0 0
      %9474 = vmatpush1.bf16.msra.mxu0 0
      %9475 = vmatprep.subr.bf16.mxu0 0
      %9476 = vmatpush1.bf16.msra.mxu0 0
      %9477 = vmatprep.subr.bf16.mxu0 0
      %9478 = vmatpush1.bf16.msra.mxu0 0
      %9479 = vmatprep.subr.bf16.mxu0 0
      %9480 = vmatpush1.bf16.msra.mxu0 0
      %9481 = vmatprep.subr.bf16.mxu0 0
      %9482 = vmatpush1.bf16.msra.mxu0 0
      %9483 = vmatprep.subr.bf16.mxu0 0
      %9484 = vmatpush1.bf16.msra.mxu0 0
      %9485 = vmatprep.subr.bf16.mxu0 0
      %9486 = vmatpush1.bf16.msra.mxu0 0
      %9487 = vmatprep.mubr.bf16.mxu0 0
      %9488 = vmatmul.mubr.bf16.gmra.mrb[0].mxu0 %v9445
      %v9489 = vpop.f32.mrb[0].mxu0
      %v9490 = vadd.f32 %v9441, %v9489
      %v9491 = vpop.f32.mrb[0].mxu0
      %v9492 = vadd.f32 %v9441, %v9491
      %v9493 = vpop.f32.mrb[0].mxu0
      %v9494 = vpop.f32.mrb[0].mxu0
      %9495 = vdwg.mxu0
      %v9496 = vmax.f32 %v9490, 0.0
      %v9497 = vmax.f32 %v9492, 0.0
      %9498 = vst [vmem:[%s945] sm:$0xff] %v9496
      %9499 = vst [vmem:[%s945 + $0x8] sm:$0xff] %v9497
      %v9500 = vpack.c.bf16 %v9496, %v9496
      %v9501 = vpack.c.bf16 %v9497, %v9497
      %v9502 = vld [vmem:[%s9] sm:$0xff]
      %v9503 = vld [vmem:[%s9 + $0x8] sm:$0xff]
      %v9504 = vld [vmem:[%s9 + $0x10] sm:$0xf]
      %v9505 = vld [vmem:[%s9 + $0x14] sm:$0xff]
      %v9506 = vld [vmem:[%s9 + $0x1c] sm:$0xff]
      %v9507 = vld [vmem:[%s9 + $0x24] sm:$0xf]
      %v9508 = vld [vmem:[%s9 + $0x28] sm:$0xff]
      %v9509 = vld [vmem:[%s9 + $0x30] sm:$0xff]
      %v9510 = vld [vmem:[%s9 + $0x38] sm:$0xf]
      %v9511 = vld [vmem:[%s9 + $0x3c] sm:$0xff]
      %v9512 = vld [vmem:[%s9 + $0x44] sm:$0xff]
      %v9513 = vld [vmem:[%s9 + $0x4c] sm:$0xf]
      %v9514 = vld [vmem:[%s9 + $0x50] sm:$0xff]
      %v9515 = vld [vmem:[%s9 + $0x58] sm:$0xff]
      %v9516 = vld [vmem:[%s9 + $0x60] sm:$0xf]
      %v9517 = vld [vmem:[%s9 + $0x64] sm:$0xff]
      %v9518 = vld [vmem:[%s9 + $0x6c] sm:$0xff]
      %v9519 = vld [vmem:[%s9 + $0x74] sm:$0xf]
      %v9520 = vld [vmem:[%s9 + $0x78] sm:$0xff]
      %v9521 = vld [vmem:[%s9 + $0x80] sm:$0xff]
      %v9522 = vld [vmem:[%s9 + $0x88] sm:$0xf]
      %v9523 = vld [vmem:[%s9 + $0x8c] sm:$0xff]
      %v9524 = vld [vmem:[%s9 + $0x94] sm:$0xff]
      %v9525 = vld [vmem:[%s9 + $0x9c] sm:$0xf]
      %v9526 = vld [vmem:[%s9 + $0xa0] sm:$0xff]
      %v9527 = vld [vmem:[%s9 + $0xa8] sm:$0xff]
      %v9528 = vld [vmem:[%s9 + $0xb0] sm:$0xf]
      %v9529 = vld [vmem:[%s9 + $0xb4] sm:$0xff]
      %v9530 = vld [vmem:[%s9 + $0xbc] sm:$0xff]
      %v9531 = vld [vmem:[%s9 + $0xc4] sm:$0xf]
      %v9532 = vld [vmem:[%s9 + $0xc8] sm:$0xff]
      %v9533 = vld [vmem:[%s9 + $0xd0] sm:$0xff]
      %v9534 = vld [vmem:[%s9 + $0xd8] sm:$0xf]
      %v9535 = vld [vmem:[%s9 + $0xdc] sm:$0xff]
      %v9536 = vld [vmem:[%s9 + $0xe4] sm:$0xff]
      %v9537 = vld [vmem:[%s9 + $0xec] sm:$0xf]
      %v9538 = vld [vmem:[%s9 + $0xf0] sm:$0xff]
      %v9539 = vld [vmem:[%s9 + $0xf8] sm:$0xff]
      %v9540 = vld [vmem:[%s9 + $0x100] sm:$0xf]
      %v9541 = vld [vmem:[%s9 + $0x104] sm:$0xff]
      %v9542 = vld [vmem:[%s9 + $0x10c] sm:$0xff]
      %v9543 = vld [vmem:[%s9 + $0x114] sm:$0xf]
      %v9544 = vld [vmem:[%s9 + $0x118] sm:$0xff]
      %v9545 = vld [vmem:[%s9 + $0x120] sm:$0xff]
      %v9546 = vld [vmem:[%s9 + $0x128] sm:$0xf]
      %v9547 = vld [vmem:[%s9 + $0x12c] sm:$0xff]
      %v9548 = vld [vmem:[%s9 + $0x134] sm:$0xff]
      %v9549 = vld [vmem:[%s9 + $0x13c] sm:$0xf]
      %v9550 = vld [vmem:[%s9 + $0x140] sm:$0xff]
      %v9551 = vld [vmem:[%s9 + $0x148] sm:$0xff]
      %v9552 = vld [vmem:[%s9 + $0x150] sm:$0xf]
      %v9553 = vld [vmem:[%s9 + $0x154] sm:$0xff]
      %v9554 = vld [vmem:[%s9 + $0x15c] sm:$0xff]
      %v9555 = vld [vmem:[%s9 + $0x164] sm:$0xf]
      %v9556 = vld [vmem:[%s9 + $0x168] sm:$0xff]
      %v9557 = vld [vmem:[%s9 + $0x170] sm:$0xff]
      %v9558 = vld [vmem:[%s9 + $0x178] sm:$0xf]
      %v9559 = vld [vmem:[%s9 + $0x17c] sm:$0xff]
      %v9560 = vld [vmem:[%s9 + $0x184] sm:$0xff]
      %v9561 = vld [vmem:[%s9 + $0x18c] sm:$0xf]
      %v9562 = vld [vmem:[%s9 + $0x190] sm:$0xff]
      %v9563 = vld [vmem:[%s9 + $0x198] sm:$0xff]
      %v9564 = vld [vmem:[%s9 + $0x1a0] sm:$0xf]
      %v9565 = vld [vmem:[%s9 + $0x1a4] sm:$0xff]
      %v9566 = vld [vmem:[%s9 + $0x1ac] sm:$0xff]
      %v9567 = vld [vmem:[%s9 + $0x1b4] sm:$0xf]
      %v9568 = vld [vmem:[%s9 + $0x1b8] sm:$0xff]
      %v9569 = vld [vmem:[%s9 + $0x1c0] sm:$0xff]
      %v9570 = vld [vmem:[%s9 + $0x1c8] sm:$0xf]
      %v9571 = vld [vmem:[%s9 + $0x1cc] sm:$0xff]
      %v9572 = vld [vmem:[%s9 + $0x1d4] sm:$0xff]
      %v9573 = vld [vmem:[%s9 + $0x1dc] sm:$0xf]
      %v9574 = vld [vmem:[%s9 + $0x1e0] sm:$0xff]
      %v9575 = vld [vmem:[%s9 + $0x1e8] sm:$0xff]
      %v9576 = vld [vmem:[%s9 + $0x1f0] sm:$0xf]
      %v9577 = vld [vmem:[%s9 + $0x1f4] sm:$0xff]
      %v9578 = vld [vmem:[%s9 + $0x1fc] sm:$0xff]
      %v9579 = vld [vmem:[%s9 + $0x204] sm:$0xf]
      %v9580 = vld [vmem:[%s9 + $0x208] sm:$0xff]
      %v9581 = vld [vmem:[%s9 + $0x210] sm:$0xff]
      %v9582 = vld [vmem:[%s9 + $0x218] sm:$0xf]
      %v9583 = vld [vmem:[%s9 + $0x21c] sm:$0xff]
      %v9584 = vld [vmem:[%s9 + $0x224] sm:$0xff]
      %v9585 = vld [vmem:[%s9 + $0x22c] sm:$0xf]
      %v9586 = vld [vmem:[%s9 + $0x230] sm:$0xff]
      %v9587 = vld [vmem:[%s9 + $0x238] sm:$0xff]
      %v9588 = vld [vmem:[%s9 + $0x240] sm:$0xf]
      %v9589 = vld [vmem:[%s9 + $0x244] sm:$0xff]
      %v9590 = vld [vmem:[%s9 + $0x24c] sm:$0xff]
      %v9591 = vld [vmem:[%s9 + $0x254] sm:$0xf]
      %v9592 = vld [vmem:[%s9 + $0x258] sm:$0xff]
      %v9593 = vld [vmem:[%s9 + $0x260] sm:$0xff]
      %v9594 = vld [vmem:[%s9 + $0x268] sm:$0xf]
      %v9595 = vld [vmem:[%s9 + $0x26c] sm:$0xff]
      %v9596 = vld [vmem:[%s9 + $0x274] sm:$0xff]
      %v9597 = vld [vmem:[%s9 + $0x27c] sm:$0xf]
      %v9694 = vunpack.c.l.b16 %v9502
      %v9695 = vunpack.c.h.b16 %v9502
      %v9696 = vunpack.c.l.b16 %v9503
      %v9697 = vunpack.c.h.b16 %v9503
      %v9698 = vunpack.c.l.b16 %v9504
      %v9699 = vunpack.c.l.b16 %v9505
      %v9700 = vunpack.c.h.b16 %v9505
      %v9701 = vunpack.c.l.b16 %v9506
      %v9702 = vunpack.c.h.b16 %v9506
      %v9703 = vunpack.c.l.b16 %v9507
      %v9704 = vunpack.c.l.b16 %v9508
      %v9705 = vunpack.c.h.b16 %v9508
      %v9706 = vunpack.c.l.b16 %v9509
      %v9707 = vunpack.c.h.b16 %v9509
      %v9708 = vunpack.c.l.b16 %v9510
      %v9709 = vunpack.c.l.b16 %v9511
      %v9710 = vunpack.c.h.b16 %v9511
      %v9711 = vunpack.c.l.b16 %v9512
      %v9712 = vunpack.c.h.b16 %v9512
      %v9713 = vunpack.c.l.b16 %v9513
      %v9714 = vunpack.c.l.b16 %v9514
      %v9715 = vunpack.c.h.b16 %v9514
      %v9716 = vunpack.c.l.b16 %v9515
      %v9717 = vunpack.c.h.b16 %v9515
      %v9718 = vunpack.c.l.b16 %v9516
      %v9719 = vunpack.c.l.b16 %v9517
      %v9720 = vunpack.c.h.b16 %v9517
      %v9721 = vunpack.c.l.b16 %v9518
      %v9722 = vunpack.c.h.b16 %v9518
      %v9723 = vunpack.c.l.b16 %v9519
      %v9724 = vunpack.c.l.b16 %v9520
      %v9725 = vunpack.c.h.b16 %v9520
      %v9726 = vunpack.c.l.b16 %v9521
      %v9727 = vunpack.c.h.b16 %v9521
      %v9728 = vunpack.c.l.b16 %v9522
      %v9729 = vunpack.c.l.b16 %v9523
      %v9730 = vunpack.c.h.b16 %v9523
      %v9731 = vunpack.c.l.b16 %v9524
      %v9732 = vunpack.c.h.b16 %v9524
      %v9733 = vunpack.c.l.b16 %v9525
      %v9734 = vunpack.c.l.b16 %v9526
      %v9735 = vunpack.c.h.b16 %v9526
      %v9736 = vunpack.c.l.b16 %v9527
      %v9737 = vunpack.c.h.b16 %v9527
      %v9738 = vunpack.c.l.b16 %v9528
      %v9739 = vunpack.c.l.b16 %v9529
      %v9740 = vunpack.c.h.b16 %v9529
      %v9741 = vunpack.c.l.b16 %v9530
      %v9742 = vunpack.c.h.b16 %v9530
      %v9743 = vunpack.c.l.b16 %v9531
      %v9744 = vunpack.c.l.b16 %v9532
      %v9745 = vunpack.c.h.b16 %v9532
      %v9746 = vunpack.c.l.b16 %v9533
      %v9747 = vunpack.c.h.b16 %v9533
      %v9748 = vunpack.c.l.b16 %v9534
      %v9749 = vunpack.c.l.b16 %v9535
      %v9750 = vunpack.c.h.b16 %v9535
      %v9751 = vunpack.c.l.b16 %v9536
      %v9752 = vunpack.c.h.b16 %v9536
      %v9753 = vunpack.c.l.b16 %v9537
      %v9754 = vunpack.c.l.b16 %v9538
      %v9755 = vunpack.c.h.b16 %v9538
      %v9756 = vunpack.c.l.b16 %v9539
      %v9757 = vunpack.c.h.b16 %v9539
      %v9758 = vunpack.c.l.b16 %v9540
      %v9759 = vunpack.c.l.b16 %v9541
      %v9760 = vunpack.c.h.b16 %v9541
      %v9761 = vunpack.c.l.b16 %v9542
      %v9762 = vunpack.c.h.b16 %v9542
      %v9763 = vunpack.c.l.b16 %v9543
      %v9764 = vunpack.c.l.b16 %v9544
      %v9765 = vunpack.c.h.b16 %v9544
      %v9766 = vunpack.c.l.b16 %v9545
      %v9767 = vunpack.c.h.b16 %v9545
      %v9768 = vunpack.c.l.b16 %v9546
      %v9769 = vunpack.c.l.b16 %v9547
      %v9770 = vunpack.c.h.b16 %v9547
      %v9771 = vunpack.c.l.b16 %v9548
      %v9772 = vunpack.c.h.b16 %v9548
      %v9773 = vunpack.c.l.b16 %v9549
      %v9774 = vunpack.c.l.b16 %v9550
      %v9775 = vunpack.c.h.b16 %v9550
      %v9776 = vunpack.c.l.b16 %v9551
      %v9777 = vunpack.c.h.b16 %v9551
      %v9778 = vunpack.c.l.b16 %v9552
      %v9779 = vunpack.c.l.b16 %v9553
      %v9780 = vunpack.c.h.b16 %v9553
      %v9781 = vunpack.c.l.b16 %v9554
      %v9782 = vunpack.c.h.b16 %v9554
      %v9783 = vunpack.c.l.b16 %v9555
      %v9784 = vunpack.c.l.b16 %v9556
      %v9785 = vunpack.c.h.b16 %v9556
      %v9786 = vunpack.c.l.b16 %v9557
      %v9787 = vunpack.c.h.b16 %v9557
      %v9788 = vunpack.c.l.b16 %v9558
      %v9789 = vunpack.c.l.b16 %v9559
      %v9790 = vunpack.c.h.b16 %v9559
      %v9791 = vunpack.c.l.b16 %v9560
      %v9792 = vunpack.c.h.b16 %v9560
      %v9793 = vunpack.c.l.b16 %v9561
      %v9794 = vunpack.c.l.b16 %v9562
      %v9795 = vunpack.c.h.b16 %v9562
      %v9796 = vunpack.c.l.b16 %v9563
      %v9797 = vunpack.c.h.b16 %v9563
      %v9798 = vunpack.c.l.b16 %v9564
      %v9799 = vunpack.c.l.b16 %v9565
      %v9800 = vunpack.c.h.b16 %v9565
      %v9801 = vunpack.c.l.b16 %v9566
      %v9802 = vunpack.c.h.b16 %v9566
      %v9803 = vunpack.c.l.b16 %v9567
      %v9804 = vunpack.c.l.b16 %v9568
      %v9805 = vunpack.c.h.b16 %v9568
      %v9806 = vunpack.c.l.b16 %v9569
      %v9807 = vunpack.c.h.b16 %v9569
      %v9808 = vunpack.c.l.b16 %v9570
      %v9809 = vunpack.c.l.b16 %v9571
      %v9810 = vunpack.c.h.b16 %v9571
      %v9811 = vunpack.c.l.b16 %v9572
      %v9812 = vunpack.c.h.b16 %v9572
      %v9813 = vunpack.c.l.b16 %v9573
      %v9814 = vunpack.c.l.b16 %v9574
      %v9815 = vunpack.c.h.b16 %v9574
      %v9816 = vunpack.c.l.b16 %v9575
      %v9817 = vunpack.c.h.b16 %v9575
      %v9818 = vunpack.c.l.b16 %v9576
      %v9819 = vunpack.c.l.b16 %v9577
      %v9820 = vunpack.c.h.b16 %v9577
      %v9821 = vunpack.c.l.b16 %v9578
      %v9822 = vunpack.c.h.b16 %v9578
      %v9823 = vunpack.c.l.b16 %v9579
      %v9824 = vunpack.c.l.b16 %v9580
      %v9825 = vunpack.c.h.b16 %v9580
      %v9826 = vunpack.c.l.b16 %v9581
      %v9827 = vunpack.c.h.b16 %v9581
      %v9828 = vunpack.c.l.b16 %v9582
      %v9829 = vunpack.c.l.b16 %v9583
      %v9830 = vunpack.c.h.b16 %v9583
      %v9831 = vunpack.c.l.b16 %v9584
      %v9832 = vunpack.c.h.b16 %v9584
      %v9833 = vunpack.c.l.b16 %v9585
      %v9834 = vunpack.c.l.b16 %v9586
      %v9835 = vunpack.c.h.b16 %v9586
      %v9836 = vunpack.c.l.b16 %v9587
      %v9837 = vunpack.c.h.b16 %v9587
      %v9838 = vunpack.c.l.b16 %v9588
      %v9839 = vunpack.c.l.b16 %v9589
      %v9840 = vunpack.c.h.b16 %v9589
      %v9841 = vunpack.c.l.b16 %v9590
      %v9842 = vunpack.c.h.b16 %v9590
      %v9843 = vunpack.c.l.b16 %v9591
      %v9844 = vunpack.c.l.b16 %v9592
      %v9845 = vunpack.c.h.b16 %v9592
      %v9846 = vunpack.c.l.b16 %v9593
      %v9847 = vunpack.c.h.b16 %v9593
      %v9848 = vunpack.c.l.b16 %v9594
      %v9849 = vunpack.c.l.b16 %v9595
      %v9850 = vunpack.c.h.b16 %v9595
      %v9851 = vunpack.c.l.b16 %v9596
      %v9852 = vunpack.c.h.b16 %v9596
      %v9853 = vunpack.c.l.b16 %v9597
      %v9854 = vpack.c.b16 %v9699, %v9694
      %v9855 = vpack.c.b16 %v9700, %v9695
      %v9856 = vpack.c.b16 %v9701, %v9696
      %v9857 = vpack.c.b16 %v9702, %v9697
      %v9858 = vpack.c.b16 %v9703, %v9698
      %v9859 = vpack.c.b16 %v9709, %v9704
      %v9860 = vpack.c.b16 %v9710, %v9705
      %v9861 = vpack.c.b16 %v9711, %v9706
      %v9862 = vpack.c.b16 %v9712, %v9707
      %v9863 = vpack.c.b16 %v9713, %v9708
      %v9864 = vpack.c.b16 %v9719, %v9714
      %v9865 = vpack.c.b16 %v9720, %v9715
      %v9866 = vpack.c.b16 %v9721, %v9716
      %v9867 = vpack.c.b16 %v9722, %v9717
      %v9868 = vpack.c.b16 %v9723, %v9718
      %v9869 = vpack.c.b16 %v9729, %v9724
      %v9870 = vpack.c.b16 %v9730, %v9725
      %v9871 = vpack.c.b16 %v9731, %v9726
      %v9872 = vpack.c.b16 %v9732, %v9727
      %v9873 = vpack.c.b16 %v9733, %v9728
      %v9874 = vpack.c.b16 %v9739, %v9734
      %v9875 = vpack.c.b16 %v9740, %v9735
      %v9876 = vpack.c.b16 %v9741, %v9736
      %v9877 = vpack.c.b16 %v9742, %v9737
      %v9878 = vpack.c.b16 %v9743, %v9738
      %v9879 = vpack.c.b16 %v9749, %v9744
      %v9880 = vpack.c.b16 %v9750, %v9745
      %v9881 = vpack.c.b16 %v9751, %v9746
      %v9882 = vpack.c.b16 %v9752, %v9747
      %v9883 = vpack.c.b16 %v9753, %v9748
      %v9884 = vpack.c.b16 %v9759, %v9754
      %v9885 = vpack.c.b16 %v9760, %v9755
      %v9886 = vpack.c.b16 %v9761, %v9756
      %v9887 = vpack.c.b16 %v9762, %v9757
      %v9888 = vpack.c.b16 %v9763, %v9758
      %v9889 = vpack.c.b16 %v9769, %v9764
      %v9890 = vpack.c.b16 %v9770, %v9765
      %v9891 = vpack.c.b16 %v9771, %v9766
      %v9892 = vpack.c.b16 %v9772, %v9767
      %v9893 = vpack.c.b16 %v9773, %v9768
      %v9894 = vpack.c.b16 %v9779, %v9774
      %v9895 = vpack.c.b16 %v9780, %v9775
      %v9896 = vpack.c.b16 %v9781, %v9776
      %v9897 = vpack.c.b16 %v9782, %v9777
      %v9898 = vpack.c.b16 %v9783, %v9778
      %v9899 = vpack.c.b16 %v9789, %v9784
      %v9900 = vpack.c.b16 %v9790, %v9785
      %v9901 = vpack.c.b16 %v9791, %v9786
      %v9902 = vpack.c.b16 %v9792, %v9787
      %v9903 = vpack.c.b16 %v9793, %v9788
      %v9904 = vpack.c.b16 %v9799, %v9794
      %v9905 = vpack.c.b16 %v9800, %v9795
      %v9906 = vpack.c.b16 %v9801, %v9796
      %v9907 = vpack.c.b16 %v9802, %v9797
      %v9908 = vpack.c.b16 %v9803, %v9798
      %v9909 = vpack.c.b16 %v9809, %v9804
      %v9910 = vpack.c.b16 %v9810, %v9805
      %v9911 = vpack.c.b16 %v9811, %v9806
      %v9912 = vpack.c.b16 %v9812, %v9807
      %v9913 = vpack.c.b16 %v9813, %v9808
      %v9914 = vpack.c.b16 %v9819, %v9814
      %v9915 = vpack.c.b16 %v9820, %v9815
      %v9916 = vpack.c.b16 %v9821, %v9816
      %v9917 = vpack.c.b16 %v9822, %v9817
      %v9918 = vpack.c.b16 %v9823, %v9818
      %v9919 = vpack.c.b16 %v9829, %v9824
      %v9920 = vpack.c.b16 %v9830, %v9825
      %v9921 = vpack.c.b16 %v9831, %v9826
      %v9922 = vpack.c.b16 %v9832, %v9827
      %v9923 = vpack.c.b16 %v9833, %v9828
      %v9924 = vpack.c.b16 %v9839, %v9834
      %v9925 = vpack.c.b16 %v9840, %v9835
      %v9926 = vpack.c.b16 %v9841, %v9836
      %v9927 = vpack.c.b16 %v9842, %v9837
      %v9928 = vpack.c.b16 %v9843, %v9838
      %v9929 = vpack.c.b16 %v9849, %v9844
      %v9930 = vpack.c.b16 %v9850, %v9845
      %v9931 = vpack.c.b16 %v9851, %v9846
      %v9932 = vpack.c.b16 %v9852, %v9847
      %v9933 = vpack.c.b16 %v9853, %v9848
      %10014 = vmatprep.subr.bf16.mxu0 %v9855
      %10015 = vmatpush1.bf16.msra.mxu0 %v9854
      %10016 = vmatprep.subr.bf16.mxu0 %v9860
      %10017 = vmatpush1.bf16.msra.mxu0 %v9859
      %10018 = vmatprep.subr.bf16.mxu0 %v9865
      %10019 = vmatpush1.bf16.msra.mxu0 %v9864
      %10020 = vmatprep.subr.bf16.mxu0 %v9870
      %10021 = vmatpush1.bf16.msra.mxu0 %v9869
      %10022 = vmatprep.subr.bf16.mxu0 %v9875
      %10023 = vmatpush1.bf16.msra.mxu0 %v9874
      %10024 = vmatprep.subr.bf16.mxu0 %v9880
      %10025 = vmatpush1.bf16.msra.mxu0 %v9879
      %10026 = vmatprep.subr.bf16.mxu0 %v9885
      %10027 = vmatpush1.bf16.msra.mxu0 %v9884
      %10028 = vmatprep.subr.bf16.mxu0 %v9890
      %10029 = vmatpush1.bf16.msra.mxu0 %v9889
      %10030 = vmatprep.subr.bf16.mxu0 %v9895
      %10031 = vmatpush1.bf16.msra.mxu0 %v9894
      %10032 = vmatprep.subr.bf16.mxu0 %v9900
      %10033 = vmatpush1.bf16.msra.mxu0 %v9899
      %10034 = vmatprep.subr.bf16.mxu0 %v9905
      %10035 = vmatpush1.bf16.msra.mxu0 %v9904
      %10036 = vmatprep.subr.bf16.mxu0 %v9910
      %10037 = vmatpush1.bf16.msra.mxu0 %v9909
      %10038 = vmatprep.subr.bf16.mxu0 %v9915
      %10039 = vmatpush1.bf16.msra.mxu0 %v9914
      %10040 = vmatprep.subr.bf16.mxu0 %v9920
      %10041 = vmatpush1.bf16.msra.mxu0 %v9919
      %10042 = vmatprep.subr.bf16.mxu0 %v9925
      %10043 = vmatpush1.bf16.msra.mxu0 %v9924
      %10044 = vmatprep.subr.bf16.mxu0 %v9930
      %10045 = vmatpush1.bf16.msra.mxu0 %v9929
      %10046 = vmatprep.mubr.bf16.mxu0 %v9501
      %10047 = vmatmul.mubr.bf16.gmra.mrb[0].mxu0 %v9500
      %v10048 = vpop.f32.mrb[0].mxu0
      %v10049 = vadd.f32 0.0, %v10048
      %v10050 = vpop.f32.mrb[0].mxu0
      %v10051 = vadd.f32 0.0, %v10050
      %v10052 = vpop.f32.mrb[0].mxu0
      %v10053 = vpop.f32.mrb[0].mxu0
      %10054 = vdwg.mxu0
      %10055 = vmatprep.subr.bf16.mxu0 %v9857
      %10056 = vmatpush1.bf16.msra.mxu0 %v9856
      %10057 = vmatprep.subr.bf16.mxu0 %v9862
      %10058 = vmatpush1.bf16.msra.mxu0 %v9861
      %10059 = vmatprep.subr.bf16.mxu0 %v9867
      %10060 = vmatpush1.bf16.msra.mxu0 %v9866
      %10061 = vmatprep.subr.bf16.mxu0 %v9872
      %10062 = vmatpush1.bf16.msra.mxu0 %v9871
      %10063 = vmatprep.subr.bf16.mxu0 %v9877
      %10064 = vmatpush1.bf16.msra.mxu0 %v9876
      %10065 = vmatprep.subr.bf16.mxu0 %v9882
      %10066 = vmatpush1.bf16.msra.mxu0 %v9881
      %10067 = vmatprep.subr.bf16.mxu0 %v9887
      %10068 = vmatpush1.bf16.msra.mxu0 %v9886
      %10069 = vmatprep.subr.bf16.mxu0 %v9892
      %10070 = vmatpush1.bf16.msra.mxu0 %v9891
      %10071 = vmatprep.subr.bf16.mxu0 %v9897
      %10072 = vmatpush1.bf16.msra.mxu0 %v9896
      %10073 = vmatprep.subr.bf16.mxu0 %v9902
      %10074 = vmatpush1.bf16.msra.mxu0 %v9901
      %10075 = vmatprep.subr.bf16.mxu0 %v9907
      %10076 = vmatpush1.bf16.msra.mxu0 %v9906
      %10077 = vmatprep.subr.bf16.mxu0 %v9912
      %10078 = vmatpush1.bf16.msra.mxu0 %v9911
      %10079 = vmatprep.subr.bf16.mxu0 %v9917
      %10080 = vmatpush1.bf16.msra.mxu0 %v9916
      %10081 = vmatprep.subr.bf16.mxu0 %v9922
      %10082 = vmatpush1.bf16.msra.mxu0 %v9921
      %10083 = vmatprep.subr.bf16.mxu0 %v9927
      %10084 = vmatpush1.bf16.msra.mxu0 %v9926
      %10085 = vmatprep.subr.bf16.mxu0 %v9932
      %10086 = vmatpush1.bf16.msra.mxu0 %v9931
      %10087 = vmatprep.mubr.bf16.mxu0 %v9501
      %10088 = vmatmul.mubr.bf16.gmra.mrb[0].mxu0 %v9500
      %v10089 = vpop.f32.mrb[0].mxu0
      %v10090 = vadd.f32 0.0, %v10089
      %v10091 = vpop.f32.mrb[0].mxu0
      %v10092 = vadd.f32 0.0, %v10091
      %v10093 = vpop.f32.mrb[0].mxu0
      %v10094 = vpop.f32.mrb[0].mxu0
      %10095 = vdwg.mxu0
      %10096 = vmatprep.subr.bf16.mxu0 0
      %10097 = vmatpush1.bf16.msra.mxu0 %v9858
      %10098 = vmatprep.subr.bf16.mxu0 0
      %10099 = vmatpush1.bf16.msra.mxu0 %v9863
      %10100 = vmatprep.subr.bf16.mxu0 0
      %10101 = vmatpush1.bf16.msra.mxu0 %v9868
      %10102 = vmatprep.subr.bf16.mxu0 0
      %10103 = vmatpush1.bf16.msra.mxu0 %v9873
      %10104 = vmatprep.subr.bf16.mxu0 0
      %10105 = vmatpush1.bf16.msra.mxu0 %v9878
      %10106 = vmatprep.subr.bf16.mxu0 0
      %10107 = vmatpush1.bf16.msra.mxu0 %v9883
      %10108 = vmatprep.subr.bf16.mxu0 0
      %10109 = vmatpush1.bf16.msra.mxu0 %v9888
      %10110 = vmatprep.subr.bf16.mxu0 0
      %10111 = vmatpush1.bf16.msra.mxu0 %v9893
      %10112 = vmatprep.subr.bf16.mxu0 0
      %10113 = vmatpush1.bf16.msra.mxu0 %v9898
      %10114 = vmatprep.subr.bf16.mxu0 0
      %10115 = vmatpush1.bf16.msra.mxu0 %v9903
      %10116 = vmatprep.subr.bf16.mxu0 0
      %10117 = vmatpush1.bf16.msra.mxu0 %v9908
      %10118 = vmatprep.subr.bf16.mxu0 0
      %10119 = vmatpush1.bf16.msra.mxu0 %v9913
      %10120 = vmatprep.subr.bf16.mxu0 0
      %10121 = vmatpush1.bf16.msra.mxu0 %v9918
      %10122 = vmatprep.subr.bf16.mxu0 0
      %10123 = vmatpush1.bf16.msra.mxu0 %v9923
      %10124 = vmatprep.subr.bf16.mxu0 0
      %10125 = vmatpush1.bf16.msra.mxu0 %v9928
      %10126 = vmatprep.subr.bf16.mxu0 0
      %10127 = vmatpush1.bf16.msra.mxu0 %v9933
      %10128 = vmatprep.mubr.bf16.mxu0 %v9501
      %10129 = vmatmul.mubr.bf16.gmra.mrb[0].mxu0 %v9500
      %v10130 = vpop.f32.mrb[0].mxu0
      %v10131 = vadd.f32 0.0, %v10130
      %v10132 = vpop.f32.mrb[0].mxu0
      %v10133 = vpop.f32.mrb[0].mxu0
      %v10134 = vpop.f32.mrb[0].mxu0
      %10135 = vdwg.mxu0
      %10137 = vrot.lane.b32.xlu0 %v10049, 64
      %v10138 = vpop.permute.xlu0 %10137
      %10141 = vrot.lane.b32.xlu0 %v10051, 64
      %v10142 = vpop.permute.xlu0 %10141
      %10145 = vrot.lane.b32.xlu0 %v10090, 64
      %v10146 = vpop.permute.xlu0 %10145
      %10149 = vrot.lane.b32.xlu0 %v10092, 64
      %v10150 = vpop.permute.xlu0 %10149
      %v10152 = vld [vmem:[%s11] sm:$0xf]
      %v10153 = vld [vmem:[%s11 + $0x4] sm:$0xf]
      %v10154 = vpack.c.bf16 %v10138, %v10049
      %v10155 = vpack.c.bf16 %v10142, %v10051
      %v10156 = vpack.c.bf16 %v10146, %v10090
      %v10157 = vpack.c.bf16 %v10150, %v10092
      %v10158 = vpack.c.bf16 %v10131, %v10131
      %v10159 = vld [vmem:[%s13] sm:$0xff]
      %v10160 = vld [vmem:[%s13 + $0x8] sm:$0xff]
      %10162 = vset.pattern.permute.xlu0 0
      %10163 = vperm.xlu0 %10162, %v10159
      %v10164 = vpop.permute.xlu0 %10163
      %10167 = vset.pattern.permute.xlu0 0
      %10168 = vperm.xlu0 %10167, %v10160
      %v10169 = vpop.permute.xlu0 %10168
      %v10173 = vunpack.c.l.b16 %v10152
      %v10174 = vunpack.c.l.b16 %v10153
      %v10175 = vpack.c.b16 %v10174, %v10173
      %vm10176 = vcmask 588800
      %v10178 = vsel %vm10176, %v10175, 0
      %v10181 = vsel %vm9420, %v10158, 0
      %10183 = vmatprep.subr.bf16.mxu0 0
      %10184 = vmatpush1.bf16.msra.mxu0 %v10154
      %10185 = vmatprep.subr.bf16.mxu0 0
      %10186 = vmatpush1.bf16.msra.mxu0 %v10155
      %10187 = vmatprep.subr.bf16.mxu0 0
      %10188 = vmatpush1.bf16.msra.mxu0 %v10156
      %10189 = vmatprep.subr.bf16.mxu0 0
      %10190 = vmatpush1.bf16.msra.mxu0 %v10157
      %10191 = vmatprep.subr.bf16.mxu0 0
      %10192 = vmatpush1.bf16.msra.mxu0 %v10181
      %10193 = vmatprep.subr.bf16.mxu0 0
      %10194 = vmatpush1.bf16.msra.mxu0 0
      %10195 = vmatprep.subr.bf16.mxu0 0
      %10196 = vmatpush1.bf16.msra.mxu0 0
      %10197 = vmatprep.subr.bf16.mxu0 0
      %10198 = vmatpush1.bf16.msra.mxu0 0
      %10199 = vmatprep.subr.bf16.mxu0 0
      %10200 = vmatpush1.bf16.msra.mxu0 0
      %10201 = vmatprep.subr.bf16.mxu0 0
      %10202 = vmatpush1.bf16.msra.mxu0 0
      %10203 = vmatprep.subr.bf16.mxu0 0
      %10204 = vmatpush1.bf16.msra.mxu0 0
      %10205 = vmatprep.subr.bf16.mxu0 0
      %10206 = vmatpush1.bf16.msra.mxu0 0
      %10207 = vmatprep.subr.bf16.mxu0 0
      %10208 = vmatpush1.bf16.msra.mxu0 0
      %10209 = vmatprep.subr.bf16.mxu0 0
      %10210 = vmatpush1.bf16.msra.mxu0 0
      %10211 = vmatprep.subr.bf16.mxu0 0
      %10212 = vmatpush1.bf16.msra.mxu0 0
      %10213 = vmatprep.subr.bf16.mxu0 0
      %10214 = vmatpush1.bf16.msra.mxu0 0
      %10215 = vmatprep.mubr.bf16.mxu0 0
      %10216 = vmatmul.mubr.bf16.gmra.mrb[0].mxu0 %v10178
      %v10217 = vpop.f32.mrb[0].mxu0
      %v10218 = vadd.f32 %v10164, %v10217
      %v10219 = vpop.f32.mrb[0].mxu0
      %v10220 = vpop.f32.mrb[0].mxu0
      %v10221 = vadd.f32 %v10169, %v10220
      %v10222 = vpop.f32.mrb[0].mxu0
      %10223 = vdwg.mxu0
      %v10224 = vmax.f32 %v10218, 0.0
      %v10225 = vmax.f32 %v10221, 0.0
      %vm10226 = vcmask 523264
      %10227 = vst.msk [vmem:[%s950] sm:$0xff] %vm10226, %v10224
      %10228 = vst.msk [vmem:[%s950 + $0x8] sm:$0xff] %vm10226, %v10225
      %v10229 = vld [vmem:[%s15] sm:$0xf]
      %v10230 = vld [vmem:[%s15 + $0x4] sm:$0xf]
      %v10231 = vpack.c.bf16 %v10225, %v10224
      %v10232 = vld [vmem:[%s17] sm:$0xff]
      %v10233 = vld [vmem:[%s17 + $0x8] sm:$0xff]
      %10235 = vset.pattern.permute.xlu0 0
      %10236 = vperm.xlu0 %10235, %v10232
      %v10237 = vpop.permute.xlu0 %10236
      %10240 = vset.pattern.permute.xlu0 0
      %10241 = vperm.xlu0 %10240, %v10233
      %v10242 = vpop.permute.xlu0 %10241
      %v10246 = vunpack.c.l.b16 %v10229
      %v10247 = vunpack.c.l.b16 %v10230
      %v10248 = vpack.c.b16 %v10247, %v10246
      %vm10249 = vcmask 130048
      %v10251 = vsel %vm10249, %v10248, 0
      %10253 = vmatprep.subr.bf16.mxu0 0
      %10254 = vmatpush1.bf16.msra.mxu0 %v10231
      %10255 = vmatprep.subr.bf16.mxu0 0
      %10256 = vmatpush1.bf16.msra.mxu0 0
      %10257 = vmatprep.subr.bf16.mxu0 0
      %10258 = vmatpush1.bf16.msra.mxu0 0
      %10259 = vmatprep.subr.bf16.mxu0 0
      %10260 = vmatpush1.bf16.msra.mxu0 0
      %10261 = vmatprep.subr.bf16.mxu0 0
      %10262 = vmatpush1.bf16.msra.mxu0 0
      %10263 = vmatprep.subr.bf16.mxu0 0
      %10264 = vmatpush1.bf16.msra.mxu0 0
      %10265 = vmatprep.subr.bf16.mxu0 0
      %10266 = vmatpush1.bf16.msra.mxu0 0
      %10267 = vmatprep.subr.bf16.mxu0 0
      %10268 = vmatpush1.bf16.msra.mxu0 0
      %10269 = vmatprep.subr.bf16.mxu0 0
      %10270 = vmatpush1.bf16.msra.mxu0 0
      %10271 = vmatprep.subr.bf16.mxu0 0
      %10272 = vmatpush1.bf16.msra.mxu0 0
      %10273 = vmatprep.subr.bf16.mxu0 0
      %10274 = vmatpush1.bf16.msra.mxu0 0
      %10275 = vmatprep.subr.bf16.mxu0 0
      %10276 = vmatpush1.bf16.msra.mxu0 0
      %10277 = vmatprep.subr.bf16.mxu0 0
      %10278 = vmatpush1.bf16.msra.mxu0 0
      %10279 = vmatprep.subr.bf16.mxu0 0
      %10280 = vmatpush1.bf16.msra.mxu0 0
      %10281 = vmatprep.subr.bf16.mxu0 0
      %10282 = vmatpush1.bf16.msra.mxu0 0
      %10283 = vmatprep.subr.bf16.mxu0 0
      %10284 = vmatpush1.bf16.msra.mxu0 0
      %10285 = vmatprep.mubr.bf16.mxu0 0
      %10286 = vmatmul.mubr.bf16.gmra.mrb[0].mxu0 %v10251
      %v10287 = vpop.f32.mrb[0].mxu0
      %v10288 = vadd.f32 %v10237, %v10287
      %v10289 = vpop.f32.mrb[0].mxu0
      %v10290 = vpop.f32.mrb[0].mxu0
      %v10291 = vadd.f32 %v10242, %v10290
      %v10292 = vpop.f32.mrb[0].mxu0
      %10293 = vdwg.mxu0
      %v10294 = vmax.f32 %v10288, 0.0
      %v10295 = vmax.f32 %v10291, 0.0
      %v10296 = vpack.c.bf16 %v10295, %v10294
      %v10297 = vld [vmem:[%s19] sm:$0xf]
      %v10298 = vld [vmem:[%s19 + $0x4] sm:$0xf]
      %v10299 = vld [vmem:[%s19 + $0x8] sm:$0xf]
      %v10300 = vld [vmem:[%s19 + $0xc] sm:$0xf]
      %v10301 = vld [vmem:[%s19 + $0x10] sm:$0xf]
      %v10302 = vld [vmem:[%s19 + $0x14] sm:$0xf]
      %v10303 = vld [vmem:[%s19 + $0x18] sm:$0xf]
      %v10304 = vld [vmem:[%s19 + $0x1c] sm:$0xf]
      %v10313 = vunpack.c.l.b16 %v10297
      %v10314 = vunpack.c.l.b16 %v10298
      %v10315 = vunpack.c.l.b16 %v10299
      %v10316 = vunpack.c.l.b16 %v10300
      %v10317 = vunpack.c.l.b16 %v10301
      %v10318 = vunpack.c.l.b16 %v10302
      %v10319 = vunpack.c.l.b16 %v10303
      %v10320 = vunpack.c.l.b16 %v10304
      %v10321 = vpack.c.b16 %v10314, %v10313
      %v10322 = vpack.c.b16 %v10316, %v10315
      %v10323 = vpack.c.b16 %v10318, %v10317
      %v10324 = vpack.c.b16 %v10320, %v10319
      %v10330 = vsel %vm10226, %v10296, 0
      %10332 = vmatprep.subr.bf16.mxu0 0
      %10333 = vmatpush1.bf16.msra.mxu0 %v10321
      %10334 = vmatprep.subr.bf16.mxu0 0
      %10335 = vmatpush1.bf16.msra.mxu0 %v10322
      %10336 = vmatprep.subr.bf16.mxu0 0
      %10337 = vmatpush1.bf16.msra.mxu0 %v10323
      %10338 = vmatprep.subr.bf16.mxu0 0
      %10339 = vmatpush1.bf16.msra.mxu0 %v10324
      %10340 = vmatprep.subr.bf16.mxu0 0
      %10341 = vmatpush1.bf16.msra.mxu0 0
      %10342 = vmatprep.subr.bf16.mxu0 0
      %10343 = vmatpush1.bf16.msra.mxu0 0
      %10344 = vmatprep.subr.bf16.mxu0 0
      %10345 = vmatpush1.bf16.msra.mxu0 0
      %10346 = vmatprep.subr.bf16.mxu0 0
      %10347 = vmatpush1.bf16.msra.mxu0 0
      %10348 = vmatprep.subr.bf16.mxu0 0
      %10349 = vmatpush1.bf16.msra.mxu0 0
      %10350 = vmatprep.subr.bf16.mxu0 0
      %10351 = vmatpush1.bf16.msra.mxu0 0
      %10352 = vmatprep.subr.bf16.mxu0 0
      %10353 = vmatpush1.bf16.msra.mxu0 0
      %10354 = vmatprep.subr.bf16.mxu0 0
      %10355 = vmatpush1.bf16.msra.mxu0 0
      %10356 = vmatprep.subr.bf16.mxu0 0
      %10357 = vmatpush1.bf16.msra.mxu0 0
      %10358 = vmatprep.subr.bf16.mxu0 0
      %10359 = vmatpush1.bf16.msra.mxu0 0
      %10360 = vmatprep.subr.bf16.mxu0 0
      %10361 = vmatpush1.bf16.msra.mxu0 0
      %10362 = vmatprep.subr.bf16.mxu0 0
      %10363 = vmatpush1.bf16.msra.mxu0 0
      %10364 = vmatprep.mubr.bf16.mxu0 0
      %10365 = vmatmul.mubr.bf16.gmra.mrb[0].mxu0 %v10330
      %v10366 = vpop.f32.mrb[0].mxu0
      %v10367 = vadd.f32 0.0, %v10366
      %v10368 = vpop.f32.mrb[0].mxu0
      %v10369 = vpop.f32.mrb[0].mxu0
      %v10370 = vadd.f32 0.0, %v10369
      %v10371 = vpop.f32.mrb[0].mxu0
      %10372 = vdwg.mxu0
      %v10373 = vld [vmem:[%s21] sm:$0xff]
      %v10374 = vld [vmem:[%s21 + $0x8] sm:$0xff]
      %v10375 = vld [vmem:[%s21 + $0x10] sm:$0xff]
      %v10376 = vld [vmem:[%s21 + $0x18] sm:$0xff]
      %v10377 = vld [vmem:[%s21 + $0x20] sm:$0xff]
      %v10378 = vld [vmem:[%s21 + $0x28] sm:$0xff]
      %v10379 = vld [vmem:[%s21 + $0x30] sm:$0xff]
      %v10380 = vld [vmem:[%s21 + $0x38] sm:$0xff]
      %v10389 = vunpack.c.l.b16 %v10373
      %v10390 = vunpack.c.h.b16 %v10373
      %v10391 = vunpack.c.l.b16 %v10374
      %v10392 = vunpack.c.h.b16 %v10374
      %v10393 = vunpack.c.l.b16 %v10375
      %v10394 = vunpack.c.h.b16 %v10375
      %v10395 = vunpack.c.l.b16 %v10376
      %v10396 = vunpack.c.h.b16 %v10376
      %v10397 = vunpack.c.l.b16 %v10377
      %v10398 = vunpack.c.h.b16 %v10377
      %v10399 = vunpack.c.l.b16 %v10378
      %v10400 = vunpack.c.h.b16 %v10378
      %v10401 = vunpack.c.l.b16 %v10379
      %v10402 = vunpack.c.h.b16 %v10379
      %v10403 = vunpack.c.l.b16 %v10380
      %v10404 = vunpack.c.h.b16 %v10380
      %v10405 = vpack.c.b16 %v10391, %v10389
      %v10406 = vpack.c.b16 %v10392, %v10390
      %v10407 = vpack.c.b16 %v10395, %v10393
      %v10408 = vpack.c.b16 %v10396, %v10394
      %v10409 = vpack.c.b16 %v10399, %v10397
      %v10410 = vpack.c.b16 %v10400, %v10398
      %v10411 = vpack.c.b16 %v10403, %v10401
      %v10412 = vpack.c.b16 %v10404, %v10402
      %10421 = vmatprep.subr.bf16.mxu0 %v10406
      %10422 = vmatpush1.bf16.msra.mxu0 %v10405
      %10423 = vmatprep.subr.bf16.mxu0 %v10408
      %10424 = vmatpush1.bf16.msra.mxu0 %v10407
      %10425 = vmatprep.subr.bf16.mxu0 %v10410
      %10426 = vmatpush1.bf16.msra.mxu0 %v10409
      %10427 = vmatprep.subr.bf16.mxu0 %v10412
      %10428 = vmatpush1.bf16.msra.mxu0 %v10411
      %10429 = vmatprep.subr.bf16.mxu0 0
      %10430 = vmatpush1.bf16.msra.mxu0 0
      %10431 = vmatprep.subr.bf16.mxu0 0
      %10432 = vmatpush1.bf16.msra.mxu0 0
      %10433 = vmatprep.subr.bf16.mxu0 0
      %10434 = vmatpush1.bf16.msra.mxu0 0
      %10435 = vmatprep.subr.bf16.mxu0 0
      %10436 = vmatpush1.bf16.msra.mxu0 0
      %10437 = vmatprep.subr.bf16.mxu0 0
      %10438 = vmatpush1.bf16.msra.mxu0 0
      %10439 = vmatprep.subr.bf16.mxu0 0
      %10440 = vmatpush1.bf16.msra.mxu0 0
      %10441 = vmatprep.subr.bf16.mxu0 0
      %10442 = vmatpush1.bf16.msra.mxu0 0
      %10443 = vmatprep.subr.bf16.mxu0 0
      %10444 = vmatpush1.bf16.msra.mxu0 0
      %10445 = vmatprep.subr.bf16.mxu0 0
      %10446 = vmatpush1.bf16.msra.mxu0 0
      %10447 = vmatprep.subr.bf16.mxu0 0
      %10448 = vmatpush1.bf16.msra.mxu0 0
      %10449 = vmatprep.subr.bf16.mxu0 0
      %10450 = vmatpush1.bf16.msra.mxu0 0
      %10451 = vmatprep.subr.bf16.mxu0 0
      %10452 = vmatpush1.bf16.msra.mxu0 0
      %10453 = vmatprep.mubr.bf16.mxu0 0
      %10454 = vmatmul.mubr.bf16.gmra.mrb[0].mxu0 %v10330
      %v10455 = vpop.f32.mrb[0].mxu0
      %v10456 = vadd.f32 0.0, %v10455
      %v10457 = vpop.f32.mrb[0].mxu0
      %v10458 = vadd.f32 0.0, %v10457
      %v10459 = vpop.f32.mrb[0].mxu0
      %v10460 = vadd.f32 0.0, %v10459
      %v10461 = vpop.f32.mrb[0].mxu0
      %v10462 = vadd.f32 0.0, %v10461
      %10463 = vdwg.mxu0
      %10466 = vrot.lane.b32.xlu0 %v10456, 112
      %v10467 = vpop.permute.xlu0 %10466
      %10468 = vrot.lane.b32.xlu0 %v10460, 112
      %v10469 = vpop.permute.xlu0 %10468
      %10472 = vrot.lane.b32.xlu0 %v10456, 96
      %v10473 = vpop.permute.xlu0 %10472
      %10474 = vrot.lane.b32.xlu0 %v10460, 96
      %v10475 = vpop.permute.xlu0 %10474
      %10478 = vrot.lane.b32.xlu0 %v10456, 80
      %v10479 = vpop.permute.xlu0 %10478
      %10480 = vrot.lane.b32.xlu0 %v10460, 80
      %v10481 = vpop.permute.xlu0 %10480
      %10484 = vrot.lane.b32.xlu0 %v10456, 64
      %v10485 = vpop.permute.xlu0 %10484
      %10486 = vrot.lane.b32.xlu0 %v10460, 64
      %v10487 = vpop.permute.xlu0 %10486
      %10490 = vrot.lane.b32.xlu0 %v10456, 48
      %v10491 = vpop.permute.xlu0 %10490
      %10492 = vrot.lane.b32.xlu0 %v10460, 48
      %v10493 = vpop.permute.xlu0 %10492
      %10496 = vrot.lane.b32.xlu0 %v10456, 32
      %v10497 = vpop.permute.xlu0 %10496
      %10498 = vrot.lane.b32.xlu0 %v10460, 32
      %v10499 = vpop.permute.xlu0 %10498
      %10502 = vrot.lane.b32.xlu0 %v10456, 16
      %v10503 = vpop.permute.xlu0 %10502
      %10504 = vrot.lane.b32.xlu0 %v10460, 16
      %v10505 = vpop.permute.xlu0 %10504
      %v10508 = vld [vmem:[%s23] sm:$0xff]
      %v10509 = vld [vmem:[%s23 + $0x8] sm:$0xff]
      %v10510 = vpack.c.bf16 %v10460, %v10456
      %v10511 = vpack.c.bf16 %v10469, %v10467
      %v10512 = vpack.c.bf16 %v10475, %v10473
      %v10513 = vpack.c.bf16 %v10481, %v10479
      %v10514 = vpack.c.bf16 %v10487, %v10485
      %v10515 = vpack.c.bf16 %v10493, %v10491
      %v10516 = vpack.c.bf16 %v10499, %v10497
      %v10517 = vpack.c.bf16 %v10505, %v10503
      %v10518 = vpack.c.bf16 %v10462, %v10458
      %v10519 = vld [vmem:[%s25] sm:$0xff]
      %v10520 = vld [vmem:[%s25 + $0x8] sm:$0xff]
      %10522 = vset.pattern.permute.xlu0 0
      %10523 = vperm.xlu0 %10522, %v10519
      %v10524 = vpop.permute.xlu0 %10523
      %10527 = vset.pattern.permute.xlu0 0
      %10528 = vperm.xlu0 %10527, %v10520
      %v10529 = vpop.permute.xlu0 %10528
      %v10533 = vunpack.c.l.b16 %v10508
      %v10534 = vunpack.c.h.b16 %v10508
      %v10535 = vunpack.c.l.b16 %v10509
      %v10536 = vunpack.c.h.b16 %v10509
      %v10537 = vpack.c.b16 %v10535, %v10533
      %v10538 = vpack.c.b16 %v10536, %v10534
      %v10541 = vsel %vm10249, %v10538, 0
      %10543 = vmatprep.subr.bf16.mxu0 0
      %10544 = vmatpush1.bf16.msra.mxu0 %v10510
      %10545 = vmatprep.subr.bf16.mxu0 0
      %10546 = vmatpush1.bf16.msra.mxu0 %v10511
      %10547 = vmatprep.subr.bf16.mxu0 0
      %10548 = vmatpush1.bf16.msra.mxu0 %v10512
      %10549 = vmatprep.subr.bf16.mxu0 0
      %10550 = vmatpush1.bf16.msra.mxu0 %v10513
      %10551 = vmatprep.subr.bf16.mxu0 0
      %10552 = vmatpush1.bf16.msra.mxu0 %v10514
      %10553 = vmatprep.subr.bf16.mxu0 0
      %10554 = vmatpush1.bf16.msra.mxu0 %v10515
      %10555 = vmatprep.subr.bf16.mxu0 0
      %10556 = vmatpush1.bf16.msra.mxu0 %v10516
      %10557 = vmatprep.subr.bf16.mxu0 0
      %10558 = vmatpush1.bf16.msra.mxu0 %v10517
      %10559 = vmatprep.subr.bf16.mxu0 0
      %10560 = vmatpush1.bf16.msra.mxu0 %v10518
      %10561 = vmatprep.subr.bf16.mxu0 0
      %10562 = vmatpush1.bf16.msra.mxu0 0
      %10563 = vmatprep.subr.bf16.mxu0 0
      %10564 = vmatpush1.bf16.msra.mxu0 0
      %10565 = vmatprep.subr.bf16.mxu0 0
      %10566 = vmatpush1.bf16.msra.mxu0 0
      %10567 = vmatprep.subr.bf16.mxu0 0
      %10568 = vmatpush1.bf16.msra.mxu0 0
      %10569 = vmatprep.subr.bf16.mxu0 0
      %10570 = vmatpush1.bf16.msra.mxu0 0
      %10571 = vmatprep.subr.bf16.mxu0 0
      %10572 = vmatpush1.bf16.msra.mxu0 0
      %10573 = vmatprep.subr.bf16.mxu0 0
      %10574 = vmatpush1.bf16.msra.mxu0 0
      %10575 = vmatprep.mubr.bf16.mxu0 %v10541
      %10576 = vmatmul.mubr.bf16.gmra.mrb[0].mxu0 %v10537
      %v10577 = vpop.f32.mrb[0].mxu0
      %v10578 = vadd.f32 %v10524, %v10577
      %v10579 = vpop.f32.mrb[0].mxu0
      %v10580 = vpop.f32.mrb[0].mxu0
      %v10581 = vadd.f32 %v10529, %v10580
      %v10582 = vpop.f32.mrb[0].mxu0
      %10583 = vdwg.mxu0
      %v10584 = vpack.c.bf16 %v10581, %v10578
      %v10585 = vld [vmem:[%s27] sm:$0xff]
      %v10586 = vld [vmem:[%s27 + $0x8] sm:$0xff]
      %v10589 = vunpack.c.l.b16 %v10585
      %v10590 = vunpack.c.h.b16 %v10585
      %v10591 = vunpack.c.l.b16 %v10586
      %v10592 = vunpack.c.h.b16 %v10586
      %v10593 = vpack.c.b16 %v10591, %v10589
      %v10594 = vpack.c.b16 %v10592, %v10590
      %v10598 = vsel %vm10249, %v10584, 0
      %10600 = vmatprep.subr.bf16.mxu0 %v10594
      %10601 = vmatpush1.bf16.msra.mxu0 %v10593
      %10602 = vmatprep.subr.bf16.mxu0 0
      %10603 = vmatpush1.bf16.msra.mxu0 0
      %10604 = vmatprep.subr.bf16.mxu0 0
      %10605 = vmatpush1.bf16.msra.mxu0 0
      %10606 = vmatprep.subr.bf16.mxu0 0
      %10607 = vmatpush1.bf16.msra.mxu0 0
      %10608 = vmatprep.subr.bf16.mxu0 0
      %10609 = vmatpush1.bf16.msra.mxu0 0
      %10610 = vmatprep.subr.bf16.mxu0 0
      %10611 = vmatpush1.bf16.msra.mxu0 0
      %10612 = vmatprep.subr.bf16.mxu0 0
      %10613 = vmatpush1.bf16.msra.mxu0 0
      %10614 = vmatprep.subr.bf16.mxu0 0
      %10615 = vmatpush1.bf16.msra.mxu0 0
      %10616 = vmatprep.subr.bf16.mxu0 0
      %10617 = vmatpush1.bf16.msra.mxu0 0
      %10618 = vmatprep.subr.bf16.mxu0 0
      %10619 = vmatpush1.bf16.msra.mxu0 0
      %10620 = vmatprep.subr.bf16.mxu0 0
      %10621 = vmatpush1.bf16.msra.mxu0 0
      %10622 = vmatprep.subr.bf16.mxu0 0
      %10623 = vmatpush1.bf16.msra.mxu0 0
      %10624 = vmatprep.subr.bf16.mxu0 0
      %10625 = vmatpush1.bf16.msra.mxu0 0
      %10626 = vmatprep.subr.bf16.mxu0 0
      %10627 = vmatpush1.bf16.msra.mxu0 0
      %10628 = vmatprep.subr.bf16.mxu0 0
      %10629 = vmatpush1.bf16.msra.mxu0 0
      %10630 = vmatprep.subr.bf16.mxu0 0
      %10631 = vmatpush1.bf16.msra.mxu0 0
      %10632 = vmatprep.mubr.bf16.mxu0 0
      %10633 = vmatmul.mubr.bf16.gmra.mrb[0].mxu0 %v10598
      %v10634 = vpop.f32.mrb[0].mxu0
      %v10635 = vadd.f32 0.0, %v10634
      %v10636 = vpop.f32.mrb[0].mxu0
      %v10637 = vadd.f32 0.0, %v10636
      %v10638 = vpop.f32.mrb[0].mxu0
      %v10639 = vadd.f32 0.0, %v10638
      %v10640 = vpop.f32.mrb[0].mxu0
      %v10641 = vadd.f32 0.0, %v10640
      %10642 = vdwg.mxu0
      %10645 = vrot.lane.b32.xlu0 %v10635, 112
      %v10646 = vpop.permute.xlu0 %10645
      %10647 = vrot.lane.b32.xlu0 %v10639, 112
      %v10648 = vpop.permute.xlu0 %10647
      %10651 = vrot.lane.b32.xlu0 %v10635, 96
      %v10652 = vpop.permute.xlu0 %10651
      %10653 = vrot.lane.b32.xlu0 %v10639, 96
      %v10654 = vpop.permute.xlu0 %10653
      %10657 = vrot.lane.b32.xlu0 %v10635, 80
      %v10658 = vpop.permute.xlu0 %10657
      %10659 = vrot.lane.b32.xlu0 %v10639, 80
      %v10660 = vpop.permute.xlu0 %10659
      %10663 = vrot.lane.b32.xlu0 %v10635, 64
      %v10664 = vpop.permute.xlu0 %10663
      %10665 = vrot.lane.b32.xlu0 %v10639, 64
      %v10666 = vpop.permute.xlu0 %10665
      %10669 = vrot.lane.b32.xlu0 %v10635, 48
      %v10670 = vpop.permute.xlu0 %10669
      %10671 = vrot.lane.b32.xlu0 %v10639, 48
      %v10672 = vpop.permute.xlu0 %10671
      %10675 = vrot.lane.b32.xlu0 %v10635, 32
      %v10676 = vpop.permute.xlu0 %10675
      %10677 = vrot.lane.b32.xlu0 %v10639, 32
      %v10678 = vpop.permute.xlu0 %10677
      %10681 = vrot.lane.b32.xlu0 %v10635, 16
      %v10682 = vpop.permute.xlu0 %10681
      %10683 = vrot.lane.b32.xlu0 %v10639, 16
      %v10684 = vpop.permute.xlu0 %10683
      %v10687 = vld [vmem:[%s29] sm:$0xff]
      %v10688 = vpack.c.bf16 %v10639, %v10635
      %v10689 = vpack.c.bf16 %v10648, %v10646
      %v10690 = vpack.c.bf16 %v10654, %v10652
      %v10691 = vpack.c.bf16 %v10660, %v10658
      %v10692 = vpack.c.bf16 %v10666, %v10664
      %v10693 = vpack.c.bf16 %v10672, %v10670
      %v10694 = vpack.c.bf16 %v10678, %v10676
      %v10695 = vpack.c.bf16 %v10684, %v10682
      %v10696 = vpack.c.bf16 %v10641, %v10637
      %v10697 = vld [vmem:[%s31] sm:$0xff]
      %10699 = vset.pattern.permute.xlu0 0
      %10700 = vperm.xlu0 %10699, %v10697
      %v10701 = vpop.permute.xlu0 %10700
      %v10704 = vunpack.c.l.b16 %v10687
      %v10705 = vunpack.c.h.b16 %v10687
      %v10706 = vpack.c.b16 %v10704, %v10704
      %v10707 = vpack.c.b16 %v10705, %v10705
      %v10710 = vsel %vm10249, %v10707, 0
      %10712 = vmatprep.subr.bf16.mxu0 0
      %10713 = vmatpush1.bf16.msra.mxu0 %v10688
      %10714 = vmatprep.subr.bf16.mxu0 0
      %10715 = vmatpush1.bf16.msra.mxu0 %v10689
      %10716 = vmatprep.subr.bf16.mxu0 0
      %10717 = vmatpush1.bf16.msra.mxu0 %v10690
      %10718 = vmatprep.subr.bf16.mxu0 0
      %10719 = vmatpush1.bf16.msra.mxu0 %v10691
      %10720 = vmatprep.subr.bf16.mxu0 0
      %10721 = vmatpush1.bf16.msra.mxu0 %v10692
      %10722 = vmatprep.subr.bf16.mxu0 0
      %10723 = vmatpush1.bf16.msra.mxu0 %v10693
      %10724 = vmatprep.subr.bf16.mxu0 0
      %10725 = vmatpush1.bf16.msra.mxu0 %v10694
      %10726 = vmatprep.subr.bf16.mxu0 0
      %10727 = vmatpush1.bf16.msra.mxu0 %v10695
      %10728 = vmatprep.subr.bf16.mxu0 0
      %10729 = vmatpush1.bf16.msra.mxu0 %v10696
      %10730 = vmatprep.subr.bf16.mxu0 0
      %10731 = vmatpush1.bf16.msra.mxu0 0
      %10732 = vmatprep.subr.bf16.mxu0 0
      %10733 = vmatpush1.bf16.msra.mxu0 0
      %10734 = vmatprep.subr.bf16.mxu0 0
      %10735 = vmatpush1.bf16.msra.mxu0 0
      %10736 = vmatprep.subr.bf16.mxu0 0
      %10737 = vmatpush1.bf16.msra.mxu0 0
      %10738 = vmatprep.subr.bf16.mxu0 0
      %10739 = vmatpush1.bf16.msra.mxu0 0
      %10740 = vmatprep.subr.bf16.mxu0 0
      %10741 = vmatpush1.bf16.msra.mxu0 0
      %10742 = vmatprep.subr.bf16.mxu0 0
      %10743 = vmatpush1.bf16.msra.mxu0 0
      %10744 = vmatprep.mubr.bf16.mxu0 %v10710
      %10745 = vmatmul.mubr.bf16.gmra.mrb[0].mxu0 %v10706
      %v10746 = vpop.f32.mrb[0].mxu0
      %v10747 = vadd.f32 %v10701, %v10746
      %v10748 = vpop.f32.mrb[0].mxu0
      %v10749 = vpop.f32.mrb[0].mxu0
      %v10750 = vpop.f32.mrb[0].mxu0
      %10751 = vdwg.mxu0
      %v10752 = vmax.f32 %v10747, 0.0
      %v10753 = vpack.c.bf16 %v10752, %v10752
      %v10755 = vsel %vm10249, %v10753, 0
      %10757 = vmatprep.subr.bf16.mxu0 %v10594
      %10758 = vmatpush1.bf16.msra.mxu0 %v10593
      %10759 = vmatprep.subr.bf16.mxu0 0
      %10760 = vmatpush1.bf16.msra.mxu0 0
      %10761 = vmatprep.subr.bf16.mxu0 0
      %10762 = vmatpush1.bf16.msra.mxu0 0
      %10763 = vmatprep.subr.bf16.mxu0 0
      %10764 = vmatpush1.bf16.msra.mxu0 0
      %10765 = vmatprep.subr.bf16.mxu0 0
      %10766 = vmatpush1.bf16.msra.mxu0 0
      %10767 = vmatprep.subr.bf16.mxu0 0
      %10768 = vmatpush1.bf16.msra.mxu0 0
      %10769 = vmatprep.subr.bf16.mxu0 0
      %10770 = vmatpush1.bf16.msra.mxu0 0
      %10771 = vmatprep.subr.bf16.mxu0 0
      %10772 = vmatpush1.bf16.msra.mxu0 0
      %10773 = vmatprep.subr.bf16.mxu0 0
      %10774 = vmatpush1.bf16.msra.mxu0 0
      %10775 = vmatprep.subr.bf16.mxu0 0
      %10776 = vmatpush1.bf16.msra.mxu0 0
      %10777 = vmatprep.subr.bf16.mxu0 0
      %10778 = vmatpush1.bf16.msra.mxu0 0
      %10779 = vmatprep.subr.bf16.mxu0 0
      %10780 = vmatpush1.bf16.msra.mxu0 0
      %10781 = vmatprep.subr.bf16.mxu0 0
      %10782 = vmatpush1.bf16.msra.mxu0 0
      %10783 = vmatprep.subr.bf16.mxu0 0
      %10784 = vmatpush1.bf16.msra.mxu0 0
      %10785 = vmatprep.subr.bf16.mxu0 0
      %10786 = vmatpush1.bf16.msra.mxu0 0
      %10787 = vmatprep.subr.bf16.mxu0 0
      %10788 = vmatpush1.bf16.msra.mxu0 0
      %10789 = vmatprep.mubr.bf16.mxu0 0
      %10790 = vmatmul.mubr.bf16.gmra.mrb[0].mxu0 %v10755
      %v10791 = vpop.f32.mrb[0].mxu0
      %v10792 = vadd.f32 0.0, %v10791
      %v10793 = vpop.f32.mrb[0].mxu0
      %v10794 = vadd.f32 0.0, %v10793
      %v10795 = vpop.f32.mrb[0].mxu0
      %v10796 = vpop.f32.mrb[0].mxu0
      %10797 = vdwg.mxu0
      %10799 = vrot.lane.b32.xlu0 %v10792, 112
      %v10800 = vpop.permute.xlu0 %10799
      %10802 = vrot.lane.b32.xlu0 %v10792, 96
      %v10803 = vpop.permute.xlu0 %10802
      %10805 = vrot.lane.b32.xlu0 %v10792, 80
      %v10806 = vpop.permute.xlu0 %10805
      %10808 = vrot.lane.b32.xlu0 %v10792, 64
      %v10809 = vpop.permute.xlu0 %10808
      %10811 = vrot.lane.b32.xlu0 %v10792, 48
      %v10812 = vpop.permute.xlu0 %10811
      %10814 = vrot.lane.b32.xlu0 %v10792, 32
      %v10815 = vpop.permute.xlu0 %10814
      %10817 = vrot.lane.b32.xlu0 %v10792, 16
      %v10818 = vpop.permute.xlu0 %10817
      %v10820 = vld [vmem:[%s33] sm:$0x3]
      %v10821 = vpack.c.bf16 %v10800, %v10792
      %v10822 = vpack.c.bf16 %v10806, %v10803
      %v10823 = vpack.c.bf16 %v10812, %v10809
      %v10824 = vpack.c.bf16 %v10818, %v10815
      %v10825 = vpack.c.bf16 %v10794, %v10794
      %v10826 = vld [vmem:[%s35] sm:$0xf]
      %10828 = vset.pattern.permute.xlu0 0
      %10829 = vperm.xlu0 %10828, %v10826
      %v10830 = vpop.permute.xlu0 %10829
      %v10833 = vsel %vm10176, %v10820, 0
      %v10836 = vsel %vm9420, %v10825, 0
      %10838 = vmatprep.subr.bf16.mxu0 0
      %10839 = vmatpush1.bf16.msra.mxu0 %v10821
      %10840 = vmatprep.subr.bf16.mxu0 0
      %10841 = vmatpush1.bf16.msra.mxu0 %v10822
      %10842 = vmatprep.subr.bf16.mxu0 0
      %10843 = vmatpush1.bf16.msra.mxu0 %v10823
      %10844 = vmatprep.subr.bf16.mxu0 0
      %10845 = vmatpush1.bf16.msra.mxu0 %v10824
      %10846 = vmatprep.subr.bf16.mxu0 0
      %10847 = vmatpush1.bf16.msra.mxu0 %v10836
      %10848 = vmatprep.subr.bf16.mxu0 0
      %10849 = vmatpush1.bf16.msra.mxu0 0
      %10850 = vmatprep.subr.bf16.mxu0 0
      %10851 = vmatpush1.bf16.msra.mxu0 0
      %10852 = vmatprep.subr.bf16.mxu0 0
      %10853 = vmatpush1.bf16.msra.mxu0 0
      %10854 = vmatprep.subr.bf16.mxu0 0
      %10855 = vmatpush1.bf16.msra.mxu0 0
      %10856 = vmatprep.subr.bf16.mxu0 0
      %10857 = vmatpush1.bf16.msra.mxu0 0
      %10858 = vmatprep.subr.bf16.mxu0 0
      %10859 = vmatpush1.bf16.msra.mxu0 0
      %10860 = vmatprep.subr.bf16.mxu0 0
      %10861 = vmatpush1.bf16.msra.mxu0 0
      %10862 = vmatprep.subr.bf16.mxu0 0
      %10863 = vmatpush1.bf16.msra.mxu0 0
      %10864 = vmatprep.subr.bf16.mxu0 0
      %10865 = vmatpush1.bf16.msra.mxu0 0
      %10866 = vmatprep.subr.bf16.mxu0 0
      %10867 = vmatpush1.bf16.msra.mxu0 0
      %10868 = vmatprep.subr.bf16.mxu0 0
      %10869 = vmatpush1.bf16.msra.mxu0 0
      %10870 = vmatprep.mubr.bf16.mxu0 0
      %10871 = vmatmul.mubr.bf16.gmra.mrb[0].mxu0 %v10833
      %v10872 = vpop.f32.mrb[0].mxu0
      %v10873 = vadd.f32 %v10830, %v10872
      %v10874 = vpop.f32.mrb[0].mxu0
      %v10875 = vpop.f32.mrb[0].mxu0
      %v10876 = vpop.f32.mrb[0].mxu0
      %10877 = vdwg.mxu0
      %v10878 = vmax.f32 %v10873, 0.0
      %v10879 = vpack.c.bf16 %v10878, %v10878
      %v10881 = vsel %vm10249, %v10879, 0
      %10883 = vmatprep.subr.bf16.mxu0 %v10594
      %10884 = vmatpush1.bf16.msra.mxu0 %v10593
      %10885 = vmatprep.subr.bf16.mxu0 0
      %10886 = vmatpush1.bf16.msra.mxu0 0
      %10887 = vmatprep.subr.bf16.mxu0 0
      %10888 = vmatpush1.bf16.msra.mxu0 0
      %10889 = vmatprep.subr.bf16.mxu0 0
      %10890 = vmatpush1.bf16.msra.mxu0 0
      %10891 = vmatprep.subr.bf16.mxu0 0
      %10892 = vmatpush1.bf16.msra.mxu0 0
      %10893 = vmatprep.subr.bf16.mxu0 0
      %10894 = vmatpush1.bf16.msra.mxu0 0
      %10895 = vmatprep.subr.bf16.mxu0 0
      %10896 = vmatpush1.bf16.msra.mxu0 0
      %10897 = vmatprep.subr.bf16.mxu0 0
      %10898 = vmatpush1.bf16.msra.mxu0 0
      %10899 = vmatprep.subr.bf16.mxu0 0
      %10900 = vmatpush1.bf16.msra.mxu0 0
      %10901 = vmatprep.subr.bf16.mxu0 0
      %10902 = vmatpush1.bf16.msra.mxu0 0
      %10903 = vmatprep.subr.bf16.mxu0 0
      %10904 = vmatpush1.bf16.msra.mxu0 0
      %10905 = vmatprep.subr.bf16.mxu0 0
      %10906 = vmatpush1.bf16.msra.mxu0 0
      %10907 = vmatprep.subr.bf16.mxu0 0
      %10908 = vmatpush1.bf16.msra.mxu0 0
      %10909 = vmatprep.subr.bf16.mxu0 0
      %10910 = vmatpush1.bf16.msra.mxu0 0
      %10911 = vmatprep.subr.bf16.mxu0 0
      %10912 = vmatpush1.bf16.msra.mxu0 0
      %10913 = vmatprep.subr.bf16.mxu0 0
      %10914 = vmatpush1.bf16.msra.mxu0 0
      %10915 = vmatprep.mubr.bf16.mxu0 0
      %10916 = vmatmul.mubr.bf16.gmra.mrb[0].mxu0 %v10881
      %v10917 = vpop.f32.mrb[0].mxu0
      %v10918 = vadd.f32 0.0, %v10917
      %v10919 = vpop.f32.mrb[0].mxu0
      %v10920 = vadd.f32 0.0, %v10919
      %v10921 = vpop.f32.mrb[0].mxu0
      %v10922 = vpop.f32.mrb[0].mxu0
      %10923 = vdwg.mxu0
      %v10925 = vrot.slane %v10918, 4
      %10926 = vrot.lane.b32.xlu0 %v10925, 112
      %v10927 = vpop.permute.xlu0 %10926
      %10929 = vrot.lane.b32.xlu0 %v10918, 96
      %v10930 = vpop.permute.xlu0 %10929
      %10932 = vrot.lane.b32.xlu0 %v10925, 80
      %v10933 = vpop.permute.xlu0 %10932
      %10935 = vrot.lane.b32.xlu0 %v10918, 64
      %v10936 = vpop.permute.xlu0 %10935
      %10938 = vrot.lane.b32.xlu0 %v10925, 48
      %v10939 = vpop.permute.xlu0 %10938
      %10941 = vrot.lane.b32.xlu0 %v10918, 32
      %v10942 = vpop.permute.xlu0 %10941
      %10944 = vrot.lane.b32.xlu0 %v10925, 16
      %v10945 = vpop.permute.xlu0 %10944
      %v10947 = vsel %vm9420, %v10918, %v10927
      %v10948 = vsel %vm9420, %v10930, %v10933
      %v10949 = vsel %vm9420, %v10936, %v10939
      %v10950 = vsel %vm9420, %v10942, %v10945
      %v10951 = vld [vmem:[%s37] sm:$0x3]
      %v10952 = vpack.c.bf16 %v10948, %v10947
      %v10953 = vpack.c.bf16 %v10950, %v10949
      %v10954 = vpack.c.bf16 %v10920, %v10920
      %v10955 = vld [vmem:[%s39] sm:$0xf]
      %10957 = vset.pattern.permute.xlu0 0
      %10958 = vperm.xlu0 %10957, %v10955
      %v10959 = vpop.permute.xlu0 %10958
      %vm10961 = vcmask 293888
      %v10963 = vsel %vm10961, %v10951, 0
      %v10966 = vsel %vm9426, %v10954, 0
      %10968 = vmatprep.subr.bf16.mxu0 0
      %10969 = vmatpush1.bf16.msra.mxu0 %v10952
      %10970 = vmatprep.subr.bf16.mxu0 0
      %10971 = vmatpush1.bf16.msra.mxu0 %v10953
      %10972 = vmatprep.subr.bf16.mxu0 0
      %10973 = vmatpush1.bf16.msra.mxu0 %v10966
      %10974 = vmatprep.subr.bf16.mxu0 0
      %10975 = vmatpush1.bf16.msra.mxu0 0
      %10976 = vmatprep.subr.bf16.mxu0 0
      %10977 = vmatpush1.bf16.msra.mxu0 0
      %10978 = vmatprep.subr.bf16.mxu0 0
      %10979 = vmatpush1.bf16.msra.mxu0 0
      %10980 = vmatprep.subr.bf16.mxu0 0
      %10981 = vmatpush1.bf16.msra.mxu0 0
      %10982 = vmatprep.subr.bf16.mxu0 0
      %10983 = vmatpush1.bf16.msra.mxu0 0
      %10984 = vmatprep.subr.bf16.mxu0 0
      %10985 = vmatpush1.bf16.msra.mxu0 0
      %10986 = vmatprep.subr.bf16.mxu0 0
      %10987 = vmatpush1.bf16.msra.mxu0 0
      %10988 = vmatprep.subr.bf16.mxu0 0
      %10989 = vmatpush1.bf16.msra.mxu0 0
      %10990 = vmatprep.subr.bf16.mxu0 0
      %10991 = vmatpush1.bf16.msra.mxu0 0
      %10992 = vmatprep.subr.bf16.mxu0 0
      %10993 = vmatpush1.bf16.msra.mxu0 0
      %10994 = vmatprep.subr.bf16.mxu0 0
      %10995 = vmatpush1.bf16.msra.mxu0 0
      %10996 = vmatprep.subr.bf16.mxu0 0
      %10997 = vmatpush1.bf16.msra.mxu0 0
      %10998 = vmatprep.subr.bf16.mxu0 0
      %10999 = vmatpush1.bf16.msra.mxu0 0
      %11000 = vmatprep.mubr.bf16.mxu0 0
      %11001 = vmatmul.mubr.bf16.gmra.mrb[0].mxu0 %v10963
      %v11002 = vpop.f32.mrb[0].mxu0
      %v11003 = vadd.f32 %v10959, %v11002
      %v11004 = vpop.f32.mrb[0].mxu0
      %v11005 = vpop.f32.mrb[0].mxu0
      %v11006 = vpop.f32.mrb[0].mxu0
      %11007 = vdwg.mxu0
      %v11008 = vmax.f32 %v11003, 0.0
      %v11010 = vrot.slane %v11008, 4
      %v11012 = vsel %vm9420, %v10878, %v11010
      %v11013 = vld [vmem:[%s41] sm:$0xf]
      %v11014 = vld [vmem:[%s41 + $0x4] sm:$0xf]
      %v11015 = vpack.c.bf16 %v10370, %v10367
      %v11016 = vpack.c.bf16 %v11012, %v10752
      %v11017 = vld [vmem:[%s43] sm:$0xff]
      %v11018 = vld [vmem:[%s43 + $0x8] sm:$0xff]
      %11020 = vset.pattern.permute.xlu0 0
      %11021 = vperm.xlu0 %11020, %v11017
      %v11022 = vpop.permute.xlu0 %11021
      %11025 = vset.pattern.permute.xlu0 0
      %11026 = vperm.xlu0 %11025, %v11018
      %v11027 = vpop.permute.xlu0 %11026
      %v11031 = vunpack.c.l.b16 %v11013
      %v11032 = vunpack.c.l.b16 %v11014
      %v11033 = vpack.c.b16 %v11032, %v11031
      %vm11034 = vcmask 261120
      %v11036 = vsel %vm11034, %v11033, 0
      %11038 = vmatprep.subr.bf16.mxu0 0
      %11039 = vmatpush1.bf16.msra.mxu0 %v11015
      %11040 = vmatprep.subr.bf16.mxu0 0
      %11041 = vmatpush1.bf16.msra.mxu0 %v11016
      %11042 = vmatprep.subr.bf16.mxu0 0
      %11043 = vmatpush1.bf16.msra.mxu0 0
      %11044 = vmatprep.subr.bf16.mxu0 0
      %11045 = vmatpush1.bf16.msra.mxu0 0
      %11046 = vmatprep.subr.bf16.mxu0 0
      %11047 = vmatpush1.bf16.msra.mxu0 0
      %11048 = vmatprep.subr.bf16.mxu0 0
      %11049 = vmatpush1.bf16.msra.mxu0 0
      %11050 = vmatprep.subr.bf16.mxu0 0
      %11051 = vmatpush1.bf16.msra.mxu0 0
      %11052 = vmatprep.subr.bf16.mxu0 0
      %11053 = vmatpush1.bf16.msra.mxu0 0
      %11054 = vmatprep.subr.bf16.mxu0 0
      %11055 = vmatpush1.bf16.msra.mxu0 0
      %11056 = vmatprep.subr.bf16.mxu0 0
      %11057 = vmatpush1.bf16.msra.mxu0 0
      %11058 = vmatprep.subr.bf16.mxu0 0
      %11059 = vmatpush1.bf16.msra.mxu0 0
      %11060 = vmatprep.subr.bf16.mxu0 0
      %11061 = vmatpush1.bf16.msra.mxu0 0
      %11062 = vmatprep.subr.bf16.mxu0 0
      %11063 = vmatpush1.bf16.msra.mxu0 0
      %11064 = vmatprep.subr.bf16.mxu0 0
      %11065 = vmatpush1.bf16.msra.mxu0 0
      %11066 = vmatprep.subr.bf16.mxu0 0
      %11067 = vmatpush1.bf16.msra.mxu0 0
      %11068 = vmatprep.subr.bf16.mxu0 0
      %11069 = vmatpush1.bf16.msra.mxu0 0
      %11070 = vmatprep.mubr.bf16.mxu0 0
      %11071 = vmatmul.mubr.bf16.gmra.mrb[0].mxu0 %v11036
      %v11072 = vpop.f32.mrb[0].mxu0
      %v11073 = vadd.f32 %v11022, %v11072
      %v11074 = vpop.f32.mrb[0].mxu0
      %v11075 = vpop.f32.mrb[0].mxu0
      %v11076 = vadd.f32 %v11027, %v11075
      %v11077 = vpop.f32.mrb[0].mxu0
      %11078 = vdwg.mxu0
      %v11079 = vmax.f32 %v11073, 0.0
      %v11080 = vmax.f32 %v11076, 0.0
      %v11081 = vpack.c.bf16 %v11080, %v11079
      %v11083 = vsel %vm10249, %v11081, 0
      %11085 = vmatprep.subr.bf16.mxu0 %v10594
      %11086 = vmatpush1.bf16.msra.mxu0 %v10593
      %11087 = vmatprep.subr.bf16.mxu0 0
      %11088 = vmatpush1.bf16.msra.mxu0 0
      %11089 = vmatprep.subr.bf16.mxu0 0
      %11090 = vmatpush1.bf16.msra.mxu0 0
      %11091 = vmatprep.subr.bf16.mxu0 0
      %11092 = vmatpush1.bf16.msra.mxu0 0
      %11093 = vmatprep.subr.bf16.mxu0 0
      %11094 = vmatpush1.bf16.msra.mxu0 0
      %11095 = vmatprep.subr.bf16.mxu0 0
      %11096 = vmatpush1.bf16.msra.mxu0 0
      %11097 = vmatprep.subr.bf16.mxu0 0
      %11098 = vmatpush1.bf16.msra.mxu0 0
      %11099 = vmatprep.subr.bf16.mxu0 0
      %11100 = vmatpush1.bf16.msra.mxu0 0
      %11101 = vmatprep.subr.bf16.mxu0 0
      %11102 = vmatpush1.bf16.msra.mxu0 0
      %11103 = vmatprep.subr.bf16.mxu0 0
      %11104 = vmatpush1.bf16.msra.mxu0 0
      %11105 = vmatprep.subr.bf16.mxu0 0
      %11106 = vmatpush1.bf16.msra.mxu0 0
      %11107 = vmatprep.subr.bf16.mxu0 0
      %11108 = vmatpush1.bf16.msra.mxu0 0
      %11109 = vmatprep.subr.bf16.mxu0 0
      %11110 = vmatpush1.bf16.msra.mxu0 0
      %11111 = vmatprep.subr.bf16.mxu0 0
      %11112 = vmatpush1.bf16.msra.mxu0 0
      %11113 = vmatprep.subr.bf16.mxu0 0
      %11114 = vmatpush1.bf16.msra.mxu0 0
      %11115 = vmatprep.subr.bf16.mxu0 0
      %11116 = vmatpush1.bf16.msra.mxu0 0
      %11117 = vmatprep.mubr.bf16.mxu0 0
      %11118 = vmatmul.mubr.bf16.gmra.mrb[0].mxu0 %v11083
      %v11119 = vpop.f32.mrb[0].mxu0
      %v11120 = vadd.f32 0.0, %v11119
      %v11121 = vpop.f32.mrb[0].mxu0
      %v11122 = vadd.f32 0.0, %v11121
      %v11123 = vpop.f32.mrb[0].mxu0
      %v11124 = vadd.f32 0.0, %v11123
      %v11125 = vpop.f32.mrb[0].mxu0
      %v11126 = vadd.f32 0.0, %v11125
      %11127 = vdwg.mxu0
      %11130 = vrot.lane.b32.xlu0 %v11120, 112
      %v11131 = vpop.permute.xlu0 %11130
      %11132 = vrot.lane.b32.xlu0 %v11124, 112
      %v11133 = vpop.permute.xlu0 %11132
      %11136 = vrot.lane.b32.xlu0 %v11120, 96
      %v11137 = vpop.permute.xlu0 %11136
      %11138 = vrot.lane.b32.xlu0 %v11124, 96
      %v11139 = vpop.permute.xlu0 %11138
      %11142 = vrot.lane.b32.xlu0 %v11120, 80
      %v11143 = vpop.permute.xlu0 %11142
      %11144 = vrot.lane.b32.xlu0 %v11124, 80
      %v11145 = vpop.permute.xlu0 %11144
      %11148 = vrot.lane.b32.xlu0 %v11120, 64
      %v11149 = vpop.permute.xlu0 %11148
      %11150 = vrot.lane.b32.xlu0 %v11124, 64
      %v11151 = vpop.permute.xlu0 %11150
      %11154 = vrot.lane.b32.xlu0 %v11120, 48
      %v11155 = vpop.permute.xlu0 %11154
      %11156 = vrot.lane.b32.xlu0 %v11124, 48
      %v11157 = vpop.permute.xlu0 %11156
      %11160 = vrot.lane.b32.xlu0 %v11120, 32
      %v11161 = vpop.permute.xlu0 %11160
      %11162 = vrot.lane.b32.xlu0 %v11124, 32
      %v11163 = vpop.permute.xlu0 %11162
      %11166 = vrot.lane.b32.xlu0 %v11120, 16
      %v11167 = vpop.permute.xlu0 %11166
      %11168 = vrot.lane.b32.xlu0 %v11124, 16
      %v11169 = vpop.permute.xlu0 %11168
      %v11172 = vld [vmem:[%s45] sm:$0xff]
      %v11173 = vpack.c.bf16 %v11124, %v11120
      %v11174 = vpack.c.bf16 %v11133, %v11131
      %v11175 = vpack.c.bf16 %v11139, %v11137
      %v11176 = vpack.c.bf16 %v11145, %v11143
      %v11177 = vpack.c.bf16 %v11151, %v11149
      %v11178 = vpack.c.bf16 %v11157, %v11155
      %v11179 = vpack.c.bf16 %v11163, %v11161
      %v11180 = vpack.c.bf16 %v11169, %v11167
      %v11181 = vpack.c.bf16 %v11126, %v11122
      %v11182 = vld [vmem:[%s47] sm:$0xff]
      %11184 = vset.pattern.permute.xlu0 0
      %11185 = vperm.xlu0 %11184, %v11182
      %v11186 = vpop.permute.xlu0 %11185
      %v11189 = vunpack.c.l.b16 %v11172
      %v11190 = vunpack.c.h.b16 %v11172
      %v11191 = vpack.c.b16 %v11189, %v11189
      %v11192 = vpack.c.b16 %v11190, %v11190
      %v11195 = vsel %vm10249, %v11192, 0
      %11197 = vmatprep.subr.bf16.mxu0 0
      %11198 = vmatpush1.bf16.msra.mxu0 %v11173
      %11199 = vmatprep.subr.bf16.mxu0 0
      %11200 = vmatpush1.bf16.msra.mxu0 %v11174
      %11201 = vmatprep.subr.bf16.mxu0 0
      %11202 = vmatpush1.bf16.msra.mxu0 %v11175
      %11203 = vmatprep.subr.bf16.mxu0 0
      %11204 = vmatpush1.bf16.msra.mxu0 %v11176
      %11205 = vmatprep.subr.bf16.mxu0 0
      %11206 = vmatpush1.bf16.msra.mxu0 %v11177
      %11207 = vmatprep.subr.bf16.mxu0 0
      %11208 = vmatpush1.bf16.msra.mxu0 %v11178
      %11209 = vmatprep.subr.bf16.mxu0 0
      %11210 = vmatpush1.bf16.msra.mxu0 %v11179
      %11211 = vmatprep.subr.bf16.mxu0 0
      %11212 = vmatpush1.bf16.msra.mxu0 %v11180
      %11213 = vmatprep.subr.bf16.mxu0 0
      %11214 = vmatpush1.bf16.msra.mxu0 %v11181
      %11215 = vmatprep.subr.bf16.mxu0 0
      %11216 = vmatpush1.bf16.msra.mxu0 0
      %11217 = vmatprep.subr.bf16.mxu0 0
      %11218 = vmatpush1.bf16.msra.mxu0 0
      %11219 = vmatprep.subr.bf16.mxu0 0
      %11220 = vmatpush1.bf16.msra.mxu0 0
      %11221 = vmatprep.subr.bf16.mxu0 0
      %11222 = vmatpush1.bf16.msra.mxu0 0
      %11223 = vmatprep.subr.bf16.mxu0 0
      %11224 = vmatpush1.bf16.msra.mxu0 0
      %11225 = vmatprep.subr.bf16.mxu0 0
      %11226 = vmatpush1.bf16.msra.mxu0 0
      %11227 = vmatprep.subr.bf16.mxu0 0
      %11228 = vmatpush1.bf16.msra.mxu0 0
      %11229 = vmatprep.mubr.bf16.mxu0 %v11195
      %11230 = vmatmul.mubr.bf16.gmra.mrb[0].mxu0 %v11191
      %v11231 = vpop.f32.mrb[0].mxu0
      %v11232 = vadd.f32 %v11186, %v11231
      %v11233 = vpop.f32.mrb[0].mxu0
      %v11234 = vpop.f32.mrb[0].mxu0
      %v11235 = vpop.f32.mrb[0].mxu0
      %11236 = vdwg.mxu0
      %v11237 = vmax.f32 %v11232, 0.0
      %v11238 = vpack.c.bf16 %v11237, %v11237
      %v11240 = vsel %vm10249, %v11238, 0
      %11242 = vmatprep.subr.bf16.mxu0 %v10594
      %11243 = vmatpush1.bf16.msra.mxu0 %v10593
      %11244 = vmatprep.subr.bf16.mxu0 0
      %11245 = vmatpush1.bf16.msra.mxu0 0
      %11246 = vmatprep.subr.bf16.mxu0 0
      %11247 = vmatpush1.bf16.msra.mxu0 0
      %11248 = vmatprep.subr.bf16.mxu0 0
      %11249 = vmatpush1.bf16.msra.mxu0 0
      %11250 = vmatprep.subr.bf16.mxu0 0
      %11251 = vmatpush1.bf16.msra.mxu0 0
      %11252 = vmatprep.subr.bf16.mxu0 0
      %11253 = vmatpush1.bf16.msra.mxu0 0
      %11254 = vmatprep.subr.bf16.mxu0 0
      %11255 = vmatpush1.bf16.msra.mxu0 0
      %11256 = vmatprep.subr.bf16.mxu0 0
      %11257 = vmatpush1.bf16.msra.mxu0 0
      %11258 = vmatprep.subr.bf16.mxu0 0
      %11259 = vmatpush1.bf16.msra.mxu0 0
      %11260 = vmatprep.subr.bf16.mxu0 0
      %11261 = vmatpush1.bf16.msra.mxu0 0
      %11262 = vmatprep.subr.bf16.mxu0 0
      %11263 = vmatpush1.bf16.msra.mxu0 0
      %11264 = vmatprep.subr.bf16.mxu0 0
      %11265 = vmatpush1.bf16.msra.mxu0 0
      %11266 = vmatprep.subr.bf16.mxu0 0
      %11267 = vmatpush1.bf16.msra.mxu0 0
      %11268 = vmatprep.subr.bf16.mxu0 0
      %11269 = vmatpush1.bf16.msra.mxu0 0
      %11270 = vmatprep.subr.bf16.mxu0 0
      %11271 = vmatpush1.bf16.msra.mxu0 0
      %11272 = vmatprep.subr.bf16.mxu0 0
      %11273 = vmatpush1.bf16.msra.mxu0 0
      %11274 = vmatprep.mubr.bf16.mxu0 0
      %11275 = vmatmul.mubr.bf16.gmra.mrb[0].mxu0 %v11240
      %v11276 = vpop.f32.mrb[0].mxu0
      %v11277 = vadd.f32 0.0, %v11276
      %v11278 = vpop.f32.mrb[0].mxu0
      %v11279 = vadd.f32 0.0, %v11278
      %v11280 = vpop.f32.mrb[0].mxu0
      %v11281 = vpop.f32.mrb[0].mxu0
      %11282 = vdwg.mxu0
      %11284 = vrot.lane.b32.xlu0 %v11277, 112
      %v11285 = vpop.permute.xlu0 %11284
      %11287 = vrot.lane.b32.xlu0 %v11277, 96
      %v11288 = vpop.permute.xlu0 %11287
      %11290 = vrot.lane.b32.xlu0 %v11277, 80
      %v11291 = vpop.permute.xlu0 %11290
      %11293 = vrot.lane.b32.xlu0 %v11277, 64
      %v11294 = vpop.permute.xlu0 %11293
      %11296 = vrot.lane.b32.xlu0 %v11277, 48
      %v11297 = vpop.permute.xlu0 %11296
      %11299 = vrot.lane.b32.xlu0 %v11277, 32
      %v11300 = vpop.permute.xlu0 %11299
      %11302 = vrot.lane.b32.xlu0 %v11277, 16
      %v11303 = vpop.permute.xlu0 %11302
      %v11305 = vld [vmem:[%s49] sm:$0x3]
      %v11306 = vpack.c.bf16 %v11285, %v11277
      %v11307 = vpack.c.bf16 %v11291, %v11288
      %v11308 = vpack.c.bf16 %v11297, %v11294
      %v11309 = vpack.c.bf16 %v11303, %v11300
      %v11310 = vpack.c.bf16 %v11279, %v11279
      %v11311 = vld [vmem:[%s51] sm:$0xf]
      %11313 = vset.pattern.permute.xlu0 0
      %11314 = vperm.xlu0 %11313, %v11311
      %v11315 = vpop.permute.xlu0 %11314
      %v11318 = vsel %vm10176, %v11305, 0
      %v11321 = vsel %vm9420, %v11310, 0
      %11323 = vmatprep.subr.bf16.mxu0 0
      %11324 = vmatpush1.bf16.msra.mxu0 %v11306
      %11325 = vmatprep.subr.bf16.mxu0 0
      %11326 = vmatpush1.bf16.msra.mxu0 %v11307
      %11327 = vmatprep.subr.bf16.mxu0 0
      %11328 = vmatpush1.bf16.msra.mxu0 %v11308
      %11329 = vmatprep.subr.bf16.mxu0 0
      %11330 = vmatpush1.bf16.msra.mxu0 %v11309
      %11331 = vmatprep.subr.bf16.mxu0 0
      %11332 = vmatpush1.bf16.msra.mxu0 %v11321
      %11333 = vmatprep.subr.bf16.mxu0 0
      %11334 = vmatpush1.bf16.msra.mxu0 0
      %11335 = vmatprep.subr.bf16.mxu0 0
      %11336 = vmatpush1.bf16.msra.mxu0 0
      %11337 = vmatprep.subr.bf16.mxu0 0
      %11338 = vmatpush1.bf16.msra.mxu0 0
      %11339 = vmatprep.subr.bf16.mxu0 0
      %11340 = vmatpush1.bf16.msra.mxu0 0
      %11341 = vmatprep.subr.bf16.mxu0 0
      %11342 = vmatpush1.bf16.msra.mxu0 0
      %11343 = vmatprep.subr.bf16.mxu0 0
      %11344 = vmatpush1.bf16.msra.mxu0 0
      %11345 = vmatprep.subr.bf16.mxu0 0
      %11346 = vmatpush1.bf16.msra.mxu0 0
      %11347 = vmatprep.subr.bf16.mxu0 0
      %11348 = vmatpush1.bf16.msra.mxu0 0
      %11349 = vmatprep.subr.bf16.mxu0 0
      %11350 = vmatpush1.bf16.msra.mxu0 0
      %11351 = vmatprep.subr.bf16.mxu0 0
      %11352 = vmatpush1.bf16.msra.mxu0 0
      %11353 = vmatprep.subr.bf16.mxu0 0
      %11354 = vmatpush1.bf16.msra.mxu0 0
      %11355 = vmatprep.mubr.bf16.mxu0 0
      %11356 = vmatmul.mubr.bf16.gmra.mrb[0].mxu0 %v11318
      %v11357 = vpop.f32.mrb[0].mxu0
      %v11358 = vadd.f32 %v11315, %v11357
      %v11359 = vpop.f32.mrb[0].mxu0
      %v11360 = vpop.f32.mrb[0].mxu0
      %v11361 = vpop.f32.mrb[0].mxu0
      %11362 = vdwg.mxu0
      %v11363 = vmax.f32 %v11358, 0.0
      %v11364 = vpack.c.bf16 %v11363, %v11363
      %v11366 = vsel %vm10249, %v11364, 0
      %11368 = vmatprep.subr.bf16.mxu0 %v10594
      %11369 = vmatpush1.bf16.msra.mxu0 %v10593
      %11370 = vmatprep.subr.bf16.mxu0 0
      %11371 = vmatpush1.bf16.msra.mxu0 0
      %11372 = vmatprep.subr.bf16.mxu0 0
      %11373 = vmatpush1.bf16.msra.mxu0 0
      %11374 = vmatprep.subr.bf16.mxu0 0
      %11375 = vmatpush1.bf16.msra.mxu0 0
      %11376 = vmatprep.subr.bf16.mxu0 0
      %11377 = vmatpush1.bf16.msra.mxu0 0
      %11378 = vmatprep.subr.bf16.mxu0 0
      %11379 = vmatpush1.bf16.msra.mxu0 0
      %11380 = vmatprep.subr.bf16.mxu0 0
      %11381 = vmatpush1.bf16.msra.mxu0 0
      %11382 = vmatprep.subr.bf16.mxu0 0
      %11383 = vmatpush1.bf16.msra.mxu0 0
      %11384 = vmatprep.subr.bf16.mxu0 0
      %11385 = vmatpush1.bf16.msra.mxu0 0
      %11386 = vmatprep.subr.bf16.mxu0 0
      %11387 = vmatpush1.bf16.msra.mxu0 0
      %11388 = vmatprep.subr.bf16.mxu0 0
      %11389 = vmatpush1.bf16.msra.mxu0 0
      %11390 = vmatprep.subr.bf16.mxu0 0
      %11391 = vmatpush1.bf16.msra.mxu0 0
      %11392 = vmatprep.subr.bf16.mxu0 0
      %11393 = vmatpush1.bf16.msra.mxu0 0
      %11394 = vmatprep.subr.bf16.mxu0 0
      %11395 = vmatpush1.bf16.msra.mxu0 0
      %11396 = vmatprep.subr.bf16.mxu0 0
      %11397 = vmatpush1.bf16.msra.mxu0 0
      %11398 = vmatprep.subr.bf16.mxu0 0
      %11399 = vmatpush1.bf16.msra.mxu0 0
      %11400 = vmatprep.mubr.bf16.mxu0 0
      %11401 = vmatmul.mubr.bf16.gmra.mrb[0].mxu0 %v11366
      %v11402 = vpop.f32.mrb[0].mxu0
      %v11403 = vadd.f32 0.0, %v11402
      %v11404 = vpop.f32.mrb[0].mxu0
      %v11405 = vadd.f32 0.0, %v11404
      %v11406 = vpop.f32.mrb[0].mxu0
      %v11407 = vpop.f32.mrb[0].mxu0
      %11408 = vdwg.mxu0
      %v11410 = vrot.slane %v11403, 4
      %11411 = vrot.lane.b32.xlu0 %v11410, 112
      %v11412 = vpop.permute.xlu0 %11411
      %11414 = vrot.lane.b32.xlu0 %v11403, 96
      %v11415 = vpop.permute.xlu0 %11414
      %11417 = vrot.lane.b32.xlu0 %v11410, 80
      %v11418 = vpop.permute.xlu0 %11417
      %11420 = vrot.lane.b32.xlu0 %v11403, 64
      %v11421 = vpop.permute.xlu0 %11420
      %11423 = vrot.lane.b32.xlu0 %v11410, 48
      %v11424 = vpop.permute.xlu0 %11423
      %11426 = vrot.lane.b32.xlu0 %v11403, 32
      %v11427 = vpop.permute.xlu0 %11426
      %11429 = vrot.lane.b32.xlu0 %v11410, 16
      %v11430 = vpop.permute.xlu0 %11429
      %v11432 = vsel %vm9420, %v11403, %v11412
      %v11433 = vsel %vm9420, %v11415, %v11418
      %v11434 = vsel %vm9420, %v11421, %v11424
      %v11435 = vsel %vm9420, %v11427, %v11430
      %v11436 = vld [vmem:[%s53] sm:$0x3]
      %v11437 = vpack.c.bf16 %v11433, %v11432
      %v11438 = vpack.c.bf16 %v11435, %v11434
      %v11439 = vpack.c.bf16 %v11405, %v11405
      %v11440 = vld [vmem:[%s55] sm:$0xf]
      %11442 = vset.pattern.permute.xlu0 0
      %11443 = vperm.xlu0 %11442, %v11440
      %v11444 = vpop.permute.xlu0 %11443
      %v11447 = vsel %vm10961, %v11436, 0
      %v11450 = vsel %vm9426, %v11439, 0
      %11452 = vmatprep.subr.bf16.mxu0 0
      %11453 = vmatpush1.bf16.msra.mxu0 %v11437
      %11454 = vmatprep.subr.bf16.mxu0 0
      %11455 = vmatpush1.bf16.msra.mxu0 %v11438
      %11456 = vmatprep.subr.bf16.mxu0 0
      %11457 = vmatpush1.bf16.msra.mxu0 %v11450
      %11458 = vmatprep.subr.bf16.mxu0 0
      %11459 = vmatpush1.bf16.msra.mxu0 0
      %11460 = vmatprep.subr.bf16.mxu0 0
      %11461 = vmatpush1.bf16.msra.mxu0 0
      %11462 = vmatprep.subr.bf16.mxu0 0
      %11463 = vmatpush1.bf16.msra.mxu0 0
      %11464 = vmatprep.subr.bf16.mxu0 0
      %11465 = vmatpush1.bf16.msra.mxu0 0
      %11466 = vmatprep.subr.bf16.mxu0 0
      %11467 = vmatpush1.bf16.msra.mxu0 0
      %11468 = vmatprep.subr.bf16.mxu0 0
      %11469 = vmatpush1.bf16.msra.mxu0 0
      %11470 = vmatprep.subr.bf16.mxu0 0
      %11471 = vmatpush1.bf16.msra.mxu0 0
      %11472 = vmatprep.subr.bf16.mxu0 0
      %11473 = vmatpush1.bf16.msra.mxu0 0
      %11474 = vmatprep.subr.bf16.mxu0 0
      %11475 = vmatpush1.bf16.msra.mxu0 0
      %11476 = vmatprep.subr.bf16.mxu0 0
      %11477 = vmatpush1.bf16.msra.mxu0 0
      %11478 = vmatprep.subr.bf16.mxu0 0
      %11479 = vmatpush1.bf16.msra.mxu0 0
      %11480 = vmatprep.subr.bf16.mxu0 0
      %11481 = vmatpush1.bf16.msra.mxu0 0
      %11482 = vmatprep.subr.bf16.mxu0 0
      %11483 = vmatpush1.bf16.msra.mxu0 0
      %11484 = vmatprep.mubr.bf16.mxu0 0
      %11485 = vmatmul.mubr.bf16.gmra.mrb[0].mxu0 %v11447
      %v11486 = vpop.f32.mrb[0].mxu0
      %v11487 = vadd.f32 %v11444, %v11486
      %v11488 = vpop.f32.mrb[0].mxu0
      %v11489 = vpop.f32.mrb[0].mxu0
      %v11490 = vpop.f32.mrb[0].mxu0
      %11491 = vdwg.mxu0
      %v11492 = vmax.f32 %v11487, 0.0
      %v11494 = vrot.slane %v11492, 4
      %v11496 = vsel %vm9420, %v11363, %v11494
      %11497 = vst.msk [vmem:[%s955] sm:$0xff] %vm10249, %v11079
      %11498 = vst.msk [vmem:[%s955 + $0x8] sm:$0xff] %vm10249, %v11080
      %11499 = vst.msk [vmem:[%s955 + $0x10] sm:$0xff] %vm10249, %v11237
      %11500 = vst.msk [vmem:[%s955 + $0x18] sm:$0xff] %vm10249, %v11496
      %p11501 = scmp.lt.s32.totalorder %s73, 1
      %s11502 = scalar_select %p11501, %s73, 1
      %s11503 = smul.addr %s11502, 2
      %s11504 = smul.addr %s11503, 8
      %s11505 = scalar_lea.vmem %s57, %s11504
      %p11506 = scmp.lt.s32.totalorder %s73, 1
      %s11507 = scalar_select %p11506, %s73, 1
      %s11508 = smul.addr %s11507, 2
      %s11509 = smul.addr %s11508, 8
      %s11510 = scalar_lea.vmem %s59, %s11509
      %p11511 = scmp.lt.s32.totalorder %s73, 1
      %s11512 = scalar_select %p11511, %s73, 1
      %s11513 = smul.addr %s11512, 4
      %s11514 = smul.addr %s11513, 8
      %s11515 = scalar_lea.vmem %s61, %s11514
      // Predicated region
      $region133: #{stdc_backbone_forward.1} parent=131 // pred_check
        %p11516 = pneg %p684
      $region134: #{stdc_backbone_forward.1} parent=131 // pred_check_branch
        %11518 = sbr.rel (%p11516) target = $region136
      $region135: #{stdc_backbone_forward.1} parent=131 // pred_region
        _
      $region136: #{stdc_backbone_forward.1} parent=131 // pred_fallthru
        _
      // Predicated region
      $region137: #{stdc_backbone_forward.1} parent=131 // pred_check
        %p11519 = pneg %p710
      $region138: #{stdc_backbone_forward.1} parent=131 // pred_check_branch
        %11521 = sbr.rel (%p11519) target = $region140
      $region139: #{stdc_backbone_forward.1} parent=131 // pred_region
        _
      $region140: #{stdc_backbone_forward.1} parent=131 // pred_fallthru
        _
      // Predicated region
      $region141: #{stdc_backbone_forward.1} parent=131 // pred_check
        %p11522 = pneg %p736
      $region142: #{stdc_backbone_forward.1} parent=131 // pred_check_branch
        %11524 = sbr.rel (%p11522) target = $region144
      $region143: #{stdc_backbone_forward.1} parent=131 // pred_region
        _
      $region144: #{stdc_backbone_forward.1} parent=131 // pred_fallthru
        _
    $region132: #{stdc_backbone_forward.1} parent=5 // pred_fallthru
      _
    %p11525 = scmp.le.s32.totalorder 2, %s68
    // Predicated region
    $region145: #{stdc_backbone_forward.1} parent=5 // pred_check
      %p11526 = pneg %p11525
    $region146: #{stdc_backbone_forward.1} parent=5 // pred_check_branch
      %11528 = sbr.rel (%p11526) target = $region148
    $region147: #{stdc_backbone_forward.1} parent=5 // pred_region
      %s11529 = ssub.s32 %s68, 2
      // Predicated region
      $region149: #{stdc_backbone_forward.1} parent=147 // pred_check
        %p11530 = pneg %p690
      $region150: #{stdc_backbone_forward.1} parent=147 // pred_check_branch
        %11532 = sbr.rel (%p11530) target = $region152
      $region151: #{stdc_backbone_forward.1} parent=147 // pred_region
        %p11533 = scmp.lt.s32.totalorder %s74, 1
        %s11534 = scalar_select %p11533, %s74, 1
        %s11535 = smul.addr %s11534, 2
        %s11536 = smul.addr %s11535, 8
        %s11537 = scalar_lea.vmem %s57, %s11536
      $region152: #{stdc_backbone_forward.1} parent=147 // pred_fallthru
        _
      // Predicated region
      $region153: #{stdc_backbone_forward.1} parent=147 // pred_check
        %p11538 = pneg %p716
      $region154: #{stdc_backbone_forward.1} parent=147 // pred_check_branch
        %11540 = sbr.rel (%p11538) target = $region156
      $region155: #{stdc_backbone_forward.1} parent=147 // pred_region
        %p11541 = scmp.lt.s32.totalorder %s74, 1
        %s11542 = scalar_select %p11541, %s74, 1
        %s11543 = smul.addr %s11542, 2
        %s11544 = smul.addr %s11543, 8
        %s11545 = scalar_lea.vmem %s59, %s11544
      $region156: #{stdc_backbone_forward.1} parent=147 // pred_fallthru
        _
      // Predicated region
      $region157: #{stdc_backbone_forward.1} parent=147 // pred_check
        %p11546 = pneg %p742
      $region158: #{stdc_backbone_forward.1} parent=147 // pred_check_branch
        %11548 = sbr.rel (%p11546) target = $region160
      $region159: #{stdc_backbone_forward.1} parent=147 // pred_region
        %p11549 = scmp.lt.s32.totalorder %s74, 1
        %s11550 = scalar_select %p11549, %s74, 1
        %s11551 = smul.addr %s11550, 4
        %s11552 = smul.addr %s11551, 8
        %s11553 = scalar_lea.vmem %s61, %s11552
      $region160: #{stdc_backbone_forward.1} parent=147 // pred_fallthru
        _
    $region148: #{stdc_backbone_forward.1} parent=5 // pred_fallthru
      _
  $region6: #{stdc_backbone_forward.1} parent=0 // loop_footer
    %s72 = sadd.s32 1, %s68
  $region7: #{stdc_backbone_forward.1} parent=0 // loop_footer_branch
    %67 = sbr.rel target = $region3
  $region8: #{stdc_backbone_forward.1} parent=0 // loop_exit
    _

</llo_original>
